<compile_context>
chip_gen: v5e
topology: v5e:2x2
jax: 0.10.0
libtpu: 0.0.40
codegen_flags: <defaults>
</compile_context>

<pallas_src>
import jax
import jax.numpy as jnp
import numpy as np
from jax.experimental import pallas as pl
from jax.experimental.pallas import tpu as pltpu


_K1_OFFS = tuple(32 * dh + dw for dh in range(5) for dw in range(5))      # conv1 taps
_K2_OFFS = tuple(64 * dh + 2 * dw for dh in range(5) for dw in range(5))  # conv2 taps
_SPAN1 = 892   # conv1 wide lanes  (892 + max offset 132 == 1024)
_POOL1 = 859   # pool1 wide lanes  (max valid lane 64*13 + 2*13 == 858)
_SPAN2 = 595   # conv2 wide lanes  (595 + max offset 264 == 859)
_POOL2 = 529   # pool2 wide lanes  (max valid lane 128*4 + 4*4 == 528)


# ----------------------------- fused Pallas kernel -------------------------- #

def _fused_cnn_kernel(x_ref, w1_ref, b1_ref, w2_ref, b2_ref, sel_ref,
                      wf1_ref, bf1_ref, wf2_ref, bf2_ref, wf3_ref, bf3_ref,
                      o_ref, h_sc):
    """conv1+relu+pool1+conv2+relu+pool2+flatten+fc1+fc2+fc3 for one batch block."""
    S = x_ref.shape[0]
    for s in range(S):
        xs = x_ref[s].astype(jnp.bfloat16)                       # (3, 1024) bf16
        # ---- conv1 (5x5, 3->12): 25 per-tap MXU dots, f32 accumulation ----
        acc1 = jnp.zeros((12, _SPAN1), jnp.float32)
        for t, o in enumerate(_K1_OFFS):
            acc1 = acc1 + jnp.dot(w1_ref[t], xs[:, o:o + _SPAN1],
                                  preferred_element_type=jnp.float32)
        v1 = jnp.maximum(acc1 + b1_ref[...], 0.0)                # (12, 892) f32
        # ---- maxpool 2x2 stride 2 (shifted-lane maxima) ----
        ma = jnp.maximum(v1[:, 0:_SPAN1 - 1], v1[:, 1:_SPAN1])
        m1 = jnp.maximum(ma[:, 0:_POOL1],
                         ma[:, 32:32 + _POOL1]).astype(jnp.bfloat16)   # (12, 859)
        # ---- conv2 (5x5, 12->24): 25 per-tap MXU dots ----
        acc2 = jnp.zeros((24, _SPAN2), jnp.float32)
        for t, o in enumerate(_K2_OFFS):
            acc2 = acc2 + jnp.dot(w2_ref[t], m1[:, o:o + _SPAN2],
                                  preferred_element_type=jnp.float32)
        v2 = jnp.maximum(acc2 + b2_ref[...], 0.0)                # (24, 595) f32
        # ---- maxpool 2x2 stride 2 ----
        mb = jnp.maximum(v2[:, 0:_SPAN2 - 2], v2[:, 2:_SPAN2])
        m2 = jnp.maximum(mb[:, 0:_POOL2],
                         mb[:, 64:64 + _POOL2]).astype(jnp.bfloat16)   # (24, 529)
        # ---- compact the 25 valid pooled lanes per channel -> (24, 32) ----
        feat = jnp.dot(m2, sel_ref[...],
                       preferred_element_type=jnp.float32)       # (24, 32) f32
        # ---- flatten into PyTorch x.view(-1, 24*5*5) order ----
        for c in range(24):
            h_sc[s:s + 1, c * 32:(c + 1) * 32] = feat[c:c + 1, :]
    # ---- fused FC stack, M = S rows, 128-padded lane-dense weights ----
    h = h_sc[...].astype(jnp.bfloat16)                           # (S, 768)
    z = jnp.dot(h, wf1_ref[...], preferred_element_type=jnp.float32) + bf1_ref[...]
    z = jnp.maximum(z, 0.0).astype(jnp.bfloat16)
    z = jnp.dot(z, wf2_ref[...], preferred_element_type=jnp.float32) + bf2_ref[...]
    z = jnp.maximum(z, 0.0).astype(jnp.bfloat16)
    z = jnp.dot(z, wf3_ref[...], preferred_element_type=jnp.float32) + bf3_ref[...]
    o_ref[0] = z                                                  # (S, 128) f32


def _pick_block_b(batch):
    """Samples per grid step: amortize step overhead, keep >=2 parallel steps."""
    for s in (8, 4, 2):
        if batch % s == 0 and batch // s >= 2:
            return s
    return 1


def _cnn_pallas(x_flat, prep, block_b):
    """(B,3,1024) f32 -> (B,128) f32 padded logits (real logits in [:, :10])."""
    B = x_flat.shape[0]
    gb = B // block_b
    out = pl.pallas_call(
        _fused_cnn_kernel,
        out_shape=jax.ShapeDtypeStruct((gb, block_b, 128), jnp.float32),
        grid_spec=pltpu.PrefetchScalarGridSpec(
            num_scalar_prefetch=0,
            grid=(gb,),
            in_specs=[
                pl.BlockSpec((block_b, 3, 1024), lambda i: (i, 0, 0)),
                pl.BlockSpec((25, 12, 3), lambda i: (0, 0, 0)),
                pl.BlockSpec((12, 1), lambda i: (0, 0)),
                pl.BlockSpec((25, 24, 12), lambda i: (0, 0, 0)),
                pl.BlockSpec((24, 1), lambda i: (0, 0)),
                pl.BlockSpec((_POOL2, 32), lambda i: (0, 0)),
                pl.BlockSpec((768, 128), lambda i: (0, 0)),
                pl.BlockSpec((1, 128), lambda i: (0, 0)),
                pl.BlockSpec((128, 128), lambda i: (0, 0)),
                pl.BlockSpec((1, 128), lambda i: (0, 0)),
                pl.BlockSpec((128, 128), lambda i: (0, 0)),
                pl.BlockSpec((1, 128), lambda i: (0, 0)),
            ],
            out_specs=pl.BlockSpec((1, block_b, 128), lambda i: (i, 0, 0)),
            scratch_shapes=[pltpu.VMEM((block_b, 768), jnp.float32)],
        ),
        compiler_params=pltpu.CompilerParams(
            dimension_semantics=("parallel",)),
    )(x_flat, prep["w1p"], prep["b1p"], prep["w2p"], prep["b2p"], prep["sel"],
      prep["wf1p"], prep["bf1p"], prep["wf2p"], prep["bf2p"],
      prep["wf3p"], prep["bf3p"])
    return out.reshape(B, 128)


# ------------------------------ parameters --------------------------------- #

def _uniform(key, shape, fan_in):
    bound = 1.0 / jnp.sqrt(jnp.asarray(fan_in, jnp.float32))
    return jax.random.uniform(key, shape, jnp.float32, -bound, bound)


def init_params(key):
    """Raw parameters in PyTorch layout / dtype."""
    ks = jax.random.split(key, 10)
    p = {}
    p["w1"] = _uniform(ks[0], (12, 3, 5, 5), 3 * 5 * 5)
    p["b1"] = _uniform(ks[1], (12,), 3 * 5 * 5)
    p["w2"] = _uniform(ks[2], (24, 12, 5, 5), 12 * 5 * 5)
    p["b2"] = _uniform(ks[3], (24,), 12 * 5 * 5)
    p["wf1"] = _uniform(ks[4], (120, 600), 600)     # PyTorch (out, in)
    p["bf1"] = _uniform(ks[5], (120,), 600)
    p["wf2"] = _uniform(ks[6], (60, 120), 120)
    p["bf2"] = _uniform(ks[7], (60,), 120)
    p["wf3"] = _uniform(ks[8], (10, 60), 60)
    p["bf3"] = _uniform(ks[9], (10,), 60)
    return p


def prepare_params(p):
    """One-time transpose / pad / cast to kernel-friendly layouts (at init)."""
    # conv weights as per-tap (Cout, Cin) matrices, tap index t = 5*dh + dw
    w1p = jnp.transpose(p["w1"], (2, 3, 0, 1)).reshape(25, 12, 3).astype(jnp.bfloat16)
    b1p = p["b1"].reshape(12, 1).astype(jnp.float32)
    w2p = jnp.transpose(p["w2"], (2, 3, 0, 1)).reshape(25, 24, 12).astype(jnp.bfloat16)
    b2p = p["b2"].reshape(24, 1).astype(jnp.float32)
    # selection matrix: wide lane 128*p + 4*q  ->  compact column 5*p + q
    rows = (128 * jnp.arange(5)[:, None] + 4 * jnp.arange(5)[None, :]).reshape(-1)
    sel = jnp.zeros((_POOL2, 32), jnp.float32).at[rows, jnp.arange(25)].set(1.0)
    sel = sel.astype(jnp.bfloat16)
    # fc1: (120,600) -> (768,128), rows laid out as c*32 + (5*p+q)
    wf1 = p["wf1"].T.reshape(24, 25, 120)
    wf1 = jnp.pad(wf1, ((0, 0), (0, 7), (0, 8))).reshape(768, 128).astype(jnp.bfloat16)
    bf1 = jnp.pad(p["bf1"], (0, 8)).reshape(1, 128).astype(jnp.float32)
    # fc2 / fc3 padded to 128x128
    wf2 = jnp.pad(p["wf2"].T, ((0, 8), (0, 68))).astype(jnp.bfloat16)
    bf2 = jnp.pad(p["bf2"], (0, 68)).reshape(1, 128).astype(jnp.float32)
    wf3 = jnp.pad(p["wf3"].T, ((0, 68), (0, 118))).astype(jnp.bfloat16)
    bf3 = jnp.pad(p["bf3"], (0, 118)).reshape(1, 128).astype(jnp.float32)
    return dict(w1p=w1p, b1p=b1p, w2p=w2p, b2p=b2p, sel=sel,
                wf1p=wf1, bf1p=bf1, wf2p=wf2, bf2p=bf2, wf3p=wf3, bf3p=bf3)


# -------------------------------- forward ---------------------------------- #

@jax.jit
def neural_network_forward(x_nchw, prep):
    B = x_nchw.shape[0]
    block_b = _pick_block_b(B)
    # free row-major reshape; the raw f32 input goes straight into the kernel
    x_flat = x_nchw.reshape(B, 3, 32 * 32).astype(jnp.float32)
    logits = _cnn_pallas(x_flat, prep, block_b)       # (B, 128)
    return logits[:, :10]


# -------------------------- pure-JAX reference ----------------------------- #

def reference_forward(x, p):
    dn = ("NCHW", "OIHW", "NCHW")
    y = jax.lax.conv_general_dilated(x, p["w1"], (1, 1), "VALID",
                                     dimension_numbers=dn)
    y = jnp.maximum(y + p["b1"][None, :, None, None], 0.0)
    y = jax.lax.reduce_window(y, -jnp.inf, jax.lax.max,
                              (1, 1, 2, 2), (1, 1, 2, 2), "VALID")
    y = jax.lax.conv_general_dilated(y, p["w2"], (1, 1), "VALID",
                                     dimension_numbers=dn)
    y = jnp.maximum(y + p["b2"][None, :, None, None], 0.0)
    y = jax.lax.reduce_window(y, -jnp.inf, jax.lax.max,
                              (1, 1, 2, 2), (1, 1, 2, 2), "VALID")
    y = y.reshape(y.shape[0], 24 * 5 * 5)
    y = jnp.maximum(y @ p["wf1"].T + p["bf1"], 0.0)
    y = jnp.maximum(y @ p["wf2"].T + p["bf2"], 0.0)
    return y @ p["wf3"].T + p["bf3"]


if __name__ == "__main__":
    key = jax.random.PRNGKey(0)
    pkey, xkey = jax.random.split(key)
    params = init_params(pkey)
    prep = prepare_params(params)
    # input must be 3x32x32 for the 24*5*5 flatten to hold (as in PyTorch module)
    x = jax.random.normal(xkey, (2, 3, 32, 32), jnp.float32)
    out = jax.block_until_ready(neural_network_forward(x, prep))
    assert out.shape == (2, 10)
    ref = reference_forward(x, params)
    # tolerance covers bf16 MXU operands vs. the pure-f32 reference
    np.testing.assert_allclose(np.asarray(out), np.asarray(ref), atol=5e-2, rtol=0)
    print("KERNEL_OK")
</pallas_src>

<mosaic_0001>
module attributes {stable_mosaic.version = 11 : i64} {
  func.func @_fused_cnn_kernel(%arg0: i32, %arg1: memref<1x3x1024xf32, #tpu.memory_space<vmem>>, %arg2: memref<25x12x3xbf16, #tpu.memory_space<vmem>>, %arg3: memref<12x1xf32, #tpu.memory_space<vmem>>, %arg4: memref<25x24x12xbf16, #tpu.memory_space<vmem>>, %arg5: memref<24x1xf32, #tpu.memory_space<vmem>>, %arg6: memref<529x32xbf16, #tpu.memory_space<vmem>>, %arg7: memref<768x128xbf16, #tpu.memory_space<vmem>>, %arg8: memref<1x128xf32, #tpu.memory_space<vmem>>, %arg9: memref<128x128xbf16, #tpu.memory_space<vmem>>, %arg10: memref<1x128xf32, #tpu.memory_space<vmem>>, %arg11: memref<128x128xbf16, #tpu.memory_space<vmem>>, %arg12: memref<1x128xf32, #tpu.memory_space<vmem>>, %arg13: memref<1x1x128xf32, #tpu.memory_space<vmem>>, %arg14: memref<1x768xf32, #tpu.memory_space<vmem>>) attributes {dimension_semantics = [#tpu.dimension_semantics<parallel>], iteration_bounds = array<i64: 2>, scalar_prefetch = 0 : i64, scratch_operands = 1 : i64, tpu.core_type = #tpu.core_type<tc>, window_params = [{transform_indices = @transform_0, window_bounds = array<i64: 1, 3, 1024>}, {pipeline_mode = #tpu.pipeline_mode<synchronous>, transform_indices = @transform_1, window_bounds = array<i64: 25, 12, 3>}, {pipeline_mode = #tpu.pipeline_mode<synchronous>, transform_indices = @transform_2, window_bounds = array<i64: 12, 1>}, {pipeline_mode = #tpu.pipeline_mode<synchronous>, transform_indices = @transform_3, window_bounds = array<i64: 25, 24, 12>}, {pipeline_mode = #tpu.pipeline_mode<synchronous>, transform_indices = @transform_4, window_bounds = array<i64: 24, 1>}, {pipeline_mode = #tpu.pipeline_mode<synchronous>, transform_indices = @transform_5, window_bounds = array<i64: 529, 32>}, {pipeline_mode = #tpu.pipeline_mode<synchronous>, transform_indices = @transform_6, window_bounds = array<i64: 768, 128>}, {pipeline_mode = #tpu.pipeline_mode<synchronous>, transform_indices = @transform_7, window_bounds = array<i64: 1, 128>}, {pipeline_mode = #tpu.pipeline_mode<synchronous>, transform_indices = @transform_8, window_bounds = array<i64: 128, 128>}, {pipeline_mode = #tpu.pipeline_mode<synchronous>, transform_indices = @transform_9, window_bounds = array<i64: 1, 128>}, {pipeline_mode = #tpu.pipeline_mode<synchronous>, transform_indices = @transform_10, window_bounds = array<i64: 128, 128>}, {pipeline_mode = #tpu.pipeline_mode<synchronous>, transform_indices = @transform_11, window_bounds = array<i64: 1, 128>}, {transform_indices = @transform_12, window_bounds = array<i64: 1, 1, 128>}]} {
    %c0 = arith.constant 0 : index
    %c0_0 = arith.constant 0 : index
    %c0_1 = arith.constant 0 : index
    %0 = vector.load %arg1[%c0, %c0_0, %c0_1] : memref<1x3x1024xf32, #tpu.memory_space<vmem>>, vector<1x3x1024xf32>
    %1 = vector.shape_cast %0 : vector<1x3x1024xf32> to vector<3x1024xf32>
    %2 = arith.truncf %1 : vector<3x1024xf32> to vector<3x1024xbf16>
    %cst = arith.constant 0.000000e+00 : f32
    %3 = vector.broadcast %cst : f32 to vector<12x892xf32>
    %c0_2 = arith.constant 0 : index
    %c0_3 = arith.constant 0 : index
    %c0_4 = arith.constant 0 : index
    %4 = vector.load %arg2[%c0_2, %c0_3, %c0_4] : memref<25x12x3xbf16, #tpu.memory_space<vmem>>, vector<1x12x3xbf16>
    %5 = vector.shape_cast %4 : vector<1x12x3xbf16> to vector<12x3xbf16>
    %6 = vector.extract_strided_slice %2 {offsets = [0, 0], sizes = [3, 892], strides = [1, 1]} : vector<3x1024xbf16> to vector<3x892xbf16>
    %cst_5 = arith.constant dense<0.000000e+00> : vector<12x892xf32>
    %7 = tpu.matmul %5, %6, %cst_5 {dimension_numbers = #tpu.dot_dimension_numbers<[1], [0], [0], [1], [0, 0, 1, 1], [], []>} : vector<12x3xbf16>, vector<3x892xbf16>, vector<12x892xf32> -> vector<12x892xf32>
    %8 = arith.addf %3, %7 : vector<12x892xf32>
    %c1 = arith.constant 1 : index
    %c0_6 = arith.constant 0 : index
    %c0_7 = arith.constant 0 : index
    %9 = vector.load %arg2[%c1, %c0_6, %c0_7] : memref<25x12x3xbf16, #tpu.memory_space<vmem>>, vector<1x12x3xbf16>
    %10 = vector.shape_cast %9 : vector<1x12x3xbf16> to vector<12x3xbf16>
    %11 = vector.extract_strided_slice %2 {offsets = [0, 1], sizes = [3, 892], strides = [1, 1]} : vector<3x1024xbf16> to vector<3x892xbf16>
    %cst_8 = arith.constant dense<0.000000e+00> : vector<12x892xf32>
    %12 = tpu.matmul %10, %11, %cst_8 {dimension_numbers = #tpu.dot_dimension_numbers<[1], [0], [0], [1], [0, 0, 1, 1], [], []>} : vector<12x3xbf16>, vector<3x892xbf16>, vector<12x892xf32> -> vector<12x892xf32>
    %13 = arith.addf %8, %12 : vector<12x892xf32>
    %c2 = arith.constant 2 : index
    %c0_9 = arith.constant 0 : index
    %c0_10 = arith.constant 0 : index
    %14 = vector.load %arg2[%c2, %c0_9, %c0_10] : memref<25x12x3xbf16, #tpu.memory_space<vmem>>, vector<1x12x3xbf16>
    %15 = vector.shape_cast %14 : vector<1x12x3xbf16> to vector<12x3xbf16>
    %16 = vector.extract_strided_slice %2 {offsets = [0, 2], sizes = [3, 892], strides = [1, 1]} : vector<3x1024xbf16> to vector<3x892xbf16>
    %cst_11 = arith.constant dense<0.000000e+00> : vector<12x892xf32>
    %17 = tpu.matmul %15, %16, %cst_11 {dimension_numbers = #tpu.dot_dimension_numbers<[1], [0], [0], [1], [0, 0, 1, 1], [], []>} : vector<12x3xbf16>, vector<3x892xbf16>, vector<12x892xf32> -> vector<12x892xf32>
    %18 = arith.addf %13, %17 : vector<12x892xf32>
    %c3 = arith.constant 3 : index
    %c0_12 = arith.constant 0 : index
    %c0_13 = arith.constant 0 : index
    %19 = vector.load %arg2[%c3, %c0_12, %c0_13] : memref<25x12x3xbf16, #tpu.memory_space<vmem>>, vector<1x12x3xbf16>
    %20 = vector.shape_cast %19 : vector<1x12x3xbf16> to vector<12x3xbf16>
    %21 = vector.extract_strided_slice %2 {offsets = [0, 3], sizes = [3, 892], strides = [1, 1]} : vector<3x1024xbf16> to vector<3x892xbf16>
    %cst_14 = arith.constant dense<0.000000e+00> : vector<12x892xf32>
    %22 = tpu.matmul %20, %21, %cst_14 {dimension_numbers = #tpu.dot_dimension_numbers<[1], [0], [0], [1], [0, 0, 1, 1], [], []>} : vector<12x3xbf16>, vector<3x892xbf16>, vector<12x892xf32> -> vector<12x892xf32>
    %23 = arith.addf %18, %22 : vector<12x892xf32>
    %c4 = arith.constant 4 : index
    %c0_15 = arith.constant 0 : index
    %c0_16 = arith.constant 0 : index
    %24 = vector.load %arg2[%c4, %c0_15, %c0_16] : memref<25x12x3xbf16, #tpu.memory_space<vmem>>, vector<1x12x3xbf16>
    %25 = vector.shape_cast %24 : vector<1x12x3xbf16> to vector<12x3xbf16>
    %26 = vector.extract_strided_slice %2 {offsets = [0, 4], sizes = [3, 892], strides = [1, 1]} : vector<3x1024xbf16> to vector<3x892xbf16>
    %cst_17 = arith.constant dense<0.000000e+00> : vector<12x892xf32>
    %27 = tpu.matmul %25, %26, %cst_17 {dimension_numbers = #tpu.dot_dimension_numbers<[1], [0], [0], [1], [0, 0, 1, 1], [], []>} : vector<12x3xbf16>, vector<3x892xbf16>, vector<12x892xf32> -> vector<12x892xf32>
    %28 = arith.addf %23, %27 : vector<12x892xf32>
    %c5 = arith.constant 5 : index
    %c0_18 = arith.constant 0 : index
    %c0_19 = arith.constant 0 : index
    %29 = vector.load %arg2[%c5, %c0_18, %c0_19] : memref<25x12x3xbf16, #tpu.memory_space<vmem>>, vector<1x12x3xbf16>
    %30 = vector.shape_cast %29 : vector<1x12x3xbf16> to vector<12x3xbf16>
    %31 = vector.extract_strided_slice %2 {offsets = [0, 32], sizes = [3, 892], strides = [1, 1]} : vector<3x1024xbf16> to vector<3x892xbf16>
    %cst_20 = arith.constant dense<0.000000e+00> : vector<12x892xf32>
    %32 = tpu.matmul %30, %31, %cst_20 {dimension_numbers = #tpu.dot_dimension_numbers<[1], [0], [0], [1], [0, 0, 1, 1], [], []>} : vector<12x3xbf16>, vector<3x892xbf16>, vector<12x892xf32> -> vector<12x892xf32>
    %33 = arith.addf %28, %32 : vector<12x892xf32>
    %c6 = arith.constant 6 : index
    %c0_21 = arith.constant 0 : index
    %c0_22 = arith.constant 0 : index
    %34 = vector.load %arg2[%c6, %c0_21, %c0_22] : memref<25x12x3xbf16, #tpu.memory_space<vmem>>, vector<1x12x3xbf16>
    %35 = vector.shape_cast %34 : vector<1x12x3xbf16> to vector<12x3xbf16>
    %36 = vector.extract_strided_slice %2 {offsets = [0, 33], sizes = [3, 892], strides = [1, 1]} : vector<3x1024xbf16> to vector<3x892xbf16>
    %cst_23 = arith.constant dense<0.000000e+00> : vector<12x892xf32>
    %37 = tpu.matmul %35, %36, %cst_23 {dimension_numbers = #tpu.dot_dimension_numbers<[1], [0], [0], [1], [0, 0, 1, 1], [], []>} : vector<12x3xbf16>, vector<3x892xbf16>, vector<12x892xf32> -> vector<12x892xf32>
    %38 = arith.addf %33, %37 : vector<12x892xf32>
    %c7 = arith.constant 7 : index
    %c0_24 = arith.constant 0 : index
    %c0_25 = arith.constant 0 : index
    %39 = vector.load %arg2[%c7, %c0_24, %c0_25] : memref<25x12x3xbf16, #tpu.memory_space<vmem>>, vector<1x12x3xbf16>
    %40 = vector.shape_cast %39 : vector<1x12x3xbf16> to vector<12x3xbf16>
    %41 = vector.extract_strided_slice %2 {offsets = [0, 34], sizes = [3, 892], strides = [1, 1]} : vector<3x1024xbf16> to vector<3x892xbf16>
    %cst_26 = arith.constant dense<0.000000e+00> : vector<12x892xf32>
    %42 = tpu.matmul %40, %41, %cst_26 {dimension_numbers = #tpu.dot_dimension_numbers<[1], [0], [0], [1], [0, 0, 1, 1], [], []>} : vector<12x3xbf16>, vector<3x892xbf16>, vector<12x892xf32> -> vector<12x892xf32>
    %43 = arith.addf %38, %42 : vector<12x892xf32>
    %c8 = arith.constant 8 : index
    %c0_27 = arith.constant 0 : index
    %c0_28 = arith.constant 0 : index
    %44 = vector.load %arg2[%c8, %c0_27, %c0_28] : memref<25x12x3xbf16, #tpu.memory_space<vmem>>, vector<1x12x3xbf16>
    %45 = vector.shape_cast %44 : vector<1x12x3xbf16> to vector<12x3xbf16>
    %46 = vector.extract_strided_slice %2 {offsets = [0, 35], sizes = [3, 892], strides = [1, 1]} : vector<3x1024xbf16> to vector<3x892xbf16>
    %cst_29 = arith.constant dense<0.000000e+00> : vector<12x892xf32>
    %47 = tpu.matmul %45, %46, %cst_29 {dimension_numbers = #tpu.dot_dimension_numbers<[1], [0], [0], [1], [0, 0, 1, 1], [], []>} : vector<12x3xbf16>, vector<3x892xbf16>, vector<12x892xf32> -> vector<12x892xf32>
    %48 = arith.addf %43, %47 : vector<12x892xf32>
    %c9 = arith.constant 9 : index
    %c0_30 = arith.constant 0 : index
    %c0_31 = arith.constant 0 : index
    %49 = vector.load %arg2[%c9, %c0_30, %c0_31] : memref<25x12x3xbf16, #tpu.memory_space<vmem>>, vector<1x12x3xbf16>
    %50 = vector.shape_cast %49 : vector<1x12x3xbf16> to vector<12x3xbf16>
    %51 = vector.extract_strided_slice %2 {offsets = [0, 36], sizes = [3, 892], strides = [1, 1]} : vector<3x1024xbf16> to vector<3x892xbf16>
    %cst_32 = arith.constant dense<0.000000e+00> : vector<12x892xf32>
    %52 = tpu.matmul %50, %51, %cst_32 {dimension_numbers = #tpu.dot_dimension_numbers<[1], [0], [0], [1], [0, 0, 1, 1], [], []>} : vector<12x3xbf16>, vector<3x892xbf16>, vector<12x892xf32> -> vector<12x892xf32>
    %53 = arith.addf %48, %52 : vector<12x892xf32>
    %c10 = arith.constant 10 : index
    %c0_33 = arith.constant 0 : index
    %c0_34 = arith.constant 0 : index
    %54 = vector.load %arg2[%c10, %c0_33, %c0_34] : memref<25x12x3xbf16, #tpu.memory_space<vmem>>, vector<1x12x3xbf16>
    %55 = vector.shape_cast %54 : vector<1x12x3xbf16> to vector<12x3xbf16>
    %56 = vector.extract_strided_slice %2 {offsets = [0, 64], sizes = [3, 892], strides = [1, 1]} : vector<3x1024xbf16> to vector<3x892xbf16>
    %cst_35 = arith.constant dense<0.000000e+00> : vector<12x892xf32>
    %57 = tpu.matmul %55, %56, %cst_35 {dimension_numbers = #tpu.dot_dimension_numbers<[1], [0], [0], [1], [0, 0, 1, 1], [], []>} : vector<12x3xbf16>, vector<3x892xbf16>, vector<12x892xf32> -> vector<12x892xf32>
    %58 = arith.addf %53, %57 : vector<12x892xf32>
    %c11 = arith.constant 11 : index
    %c0_36 = arith.constant 0 : index
    %c0_37 = arith.constant 0 : index
    %59 = vector.load %arg2[%c11, %c0_36, %c0_37] : memref<25x12x3xbf16, #tpu.memory_space<vmem>>, vector<1x12x3xbf16>
    %60 = vector.shape_cast %59 : vector<1x12x3xbf16> to vector<12x3xbf16>
    %61 = vector.extract_strided_slice %2 {offsets = [0, 65], sizes = [3, 892], strides = [1, 1]} : vector<3x1024xbf16> to vector<3x892xbf16>
    %cst_38 = arith.constant dense<0.000000e+00> : vector<12x892xf32>
    %62 = tpu.matmul %60, %61, %cst_38 {dimension_numbers = #tpu.dot_dimension_numbers<[1], [0], [0], [1], [0, 0, 1, 1], [], []>} : vector<12x3xbf16>, vector<3x892xbf16>, vector<12x892xf32> -> vector<12x892xf32>
    %63 = arith.addf %58, %62 : vector<12x892xf32>
    %c12 = arith.constant 12 : index
    %c0_39 = arith.constant 0 : index
    %c0_40 = arith.constant 0 : index
    %64 = vector.load %arg2[%c12, %c0_39, %c0_40] : memref<25x12x3xbf16, #tpu.memory_space<vmem>>, vector<1x12x3xbf16>
    %65 = vector.shape_cast %64 : vector<1x12x3xbf16> to vector<12x3xbf16>
    %66 = vector.extract_strided_slice %2 {offsets = [0, 66], sizes = [3, 892], strides = [1, 1]} : vector<3x1024xbf16> to vector<3x892xbf16>
    %cst_41 = arith.constant dense<0.000000e+00> : vector<12x892xf32>
    %67 = tpu.matmul %65, %66, %cst_41 {dimension_numbers = #tpu.dot_dimension_numbers<[1], [0], [0], [1], [0, 0, 1, 1], [], []>} : vector<12x3xbf16>, vector<3x892xbf16>, vector<12x892xf32> -> vector<12x892xf32>
    %68 = arith.addf %63, %67 : vector<12x892xf32>
    %c13 = arith.constant 13 : index
    %c0_42 = arith.constant 0 : index
    %c0_43 = arith.constant 0 : index
    %69 = vector.load %arg2[%c13, %c0_42, %c0_43] : memref<25x12x3xbf16, #tpu.memory_space<vmem>>, vector<1x12x3xbf16>
    %70 = vector.shape_cast %69 : vector<1x12x3xbf16> to vector<12x3xbf16>
    %71 = vector.extract_strided_slice %2 {offsets = [0, 67], sizes = [3, 892], strides = [1, 1]} : vector<3x1024xbf16> to vector<3x892xbf16>
    %cst_44 = arith.constant dense<0.000000e+00> : vector<12x892xf32>
    %72 = tpu.matmul %70, %71, %cst_44 {dimension_numbers = #tpu.dot_dimension_numbers<[1], [0], [0], [1], [0, 0, 1, 1], [], []>} : vector<12x3xbf16>, vector<3x892xbf16>, vector<12x892xf32> -> vector<12x892xf32>
    %73 = arith.addf %68, %72 : vector<12x892xf32>
    %c14 = arith.constant 14 : index
    %c0_45 = arith.constant 0 : index
    %c0_46 = arith.constant 0 : index
    %74 = vector.load %arg2[%c14, %c0_45, %c0_46] : memref<25x12x3xbf16, #tpu.memory_space<vmem>>, vector<1x12x3xbf16>
    %75 = vector.shape_cast %74 : vector<1x12x3xbf16> to vector<12x3xbf16>
    %76 = vector.extract_strided_slice %2 {offsets = [0, 68], sizes = [3, 892], strides = [1, 1]} : vector<3x1024xbf16> to vector<3x892xbf16>
    %cst_47 = arith.constant dense<0.000000e+00> : vector<12x892xf32>
    %77 = tpu.matmul %75, %76, %cst_47 {dimension_numbers = #tpu.dot_dimension_numbers<[1], [0], [0], [1], [0, 0, 1, 1], [], []>} : vector<12x3xbf16>, vector<3x892xbf16>, vector<12x892xf32> -> vector<12x892xf32>
    %78 = arith.addf %73, %77 : vector<12x892xf32>
    %c15 = arith.constant 15 : index
    %c0_48 = arith.constant 0 : index
    %c0_49 = arith.constant 0 : index
    %79 = vector.load %arg2[%c15, %c0_48, %c0_49] : memref<25x12x3xbf16, #tpu.memory_space<vmem>>, vector<1x12x3xbf16>
    %80 = vector.shape_cast %79 : vector<1x12x3xbf16> to vector<12x3xbf16>
    %81 = vector.extract_strided_slice %2 {offsets = [0, 96], sizes = [3, 892], strides = [1, 1]} : vector<3x1024xbf16> to vector<3x892xbf16>
    %cst_50 = arith.constant dense<0.000000e+00> : vector<12x892xf32>
    %82 = tpu.matmul %80, %81, %cst_50 {dimension_numbers = #tpu.dot_dimension_numbers<[1], [0], [0], [1], [0, 0, 1, 1], [], []>} : vector<12x3xbf16>, vector<3x892xbf16>, vector<12x892xf32> -> vector<12x892xf32>
    %83 = arith.addf %78, %82 : vector<12x892xf32>
    %c16 = arith.constant 16 : index
    %c0_51 = arith.constant 0 : index
    %c0_52 = arith.constant 0 : index
    %84 = vector.load %arg2[%c16, %c0_51, %c0_52] : memref<25x12x3xbf16, #tpu.memory_space<vmem>>, vector<1x12x3xbf16>
    %85 = vector.shape_cast %84 : vector<1x12x3xbf16> to vector<12x3xbf16>
    %86 = vector.extract_strided_slice %2 {offsets = [0, 97], sizes = [3, 892], strides = [1, 1]} : vector<3x1024xbf16> to vector<3x892xbf16>
    %cst_53 = arith.constant dense<0.000000e+00> : vector<12x892xf32>
    %87 = tpu.matmul %85, %86, %cst_53 {dimension_numbers = #tpu.dot_dimension_numbers<[1], [0], [0], [1], [0, 0, 1, 1], [], []>} : vector<12x3xbf16>, vector<3x892xbf16>, vector<12x892xf32> -> vector<12x892xf32>
    %88 = arith.addf %83, %87 : vector<12x892xf32>
    %c17 = arith.constant 17 : index
    %c0_54 = arith.constant 0 : index
    %c0_55 = arith.constant 0 : index
    %89 = vector.load %arg2[%c17, %c0_54, %c0_55] : memref<25x12x3xbf16, #tpu.memory_space<vmem>>, vector<1x12x3xbf16>
    %90 = vector.shape_cast %89 : vector<1x12x3xbf16> to vector<12x3xbf16>
    %91 = vector.extract_strided_slice %2 {offsets = [0, 98], sizes = [3, 892], strides = [1, 1]} : vector<3x1024xbf16> to vector<3x892xbf16>
    %cst_56 = arith.constant dense<0.000000e+00> : vector<12x892xf32>
    %92 = tpu.matmul %90, %91, %cst_56 {dimension_numbers = #tpu.dot_dimension_numbers<[1], [0], [0], [1], [0, 0, 1, 1], [], []>} : vector<12x3xbf16>, vector<3x892xbf16>, vector<12x892xf32> -> vector<12x892xf32>
    %93 = arith.addf %88, %92 : vector<12x892xf32>
    %c18 = arith.constant 18 : index
    %c0_57 = arith.constant 0 : index
    %c0_58 = arith.constant 0 : index
    %94 = vector.load %arg2[%c18, %c0_57, %c0_58] : memref<25x12x3xbf16, #tpu.memory_space<vmem>>, vector<1x12x3xbf16>
    %95 = vector.shape_cast %94 : vector<1x12x3xbf16> to vector<12x3xbf16>
    %96 = vector.extract_strided_slice %2 {offsets = [0, 99], sizes = [3, 892], strides = [1, 1]} : vector<3x1024xbf16> to vector<3x892xbf16>
    %cst_59 = arith.constant dense<0.000000e+00> : vector<12x892xf32>
    %97 = tpu.matmul %95, %96, %cst_59 {dimension_numbers = #tpu.dot_dimension_numbers<[1], [0], [0], [1], [0, 0, 1, 1], [], []>} : vector<12x3xbf16>, vector<3x892xbf16>, vector<12x892xf32> -> vector<12x892xf32>
    %98 = arith.addf %93, %97 : vector<12x892xf32>
    %c19 = arith.constant 19 : index
    %c0_60 = arith.constant 0 : index
    %c0_61 = arith.constant 0 : index
    %99 = vector.load %arg2[%c19, %c0_60, %c0_61] : memref<25x12x3xbf16, #tpu.memory_space<vmem>>, vector<1x12x3xbf16>
    %100 = vector.shape_cast %99 : vector<1x12x3xbf16> to vector<12x3xbf16>
    %101 = vector.extract_strided_slice %2 {offsets = [0, 100], sizes = [3, 892], strides = [1, 1]} : vector<3x1024xbf16> to vector<3x892xbf16>
    %cst_62 = arith.constant dense<0.000000e+00> : vector<12x892xf32>
    %102 = tpu.matmul %100, %101, %cst_62 {dimension_numbers = #tpu.dot_dimension_numbers<[1], [0], [0], [1], [0, 0, 1, 1], [], []>} : vector<12x3xbf16>, vector<3x892xbf16>, vector<12x892xf32> -> vector<12x892xf32>
    %103 = arith.addf %98, %102 : vector<12x892xf32>
    %c20 = arith.constant 20 : index
    %c0_63 = arith.constant 0 : index
    %c0_64 = arith.constant 0 : index
    %104 = vector.load %arg2[%c20, %c0_63, %c0_64] : memref<25x12x3xbf16, #tpu.memory_space<vmem>>, vector<1x12x3xbf16>
    %105 = vector.shape_cast %104 : vector<1x12x3xbf16> to vector<12x3xbf16>
    %106 = vector.extract_strided_slice %2 {offsets = [0, 128], sizes = [3, 892], strides = [1, 1]} : vector<3x1024xbf16> to vector<3x892xbf16>
    %cst_65 = arith.constant dense<0.000000e+00> : vector<12x892xf32>
    %107 = tpu.matmul %105, %106, %cst_65 {dimension_numbers = #tpu.dot_dimension_numbers<[1], [0], [0], [1], [0, 0, 1, 1], [], []>} : vector<12x3xbf16>, vector<3x892xbf16>, vector<12x892xf32> -> vector<12x892xf32>
    %108 = arith.addf %103, %107 : vector<12x892xf32>
    %c21 = arith.constant 21 : index
    %c0_66 = arith.constant 0 : index
    %c0_67 = arith.constant 0 : index
    %109 = vector.load %arg2[%c21, %c0_66, %c0_67] : memref<25x12x3xbf16, #tpu.memory_space<vmem>>, vector<1x12x3xbf16>
    %110 = vector.shape_cast %109 : vector<1x12x3xbf16> to vector<12x3xbf16>
    %111 = vector.extract_strided_slice %2 {offsets = [0, 129], sizes = [3, 892], strides = [1, 1]} : vector<3x1024xbf16> to vector<3x892xbf16>
    %cst_68 = arith.constant dense<0.000000e+00> : vector<12x892xf32>
    %112 = tpu.matmul %110, %111, %cst_68 {dimension_numbers = #tpu.dot_dimension_numbers<[1], [0], [0], [1], [0, 0, 1, 1], [], []>} : vector<12x3xbf16>, vector<3x892xbf16>, vector<12x892xf32> -> vector<12x892xf32>
    %113 = arith.addf %108, %112 : vector<12x892xf32>
    %c22 = arith.constant 22 : index
    %c0_69 = arith.constant 0 : index
    %c0_70 = arith.constant 0 : index
    %114 = vector.load %arg2[%c22, %c0_69, %c0_70] : memref<25x12x3xbf16, #tpu.memory_space<vmem>>, vector<1x12x3xbf16>
    %115 = vector.shape_cast %114 : vector<1x12x3xbf16> to vector<12x3xbf16>
    %116 = vector.extract_strided_slice %2 {offsets = [0, 130], sizes = [3, 892], strides = [1, 1]} : vector<3x1024xbf16> to vector<3x892xbf16>
    %cst_71 = arith.constant dense<0.000000e+00> : vector<12x892xf32>
    %117 = tpu.matmul %115, %116, %cst_71 {dimension_numbers = #tpu.dot_dimension_numbers<[1], [0], [0], [1], [0, 0, 1, 1], [], []>} : vector<12x3xbf16>, vector<3x892xbf16>, vector<12x892xf32> -> vector<12x892xf32>
    %118 = arith.addf %113, %117 : vector<12x892xf32>
    %c23 = arith.constant 23 : index
    %c0_72 = arith.constant 0 : index
    %c0_73 = arith.constant 0 : index
    %119 = vector.load %arg2[%c23, %c0_72, %c0_73] : memref<25x12x3xbf16, #tpu.memory_space<vmem>>, vector<1x12x3xbf16>
    %120 = vector.shape_cast %119 : vector<1x12x3xbf16> to vector<12x3xbf16>
    %121 = vector.extract_strided_slice %2 {offsets = [0, 131], sizes = [3, 892], strides = [1, 1]} : vector<3x1024xbf16> to vector<3x892xbf16>
    %cst_74 = arith.constant dense<0.000000e+00> : vector<12x892xf32>
    %122 = tpu.matmul %120, %121, %cst_74 {dimension_numbers = #tpu.dot_dimension_numbers<[1], [0], [0], [1], [0, 0, 1, 1], [], []>} : vector<12x3xbf16>, vector<3x892xbf16>, vector<12x892xf32> -> vector<12x892xf32>
    %123 = arith.addf %118, %122 : vector<12x892xf32>
    %c24 = arith.constant 24 : index
    %c0_75 = arith.constant 0 : index
    %c0_76 = arith.constant 0 : index
    %124 = vector.load %arg2[%c24, %c0_75, %c0_76] : memref<25x12x3xbf16, #tpu.memory_space<vmem>>, vector<1x12x3xbf16>
    %125 = vector.shape_cast %124 : vector<1x12x3xbf16> to vector<12x3xbf16>
    %126 = vector.extract_strided_slice %2 {offsets = [0, 132], sizes = [3, 892], strides = [1, 1]} : vector<3x1024xbf16> to vector<3x892xbf16>
    %cst_77 = arith.constant dense<0.000000e+00> : vector<12x892xf32>
    %127 = tpu.matmul %125, %126, %cst_77 {dimension_numbers = #tpu.dot_dimension_numbers<[1], [0], [0], [1], [0, 0, 1, 1], [], []>} : vector<12x3xbf16>, vector<3x892xbf16>, vector<12x892xf32> -> vector<12x892xf32>
    %128 = arith.addf %123, %127 : vector<12x892xf32>
    %c0_78 = arith.constant 0 : index
    %c0_79 = arith.constant 0 : index
    %129 = vector.load %arg3[%c0_78, %c0_79] : memref<12x1xf32, #tpu.memory_space<vmem>>, vector<12x1xf32>
    %130 = vector.broadcast %129 : vector<12x1xf32> to vector<12x892xf32>
    %131 = arith.addf %128, %130 : vector<12x892xf32>
    %cst_80 = arith.constant 0.000000e+00 : f32
    %132 = vector.broadcast %cst_80 : f32 to vector<12x892xf32>
    %133 = arith.maximumf %131, %132 : vector<12x892xf32>
    %134 = vector.extract_strided_slice %133 {offsets = [0, 0], sizes = [12, 891], strides = [1, 1]} : vector<12x892xf32> to vector<12x891xf32>
    %135 = vector.extract_strided_slice %133 {offsets = [0, 1], sizes = [12, 891], strides = [1, 1]} : vector<12x892xf32> to vector<12x891xf32>
    %136 = arith.maximumf %134, %135 : vector<12x891xf32>
    %137 = vector.extract_strided_slice %136 {offsets = [0, 0], sizes = [12, 859], strides = [1, 1]} : vector<12x891xf32> to vector<12x859xf32>
    %138 = vector.extract_strided_slice %136 {offsets = [0, 32], sizes = [12, 859], strides = [1, 1]} : vector<12x891xf32> to vector<12x859xf32>
    %139 = arith.maximumf %137, %138 : vector<12x859xf32>
    %140 = arith.truncf %139 : vector<12x859xf32> to vector<12x859xbf16>
    %cst_81 = arith.constant 0.000000e+00 : f32
    %141 = vector.broadcast %cst_81 : f32 to vector<24x595xf32>
    %c0_82 = arith.constant 0 : index
    %c0_83 = arith.constant 0 : index
    %c0_84 = arith.constant 0 : index
    %142 = vector.load %arg4[%c0_82, %c0_83, %c0_84] : memref<25x24x12xbf16, #tpu.memory_space<vmem>>, vector<1x24x12xbf16>
    %143 = vector.shape_cast %142 : vector<1x24x12xbf16> to vector<24x12xbf16>
    %144 = vector.extract_strided_slice %140 {offsets = [0, 0], sizes = [12, 595], strides = [1, 1]} : vector<12x859xbf16> to vector<12x595xbf16>
    %cst_85 = arith.constant dense<0.000000e+00> : vector<24x595xf32>
    %145 = tpu.matmul %143, %144, %cst_85 {dimension_numbers = #tpu.dot_dimension_numbers<[1], [0], [0], [1], [0, 0, 1, 1], [], []>} : vector<24x12xbf16>, vector<12x595xbf16>, vector<24x595xf32> -> vector<24x595xf32>
    %146 = arith.addf %141, %145 : vector<24x595xf32>
    %c1_86 = arith.constant 1 : index
    %c0_87 = arith.constant 0 : index
    %c0_88 = arith.constant 0 : index
    %147 = vector.load %arg4[%c1_86, %c0_87, %c0_88] : memref<25x24x12xbf16, #tpu.memory_space<vmem>>, vector<1x24x12xbf16>
    %148 = vector.shape_cast %147 : vector<1x24x12xbf16> to vector<24x12xbf16>
    %149 = vector.extract_strided_slice %140 {offsets = [0, 2], sizes = [12, 595], strides = [1, 1]} : vector<12x859xbf16> to vector<12x595xbf16>
    %cst_89 = arith.constant dense<0.000000e+00> : vector<24x595xf32>
    %150 = tpu.matmul %148, %149, %cst_89 {dimension_numbers = #tpu.dot_dimension_numbers<[1], [0], [0], [1], [0, 0, 1, 1], [], []>} : vector<24x12xbf16>, vector<12x595xbf16>, vector<24x595xf32> -> vector<24x595xf32>
    %151 = arith.addf %146, %150 : vector<24x595xf32>
    %c2_90 = arith.constant 2 : index
    %c0_91 = arith.constant 0 : index
    %c0_92 = arith.constant 0 : index
    %152 = vector.load %arg4[%c2_90, %c0_91, %c0_92] : memref<25x24x12xbf16, #tpu.memory_space<vmem>>, vector<1x24x12xbf16>
    %153 = vector.shape_cast %152 : vector<1x24x12xbf16> to vector<24x12xbf16>
    %154 = vector.extract_strided_slice %140 {offsets = [0, 4], sizes = [12, 595], strides = [1, 1]} : vector<12x859xbf16> to vector<12x595xbf16>
    %cst_93 = arith.constant dense<0.000000e+00> : vector<24x595xf32>
    %155 = tpu.matmul %153, %154, %cst_93 {dimension_numbers = #tpu.dot_dimension_numbers<[1], [0], [0], [1], [0, 0, 1, 1], [], []>} : vector<24x12xbf16>, vector<12x595xbf16>, vector<24x595xf32> -> vector<24x595xf32>
    %156 = arith.addf %151, %155 : vector<24x595xf32>
    %c3_94 = arith.constant 3 : index
    %c0_95 = arith.constant 0 : index
    %c0_96 = arith.constant 0 : index
    %157 = vector.load %arg4[%c3_94, %c0_95, %c0_96] : memref<25x24x12xbf16, #tpu.memory_space<vmem>>, vector<1x24x12xbf16>
    %158 = vector.shape_cast %157 : vector<1x24x12xbf16> to vector<24x12xbf16>
    %159 = vector.extract_strided_slice %140 {offsets = [0, 6], sizes = [12, 595], strides = [1, 1]} : vector<12x859xbf16> to vector<12x595xbf16>
    %cst_97 = arith.constant dense<0.000000e+00> : vector<24x595xf32>
    %160 = tpu.matmul %158, %159, %cst_97 {dimension_numbers = #tpu.dot_dimension_numbers<[1], [0], [0], [1], [0, 0, 1, 1], [], []>} : vector<24x12xbf16>, vector<12x595xbf16>, vector<24x595xf32> -> vector<24x595xf32>
    %161 = arith.addf %156, %160 : vector<24x595xf32>
    %c4_98 = arith.constant 4 : index
    %c0_99 = arith.constant 0 : index
    %c0_100 = arith.constant 0 : index
    %162 = vector.load %arg4[%c4_98, %c0_99, %c0_100] : memref<25x24x12xbf16, #tpu.memory_space<vmem>>, vector<1x24x12xbf16>
    %163 = vector.shape_cast %162 : vector<1x24x12xbf16> to vector<24x12xbf16>
    %164 = vector.extract_strided_slice %140 {offsets = [0, 8], sizes = [12, 595], strides = [1, 1]} : vector<12x859xbf16> to vector<12x595xbf16>
    %cst_101 = arith.constant dense<0.000000e+00> : vector<24x595xf32>
    %165 = tpu.matmul %163, %164, %cst_101 {dimension_numbers = #tpu.dot_dimension_numbers<[1], [0], [0], [1], [0, 0, 1, 1], [], []>} : vector<24x12xbf16>, vector<12x595xbf16>, vector<24x595xf32> -> vector<24x595xf32>
    %166 = arith.addf %161, %165 : vector<24x595xf32>
    %c5_102 = arith.constant 5 : index
    %c0_103 = arith.constant 0 : index
    %c0_104 = arith.constant 0 : index
    %167 = vector.load %arg4[%c5_102, %c0_103, %c0_104] : memref<25x24x12xbf16, #tpu.memory_space<vmem>>, vector<1x24x12xbf16>
    %168 = vector.shape_cast %167 : vector<1x24x12xbf16> to vector<24x12xbf16>
    %169 = vector.extract_strided_slice %140 {offsets = [0, 64], sizes = [12, 595], strides = [1, 1]} : vector<12x859xbf16> to vector<12x595xbf16>
    %cst_105 = arith.constant dense<0.000000e+00> : vector<24x595xf32>
    %170 = tpu.matmul %168, %169, %cst_105 {dimension_numbers = #tpu.dot_dimension_numbers<[1], [0], [0], [1], [0, 0, 1, 1], [], []>} : vector<24x12xbf16>, vector<12x595xbf16>, vector<24x595xf32> -> vector<24x595xf32>
    %171 = arith.addf %166, %170 : vector<24x595xf32>
    %c6_106 = arith.constant 6 : index
    %c0_107 = arith.constant 0 : index
    %c0_108 = arith.constant 0 : index
    %172 = vector.load %arg4[%c6_106, %c0_107, %c0_108] : memref<25x24x12xbf16, #tpu.memory_space<vmem>>, vector<1x24x12xbf16>
    %173 = vector.shape_cast %172 : vector<1x24x12xbf16> to vector<24x12xbf16>
    %174 = vector.extract_strided_slice %140 {offsets = [0, 66], sizes = [12, 595], strides = [1, 1]} : vector<12x859xbf16> to vector<12x595xbf16>
    %cst_109 = arith.constant dense<0.000000e+00> : vector<24x595xf32>
    %175 = tpu.matmul %173, %174, %cst_109 {dimension_numbers = #tpu.dot_dimension_numbers<[1], [0], [0], [1], [0, 0, 1, 1], [], []>} : vector<24x12xbf16>, vector<12x595xbf16>, vector<24x595xf32> -> vector<24x595xf32>
    %176 = arith.addf %171, %175 : vector<24x595xf32>
    %c7_110 = arith.constant 7 : index
    %c0_111 = arith.constant 0 : index
    %c0_112 = arith.constant 0 : index
    %177 = vector.load %arg4[%c7_110, %c0_111, %c0_112] : memref<25x24x12xbf16, #tpu.memory_space<vmem>>, vector<1x24x12xbf16>
    %178 = vector.shape_cast %177 : vector<1x24x12xbf16> to vector<24x12xbf16>
    %179 = vector.extract_strided_slice %140 {offsets = [0, 68], sizes = [12, 595], strides = [1, 1]} : vector<12x859xbf16> to vector<12x595xbf16>
    %cst_113 = arith.constant dense<0.000000e+00> : vector<24x595xf32>
    %180 = tpu.matmul %178, %179, %cst_113 {dimension_numbers = #tpu.dot_dimension_numbers<[1], [0], [0], [1], [0, 0, 1, 1], [], []>} : vector<24x12xbf16>, vector<12x595xbf16>, vector<24x595xf32> -> vector<24x595xf32>
    %181 = arith.addf %176, %180 : vector<24x595xf32>
    %c8_114 = arith.constant 8 : index
    %c0_115 = arith.constant 0 : index
    %c0_116 = arith.constant 0 : index
    %182 = vector.load %arg4[%c8_114, %c0_115, %c0_116] : memref<25x24x12xbf16, #tpu.memory_space<vmem>>, vector<1x24x12xbf16>
    %183 = vector.shape_cast %182 : vector<1x24x12xbf16> to vector<24x12xbf16>
    %184 = vector.extract_strided_slice %140 {offsets = [0, 70], sizes = [12, 595], strides = [1, 1]} : vector<12x859xbf16> to vector<12x595xbf16>
    %cst_117 = arith.constant dense<0.000000e+00> : vector<24x595xf32>
    %185 = tpu.matmul %183, %184, %cst_117 {dimension_numbers = #tpu.dot_dimension_numbers<[1], [0], [0], [1], [0, 0, 1, 1], [], []>} : vector<24x12xbf16>, vector<12x595xbf16>, vector<24x595xf32> -> vector<24x595xf32>
    %186 = arith.addf %181, %185 : vector<24x595xf32>
    %c9_118 = arith.constant 9 : index
    %c0_119 = arith.constant 0 : index
    %c0_120 = arith.constant 0 : index
    %187 = vector.load %arg4[%c9_118, %c0_119, %c0_120] : memref<25x24x12xbf16, #tpu.memory_space<vmem>>, vector<1x24x12xbf16>
    %188 = vector.shape_cast %187 : vector<1x24x12xbf16> to vector<24x12xbf16>
    %189 = vector.extract_strided_slice %140 {offsets = [0, 72], sizes = [12, 595], strides = [1, 1]} : vector<12x859xbf16> to vector<12x595xbf16>
    %cst_121 = arith.constant dense<0.000000e+00> : vector<24x595xf32>
    %190 = tpu.matmul %188, %189, %cst_121 {dimension_numbers = #tpu.dot_dimension_numbers<[1], [0], [0], [1], [0, 0, 1, 1], [], []>} : vector<24x12xbf16>, vector<12x595xbf16>, vector<24x595xf32> -> vector<24x595xf32>
    %191 = arith.addf %186, %190 : vector<24x595xf32>
    %c10_122 = arith.constant 10 : index
    %c0_123 = arith.constant 0 : index
    %c0_124 = arith.constant 0 : index
    %192 = vector.load %arg4[%c10_122, %c0_123, %c0_124] : memref<25x24x12xbf16, #tpu.memory_space<vmem>>, vector<1x24x12xbf16>
    %193 = vector.shape_cast %192 : vector<1x24x12xbf16> to vector<24x12xbf16>
    %194 = vector.extract_strided_slice %140 {offsets = [0, 128], sizes = [12, 595], strides = [1, 1]} : vector<12x859xbf16> to vector<12x595xbf16>
    %cst_125 = arith.constant dense<0.000000e+00> : vector<24x595xf32>
    %195 = tpu.matmul %193, %194, %cst_125 {dimension_numbers = #tpu.dot_dimension_numbers<[1], [0], [0], [1], [0, 0, 1, 1], [], []>} : vector<24x12xbf16>, vector<12x595xbf16>, vector<24x595xf32> -> vector<24x595xf32>
    %196 = arith.addf %191, %195 : vector<24x595xf32>
    %c11_126 = arith.constant 11 : index
    %c0_127 = arith.constant 0 : index
    %c0_128 = arith.constant 0 : index
    %197 = vector.load %arg4[%c11_126, %c0_127, %c0_128] : memref<25x24x12xbf16, #tpu.memory_space<vmem>>, vector<1x24x12xbf16>
    %198 = vector.shape_cast %197 : vector<1x24x12xbf16> to vector<24x12xbf16>
    %199 = vector.extract_strided_slice %140 {offsets = [0, 130], sizes = [12, 595], strides = [1, 1]} : vector<12x859xbf16> to vector<12x595xbf16>
    %cst_129 = arith.constant dense<0.000000e+00> : vector<24x595xf32>
    %200 = tpu.matmul %198, %199, %cst_129 {dimension_numbers = #tpu.dot_dimension_numbers<[1], [0], [0], [1], [0, 0, 1, 1], [], []>} : vector<24x12xbf16>, vector<12x595xbf16>, vector<24x595xf32> -> vector<24x595xf32>
    %201 = arith.addf %196, %200 : vector<24x595xf32>
    %c12_130 = arith.constant 12 : index
    %c0_131 = arith.constant 0 : index
    %c0_132 = arith.constant 0 : index
    %202 = vector.load %arg4[%c12_130, %c0_131, %c0_132] : memref<25x24x12xbf16, #tpu.memory_space<vmem>>, vector<1x24x12xbf16>
    %203 = vector.shape_cast %202 : vector<1x24x12xbf16> to vector<24x12xbf16>
    %204 = vector.extract_strided_slice %140 {offsets = [0, 132], sizes = [12, 595], strides = [1, 1]} : vector<12x859xbf16> to vector<12x595xbf16>
    %cst_133 = arith.constant dense<0.000000e+00> : vector<24x595xf32>
    %205 = tpu.matmul %203, %204, %cst_133 {dimension_numbers = #tpu.dot_dimension_numbers<[1], [0], [0], [1], [0, 0, 1, 1], [], []>} : vector<24x12xbf16>, vector<12x595xbf16>, vector<24x595xf32> -> vector<24x595xf32>
    %206 = arith.addf %201, %205 : vector<24x595xf32>
    %c13_134 = arith.constant 13 : index
    %c0_135 = arith.constant 0 : index
    %c0_136 = arith.constant 0 : index
    %207 = vector.load %arg4[%c13_134, %c0_135, %c0_136] : memref<25x24x12xbf16, #tpu.memory_space<vmem>>, vector<1x24x12xbf16>
    %208 = vector.shape_cast %207 : vector<1x24x12xbf16> to vector<24x12xbf16>
    %209 = vector.extract_strided_slice %140 {offsets = [0, 134], sizes = [12, 595], strides = [1, 1]} : vector<12x859xbf16> to vector<12x595xbf16>
    %cst_137 = arith.constant dense<0.000000e+00> : vector<24x595xf32>
    %210 = tpu.matmul %208, %209, %cst_137 {dimension_numbers = #tpu.dot_dimension_numbers<[1], [0], [0], [1], [0, 0, 1, 1], [], []>} : vector<24x12xbf16>, vector<12x595xbf16>, vector<24x595xf32> -> vector<24x595xf32>
    %211 = arith.addf %206, %210 : vector<24x595xf32>
    %c14_138 = arith.constant 14 : index
    %c0_139 = arith.constant 0 : index
    %c0_140 = arith.constant 0 : index
    %212 = vector.load %arg4[%c14_138, %c0_139, %c0_140] : memref<25x24x12xbf16, #tpu.memory_space<vmem>>, vector<1x24x12xbf16>
    %213 = vector.shape_cast %212 : vector<1x24x12xbf16> to vector<24x12xbf16>
    %214 = vector.extract_strided_slice %140 {offsets = [0, 136], sizes = [12, 595], strides = [1, 1]} : vector<12x859xbf16> to vector<12x595xbf16>
    %cst_141 = arith.constant dense<0.000000e+00> : vector<24x595xf32>
    %215 = tpu.matmul %213, %214, %cst_141 {dimension_numbers = #tpu.dot_dimension_numbers<[1], [0], [0], [1], [0, 0, 1, 1], [], []>} : vector<24x12xbf16>, vector<12x595xbf16>, vector<24x595xf32> -> vector<24x595xf32>
    %216 = arith.addf %211, %215 : vector<24x595xf32>
    %c15_142 = arith.constant 15 : index
    %c0_143 = arith.constant 0 : index
    %c0_144 = arith.constant 0 : index
    %217 = vector.load %arg4[%c15_142, %c0_143, %c0_144] : memref<25x24x12xbf16, #tpu.memory_space<vmem>>, vector<1x24x12xbf16>
    %218 = vector.shape_cast %217 : vector<1x24x12xbf16> to vector<24x12xbf16>
    %219 = vector.extract_strided_slice %140 {offsets = [0, 192], sizes = [12, 595], strides = [1, 1]} : vector<12x859xbf16> to vector<12x595xbf16>
    %cst_145 = arith.constant dense<0.000000e+00> : vector<24x595xf32>
    %220 = tpu.matmul %218, %219, %cst_145 {dimension_numbers = #tpu.dot_dimension_numbers<[1], [0], [0], [1], [0, 0, 1, 1], [], []>} : vector<24x12xbf16>, vector<12x595xbf16>, vector<24x595xf32> -> vector<24x595xf32>
    %221 = arith.addf %216, %220 : vector<24x595xf32>
    %c16_146 = arith.constant 16 : index
    %c0_147 = arith.constant 0 : index
    %c0_148 = arith.constant 0 : index
    %222 = vector.load %arg4[%c16_146, %c0_147, %c0_148] : memref<25x24x12xbf16, #tpu.memory_space<vmem>>, vector<1x24x12xbf16>
    %223 = vector.shape_cast %222 : vector<1x24x12xbf16> to vector<24x12xbf16>
    %224 = vector.extract_strided_slice %140 {offsets = [0, 194], sizes = [12, 595], strides = [1, 1]} : vector<12x859xbf16> to vector<12x595xbf16>
    %cst_149 = arith.constant dense<0.000000e+00> : vector<24x595xf32>
    %225 = tpu.matmul %223, %224, %cst_149 {dimension_numbers = #tpu.dot_dimension_numbers<[1], [0], [0], [1], [0, 0, 1, 1], [], []>} : vector<24x12xbf16>, vector<12x595xbf16>, vector<24x595xf32> -> vector<24x595xf32>
    %226 = arith.addf %221, %225 : vector<24x595xf32>
    %c17_150 = arith.constant 17 : index
    %c0_151 = arith.constant 0 : index
    %c0_152 = arith.constant 0 : index
    %227 = vector.load %arg4[%c17_150, %c0_151, %c0_152] : memref<25x24x12xbf16, #tpu.memory_space<vmem>>, vector<1x24x12xbf16>
    %228 = vector.shape_cast %227 : vector<1x24x12xbf16> to vector<24x12xbf16>
    %229 = vector.extract_strided_slice %140 {offsets = [0, 196], sizes = [12, 595], strides = [1, 1]} : vector<12x859xbf16> to vector<12x595xbf16>
    %cst_153 = arith.constant dense<0.000000e+00> : vector<24x595xf32>
    %230 = tpu.matmul %228, %229, %cst_153 {dimension_numbers = #tpu.dot_dimension_numbers<[1], [0], [0], [1], [0, 0, 1, 1], [], []>} : vector<24x12xbf16>, vector<12x595xbf16>, vector<24x595xf32> -> vector<24x595xf32>
    %231 = arith.addf %226, %230 : vector<24x595xf32>
    %c18_154 = arith.constant 18 : index
    %c0_155 = arith.constant 0 : index
    %c0_156 = arith.constant 0 : index
    %232 = vector.load %arg4[%c18_154, %c0_155, %c0_156] : memref<25x24x12xbf16, #tpu.memory_space<vmem>>, vector<1x24x12xbf16>
    %233 = vector.shape_cast %232 : vector<1x24x12xbf16> to vector<24x12xbf16>
    %234 = vector.extract_strided_slice %140 {offsets = [0, 198], sizes = [12, 595], strides = [1, 1]} : vector<12x859xbf16> to vector<12x595xbf16>
    %cst_157 = arith.constant dense<0.000000e+00> : vector<24x595xf32>
    %235 = tpu.matmul %233, %234, %cst_157 {dimension_numbers = #tpu.dot_dimension_numbers<[1], [0], [0], [1], [0, 0, 1, 1], [], []>} : vector<24x12xbf16>, vector<12x595xbf16>, vector<24x595xf32> -> vector<24x595xf32>
    %236 = arith.addf %231, %235 : vector<24x595xf32>
    %c19_158 = arith.constant 19 : index
    %c0_159 = arith.constant 0 : index
    %c0_160 = arith.constant 0 : index
    %237 = vector.load %arg4[%c19_158, %c0_159, %c0_160] : memref<25x24x12xbf16, #tpu.memory_space<vmem>>, vector<1x24x12xbf16>
    %238 = vector.shape_cast %237 : vector<1x24x12xbf16> to vector<24x12xbf16>
    %239 = vector.extract_strided_slice %140 {offsets = [0, 200], sizes = [12, 595], strides = [1, 1]} : vector<12x859xbf16> to vector<12x595xbf16>
    %cst_161 = arith.constant dense<0.000000e+00> : vector<24x595xf32>
    %240 = tpu.matmul %238, %239, %cst_161 {dimension_numbers = #tpu.dot_dimension_numbers<[1], [0], [0], [1], [0, 0, 1, 1], [], []>} : vector<24x12xbf16>, vector<12x595xbf16>, vector<24x595xf32> -> vector<24x595xf32>
    %241 = arith.addf %236, %240 : vector<24x595xf32>
    %c20_162 = arith.constant 20 : index
    %c0_163 = arith.constant 0 : index
    %c0_164 = arith.constant 0 : index
    %242 = vector.load %arg4[%c20_162, %c0_163, %c0_164] : memref<25x24x12xbf16, #tpu.memory_space<vmem>>, vector<1x24x12xbf16>
    %243 = vector.shape_cast %242 : vector<1x24x12xbf16> to vector<24x12xbf16>
    %244 = vector.extract_strided_slice %140 {offsets = [0, 256], sizes = [12, 595], strides = [1, 1]} : vector<12x859xbf16> to vector<12x595xbf16>
    %cst_165 = arith.constant dense<0.000000e+00> : vector<24x595xf32>
    %245 = tpu.matmul %243, %244, %cst_165 {dimension_numbers = #tpu.dot_dimension_numbers<[1], [0], [0], [1], [0, 0, 1, 1], [], []>} : vector<24x12xbf16>, vector<12x595xbf16>, vector<24x595xf32> -> vector<24x595xf32>
    %246 = arith.addf %241, %245 : vector<24x595xf32>
    %c21_166 = arith.constant 21 : index
    %c0_167 = arith.constant 0 : index
    %c0_168 = arith.constant 0 : index
    %247 = vector.load %arg4[%c21_166, %c0_167, %c0_168] : memref<25x24x12xbf16, #tpu.memory_space<vmem>>, vector<1x24x12xbf16>
    %248 = vector.shape_cast %247 : vector<1x24x12xbf16> to vector<24x12xbf16>
    %249 = vector.extract_strided_slice %140 {offsets = [0, 258], sizes = [12, 595], strides = [1, 1]} : vector<12x859xbf16> to vector<12x595xbf16>
    %cst_169 = arith.constant dense<0.000000e+00> : vector<24x595xf32>
    %250 = tpu.matmul %248, %249, %cst_169 {dimension_numbers = #tpu.dot_dimension_numbers<[1], [0], [0], [1], [0, 0, 1, 1], [], []>} : vector<24x12xbf16>, vector<12x595xbf16>, vector<24x595xf32> -> vector<24x595xf32>
    %251 = arith.addf %246, %250 : vector<24x595xf32>
    %c22_170 = arith.constant 22 : index
    %c0_171 = arith.constant 0 : index
    %c0_172 = arith.constant 0 : index
    %252 = vector.load %arg4[%c22_170, %c0_171, %c0_172] : memref<25x24x12xbf16, #tpu.memory_space<vmem>>, vector<1x24x12xbf16>
    %253 = vector.shape_cast %252 : vector<1x24x12xbf16> to vector<24x12xbf16>
    %254 = vector.extract_strided_slice %140 {offsets = [0, 260], sizes = [12, 595], strides = [1, 1]} : vector<12x859xbf16> to vector<12x595xbf16>
    %cst_173 = arith.constant dense<0.000000e+00> : vector<24x595xf32>
    %255 = tpu.matmul %253, %254, %cst_173 {dimension_numbers = #tpu.dot_dimension_numbers<[1], [0], [0], [1], [0, 0, 1, 1], [], []>} : vector<24x12xbf16>, vector<12x595xbf16>, vector<24x595xf32> -> vector<24x595xf32>
    %256 = arith.addf %251, %255 : vector<24x595xf32>
    %c23_174 = arith.constant 23 : index
    %c0_175 = arith.constant 0 : index
    %c0_176 = arith.constant 0 : index
    %257 = vector.load %arg4[%c23_174, %c0_175, %c0_176] : memref<25x24x12xbf16, #tpu.memory_space<vmem>>, vector<1x24x12xbf16>
    %258 = vector.shape_cast %257 : vector<1x24x12xbf16> to vector<24x12xbf16>
    %259 = vector.extract_strided_slice %140 {offsets = [0, 262], sizes = [12, 595], strides = [1, 1]} : vector<12x859xbf16> to vector<12x595xbf16>
    %cst_177 = arith.constant dense<0.000000e+00> : vector<24x595xf32>
    %260 = tpu.matmul %258, %259, %cst_177 {dimension_numbers = #tpu.dot_dimension_numbers<[1], [0], [0], [1], [0, 0, 1, 1], [], []>} : vector<24x12xbf16>, vector<12x595xbf16>, vector<24x595xf32> -> vector<24x595xf32>
    %261 = arith.addf %256, %260 : vector<24x595xf32>
    %c24_178 = arith.constant 24 : index
    %c0_179 = arith.constant 0 : index
    %c0_180 = arith.constant 0 : index
    %262 = vector.load %arg4[%c24_178, %c0_179, %c0_180] : memref<25x24x12xbf16, #tpu.memory_space<vmem>>, vector<1x24x12xbf16>
    %263 = vector.shape_cast %262 : vector<1x24x12xbf16> to vector<24x12xbf16>
    %264 = vector.extract_strided_slice %140 {offsets = [0, 264], sizes = [12, 595], strides = [1, 1]} : vector<12x859xbf16> to vector<12x595xbf16>
    %cst_181 = arith.constant dense<0.000000e+00> : vector<24x595xf32>
    %265 = tpu.matmul %263, %264, %cst_181 {dimension_numbers = #tpu.dot_dimension_numbers<[1], [0], [0], [1], [0, 0, 1, 1], [], []>} : vector<24x12xbf16>, vector<12x595xbf16>, vector<24x595xf32> -> vector<24x595xf32>
    %266 = arith.addf %261, %265 : vector<24x595xf32>
    %c0_182 = arith.constant 0 : index
    %c0_183 = arith.constant 0 : index
    %267 = vector.load %arg5[%c0_182, %c0_183] : memref<24x1xf32, #tpu.memory_space<vmem>>, vector<24x1xf32>
    %268 = vector.broadcast %267 : vector<24x1xf32> to vector<24x595xf32>
    %269 = arith.addf %266, %268 : vector<24x595xf32>
    %cst_184 = arith.constant 0.000000e+00 : f32
    %270 = vector.broadcast %cst_184 : f32 to vector<24x595xf32>
    %271 = arith.maximumf %269, %270 : vector<24x595xf32>
    %272 = vector.extract_strided_slice %271 {offsets = [0, 0], sizes = [24, 593], strides = [1, 1]} : vector<24x595xf32> to vector<24x593xf32>
    %273 = vector.extract_strided_slice %271 {offsets = [0, 2], sizes = [24, 593], strides = [1, 1]} : vector<24x595xf32> to vector<24x593xf32>
    %274 = arith.maximumf %272, %273 : vector<24x593xf32>
    %275 = vector.extract_strided_slice %274 {offsets = [0, 0], sizes = [24, 529], strides = [1, 1]} : vector<24x593xf32> to vector<24x529xf32>
    %276 = vector.extract_strided_slice %274 {offsets = [0, 64], sizes = [24, 529], strides = [1, 1]} : vector<24x593xf32> to vector<24x529xf32>
    %277 = arith.maximumf %275, %276 : vector<24x529xf32>
    %278 = arith.truncf %277 : vector<24x529xf32> to vector<24x529xbf16>
    %c0_185 = arith.constant 0 : index
    %c0_186 = arith.constant 0 : index
    %279 = vector.load %arg6[%c0_185, %c0_186] : memref<529x32xbf16, #tpu.memory_space<vmem>>, vector<529x32xbf16>
    %cst_187 = arith.constant dense<0.000000e+00> : vector<24x32xf32>
    %280 = tpu.matmul %278, %279, %cst_187 {dimension_numbers = #tpu.dot_dimension_numbers<[1], [0], [0], [1], [0, 0, 1, 1], [], []>} : vector<24x529xbf16>, vector<529x32xbf16>, vector<24x32xf32> -> vector<24x32xf32>
    %281 = vector.extract_strided_slice %280 {offsets = [0, 0], sizes = [1, 32], strides = [1, 1]} : vector<24x32xf32> to vector<1x32xf32>
    %c0_188 = arith.constant 0 : index
    %c0_189 = arith.constant 0 : index
    %282 = vector.load %arg14[%c0_188, %c0_189] : memref<1x768xf32, #tpu.memory_space<vmem>>, vector<1x32xf32>
    tpu.vector_store %arg14[%c0_188, %c0_189], %281 {strides = array<i32>} : memref<1x768xf32, #tpu.memory_space<vmem>>, vector<1x32xf32>,
    %283 = vector.extract_strided_slice %280 {offsets = [1, 0], sizes = [1, 32], strides = [1, 1]} : vector<24x32xf32> to vector<1x32xf32>
    %c0_190 = arith.constant 0 : index
    %c32 = arith.constant 32 : index
    %284 = vector.load %arg14[%c0_190, %c32] : memref<1x768xf32, #tpu.memory_space<vmem>>, vector<1x32xf32>
    tpu.vector_store %arg14[%c0_190, %c32], %283 {strides = array<i32>} : memref<1x768xf32, #tpu.memory_space<vmem>>, vector<1x32xf32>,
    %285 = vector.extract_strided_slice %280 {offsets = [2, 0], sizes = [1, 32], strides = [1, 1]} : vector<24x32xf32> to vector<1x32xf32>
    %c0_191 = arith.constant 0 : index
    %c64 = arith.constant 64 : index
    %286 = vector.load %arg14[%c0_191, %c64] : memref<1x768xf32, #tpu.memory_space<vmem>>, vector<1x32xf32>
    tpu.vector_store %arg14[%c0_191, %c64], %285 {strides = array<i32>} : memref<1x768xf32, #tpu.memory_space<vmem>>, vector<1x32xf32>,
    %287 = vector.extract_strided_slice %280 {offsets = [3, 0], sizes = [1, 32], strides = [1, 1]} : vector<24x32xf32> to vector<1x32xf32>
    %c0_192 = arith.constant 0 : index
    %c96 = arith.constant 96 : index
    %288 = vector.load %arg14[%c0_192, %c96] : memref<1x768xf32, #tpu.memory_space<vmem>>, vector<1x32xf32>
    tpu.vector_store %arg14[%c0_192, %c96], %287 {strides = array<i32>} : memref<1x768xf32, #tpu.memory_space<vmem>>, vector<1x32xf32>,
    %289 = vector.extract_strided_slice %280 {offsets = [4, 0], sizes = [1, 32], strides = [1, 1]} : vector<24x32xf32> to vector<1x32xf32>
    %c0_193 = arith.constant 0 : index
    %c128 = arith.constant 128 : index
    %290 = vector.load %arg14[%c0_193, %c128] : memref<1x768xf32, #tpu.memory_space<vmem>>, vector<1x32xf32>
    tpu.vector_store %arg14[%c0_193, %c128], %289 {strides = array<i32>} : memref<1x768xf32, #tpu.memory_space<vmem>>, vector<1x32xf32>,
    %291 = vector.extract_strided_slice %280 {offsets = [5, 0], sizes = [1, 32], strides = [1, 1]} : vector<24x32xf32> to vector<1x32xf32>
    %c0_194 = arith.constant 0 : index
    %c160 = arith.constant 160 : index
    %292 = vector.load %arg14[%c0_194, %c160] : memref<1x768xf32, #tpu.memory_space<vmem>>, vector<1x32xf32>
    tpu.vector_store %arg14[%c0_194, %c160], %291 {strides = array<i32>} : memref<1x768xf32, #tpu.memory_space<vmem>>, vector<1x32xf32>,
    %293 = vector.extract_strided_slice %280 {offsets = [6, 0], sizes = [1, 32], strides = [1, 1]} : vector<24x32xf32> to vector<1x32xf32>
    %c0_195 = arith.constant 0 : index
    %c192 = arith.constant 192 : index
    %294 = vector.load %arg14[%c0_195, %c192] : memref<1x768xf32, #tpu.memory_space<vmem>>, vector<1x32xf32>
    tpu.vector_store %arg14[%c0_195, %c192], %293 {strides = array<i32>} : memref<1x768xf32, #tpu.memory_space<vmem>>, vector<1x32xf32>,
    %295 = vector.extract_strided_slice %280 {offsets = [7, 0], sizes = [1, 32], strides = [1, 1]} : vector<24x32xf32> to vector<1x32xf32>
    %c0_196 = arith.constant 0 : index
    %c224 = arith.constant 224 : index
    %296 = vector.load %arg14[%c0_196, %c224] : memref<1x768xf32, #tpu.memory_space<vmem>>, vector<1x32xf32>
    tpu.vector_store %arg14[%c0_196, %c224], %295 {strides = array<i32>} : memref<1x768xf32, #tpu.memory_space<vmem>>, vector<1x32xf32>,
    %297 = vector.extract_strided_slice %280 {offsets = [8, 0], sizes = [1, 32], strides = [1, 1]} : vector<24x32xf32> to vector<1x32xf32>
    %c0_197 = arith.constant 0 : index
    %c256 = arith.constant 256 : index
    %298 = vector.load %arg14[%c0_197, %c256] : memref<1x768xf32, #tpu.memory_space<vmem>>, vector<1x32xf32>
    tpu.vector_store %arg14[%c0_197, %c256], %297 {strides = array<i32>} : memref<1x768xf32, #tpu.memory_space<vmem>>, vector<1x32xf32>,
    %299 = vector.extract_strided_slice %280 {offsets = [9, 0], sizes = [1, 32], strides = [1, 1]} : vector<24x32xf32> to vector<1x32xf32>
    %c0_198 = arith.constant 0 : index
    %c288 = arith.constant 288 : index
    %300 = vector.load %arg14[%c0_198, %c288] : memref<1x768xf32, #tpu.memory_space<vmem>>, vector<1x32xf32>
    tpu.vector_store %arg14[%c0_198, %c288], %299 {strides = array<i32>} : memref<1x768xf32, #tpu.memory_space<vmem>>, vector<1x32xf32>,
    %301 = vector.extract_strided_slice %280 {offsets = [10, 0], sizes = [1, 32], strides = [1, 1]} : vector<24x32xf32> to vector<1x32xf32>
    %c0_199 = arith.constant 0 : index
    %c320 = arith.constant 320 : index
    %302 = vector.load %arg14[%c0_199, %c320] : memref<1x768xf32, #tpu.memory_space<vmem>>, vector<1x32xf32>
    tpu.vector_store %arg14[%c0_199, %c320], %301 {strides = array<i32>} : memref<1x768xf32, #tpu.memory_space<vmem>>, vector<1x32xf32>,
    %303 = vector.extract_strided_slice %280 {offsets = [11, 0], sizes = [1, 32], strides = [1, 1]} : vector<24x32xf32> to vector<1x32xf32>
    %c0_200 = arith.constant 0 : index
    %c352 = arith.constant 352 : index
    %304 = vector.load %arg14[%c0_200, %c352] : memref<1x768xf32, #tpu.memory_space<vmem>>, vector<1x32xf32>
    tpu.vector_store %arg14[%c0_200, %c352], %303 {strides = array<i32>} : memref<1x768xf32, #tpu.memory_space<vmem>>, vector<1x32xf32>,
    %305 = vector.extract_strided_slice %280 {offsets = [12, 0], sizes = [1, 32], strides = [1, 1]} : vector<24x32xf32> to vector<1x32xf32>
    %c0_201 = arith.constant 0 : index
    %c384 = arith.constant 384 : index
    %306 = vector.load %arg14[%c0_201, %c384] : memref<1x768xf32, #tpu.memory_space<vmem>>, vector<1x32xf32>
    tpu.vector_store %arg14[%c0_201, %c384], %305 {strides = array<i32>} : memref<1x768xf32, #tpu.memory_space<vmem>>, vector<1x32xf32>,
    %307 = vector.extract_strided_slice %280 {offsets = [13, 0], sizes = [1, 32], strides = [1, 1]} : vector<24x32xf32> to vector<1x32xf32>
    %c0_202 = arith.constant 0 : index
    %c416 = arith.constant 416 : index
    %308 = vector.load %arg14[%c0_202, %c416] : memref<1x768xf32, #tpu.memory_space<vmem>>, vector<1x32xf32>
    tpu.vector_store %arg14[%c0_202, %c416], %307 {strides = array<i32>} : memref<1x768xf32, #tpu.memory_space<vmem>>, vector<1x32xf32>,
    %309 = vector.extract_strided_slice %280 {offsets = [14, 0], sizes = [1, 32], strides = [1, 1]} : vector<24x32xf32> to vector<1x32xf32>
    %c0_203 = arith.constant 0 : index
    %c448 = arith.constant 448 : index
    %310 = vector.load %arg14[%c0_203, %c448] : memref<1x768xf32, #tpu.memory_space<vmem>>, vector<1x32xf32>
    tpu.vector_store %arg14[%c0_203, %c448], %309 {strides = array<i32>} : memref<1x768xf32, #tpu.memory_space<vmem>>, vector<1x32xf32>,
    %311 = vector.extract_strided_slice %280 {offsets = [15, 0], sizes = [1, 32], strides = [1, 1]} : vector<24x32xf32> to vector<1x32xf32>
    %c0_204 = arith.constant 0 : index
    %c480 = arith.constant 480 : index
    %312 = vector.load %arg14[%c0_204, %c480] : memref<1x768xf32, #tpu.memory_space<vmem>>, vector<1x32xf32>
    tpu.vector_store %arg14[%c0_204, %c480], %311 {strides = array<i32>} : memref<1x768xf32, #tpu.memory_space<vmem>>, vector<1x32xf32>,
    %313 = vector.extract_strided_slice %280 {offsets = [16, 0], sizes = [1, 32], strides = [1, 1]} : vector<24x32xf32> to vector<1x32xf32>
    %c0_205 = arith.constant 0 : index
    %c512 = arith.constant 512 : index
    %314 = vector.load %arg14[%c0_205, %c512] : memref<1x768xf32, #tpu.memory_space<vmem>>, vector<1x32xf32>
    tpu.vector_store %arg14[%c0_205, %c512], %313 {strides = array<i32>} : memref<1x768xf32, #tpu.memory_space<vmem>>, vector<1x32xf32>,
    %315 = vector.extract_strided_slice %280 {offsets = [17, 0], sizes = [1, 32], strides = [1, 1]} : vector<24x32xf32> to vector<1x32xf32>
    %c0_206 = arith.constant 0 : index
    %c544 = arith.constant 544 : index
    %316 = vector.load %arg14[%c0_206, %c544] : memref<1x768xf32, #tpu.memory_space<vmem>>, vector<1x32xf32>
    tpu.vector_store %arg14[%c0_206, %c544], %315 {strides = array<i32>} : memref<1x768xf32, #tpu.memory_space<vmem>>, vector<1x32xf32>,
    %317 = vector.extract_strided_slice %280 {offsets = [18, 0], sizes = [1, 32], strides = [1, 1]} : vector<24x32xf32> to vector<1x32xf32>
    %c0_207 = arith.constant 0 : index
    %c576 = arith.constant 576 : index
    %318 = vector.load %arg14[%c0_207, %c576] : memref<1x768xf32, #tpu.memory_space<vmem>>, vector<1x32xf32>
    tpu.vector_store %arg14[%c0_207, %c576], %317 {strides = array<i32>} : memref<1x768xf32, #tpu.memory_space<vmem>>, vector<1x32xf32>,
    %319 = vector.extract_strided_slice %280 {offsets = [19, 0], sizes = [1, 32], strides = [1, 1]} : vector<24x32xf32> to vector<1x32xf32>
    %c0_208 = arith.constant 0 : index
    %c608 = arith.constant 608 : index
    %320 = vector.load %arg14[%c0_208, %c608] : memref<1x768xf32, #tpu.memory_space<vmem>>, vector<1x32xf32>
    tpu.vector_store %arg14[%c0_208, %c608], %319 {strides = array<i32>} : memref<1x768xf32, #tpu.memory_space<vmem>>, vector<1x32xf32>,
    %321 = vector.extract_strided_slice %280 {offsets = [20, 0], sizes = [1, 32], strides = [1, 1]} : vector<24x32xf32> to vector<1x32xf32>
    %c0_209 = arith.constant 0 : index
    %c640 = arith.constant 640 : index
    %322 = vector.load %arg14[%c0_209, %c640] : memref<1x768xf32, #tpu.memory_space<vmem>>, vector<1x32xf32>
    tpu.vector_store %arg14[%c0_209, %c640], %321 {strides = array<i32>} : memref<1x768xf32, #tpu.memory_space<vmem>>, vector<1x32xf32>,
    %323 = vector.extract_strided_slice %280 {offsets = [21, 0], sizes = [1, 32], strides = [1, 1]} : vector<24x32xf32> to vector<1x32xf32>
    %c0_210 = arith.constant 0 : index
    %c672 = arith.constant 672 : index
    %324 = vector.load %arg14[%c0_210, %c672] : memref<1x768xf32, #tpu.memory_space<vmem>>, vector<1x32xf32>
    tpu.vector_store %arg14[%c0_210, %c672], %323 {strides = array<i32>} : memref<1x768xf32, #tpu.memory_space<vmem>>, vector<1x32xf32>,
    %325 = vector.extract_strided_slice %280 {offsets = [22, 0], sizes = [1, 32], strides = [1, 1]} : vector<24x32xf32> to vector<1x32xf32>
    %c0_211 = arith.constant 0 : index
    %c704 = arith.constant 704 : index
    %326 = vector.load %arg14[%c0_211, %c704] : memref<1x768xf32, #tpu.memory_space<vmem>>, vector<1x32xf32>
    tpu.vector_store %arg14[%c0_211, %c704], %325 {strides = array<i32>} : memref<1x768xf32, #tpu.memory_space<vmem>>, vector<1x32xf32>,
    %327 = vector.extract_strided_slice %280 {offsets = [23, 0], sizes = [1, 32], strides = [1, 1]} : vector<24x32xf32> to vector<1x32xf32>
    %c0_212 = arith.constant 0 : index
    %c736 = arith.constant 736 : index
    %328 = vector.load %arg14[%c0_212, %c736] : memref<1x768xf32, #tpu.memory_space<vmem>>, vector<1x32xf32>
    tpu.vector_store %arg14[%c0_212, %c736], %327 {strides = array<i32>} : memref<1x768xf32, #tpu.memory_space<vmem>>, vector<1x32xf32>,
    %c0_213 = arith.constant 0 : index
    %c0_214 = arith.constant 0 : index
    %329 = vector.load %arg14[%c0_213, %c0_214] : memref<1x768xf32, #tpu.memory_space<vmem>>, vector<1x768xf32>
    %330 = arith.truncf %329 : vector<1x768xf32> to vector<1x768xbf16>
    %c0_215 = arith.constant 0 : index
    %c0_216 = arith.constant 0 : index
    %331 = vector.load %arg7[%c0_215, %c0_216] : memref<768x128xbf16, #tpu.memory_space<vmem>>, vector<768x128xbf16>
    %cst_217 = arith.constant dense<0.000000e+00> : vector<1x128xf32>
    %332 = tpu.matmul %330, %331, %cst_217 {dimension_numbers = #tpu.dot_dimension_numbers<[1], [0], [0], [1], [0, 0, 1, 1], [], []>} : vector<1x768xbf16>, vector<768x128xbf16>, vector<1x128xf32> -> vector<1x128xf32>
    %c0_218 = arith.constant 0 : index
    %c0_219 = arith.constant 0 : index
    %333 = vector.load %arg8[%c0_218, %c0_219] : memref<1x128xf32, #tpu.memory_space<vmem>>, vector<1x128xf32>
    %334 = arith.addf %332, %333 : vector<1x128xf32>
    %cst_220 = arith.constant 0.000000e+00 : f32
    %335 = vector.broadcast %cst_220 : f32 to vector<1x128xf32>
    %336 = arith.maximumf %334, %335 : vector<1x128xf32>
    %337 = arith.truncf %336 : vector<1x128xf32> to vector<1x128xbf16>
    %c0_221 = arith.constant 0 : index
    %c0_222 = arith.constant 0 : index
    %338 = vector.load %arg9[%c0_221, %c0_222] : memref<128x128xbf16, #tpu.memory_space<vmem>>, vector<128x128xbf16>
    %cst_223 = arith.constant dense<0.000000e+00> : vector<1x128xf32>
    %339 = tpu.matmul %337, %338, %cst_223 {dimension_numbers = #tpu.dot_dimension_numbers<[1], [0], [0], [1], [0, 0, 1, 1], [], []>} : vector<1x128xbf16>, vector<128x128xbf16>, vector<1x128xf32> -> vector<1x128xf32>
    %c0_224 = arith.constant 0 : index
    %c0_225 = arith.constant 0 : index
    %340 = vector.load %arg10[%c0_224, %c0_225] : memref<1x128xf32, #tpu.memory_space<vmem>>, vector<1x128xf32>
    %341 = arith.addf %339, %340 : vector<1x128xf32>
    %cst_226 = arith.constant 0.000000e+00 : f32
    %342 = vector.broadcast %cst_226 : f32 to vector<1x128xf32>
    %343 = arith.maximumf %341, %342 : vector<1x128xf32>
    %344 = arith.truncf %343 : vector<1x128xf32> to vector<1x128xbf16>
    %c0_227 = arith.constant 0 : index
    %c0_228 = arith.constant 0 : index
    %345 = vector.load %arg11[%c0_227, %c0_228] : memref<128x128xbf16, #tpu.memory_space<vmem>>, vector<128x128xbf16>
    %cst_229 = arith.constant dense<0.000000e+00> : vector<1x128xf32>
    %346 = tpu.matmul %344, %345, %cst_229 {dimension_numbers = #tpu.dot_dimension_numbers<[1], [0], [0], [1], [0, 0, 1, 1], [], []>} : vector<1x128xbf16>, vector<128x128xbf16>, vector<1x128xf32> -> vector<1x128xf32>
    %c0_230 = arith.constant 0 : index
    %c0_231 = arith.constant 0 : index
    %347 = vector.load %arg12[%c0_230, %c0_231] : memref<1x128xf32, #tpu.memory_space<vmem>>, vector<1x128xf32>
    %348 = arith.addf %346, %347 : vector<1x128xf32>
    %c0_232 = arith.constant 0 : index
    %c0_233 = arith.constant 0 : index
    %c0_234 = arith.constant 0 : index
    %349 = vector.load %arg13[%c0_232, %c0_233, %c0_234] : memref<1x1x128xf32, #tpu.memory_space<vmem>>, vector<1x1x128xf32>
    %350 = vector.shape_cast %349 : vector<1x1x128xf32> to vector<1x128xf32>
    %351 = vector.shape_cast %348 : vector<1x128xf32> to vector<1x1x128xf32>
    tpu.vector_store %arg13[%c0_232, %c0_233, %c0_234], %351 {strides = array<i32>} : memref<1x1x128xf32, #tpu.memory_space<vmem>>, vector<1x1x128xf32>,
    return
  }
  func.func @transform_0(%arg0: i32) -> (i32, i32, i32) {
    %c0_i32 = arith.constant 0 : i32
    %c0_i32_0 = arith.constant 0 : i32
    %c0_i32_1 = arith.constant 0 : i32
    return %arg0, %c0_i32, %c0_i32_0 : i32, i32, i32
  }
  func.func @transform_1(%arg0: i32) -> (i32, i32, i32) {
    %c0_i32 = arith.constant 0 : i32
    %c0_i32_0 = arith.constant 0 : i32
    %c0_i32_1 = arith.constant 0 : i32
    %c0_i32_2 = arith.constant 0 : i32
    return %c0_i32, %c0_i32_0, %c0_i32_1 : i32, i32, i32
  }
  func.func @transform_2(%arg0: i32) -> (i32, i32) {
    %c0_i32 = arith.constant 0 : i32
    %c0_i32_0 = arith.constant 0 : i32
    %c0_i32_1 = arith.constant 0 : i32
    return %c0_i32, %c0_i32_0 : i32, i32
  }
  func.func @transform_3(%arg0: i32) -> (i32, i32, i32) {
    %c0_i32 = arith.constant 0 : i32
    %c0_i32_0 = arith.constant 0 : i32
    %c0_i32_1 = arith.constant 0 : i32
    %c0_i32_2 = arith.constant 0 : i32
    return %c0_i32, %c0_i32_0, %c0_i32_1 : i32, i32, i32
  }
  func.func @transform_4(%arg0: i32) -> (i32, i32) {
    %c0_i32 = arith.constant 0 : i32
    %c0_i32_0 = arith.constant 0 : i32
    %c0_i32_1 = arith.constant 0 : i32
    return %c0_i32, %c0_i32_0 : i32, i32
  }
  func.func @transform_5(%arg0: i32) -> (i32, i32) {
    %c0_i32 = arith.constant 0 : i32
    %c0_i32_0 = arith.constant 0 : i32
    %c0_i32_1 = arith.constant 0 : i32
    return %c0_i32, %c0_i32_0 : i32, i32
  }
  func.func @transform_6(%arg0: i32) -> (i32, i32) {
    %c0_i32 = arith.constant 0 : i32
    %c0_i32_0 = arith.constant 0 : i32
    %c0_i32_1 = arith.constant 0 : i32
    return %c0_i32, %c0_i32_0 : i32, i32
  }
  func.func @transform_7(%arg0: i32) -> (i32, i32) {
    %c0_i32 = arith.constant 0 : i32
    %c0_i32_0 = arith.constant 0 : i32
    %c0_i32_1 = arith.constant 0 : i32
    return %c0_i32, %c0_i32_0 : i32, i32
  }
  func.func @transform_8(%arg0: i32) -> (i32, i32) {
    %c0_i32 = arith.constant 0 : i32
    %c0_i32_0 = arith.constant 0 : i32
    %c0_i32_1 = arith.constant 0 : i32
    return %c0_i32, %c0_i32_0 : i32, i32
  }
  func.func @transform_9(%arg0: i32) -> (i32, i32) {
    %c0_i32 = arith.constant 0 : i32
    %c0_i32_0 = arith.constant 0 : i32
    %c0_i32_1 = arith.constant 0 : i32
    return %c0_i32, %c0_i32_0 : i32, i32
  }
  func.func @transform_10(%arg0: i32) -> (i32, i32) {
    %c0_i32 = arith.constant 0 : i32
    %c0_i32_0 = arith.constant 0 : i32
    %c0_i32_1 = arith.constant 0 : i32
    return %c0_i32, %c0_i32_0 : i32, i32
  }
  func.func @transform_11(%arg0: i32) -> (i32, i32) {
    %c0_i32 = arith.constant 0 : i32
    %c0_i32_0 = arith.constant 0 : i32
    %c0_i32_1 = arith.constant 0 : i32
    return %c0_i32, %c0_i32_0 : i32, i32
  }
  func.func @transform_12(%arg0: i32) -> (i32, i32, i32) {
    %c0_i32 = arith.constant 0 : i32
    %c0_i32_0 = arith.constant 0 : i32
    %c0_i32_1 = arith.constant 0 : i32
    return %arg0, %c0_i32, %c0_i32_0 : i32, i32, i32
  }
}

</mosaic_0001>

<llo_original>
// kernel: neural_network_forward.1
$region0: #{neural_network_forward.1}
  #allocation0 [shape = 'u32[]', space=smem, size = 0x4, offset = 0x4, fixed_abs, tag = 'smem constant byte address 0x4 - core index']
  #allocation1 [shape = 'u32[72,128]{1,0:T(1,128)}', space=vmem, size = 0x9000, scoped, tag = 'internal scratch']
  #allocation2 [shape = 'f32[1,768]{1,0:T(1,128)}', space=vmem, size = 0xc00, scoped, tag = 'scratch operand']
  %s0 = inlined_call_operand.vmem [shape: f32[2,3,1024], index: 0, kind: input, shape index: {}]
  %s1 = inlined_call_operand.vmem [shape: bf16[25,12,3], index: 1, kind: input, shape index: {}]
  %s2 = inlined_call_operand.vmem [shape: f32[12,1], index: 2, kind: input, shape index: {}]
  %s3 = inlined_call_operand.vmem [shape: bf16[25,24,12], index: 3, kind: input, shape index: {}]
  %s4 = inlined_call_operand.vmem [shape: f32[24,1], index: 4, kind: input, shape index: {}]
  %s5 = inlined_call_operand.vmem [shape: bf16[529,32], index: 5, kind: input, shape index: {}]
  %s6 = inlined_call_operand.vmem [shape: bf16[768,128], index: 6, kind: input, shape index: {}]
  %s7 = inlined_call_operand.vmem [shape: f32[1,128], index: 7, kind: input, shape index: {}]
  %s8 = inlined_call_operand.vmem [shape: bf16[128,128], index: 8, kind: input, shape index: {}]
  %s9 = inlined_call_operand.vmem [shape: f32[1,128], index: 9, kind: input, shape index: {}]
  %s10 = inlined_call_operand.vmem [shape: bf16[128,128], index: 10, kind: input, shape index: {}]
  %s11 = inlined_call_operand.vmem [shape: f32[1,128], index: 11, kind: input, shape index: {}]
  %s12 = inlined_call_operand.hbm [shape: f32[2,1,128], index: 12, kind: output, shape index: {}]
  %s13 = sld [smem:[#allocation0]]
  $region81: #{neural_network_forward.1} parent=0
    _
  %s15 = ssub.s32 1, %s13
  %s16 = scalar_select 0, %s15, %s13
  $region1: #{neural_network_forward.1} parent=0
    #allocation3 [shape = 'u8[1024]{0}', space=vmem, size = 0x400, scoped, tag = 'output window, operand 0']
    #allocation4 [shape = 's32[2]{0}', space=sflag, size = 0x8, scoped, tag = 'scoped memory for neural_network_forward.1']
    %17 = vsyncpa [#allocation4], 0
    %s18 = scalar_lea.sflag [#allocation4], 1
    %19 = vsyncpa %s18, 0
    loop: start=0, step=1, limit=4
    $region2: #{neural_network_forward.1} parent=1 // loop_pre_header
      _
    $region3: #{neural_network_forward.1} parent=1 // loop_header
      %s21 = sphi 0, %s25
      %p22 = scmp.ge.s32.totalorder %s21, 4
      %s31 = sphi 0, %s33
      %s34 = sphi 0, %s31
      %s35 = sphi 0, %s34
      %s51 = sphi 0, %s35
      %s55 = sphi 0, %s55
      %s57 = sphi 0, %s55
      %s58 = sphi 0, %s57
      %s72 = sphi 0, %s58
      %s76 = sphi 0, %s76
      %s78 = sphi 0, %s76
      %s79 = sphi 0, %s78
      %s93 = sphi 0, %s79
      %s97 = sphi 0, %s97
      %s99 = sphi 0, %s97
      %s100 = sphi 0, %s99
      %s114 = sphi 0, %s100
      %s118 = sphi 0, %s118
      %s120 = sphi 0, %s118
      %s121 = sphi 0, %s120
      %s135 = sphi 0, %s121
      %s139 = sphi 0, %s139
      %s141 = sphi 0, %s139
      %s142 = sphi 0, %s141
      %s156 = sphi 0, %s142
      %s160 = sphi 0, %s160
      %s162 = sphi 0, %s160
      %s163 = sphi 0, %s162
      %s177 = sphi 0, %s163
      %s181 = sphi 0, %s181
      %s183 = sphi 0, %s181
      %s184 = sphi 0, %s183
      %s198 = sphi 0, %s184
      %s202 = sphi 0, %s202
      %s204 = sphi 0, %s202
      %s205 = sphi 0, %s204
      %s219 = sphi 0, %s205
      %s223 = sphi 0, %s223
      %s225 = sphi 0, %s223
      %s226 = sphi 0, %s225
      %s240 = sphi 0, %s226
      %s244 = sphi 0, %s244
      %s246 = sphi 0, %s244
      %s247 = sphi 0, %s246
      %s261 = sphi 0, %s247
      %s265 = sphi 0, %s265
      %s267 = sphi 0, %s265
      %s268 = sphi 0, %s267
      %s282 = sphi 0, %s268
      %s288 = sphi 0, %s290
      %s291 = sphi 0, %s288
      %s292 = sphi 0, %s291
      %s308 = sphi 0, %s292
    $region4: #{neural_network_forward.1} parent=1 // loop_header_branch
      %24 = sbr.rel (%p22) target = $region8
    $region5: #{neural_network_forward.1} parent=1 // loop_body
      %s26 = ssub.s32 %s21, 1
      %s27 = ssub.s32 %s21, 2
      %s28 = sadd.s32 %s21, 1
      %s29 = ssub.s32 %s21, %s28
      %p30 = scmp.eq.s32.totalorder %s29, 0
      %s32 = sadd.s32 %s31, 1
      %s33 = scalar_select %p30, %s31, %s32
      %p36 = pneg %p30
      %p37 = scmp.eq.s32.totalorder %s21, 1
      %p38 = por %p36, %p37
      %p39 = scmp.ne.s32.totalorder %s31, %s34
      %p40 = scmp.eq.s32.totalorder %s21, 0
      %p41 = por %p39, %p40
      %p42 = scmp.ne.s32.totalorder %s31, %s34
      %p43 = scmp.eq.s32.totalorder %s26, 1
      %p44 = por %p42, %p43
      %p45 = scmp.ne.s32.totalorder %s34, %s35
      %p46 = scmp.eq.s32.totalorder %s26, 0
      %p47 = por %p45, %p46
      %p48 = scmp.ne.s32.totalorder %s34, %s35
      %p49 = scmp.eq.s32.totalorder %s27, 1
      %p50 = por %p48, %p49
      %p52 = scmp.ne.s32.totalorder %s35, %s51
      %p53 = scmp.eq.s32.totalorder %s27, 0
      %p54 = por %p52, %p53
      %s56 = sadd.s32 %s55, 1
      %p59 = scmp.eq.s32.totalorder %s21, 1
      %p60 = scmp.ne.s32.totalorder %s55, %s57
      %p61 = scmp.eq.s32.totalorder %s21, 0
      %p62 = por %p60, %p61
      %p63 = scmp.ne.s32.totalorder %s55, %s57
      %p64 = scmp.eq.s32.totalorder %s26, 1
      %p65 = por %p63, %p64
      %p66 = scmp.ne.s32.totalorder %s57, %s58
      %p67 = scmp.eq.s32.totalorder %s26, 0
      %p68 = por %p66, %p67
      %p69 = scmp.ne.s32.totalorder %s57, %s58
      %p70 = scmp.eq.s32.totalorder %s27, 1
      %p71 = por %p69, %p70
      %p73 = scmp.ne.s32.totalorder %s58, %s72
      %p74 = scmp.eq.s32.totalorder %s27, 0
      %p75 = por %p73, %p74
      %s77 = sadd.s32 %s76, 1
      %p80 = scmp.eq.s32.totalorder %s21, 1
      %p81 = scmp.ne.s32.totalorder %s76, %s78
      %p82 = scmp.eq.s32.totalorder %s21, 0
      %p83 = por %p81, %p82
      %p84 = scmp.ne.s32.totalorder %s76, %s78
      %p85 = scmp.eq.s32.totalorder %s26, 1
      %p86 = por %p84, %p85
      %p87 = scmp.ne.s32.totalorder %s78, %s79
      %p88 = scmp.eq.s32.totalorder %s26, 0
      %p89 = por %p87, %p88
      %p90 = scmp.ne.s32.totalorder %s78, %s79
      %p91 = scmp.eq.s32.totalorder %s27, 1
      %p92 = por %p90, %p91
      %p94 = scmp.ne.s32.totalorder %s79, %s93
      %p95 = scmp.eq.s32.totalorder %s27, 0
      %p96 = por %p94, %p95
      %s98 = sadd.s32 %s97, 1
      %p101 = scmp.eq.s32.totalorder %s21, 1
      %p102 = scmp.ne.s32.totalorder %s97, %s99
      %p103 = scmp.eq.s32.totalorder %s21, 0
      %p104 = por %p102, %p103
      %p105 = scmp.ne.s32.totalorder %s97, %s99
      %p106 = scmp.eq.s32.totalorder %s26, 1
      %p107 = por %p105, %p106
      %p108 = scmp.ne.s32.totalorder %s99, %s100
      %p109 = scmp.eq.s32.totalorder %s26, 0
      %p110 = por %p108, %p109
      %p111 = scmp.ne.s32.totalorder %s99, %s100
      %p112 = scmp.eq.s32.totalorder %s27, 1
      %p113 = por %p111, %p112
      %p115 = scmp.ne.s32.totalorder %s100, %s114
      %p116 = scmp.eq.s32.totalorder %s27, 0
      %p117 = por %p115, %p116
      %s119 = sadd.s32 %s118, 1
      %p122 = scmp.eq.s32.totalorder %s21, 1
      %p123 = scmp.ne.s32.totalorder %s118, %s120
      %p124 = scmp.eq.s32.totalorder %s21, 0
      %p125 = por %p123, %p124
      %p126 = scmp.ne.s32.totalorder %s118, %s120
      %p127 = scmp.eq.s32.totalorder %s26, 1
      %p128 = por %p126, %p127
      %p129 = scmp.ne.s32.totalorder %s120, %s121
      %p130 = scmp.eq.s32.totalorder %s26, 0
      %p131 = por %p129, %p130
      %p132 = scmp.ne.s32.totalorder %s120, %s121
      %p133 = scmp.eq.s32.totalorder %s27, 1
      %p134 = por %p132, %p133
      %p136 = scmp.ne.s32.totalorder %s121, %s135
      %p137 = scmp.eq.s32.totalorder %s27, 0
      %p138 = por %p136, %p137
      %s140 = sadd.s32 %s139, 1
      %p143 = scmp.eq.s32.totalorder %s21, 1
      %p144 = scmp.ne.s32.totalorder %s139, %s141
      %p145 = scmp.eq.s32.totalorder %s21, 0
      %p146 = por %p144, %p145
      %p147 = scmp.ne.s32.totalorder %s139, %s141
      %p148 = scmp.eq.s32.totalorder %s26, 1
      %p149 = por %p147, %p148
      %p150 = scmp.ne.s32.totalorder %s141, %s142
      %p151 = scmp.eq.s32.totalorder %s26, 0
      %p152 = por %p150, %p151
      %p153 = scmp.ne.s32.totalorder %s141, %s142
      %p154 = scmp.eq.s32.totalorder %s27, 1
      %p155 = por %p153, %p154
      %p157 = scmp.ne.s32.totalorder %s142, %s156
      %p158 = scmp.eq.s32.totalorder %s27, 0
      %p159 = por %p157, %p158
      %s161 = sadd.s32 %s160, 1
      %p164 = scmp.eq.s32.totalorder %s21, 1
      %p165 = scmp.ne.s32.totalorder %s160, %s162
      %p166 = scmp.eq.s32.totalorder %s21, 0
      %p167 = por %p165, %p166
      %p168 = scmp.ne.s32.totalorder %s160, %s162
      %p169 = scmp.eq.s32.totalorder %s26, 1
      %p170 = por %p168, %p169
      %p171 = scmp.ne.s32.totalorder %s162, %s163
      %p172 = scmp.eq.s32.totalorder %s26, 0
      %p173 = por %p171, %p172
      %p174 = scmp.ne.s32.totalorder %s162, %s163
      %p175 = scmp.eq.s32.totalorder %s27, 1
      %p176 = por %p174, %p175
      %p178 = scmp.ne.s32.totalorder %s163, %s177
      %p179 = scmp.eq.s32.totalorder %s27, 0
      %p180 = por %p178, %p179
      %s182 = sadd.s32 %s181, 1
      %p185 = scmp.eq.s32.totalorder %s21, 1
      %p186 = scmp.ne.s32.totalorder %s181, %s183
      %p187 = scmp.eq.s32.totalorder %s21, 0
      %p188 = por %p186, %p187
      %p189 = scmp.ne.s32.totalorder %s181, %s183
      %p190 = scmp.eq.s32.totalorder %s26, 1
      %p191 = por %p189, %p190
      %p192 = scmp.ne.s32.totalorder %s183, %s184
      %p193 = scmp.eq.s32.totalorder %s26, 0
      %p194 = por %p192, %p193
      %p195 = scmp.ne.s32.totalorder %s183, %s184
      %p196 = scmp.eq.s32.totalorder %s27, 1
      %p197 = por %p195, %p196
      %p199 = scmp.ne.s32.totalorder %s184, %s198
      %p200 = scmp.eq.s32.totalorder %s27, 0
      %p201 = por %p199, %p200
      %s203 = sadd.s32 %s202, 1
      %p206 = scmp.eq.s32.totalorder %s21, 1
      %p207 = scmp.ne.s32.totalorder %s202, %s204
      %p208 = scmp.eq.s32.totalorder %s21, 0
      %p209 = por %p207, %p208
      %p210 = scmp.ne.s32.totalorder %s202, %s204
      %p211 = scmp.eq.s32.totalorder %s26, 1
      %p212 = por %p210, %p211
      %p213 = scmp.ne.s32.totalorder %s204, %s205
      %p214 = scmp.eq.s32.totalorder %s26, 0
      %p215 = por %p213, %p214
      %p216 = scmp.ne.s32.totalorder %s204, %s205
      %p217 = scmp.eq.s32.totalorder %s27, 1
      %p218 = por %p216, %p217
      %p220 = scmp.ne.s32.totalorder %s205, %s219
      %p221 = scmp.eq.s32.totalorder %s27, 0
      %p222 = por %p220, %p221
      %s224 = sadd.s32 %s223, 1
      %p227 = scmp.eq.s32.totalorder %s21, 1
      %p228 = scmp.ne.s32.totalorder %s223, %s225
      %p229 = scmp.eq.s32.totalorder %s21, 0
      %p230 = por %p228, %p229
      %p231 = scmp.ne.s32.totalorder %s223, %s225
      %p232 = scmp.eq.s32.totalorder %s26, 1
      %p233 = por %p231, %p232
      %p234 = scmp.ne.s32.totalorder %s225, %s226
      %p235 = scmp.eq.s32.totalorder %s26, 0
      %p236 = por %p234, %p235
      %p237 = scmp.ne.s32.totalorder %s225, %s226
      %p238 = scmp.eq.s32.totalorder %s27, 1
      %p239 = por %p237, %p238
      %p241 = scmp.ne.s32.totalorder %s226, %s240
      %p242 = scmp.eq.s32.totalorder %s27, 0
      %p243 = por %p241, %p242
      %s245 = sadd.s32 %s244, 1
      %p248 = scmp.eq.s32.totalorder %s21, 1
      %p249 = scmp.ne.s32.totalorder %s244, %s246
      %p250 = scmp.eq.s32.totalorder %s21, 0
      %p251 = por %p249, %p250
      %p252 = scmp.ne.s32.totalorder %s244, %s246
      %p253 = scmp.eq.s32.totalorder %s26, 1
      %p254 = por %p252, %p253
      %p255 = scmp.ne.s32.totalorder %s246, %s247
      %p256 = scmp.eq.s32.totalorder %s26, 0
      %p257 = por %p255, %p256
      %p258 = scmp.ne.s32.totalorder %s246, %s247
      %p259 = scmp.eq.s32.totalorder %s27, 1
      %p260 = por %p258, %p259
      %p262 = scmp.ne.s32.totalorder %s247, %s261
      %p263 = scmp.eq.s32.totalorder %s27, 0
      %p264 = por %p262, %p263
      %s266 = sadd.s32 %s265, 1
      %p269 = scmp.eq.s32.totalorder %s21, 1
      %p270 = scmp.ne.s32.totalorder %s265, %s267
      %p271 = scmp.eq.s32.totalorder %s21, 0
      %p272 = por %p270, %p271
      %p273 = scmp.ne.s32.totalorder %s265, %s267
      %p274 = scmp.eq.s32.totalorder %s26, 1
      %p275 = por %p273, %p274
      %p276 = scmp.ne.s32.totalorder %s267, %s268
      %p277 = scmp.eq.s32.totalorder %s26, 0
      %p278 = por %p276, %p277
      %p279 = scmp.ne.s32.totalorder %s267, %s268
      %p280 = scmp.eq.s32.totalorder %s27, 1
      %p281 = por %p279, %p280
      %p283 = scmp.ne.s32.totalorder %s268, %s282
      %p284 = scmp.eq.s32.totalorder %s27, 0
      %p285 = por %p283, %p284
      %s286 = ssub.s32 %s21, %s28
      %p287 = scmp.eq.s32.totalorder %s286, 0
      %s289 = sadd.s32 %s288, 1
      %s290 = scalar_select %p287, %s288, %s289
      %p293 = pneg %p287
      %p294 = scmp.eq.s32.totalorder %s21, 1
      %p295 = por %p293, %p294
      %p296 = scmp.ne.s32.totalorder %s288, %s291
      %p297 = scmp.eq.s32.totalorder %s21, 0
      %p298 = por %p296, %p297
      %p299 = scmp.ne.s32.totalorder %s288, %s291
      %p300 = scmp.eq.s32.totalorder %s26, 1
      %p301 = por %p299, %p300
      %p302 = scmp.ne.s32.totalorder %s291, %s292
      %p303 = scmp.eq.s32.totalorder %s26, 0
      %p304 = por %p302, %p303
      %p305 = scmp.ne.s32.totalorder %s291, %s292
      %p306 = scmp.eq.s32.totalorder %s27, 1
      %p307 = por %p305, %p306
      %p309 = scmp.ne.s32.totalorder %s292, %s308
      %p310 = scmp.eq.s32.totalorder %s27, 0
      %p311 = por %p309, %p310
      %p312 = scmp.le.s32.totalorder 1, %s21
      %p313 = scmp.lt.s32.totalorder %s21, 3
      %p314 = pnand %p312, %p313
      %p315 = pneg %p314
      // Predicated region
      $region9: #{neural_network_forward.1} parent=5 // pred_check
        _
      $region10: #{neural_network_forward.1} parent=5 // pred_check_branch
        %317 = sbr.rel (%p314) target = $region12
      $region11: #{neural_network_forward.1} parent=5 // pred_region
        %s318 = ssub.s32 %s21, 1
        // Predicated region
        $region13: #{neural_network_forward.1} parent=11 // pred_check
          %p319 = pneg %p68
        $region14: #{neural_network_forward.1} parent=11 // pred_check_branch
          %321 = sbr.rel (%p319) target = $region16
        $region15: #{neural_network_forward.1} parent=11 // pred_region
          _
        $region16: #{neural_network_forward.1} parent=11 // pred_fallthru
          _
        // Predicated region
        $region17: #{neural_network_forward.1} parent=11 // pred_check
          %p322 = pneg %p89
        $region18: #{neural_network_forward.1} parent=11 // pred_check_branch
          %324 = sbr.rel (%p322) target = $region20
        $region19: #{neural_network_forward.1} parent=11 // pred_region
          _
        $region20: #{neural_network_forward.1} parent=11 // pred_fallthru
          _
        // Predicated region
        $region21: #{neural_network_forward.1} parent=11 // pred_check
          %p325 = pneg %p110
        $region22: #{neural_network_forward.1} parent=11 // pred_check_branch
          %327 = sbr.rel (%p325) target = $region24
        $region23: #{neural_network_forward.1} parent=11 // pred_region
          _
        $region24: #{neural_network_forward.1} parent=11 // pred_fallthru
          _
        // Predicated region
        $region25: #{neural_network_forward.1} parent=11 // pred_check
          %p328 = pneg %p131
        $region26: #{neural_network_forward.1} parent=11 // pred_check_branch
          %330 = sbr.rel (%p328) target = $region28
        $region27: #{neural_network_forward.1} parent=11 // pred_region
          _
        $region28: #{neural_network_forward.1} parent=11 // pred_fallthru
          _
        // Predicated region
        $region29: #{neural_network_forward.1} parent=11 // pred_check
          %p331 = pneg %p152
        $region30: #{neural_network_forward.1} parent=11 // pred_check_branch
          %333 = sbr.rel (%p331) target = $region32
        $region31: #{neural_network_forward.1} parent=11 // pred_region
          _
        $region32: #{neural_network_forward.1} parent=11 // pred_fallthru
          _
        // Predicated region
        $region33: #{neural_network_forward.1} parent=11 // pred_check
          %p334 = pneg %p173
        $region34: #{neural_network_forward.1} parent=11 // pred_check_branch
          %336 = sbr.rel (%p334) target = $region36
        $region35: #{neural_network_forward.1} parent=11 // pred_region
          _
        $region36: #{neural_network_forward.1} parent=11 // pred_fallthru
          _
        // Predicated region
        $region37: #{neural_network_forward.1} parent=11 // pred_check
          %p337 = pneg %p194
        $region38: #{neural_network_forward.1} parent=11 // pred_check_branch
          %339 = sbr.rel (%p337) target = $region40
        $region39: #{neural_network_forward.1} parent=11 // pred_region
          _
        $region40: #{neural_network_forward.1} parent=11 // pred_fallthru
          _
        // Predicated region
        $region41: #{neural_network_forward.1} parent=11 // pred_check
          %p340 = pneg %p215
        $region42: #{neural_network_forward.1} parent=11 // pred_check_branch
          %342 = sbr.rel (%p340) target = $region44
        $region43: #{neural_network_forward.1} parent=11 // pred_region
          _
        $region44: #{neural_network_forward.1} parent=11 // pred_fallthru
          _
        // Predicated region
        $region45: #{neural_network_forward.1} parent=11 // pred_check
          %p343 = pneg %p236
        $region46: #{neural_network_forward.1} parent=11 // pred_check_branch
          %345 = sbr.rel (%p343) target = $region48
        $region47: #{neural_network_forward.1} parent=11 // pred_region
          _
        $region48: #{neural_network_forward.1} parent=11 // pred_fallthru
          _
        // Predicated region
        $region49: #{neural_network_forward.1} parent=11 // pred_check
          %p346 = pneg %p257
        $region50: #{neural_network_forward.1} parent=11 // pred_check_branch
          %348 = sbr.rel (%p346) target = $region52
        $region51: #{neural_network_forward.1} parent=11 // pred_region
          _
        $region52: #{neural_network_forward.1} parent=11 // pred_fallthru
          _
        // Predicated region
        $region53: #{neural_network_forward.1} parent=11 // pred_check
          %p349 = pneg %p278
        $region54: #{neural_network_forward.1} parent=11 // pred_check_branch
          %351 = sbr.rel (%p349) target = $region56
        $region55: #{neural_network_forward.1} parent=11 // pred_region
          _
        $region56: #{neural_network_forward.1} parent=11 // pred_fallthru
          _
      $region12: #{neural_network_forward.1} parent=5 // pred_fallthru
        _
      %p352 = scmp.lt.s32.totalorder %s21, 2
      // Predicated region
      $region57: #{neural_network_forward.1} parent=5 // pred_check
        %p353 = pneg %p352
      $region58: #{neural_network_forward.1} parent=5 // pred_check_branch
        %355 = sbr.rel (%p353) target = $region60
      $region59: #{neural_network_forward.1} parent=5 // pred_region
        // Predicated region
        $region61: #{neural_network_forward.1} parent=59 // pred_check
          %p356 = pneg %p41
        $region62: #{neural_network_forward.1} parent=59 // pred_check_branch
          %358 = sbr.rel (%p356) target = $region64
        $region63: #{neural_network_forward.1} parent=59 // pred_region
          %p359 = scmp.lt.s32.totalorder %s21, 1
          %s360 = scalar_select %p359, %s21, 1
          %s361 = smul.addr %s360, 8
          %s362 = smul.addr %s361, 4
          %s363 = scalar_lea.vmem %s0, %s362
        $region64: #{neural_network_forward.1} parent=59 // pred_fallthru
          _
      $region60: #{neural_network_forward.1} parent=5 // pred_fallthru
        _
      %p364 = scmp.le.s32.totalorder 1, %s21
      %p365 = scmp.lt.s32.totalorder %s21, 3
      %p366 = pnand %p364, %p365
      %p367 = pneg %p366
      // Predicated region
      $region65: #{neural_network_forward.1} parent=5 // pred_check
        _
      $region66: #{neural_network_forward.1} parent=5 // pred_check_branch
        %369 = sbr.rel (%p366) target = $region68
      $region67: #{neural_network_forward.1} parent=5 // pred_region
        %s370 = ssub.s32 %s21, 1
        %p371 = scmp.lt.s32.totalorder %s26, 1
        %s372 = scalar_select %p371, %s26, 1
        %s373 = smul.addr %s372, 8
        %s374 = smul.addr %s373, 4
        %s375 = scalar_lea.vmem %s0, %s374
        %p376 = pneg %p47
        %p377 = pneg %p44
        %p378 = pneg %p68
        %p379 = pneg %p65
        %p380 = pneg %p89
        %p381 = pneg %p86
        %p382 = pneg %p110
        %p383 = pneg %p107
        %p384 = pneg %p131
        %p385 = pneg %p128
        %p386 = pneg %p152
        %p387 = pneg %p149
        %p388 = pneg %p173
        %p389 = pneg %p170
        %p390 = pneg %p194
        %p391 = pneg %p191
        %p392 = pneg %p215
        %p393 = pneg %p212
        %p394 = pneg %p236
        %p395 = pneg %p233
        %p396 = pneg %p257
        %p397 = pneg %p254
        %p398 = pneg %p278
        %p399 = pneg %p275
        %p400 = pneg %p304
        %p401 = pneg %p301
        %s402 = sand.u32 %s291, 1
        %s403 = scalar_lea.sflag [#allocation4], %s402
        %s404 = sand.u32 %s291, 1
        %s405 = scalar_lea.vmem [#allocation3], %s404
        %p406 = scmp.lt.s32.totalorder %s26, 1
        %s407 = scalar_select %p406, %s26, 1
        %s408 = smul.addr %s407, 8
        %s409 = smul.addr %s408, 4
        %s410 = scalar_lea.vmem %s0, %s409
        %v412 = vld [vmem:[%s410] sm:$0x77]
        %v413 = vld [vmem:[%s410 + $0x8] sm:$0x77]
        %v414 = vld [vmem:[%s410 + $0x10] sm:$0x77]
        %v415 = vld [vmem:[%s410 + $0x18] sm:$0x77]
        %420 = vst [vmem:[#allocation1] ss:$2 sm:$0xff] %v412
        %s421 = scalar_lea.vmem [#allocation1], 16
        %422 = vst [vmem:[%s421] ss:$2 sm:$0xff] %v413
        %s423 = scalar_lea.vmem [#allocation1], 32
        %424 = vst [vmem:[%s423] ss:$2 sm:$0xff] %v414
        %s425 = scalar_lea.vmem [#allocation1], 48
        %426 = vst [vmem:[%s425] ss:$2 sm:$0xff] %v415
        %v427 = vld.sshfl [vmem:[#allocation1] sm:$0xff pattern:$0x75316420]
        %v428 = vld.sshfl [vmem:[#allocation1 + $0x8] sm:$0xff pattern:$0x75316420]
        %v429 = vld.sshfl [vmem:[#allocation1 + $0x10] sm:$0xff pattern:$0x75316420]
        %v430 = vld.sshfl [vmem:[#allocation1 + $0x18] sm:$0xff pattern:$0x75316420]
        %v431 = vld.sshfl [vmem:[#allocation1 + $0x20] sm:$0xff pattern:$0x75316420]
        %v432 = vld.sshfl [vmem:[#allocation1 + $0x28] sm:$0xff pattern:$0x75316420]
        %v433 = vld.sshfl [vmem:[#allocation1 + $0x30] sm:$0xff pattern:$0x75316420]
        %v434 = vld.sshfl [vmem:[#allocation1 + $0x38] sm:$0xff pattern:$0x75316420]
        %v443 = vpack.c.bf16 %v428, %v427
        %v444 = vpack.c.bf16 %v430, %v429
        %v445 = vpack.c.bf16 %v432, %v431
        %v446 = vpack.c.bf16 %v434, %v433
        %v447 = vld [vmem:[%s1] sm:$0xf]
        %v448 = vld [vmem:[%s1 + $0x4] sm:$0x3]
        %s449 = scalar_lea.vmem %s1, 8
        %v450 = vld [vmem:[%s449] sm:$0xf]
        %v451 = vld [vmem:[%s449 + $0x4] sm:$0x3]
        %v454 = vunpack.c.l.b16 %v450
        %v455 = vunpack.c.l.b16 %v451
        %v456 = vpack.c.b16 %v455, %v454
        %v461 = vunpack.c.l.b16 %v443
        %v462 = vunpack.c.h.b16 %v443
        %v463 = vunpack.c.l.b16 %v444
        %v464 = vunpack.c.h.b16 %v444
        %v465 = vunpack.c.l.b16 %v445
        %v466 = vunpack.c.h.b16 %v445
        %v467 = vunpack.c.l.b16 %v446
        %v468 = vpack.c.b16 %v461, %v461
        %v469 = vpack.c.b16 %v462, %v462
        %v470 = vpack.c.b16 %v463, %v463
        %v471 = vpack.c.b16 %v464, %v464
        %v472 = vpack.c.b16 %v465, %v465
        %v473 = vpack.c.b16 %v466, %v466
        %v474 = vpack.c.b16 %v467, %v467
        %475 = vrot.lane.b32.xlu0 %v468, 127
        %v476 = vpop.permute.xlu0 %475
        %477 = vrot.lane.b32.xlu0 %v469, 127
        %v478 = vpop.permute.xlu0 %477
        %479 = vrot.lane.b32.xlu0 %v470, 127
        %v480 = vpop.permute.xlu0 %479
        %481 = vrot.lane.b32.xlu0 %v471, 127
        %v482 = vpop.permute.xlu0 %481
        %483 = vrot.lane.b32.xlu0 %v472, 127
        %v484 = vpop.permute.xlu0 %483
        %485 = vrot.lane.b32.xlu0 %v473, 127
        %v486 = vpop.permute.xlu0 %485
        %487 = vrot.lane.b32.xlu0 %v474, 127
        %v488 = vpop.permute.xlu0 %487
        %vm489 = vcmask 1039360
        %v490 = vsel %vm489, %v476, %v478
        %v491 = vsel %vm489, %v478, %v480
        %v492 = vsel %vm489, %v480, %v482
        %v493 = vsel %vm489, %v482, %v484
        %v494 = vsel %vm489, %v484, %v486
        %v495 = vsel %vm489, %v486, %v488
        %vm496 = vcmask 23552
        %v498 = vsel %vm496, %v456, 0
        %vm500 = vcmask 1040384
        %vm501 = vcmask 1041408
        %v502 = vsel %vm500, 4294967295, 65535
        %v503 = vsel %vm501, %v502, 0
        %v505 = vand.u32 %v490, %v503
        %v508 = vand.u32 %v491, %v503
        %v511 = vand.u32 %v492, %v503
        %v514 = vand.u32 %v493, %v503
        %v517 = vand.u32 %v494, %v503
        %v520 = vand.u32 %v495, %v503
        %v523 = vand.u32 %v488, %v503
        %525 = vmatpush.bf16.msra.mxu0 0
        %526 = vmatpush.bf16.msra.mxu0 0
        %527 = vmatpush.bf16.msra.mxu0 0
        %528 = vmatpush.bf16.msra.mxu0 0
        %529 = vmatpush.bf16.msra.mxu0 0
        %530 = vmatpush.bf16.msra.mxu0 0
        %531 = vmatpush.bf16.msra.mxu0 0
        %532 = vmatpush.bf16.msra.mxu0 %v505
        %533 = vmatmul.bf16.gmra.mxu0 %v498
        %v534 = vpop.f32.mrf.mxu0
        %v535 = vadd.f32 0.0, %v534
        %v536 = vpop.f32.mrf.mxu0
        %v537 = vadd.f32 0.0, %v536
        %538 = vdwg.mxu0
        %539 = vmatpush.bf16.msra.mxu0 0
        %540 = vmatpush.bf16.msra.mxu0 0
        %541 = vmatpush.bf16.msra.mxu0 0
        %542 = vmatpush.bf16.msra.mxu0 0
        %543 = vmatpush.bf16.msra.mxu0 0
        %544 = vmatpush.bf16.msra.mxu0 0
        %545 = vmatpush.bf16.msra.mxu0 0
        %546 = vmatpush.bf16.msra.mxu0 %v508
        %547 = vmatmul.bf16.gmra.mxu0 %v498
        %v548 = vpop.f32.mrf.mxu0
        %v549 = vadd.f32 0.0, %v548
        %v550 = vpop.f32.mrf.mxu0
        %v551 = vadd.f32 0.0, %v550
        %552 = vdwg.mxu0
        %553 = vmatpush.bf16.msra.mxu0 0
        %554 = vmatpush.bf16.msra.mxu0 0
        %555 = vmatpush.bf16.msra.mxu0 0
        %556 = vmatpush.bf16.msra.mxu0 0
        %557 = vmatpush.bf16.msra.mxu0 0
        %558 = vmatpush.bf16.msra.mxu0 0
        %559 = vmatpush.bf16.msra.mxu0 0
        %560 = vmatpush.bf16.msra.mxu0 %v511
        %561 = vmatmul.bf16.gmra.mxu0 %v498
        %v562 = vpop.f32.mrf.mxu0
        %v563 = vadd.f32 0.0, %v562
        %v564 = vpop.f32.mrf.mxu0
        %v565 = vadd.f32 0.0, %v564
        %566 = vdwg.mxu0
        %567 = vmatpush.bf16.msra.mxu0 0
        %568 = vmatpush.bf16.msra.mxu0 0
        %569 = vmatpush.bf16.msra.mxu0 0
        %570 = vmatpush.bf16.msra.mxu0 0
        %571 = vmatpush.bf16.msra.mxu0 0
        %572 = vmatpush.bf16.msra.mxu0 0
        %573 = vmatpush.bf16.msra.mxu0 0
        %574 = vmatpush.bf16.msra.mxu0 %v514
        %575 = vmatmul.bf16.gmra.mxu0 %v498
        %v576 = vpop.f32.mrf.mxu0
        %v577 = vadd.f32 0.0, %v576
        %v578 = vpop.f32.mrf.mxu0
        %v579 = vadd.f32 0.0, %v578
        %580 = vdwg.mxu0
        %581 = vmatpush.bf16.msra.mxu0 0
        %582 = vmatpush.bf16.msra.mxu0 0
        %583 = vmatpush.bf16.msra.mxu0 0
        %584 = vmatpush.bf16.msra.mxu0 0
        %585 = vmatpush.bf16.msra.mxu0 0
        %586 = vmatpush.bf16.msra.mxu0 0
        %587 = vmatpush.bf16.msra.mxu0 0
        %588 = vmatpush.bf16.msra.mxu0 %v517
        %589 = vmatmul.bf16.gmra.mxu0 %v498
        %v590 = vpop.f32.mrf.mxu0
        %v591 = vadd.f32 0.0, %v590
        %v592 = vpop.f32.mrf.mxu0
        %v593 = vadd.f32 0.0, %v592
        %594 = vdwg.mxu0
        %595 = vmatpush.bf16.msra.mxu0 0
        %596 = vmatpush.bf16.msra.mxu0 0
        %597 = vmatpush.bf16.msra.mxu0 0
        %598 = vmatpush.bf16.msra.mxu0 0
        %599 = vmatpush.bf16.msra.mxu0 0
        %600 = vmatpush.bf16.msra.mxu0 0
        %601 = vmatpush.bf16.msra.mxu0 0
        %602 = vmatpush.bf16.msra.mxu0 %v520
        %603 = vmatmul.bf16.gmra.mxu0 %v498
        %v604 = vpop.f32.mrf.mxu0
        %v605 = vadd.f32 0.0, %v604
        %v606 = vpop.f32.mrf.mxu0
        %v607 = vadd.f32 0.0, %v606
        %608 = vdwg.mxu0
        %609 = vmatpush.bf16.msra.mxu0 0
        %610 = vmatpush.bf16.msra.mxu0 0
        %611 = vmatpush.bf16.msra.mxu0 0
        %612 = vmatpush.bf16.msra.mxu0 0
        %613 = vmatpush.bf16.msra.mxu0 0
        %614 = vmatpush.bf16.msra.mxu0 0
        %615 = vmatpush.bf16.msra.mxu0 0
        %616 = vmatpush.bf16.msra.mxu0 %v523
        %617 = vmatmul.bf16.gmra.mxu0 %v498
        %v618 = vpop.f32.mrf.mxu0
        %v619 = vadd.f32 0.0, %v618
        %v620 = vpop.f32.mrf.mxu0
        %v621 = vadd.f32 0.0, %v620
        %622 = vdwg.mxu0
        %v625 = vunpack.c.l.b16 %v447
        %v626 = vunpack.c.l.b16 %v448
        %v627 = vpack.c.b16 %v626, %v625
        %v629 = vsel %vm496, %v627, 0
        %v632 = vand.u32 %v468, %v503
        %v635 = vand.u32 %v469, %v503
        %v638 = vand.u32 %v470, %v503
        %v641 = vand.u32 %v471, %v503
        %v644 = vand.u32 %v472, %v503
        %v647 = vand.u32 %v473, %v503
        %v650 = vand.u32 %v474, %v503
        %652 = vmatpush.bf16.msra.mxu0 0
        %653 = vmatpush.bf16.msra.mxu0 0
        %654 = vmatpush.bf16.msra.mxu0 0
        %655 = vmatpush.bf16.msra.mxu0 0
        %656 = vmatpush.bf16.msra.mxu0 0
        %657 = vmatpush.bf16.msra.mxu0 0
        %658 = vmatpush.bf16.msra.mxu0 0
        %659 = vmatpush.bf16.msra.mxu0 %v632
        %660 = vmatmul.bf16.gmra.mxu0 %v629
        %v661 = vpop.f32.mrf.mxu0
        %v662 = vadd.f32 %v535, %v661
        %v663 = vpop.f32.mrf.mxu0
        %v664 = vadd.f32 %v537, %v663
        %665 = vdwg.mxu0
        %666 = vmatpush.bf16.msra.mxu0 0
        %667 = vmatpush.bf16.msra.mxu0 0
        %668 = vmatpush.bf16.msra.mxu0 0
        %669 = vmatpush.bf16.msra.mxu0 0
        %670 = vmatpush.bf16.msra.mxu0 0
        %671 = vmatpush.bf16.msra.mxu0 0
        %672 = vmatpush.bf16.msra.mxu0 0
        %673 = vmatpush.bf16.msra.mxu0 %v635
        %674 = vmatmul.bf16.gmra.mxu0 %v629
        %v675 = vpop.f32.mrf.mxu0
        %v676 = vadd.f32 %v549, %v675
        %v677 = vpop.f32.mrf.mxu0
        %v678 = vadd.f32 %v551, %v677
        %679 = vdwg.mxu0
        %680 = vmatpush.bf16.msra.mxu0 0
        %681 = vmatpush.bf16.msra.mxu0 0
        %682 = vmatpush.bf16.msra.mxu0 0
        %683 = vmatpush.bf16.msra.mxu0 0
        %684 = vmatpush.bf16.msra.mxu0 0
        %685 = vmatpush.bf16.msra.mxu0 0
        %686 = vmatpush.bf16.msra.mxu0 0
        %687 = vmatpush.bf16.msra.mxu0 %v638
        %688 = vmatmul.bf16.gmra.mxu0 %v629
        %v689 = vpop.f32.mrf.mxu0
        %v690 = vadd.f32 %v563, %v689
        %v691 = vpop.f32.mrf.mxu0
        %v692 = vadd.f32 %v565, %v691
        %693 = vdwg.mxu0
        %694 = vmatpush.bf16.msra.mxu0 0
        %695 = vmatpush.bf16.msra.mxu0 0
        %696 = vmatpush.bf16.msra.mxu0 0
        %697 = vmatpush.bf16.msra.mxu0 0
        %698 = vmatpush.bf16.msra.mxu0 0
        %699 = vmatpush.bf16.msra.mxu0 0
        %700 = vmatpush.bf16.msra.mxu0 0
        %701 = vmatpush.bf16.msra.mxu0 %v641
        %702 = vmatmul.bf16.gmra.mxu0 %v629
        %v703 = vpop.f32.mrf.mxu0
        %v704 = vadd.f32 %v577, %v703
        %v705 = vpop.f32.mrf.mxu0
        %v706 = vadd.f32 %v579, %v705
        %707 = vdwg.mxu0
        %708 = vmatpush.bf16.msra.mxu0 0
        %709 = vmatpush.bf16.msra.mxu0 0
        %710 = vmatpush.bf16.msra.mxu0 0
        %711 = vmatpush.bf16.msra.mxu0 0
        %712 = vmatpush.bf16.msra.mxu0 0
        %713 = vmatpush.bf16.msra.mxu0 0
        %714 = vmatpush.bf16.msra.mxu0 0
        %715 = vmatpush.bf16.msra.mxu0 %v644
        %716 = vmatmul.bf16.gmra.mxu0 %v629
        %v717 = vpop.f32.mrf.mxu0
        %v718 = vadd.f32 %v591, %v717
        %v719 = vpop.f32.mrf.mxu0
        %v720 = vadd.f32 %v593, %v719
        %721 = vdwg.mxu0
        %722 = vmatpush.bf16.msra.mxu0 0
        %723 = vmatpush.bf16.msra.mxu0 0
        %724 = vmatpush.bf16.msra.mxu0 0
        %725 = vmatpush.bf16.msra.mxu0 0
        %726 = vmatpush.bf16.msra.mxu0 0
        %727 = vmatpush.bf16.msra.mxu0 0
        %728 = vmatpush.bf16.msra.mxu0 0
        %729 = vmatpush.bf16.msra.mxu0 %v647
        %730 = vmatmul.bf16.gmra.mxu0 %v629
        %v731 = vpop.f32.mrf.mxu0
        %v732 = vadd.f32 %v605, %v731
        %v733 = vpop.f32.mrf.mxu0
        %v734 = vadd.f32 %v607, %v733
        %735 = vdwg.mxu0
        %736 = vmatpush.bf16.msra.mxu0 0
        %737 = vmatpush.bf16.msra.mxu0 0
        %738 = vmatpush.bf16.msra.mxu0 0
        %739 = vmatpush.bf16.msra.mxu0 0
        %740 = vmatpush.bf16.msra.mxu0 0
        %741 = vmatpush.bf16.msra.mxu0 0
        %742 = vmatpush.bf16.msra.mxu0 0
        %743 = vmatpush.bf16.msra.mxu0 %v650
        %744 = vmatmul.bf16.gmra.mxu0 %v629
        %v745 = vpop.f32.mrf.mxu0
        %v746 = vadd.f32 %v619, %v745
        %v747 = vpop.f32.mrf.mxu0
        %v748 = vadd.f32 %v621, %v747
        %749 = vdwg.mxu0
        %s750 = scalar_lea.vmem %s1, 16
        %v751 = vld [vmem:[%s750] sm:$0xf]
        %v752 = vld [vmem:[%s750 + $0x4] sm:$0x3]
        %v755 = vunpack.c.l.b16 %v751
        %v756 = vunpack.c.l.b16 %v752
        %v757 = vpack.c.b16 %v756, %v755
        %758 = vrot.lane.b32.xlu0 %v468, 126
        %v759 = vpop.permute.xlu0 %758
        %760 = vrot.lane.b32.xlu0 %v469, 126
        %v761 = vpop.permute.xlu0 %760
        %762 = vrot.lane.b32.xlu0 %v470, 126
        %v763 = vpop.permute.xlu0 %762
        %764 = vrot.lane.b32.xlu0 %v471, 126
        %v765 = vpop.permute.xlu0 %764
        %766 = vrot.lane.b32.xlu0 %v472, 126
        %v767 = vpop.permute.xlu0 %766
        %768 = vrot.lane.b32.xlu0 %v473, 126
        %v769 = vpop.permute.xlu0 %768
        %770 = vrot.lane.b32.xlu0 %v474, 126
        %v771 = vpop.permute.xlu0 %770
        %vm772 = vcmask 1031168
        %v773 = vsel %vm772, %v759, %v761
        %v774 = vsel %vm772, %v761, %v763
        %v775 = vsel %vm772, %v763, %v765
        %v776 = vsel %vm772, %v765, %v767
        %v777 = vsel %vm772, %v767, %v769
        %v778 = vsel %vm772, %v769, %v771
        %v780 = vsel %vm496, %v757, 0
        %v783 = vand.u32 %v773, %v503
        %v786 = vand.u32 %v774, %v503
        %v789 = vand.u32 %v775, %v503
        %v792 = vand.u32 %v776, %v503
        %v795 = vand.u32 %v777, %v503
        %v798 = vand.u32 %v778, %v503
        %v801 = vand.u32 %v771, %v503
        %803 = vmatpush.bf16.msra.mxu0 0
        %804 = vmatpush.bf16.msra.mxu0 0
        %805 = vmatpush.bf16.msra.mxu0 0
        %806 = vmatpush.bf16.msra.mxu0 0
        %807 = vmatpush.bf16.msra.mxu0 0
        %808 = vmatpush.bf16.msra.mxu0 0
        %809 = vmatpush.bf16.msra.mxu0 0
        %810 = vmatpush.bf16.msra.mxu0 %v783
        %811 = vmatmul.bf16.gmra.mxu0 %v780
        %v812 = vpop.f32.mrf.mxu0
        %v813 = vadd.f32 0.0, %v812
        %v814 = vpop.f32.mrf.mxu0
        %v815 = vadd.f32 0.0, %v814
        %816 = vdwg.mxu0
        %817 = vmatpush.bf16.msra.mxu0 0
        %818 = vmatpush.bf16.msra.mxu0 0
        %819 = vmatpush.bf16.msra.mxu0 0
        %820 = vmatpush.bf16.msra.mxu0 0
        %821 = vmatpush.bf16.msra.mxu0 0
        %822 = vmatpush.bf16.msra.mxu0 0
        %823 = vmatpush.bf16.msra.mxu0 0
        %824 = vmatpush.bf16.msra.mxu0 %v786
        %825 = vmatmul.bf16.gmra.mxu0 %v780
        %v826 = vpop.f32.mrf.mxu0
        %v827 = vadd.f32 0.0, %v826
        %v828 = vpop.f32.mrf.mxu0
        %v829 = vadd.f32 0.0, %v828
        %830 = vdwg.mxu0
        %831 = vmatpush.bf16.msra.mxu0 0
        %832 = vmatpush.bf16.msra.mxu0 0
        %833 = vmatpush.bf16.msra.mxu0 0
        %834 = vmatpush.bf16.msra.mxu0 0
        %835 = vmatpush.bf16.msra.mxu0 0
        %836 = vmatpush.bf16.msra.mxu0 0
        %837 = vmatpush.bf16.msra.mxu0 0
        %838 = vmatpush.bf16.msra.mxu0 %v789
        %839 = vmatmul.bf16.gmra.mxu0 %v780
        %v840 = vpop.f32.mrf.mxu0
        %v841 = vadd.f32 0.0, %v840
        %v842 = vpop.f32.mrf.mxu0
        %v843 = vadd.f32 0.0, %v842
        %844 = vdwg.mxu0
        %845 = vmatpush.bf16.msra.mxu0 0
        %846 = vmatpush.bf16.msra.mxu0 0
        %847 = vmatpush.bf16.msra.mxu0 0
        %848 = vmatpush.bf16.msra.mxu0 0
        %849 = vmatpush.bf16.msra.mxu0 0
        %850 = vmatpush.bf16.msra.mxu0 0
        %851 = vmatpush.bf16.msra.mxu0 0
        %852 = vmatpush.bf16.msra.mxu0 %v792
        %853 = vmatmul.bf16.gmra.mxu0 %v780
        %v854 = vpop.f32.mrf.mxu0
        %v855 = vadd.f32 0.0, %v854
        %v856 = vpop.f32.mrf.mxu0
        %v857 = vadd.f32 0.0, %v856
        %858 = vdwg.mxu0
        %859 = vmatpush.bf16.msra.mxu0 0
        %860 = vmatpush.bf16.msra.mxu0 0
        %861 = vmatpush.bf16.msra.mxu0 0
        %862 = vmatpush.bf16.msra.mxu0 0
        %863 = vmatpush.bf16.msra.mxu0 0
        %864 = vmatpush.bf16.msra.mxu0 0
        %865 = vmatpush.bf16.msra.mxu0 0
        %866 = vmatpush.bf16.msra.mxu0 %v795
        %867 = vmatmul.bf16.gmra.mxu0 %v780
        %v868 = vpop.f32.mrf.mxu0
        %v869 = vadd.f32 0.0, %v868
        %v870 = vpop.f32.mrf.mxu0
        %v871 = vadd.f32 0.0, %v870
        %872 = vdwg.mxu0
        %873 = vmatpush.bf16.msra.mxu0 0
        %874 = vmatpush.bf16.msra.mxu0 0
        %875 = vmatpush.bf16.msra.mxu0 0
        %876 = vmatpush.bf16.msra.mxu0 0
        %877 = vmatpush.bf16.msra.mxu0 0
        %878 = vmatpush.bf16.msra.mxu0 0
        %879 = vmatpush.bf16.msra.mxu0 0
        %880 = vmatpush.bf16.msra.mxu0 %v798
        %881 = vmatmul.bf16.gmra.mxu0 %v780
        %v882 = vpop.f32.mrf.mxu0
        %v883 = vadd.f32 0.0, %v882
        %v884 = vpop.f32.mrf.mxu0
        %v885 = vadd.f32 0.0, %v884
        %886 = vdwg.mxu0
        %887 = vmatpush.bf16.msra.mxu0 0
        %888 = vmatpush.bf16.msra.mxu0 0
        %889 = vmatpush.bf16.msra.mxu0 0
        %890 = vmatpush.bf16.msra.mxu0 0
        %891 = vmatpush.bf16.msra.mxu0 0
        %892 = vmatpush.bf16.msra.mxu0 0
        %893 = vmatpush.bf16.msra.mxu0 0
        %894 = vmatpush.bf16.msra.mxu0 %v801
        %895 = vmatmul.bf16.gmra.mxu0 %v780
        %v896 = vpop.f32.mrf.mxu0
        %v897 = vadd.f32 0.0, %v896
        %v898 = vpop.f32.mrf.mxu0
        %v899 = vadd.f32 0.0, %v898
        %900 = vdwg.mxu0
        %v901 = vadd.f32 %v662, %v813
        %v902 = vadd.f32 %v676, %v827
        %v903 = vadd.f32 %v690, %v841
        %v904 = vadd.f32 %v704, %v855
        %v905 = vadd.f32 %v718, %v869
        %v906 = vadd.f32 %v732, %v883
        %v907 = vadd.f32 %v746, %v897
        %v908 = vadd.f32 %v664, %v815
        %v909 = vadd.f32 %v678, %v829
        %v910 = vadd.f32 %v692, %v843
        %v911 = vadd.f32 %v706, %v857
        %v912 = vadd.f32 %v720, %v871
        %v913 = vadd.f32 %v734, %v885
        %v914 = vadd.f32 %v748, %v899
        %s915 = scalar_lea.vmem %s1, 24
        %v916 = vld [vmem:[%s915] sm:$0xf]
        %v917 = vld [vmem:[%s915 + $0x4] sm:$0x3]
        %v920 = vunpack.c.l.b16 %v916
        %v921 = vunpack.c.l.b16 %v917
        %v922 = vpack.c.b16 %v921, %v920
        %923 = vrot.lane.b32.xlu0 %v468, 125
        %v924 = vpop.permute.xlu0 %923
        %925 = vrot.lane.b32.xlu0 %v469, 125
        %v926 = vpop.permute.xlu0 %925
        %927 = vrot.lane.b32.xlu0 %v470, 125
        %v928 = vpop.permute.xlu0 %927
        %929 = vrot.lane.b32.xlu0 %v471, 125
        %v930 = vpop.permute.xlu0 %929
        %931 = vrot.lane.b32.xlu0 %v472, 125
        %v932 = vpop.permute.xlu0 %931
        %933 = vrot.lane.b32.xlu0 %v473, 125
        %v934 = vpop.permute.xlu0 %933
        %935 = vrot.lane.b32.xlu0 %v474, 125
        %v936 = vpop.permute.xlu0 %935
        %vm937 = vcmask 1022976
        %v938 = vsel %vm937, %v924, %v926
        %v939 = vsel %vm937, %v926, %v928
        %v940 = vsel %vm937, %v928, %v930
        %v941 = vsel %vm937, %v930, %v932
        %v942 = vsel %vm937, %v932, %v934
        %v943 = vsel %vm937, %v934, %v936
        %v945 = vsel %vm496, %v922, 0
        %v948 = vand.u32 %v938, %v503
        %v951 = vand.u32 %v939, %v503
        %v954 = vand.u32 %v940, %v503
        %v957 = vand.u32 %v941, %v503
        %v960 = vand.u32 %v942, %v503
        %v963 = vand.u32 %v943, %v503
        %v966 = vand.u32 %v936, %v503
        %968 = vmatpush.bf16.msra.mxu0 0
        %969 = vmatpush.bf16.msra.mxu0 0
        %970 = vmatpush.bf16.msra.mxu0 0
        %971 = vmatpush.bf16.msra.mxu0 0
        %972 = vmatpush.bf16.msra.mxu0 0
        %973 = vmatpush.bf16.msra.mxu0 0
        %974 = vmatpush.bf16.msra.mxu0 0
        %975 = vmatpush.bf16.msra.mxu0 %v948
        %976 = vmatmul.bf16.gmra.mxu0 %v945
        %v977 = vpop.f32.mrf.mxu0
        %v978 = vadd.f32 0.0, %v977
        %v979 = vpop.f32.mrf.mxu0
        %v980 = vadd.f32 0.0, %v979
        %981 = vdwg.mxu0
        %982 = vmatpush.bf16.msra.mxu0 0
        %983 = vmatpush.bf16.msra.mxu0 0
        %984 = vmatpush.bf16.msra.mxu0 0
        %985 = vmatpush.bf16.msra.mxu0 0
        %986 = vmatpush.bf16.msra.mxu0 0
        %987 = vmatpush.bf16.msra.mxu0 0
        %988 = vmatpush.bf16.msra.mxu0 0
        %989 = vmatpush.bf16.msra.mxu0 %v951
        %990 = vmatmul.bf16.gmra.mxu0 %v945
        %v991 = vpop.f32.mrf.mxu0
        %v992 = vadd.f32 0.0, %v991
        %v993 = vpop.f32.mrf.mxu0
        %v994 = vadd.f32 0.0, %v993
        %995 = vdwg.mxu0
        %996 = vmatpush.bf16.msra.mxu0 0
        %997 = vmatpush.bf16.msra.mxu0 0
        %998 = vmatpush.bf16.msra.mxu0 0
        %999 = vmatpush.bf16.msra.mxu0 0
        %1000 = vmatpush.bf16.msra.mxu0 0
        %1001 = vmatpush.bf16.msra.mxu0 0
        %1002 = vmatpush.bf16.msra.mxu0 0
        %1003 = vmatpush.bf16.msra.mxu0 %v954
        %1004 = vmatmul.bf16.gmra.mxu0 %v945
        %v1005 = vpop.f32.mrf.mxu0
        %v1006 = vadd.f32 0.0, %v1005
        %v1007 = vpop.f32.mrf.mxu0
        %v1008 = vadd.f32 0.0, %v1007
        %1009 = vdwg.mxu0
        %1010 = vmatpush.bf16.msra.mxu0 0
        %1011 = vmatpush.bf16.msra.mxu0 0
        %1012 = vmatpush.bf16.msra.mxu0 0
        %1013 = vmatpush.bf16.msra.mxu0 0
        %1014 = vmatpush.bf16.msra.mxu0 0
        %1015 = vmatpush.bf16.msra.mxu0 0
        %1016 = vmatpush.bf16.msra.mxu0 0
        %1017 = vmatpush.bf16.msra.mxu0 %v957
        %1018 = vmatmul.bf16.gmra.mxu0 %v945
        %v1019 = vpop.f32.mrf.mxu0
        %v1020 = vadd.f32 0.0, %v1019
        %v1021 = vpop.f32.mrf.mxu0
        %v1022 = vadd.f32 0.0, %v1021
        %1023 = vdwg.mxu0
        %1024 = vmatpush.bf16.msra.mxu0 0
        %1025 = vmatpush.bf16.msra.mxu0 0
        %1026 = vmatpush.bf16.msra.mxu0 0
        %1027 = vmatpush.bf16.msra.mxu0 0
        %1028 = vmatpush.bf16.msra.mxu0 0
        %1029 = vmatpush.bf16.msra.mxu0 0
        %1030 = vmatpush.bf16.msra.mxu0 0
        %1031 = vmatpush.bf16.msra.mxu0 %v960
        %1032 = vmatmul.bf16.gmra.mxu0 %v945
        %v1033 = vpop.f32.mrf.mxu0
        %v1034 = vadd.f32 0.0, %v1033
        %v1035 = vpop.f32.mrf.mxu0
        %v1036 = vadd.f32 0.0, %v1035
        %1037 = vdwg.mxu0
        %1038 = vmatpush.bf16.msra.mxu0 0
        %1039 = vmatpush.bf16.msra.mxu0 0
        %1040 = vmatpush.bf16.msra.mxu0 0
        %1041 = vmatpush.bf16.msra.mxu0 0
        %1042 = vmatpush.bf16.msra.mxu0 0
        %1043 = vmatpush.bf16.msra.mxu0 0
        %1044 = vmatpush.bf16.msra.mxu0 0
        %1045 = vmatpush.bf16.msra.mxu0 %v963
        %1046 = vmatmul.bf16.gmra.mxu0 %v945
        %v1047 = vpop.f32.mrf.mxu0
        %v1048 = vadd.f32 0.0, %v1047
        %v1049 = vpop.f32.mrf.mxu0
        %v1050 = vadd.f32 0.0, %v1049
        %1051 = vdwg.mxu0
        %1052 = vmatpush.bf16.msra.mxu0 0
        %1053 = vmatpush.bf16.msra.mxu0 0
        %1054 = vmatpush.bf16.msra.mxu0 0
        %1055 = vmatpush.bf16.msra.mxu0 0
        %1056 = vmatpush.bf16.msra.mxu0 0
        %1057 = vmatpush.bf16.msra.mxu0 0
        %1058 = vmatpush.bf16.msra.mxu0 0
        %1059 = vmatpush.bf16.msra.mxu0 %v966
        %1060 = vmatmul.bf16.gmra.mxu0 %v945
        %v1061 = vpop.f32.mrf.mxu0
        %v1062 = vadd.f32 0.0, %v1061
        %v1063 = vpop.f32.mrf.mxu0
        %v1064 = vadd.f32 0.0, %v1063
        %1065 = vdwg.mxu0
        %v1066 = vadd.f32 %v901, %v978
        %v1067 = vadd.f32 %v902, %v992
        %v1068 = vadd.f32 %v903, %v1006
        %v1069 = vadd.f32 %v904, %v1020
        %v1070 = vadd.f32 %v905, %v1034
        %v1071 = vadd.f32 %v906, %v1048
        %v1072 = vadd.f32 %v907, %v1062
        %v1073 = vadd.f32 %v908, %v980
        %v1074 = vadd.f32 %v909, %v994
        %v1075 = vadd.f32 %v910, %v1008
        %v1076 = vadd.f32 %v911, %v1022
        %v1077 = vadd.f32 %v912, %v1036
        %v1078 = vadd.f32 %v913, %v1050
        %v1079 = vadd.f32 %v914, %v1064
        %s1080 = scalar_lea.vmem %s1, 32
        %v1081 = vld [vmem:[%s1080] sm:$0xf]
        %v1082 = vld [vmem:[%s1080 + $0x4] sm:$0x3]
        %v1085 = vunpack.c.l.b16 %v1081
        %v1086 = vunpack.c.l.b16 %v1082
        %v1087 = vpack.c.b16 %v1086, %v1085
        %1088 = vrot.lane.b32.xlu0 %v468, 124
        %v1089 = vpop.permute.xlu0 %1088
        %1090 = vrot.lane.b32.xlu0 %v469, 124
        %v1091 = vpop.permute.xlu0 %1090
        %1092 = vrot.lane.b32.xlu0 %v470, 124
        %v1093 = vpop.permute.xlu0 %1092
        %1094 = vrot.lane.b32.xlu0 %v471, 124
        %v1095 = vpop.permute.xlu0 %1094
        %1096 = vrot.lane.b32.xlu0 %v472, 124
        %v1097 = vpop.permute.xlu0 %1096
        %1098 = vrot.lane.b32.xlu0 %v473, 124
        %v1099 = vpop.permute.xlu0 %1098
        %1100 = vrot.lane.b32.xlu0 %v474, 124
        %v1101 = vpop.permute.xlu0 %1100
        %vm1102 = vcmask 1014784
        %v1103 = vsel %vm1102, %v1089, %v1091
        %v1104 = vsel %vm1102, %v1091, %v1093
        %v1105 = vsel %vm1102, %v1093, %v1095
        %v1106 = vsel %vm1102, %v1095, %v1097
        %v1107 = vsel %vm1102, %v1097, %v1099
        %v1108 = vsel %vm1102, %v1099, %v1101
        %v1110 = vsel %vm496, %v1087, 0
        %v1113 = vand.u32 %v1103, %v503
        %v1116 = vand.u32 %v1104, %v503
        %v1119 = vand.u32 %v1105, %v503
        %v1122 = vand.u32 %v1106, %v503
        %v1125 = vand.u32 %v1107, %v503
        %v1128 = vand.u32 %v1108, %v503
        %v1131 = vand.u32 %v1101, %v503
        %1133 = vmatpush.bf16.msra.mxu0 0
        %1134 = vmatpush.bf16.msra.mxu0 0
        %1135 = vmatpush.bf16.msra.mxu0 0
        %1136 = vmatpush.bf16.msra.mxu0 0
        %1137 = vmatpush.bf16.msra.mxu0 0
        %1138 = vmatpush.bf16.msra.mxu0 0
        %1139 = vmatpush.bf16.msra.mxu0 0
        %1140 = vmatpush.bf16.msra.mxu0 %v1113
        %1141 = vmatmul.bf16.gmra.mxu0 %v1110
        %v1142 = vpop.f32.mrf.mxu0
        %v1143 = vadd.f32 0.0, %v1142
        %v1144 = vpop.f32.mrf.mxu0
        %v1145 = vadd.f32 0.0, %v1144
        %1146 = vdwg.mxu0
        %1147 = vmatpush.bf16.msra.mxu0 0
        %1148 = vmatpush.bf16.msra.mxu0 0
        %1149 = vmatpush.bf16.msra.mxu0 0
        %1150 = vmatpush.bf16.msra.mxu0 0
        %1151 = vmatpush.bf16.msra.mxu0 0
        %1152 = vmatpush.bf16.msra.mxu0 0
        %1153 = vmatpush.bf16.msra.mxu0 0
        %1154 = vmatpush.bf16.msra.mxu0 %v1116
        %1155 = vmatmul.bf16.gmra.mxu0 %v1110
        %v1156 = vpop.f32.mrf.mxu0
        %v1157 = vadd.f32 0.0, %v1156
        %v1158 = vpop.f32.mrf.mxu0
        %v1159 = vadd.f32 0.0, %v1158
        %1160 = vdwg.mxu0
        %1161 = vmatpush.bf16.msra.mxu0 0
        %1162 = vmatpush.bf16.msra.mxu0 0
        %1163 = vmatpush.bf16.msra.mxu0 0
        %1164 = vmatpush.bf16.msra.mxu0 0
        %1165 = vmatpush.bf16.msra.mxu0 0
        %1166 = vmatpush.bf16.msra.mxu0 0
        %1167 = vmatpush.bf16.msra.mxu0 0
        %1168 = vmatpush.bf16.msra.mxu0 %v1119
        %1169 = vmatmul.bf16.gmra.mxu0 %v1110
        %v1170 = vpop.f32.mrf.mxu0
        %v1171 = vadd.f32 0.0, %v1170
        %v1172 = vpop.f32.mrf.mxu0
        %v1173 = vadd.f32 0.0, %v1172
        %1174 = vdwg.mxu0
        %1175 = vmatpush.bf16.msra.mxu0 0
        %1176 = vmatpush.bf16.msra.mxu0 0
        %1177 = vmatpush.bf16.msra.mxu0 0
        %1178 = vmatpush.bf16.msra.mxu0 0
        %1179 = vmatpush.bf16.msra.mxu0 0
        %1180 = vmatpush.bf16.msra.mxu0 0
        %1181 = vmatpush.bf16.msra.mxu0 0
        %1182 = vmatpush.bf16.msra.mxu0 %v1122
        %1183 = vmatmul.bf16.gmra.mxu0 %v1110
        %v1184 = vpop.f32.mrf.mxu0
        %v1185 = vadd.f32 0.0, %v1184
        %v1186 = vpop.f32.mrf.mxu0
        %v1187 = vadd.f32 0.0, %v1186
        %1188 = vdwg.mxu0
        %1189 = vmatpush.bf16.msra.mxu0 0
        %1190 = vmatpush.bf16.msra.mxu0 0
        %1191 = vmatpush.bf16.msra.mxu0 0
        %1192 = vmatpush.bf16.msra.mxu0 0
        %1193 = vmatpush.bf16.msra.mxu0 0
        %1194 = vmatpush.bf16.msra.mxu0 0
        %1195 = vmatpush.bf16.msra.mxu0 0
        %1196 = vmatpush.bf16.msra.mxu0 %v1125
        %1197 = vmatmul.bf16.gmra.mxu0 %v1110
        %v1198 = vpop.f32.mrf.mxu0
        %v1199 = vadd.f32 0.0, %v1198
        %v1200 = vpop.f32.mrf.mxu0
        %v1201 = vadd.f32 0.0, %v1200
        %1202 = vdwg.mxu0
        %1203 = vmatpush.bf16.msra.mxu0 0
        %1204 = vmatpush.bf16.msra.mxu0 0
        %1205 = vmatpush.bf16.msra.mxu0 0
        %1206 = vmatpush.bf16.msra.mxu0 0
        %1207 = vmatpush.bf16.msra.mxu0 0
        %1208 = vmatpush.bf16.msra.mxu0 0
        %1209 = vmatpush.bf16.msra.mxu0 0
        %1210 = vmatpush.bf16.msra.mxu0 %v1128
        %1211 = vmatmul.bf16.gmra.mxu0 %v1110
        %v1212 = vpop.f32.mrf.mxu0
        %v1213 = vadd.f32 0.0, %v1212
        %v1214 = vpop.f32.mrf.mxu0
        %v1215 = vadd.f32 0.0, %v1214
        %1216 = vdwg.mxu0
        %1217 = vmatpush.bf16.msra.mxu0 0
        %1218 = vmatpush.bf16.msra.mxu0 0
        %1219 = vmatpush.bf16.msra.mxu0 0
        %1220 = vmatpush.bf16.msra.mxu0 0
        %1221 = vmatpush.bf16.msra.mxu0 0
        %1222 = vmatpush.bf16.msra.mxu0 0
        %1223 = vmatpush.bf16.msra.mxu0 0
        %1224 = vmatpush.bf16.msra.mxu0 %v1131
        %1225 = vmatmul.bf16.gmra.mxu0 %v1110
        %v1226 = vpop.f32.mrf.mxu0
        %v1227 = vadd.f32 0.0, %v1226
        %v1228 = vpop.f32.mrf.mxu0
        %v1229 = vadd.f32 0.0, %v1228
        %1230 = vdwg.mxu0
        %v1231 = vadd.f32 %v1066, %v1143
        %v1232 = vadd.f32 %v1067, %v1157
        %v1233 = vadd.f32 %v1068, %v1171
        %v1234 = vadd.f32 %v1069, %v1185
        %v1235 = vadd.f32 %v1070, %v1199
        %v1236 = vadd.f32 %v1071, %v1213
        %v1237 = vadd.f32 %v1072, %v1227
        %v1238 = vadd.f32 %v1073, %v1145
        %v1239 = vadd.f32 %v1074, %v1159
        %v1240 = vadd.f32 %v1075, %v1173
        %v1241 = vadd.f32 %v1076, %v1187
        %v1242 = vadd.f32 %v1077, %v1201
        %v1243 = vadd.f32 %v1078, %v1215
        %v1244 = vadd.f32 %v1079, %v1229
        %s1245 = scalar_lea.vmem %s1, 40
        %v1246 = vld [vmem:[%s1245] sm:$0xf]
        %v1247 = vld [vmem:[%s1245 + $0x4] sm:$0x3]
        %v1250 = vunpack.c.l.b16 %v1246
        %v1251 = vunpack.c.l.b16 %v1247
        %v1252 = vpack.c.b16 %v1251, %v1250
        %v1253 = vunpack.c.h.b16 %v446
        %v1254 = vpack.c.b16 %v1253, %v1253
        %1255 = vrot.lane.b32.xlu0 %v468, 96
        %v1256 = vpop.permute.xlu0 %1255
        %1257 = vrot.lane.b32.xlu0 %v469, 96
        %v1258 = vpop.permute.xlu0 %1257
        %1259 = vrot.lane.b32.xlu0 %v470, 96
        %v1260 = vpop.permute.xlu0 %1259
        %1261 = vrot.lane.b32.xlu0 %v471, 96
        %v1262 = vpop.permute.xlu0 %1261
        %1263 = vrot.lane.b32.xlu0 %v472, 96
        %v1264 = vpop.permute.xlu0 %1263
        %1265 = vrot.lane.b32.xlu0 %v473, 96
        %v1266 = vpop.permute.xlu0 %1265
        %1267 = vrot.lane.b32.xlu0 %v474, 96
        %v1268 = vpop.permute.xlu0 %1267
        %1269 = vrot.lane.b32.xlu0 %v1254, 96
        %v1270 = vpop.permute.xlu0 %1269
        %vm1271 = vcmask 785408
        %v1272 = vsel %vm1271, %v1256, %v1258
        %v1273 = vsel %vm1271, %v1258, %v1260
        %v1274 = vsel %vm1271, %v1260, %v1262
        %v1275 = vsel %vm1271, %v1262, %v1264
        %v1276 = vsel %vm1271, %v1264, %v1266
        %v1277 = vsel %vm1271, %v1266, %v1268
        %v1278 = vsel %vm1271, %v1268, %v1270
        %v1280 = vsel %vm496, %v1252, 0
        %v1283 = vand.u32 %v1272, %v503
        %v1286 = vand.u32 %v1273, %v503
        %v1289 = vand.u32 %v1274, %v503
        %v1292 = vand.u32 %v1275, %v503
        %v1295 = vand.u32 %v1276, %v503
        %v1298 = vand.u32 %v1277, %v503
        %v1301 = vand.u32 %v1278, %v503
        %1303 = vmatpush.bf16.msra.mxu0 0
        %1304 = vmatpush.bf16.msra.mxu0 0
        %1305 = vmatpush.bf16.msra.mxu0 0
        %1306 = vmatpush.bf16.msra.mxu0 0
        %1307 = vmatpush.bf16.msra.mxu0 0
        %1308 = vmatpush.bf16.msra.mxu0 0
        %1309 = vmatpush.bf16.msra.mxu0 0
        %1310 = vmatpush.bf16.msra.mxu0 %v1283
        %1311 = vmatmul.bf16.gmra.mxu0 %v1280
        %v1312 = vpop.f32.mrf.mxu0
        %v1313 = vadd.f32 0.0, %v1312
        %v1314 = vpop.f32.mrf.mxu0
        %v1315 = vadd.f32 0.0, %v1314
        %1316 = vdwg.mxu0
        %1317 = vmatpush.bf16.msra.mxu0 0
        %1318 = vmatpush.bf16.msra.mxu0 0
        %1319 = vmatpush.bf16.msra.mxu0 0
        %1320 = vmatpush.bf16.msra.mxu0 0
        %1321 = vmatpush.bf16.msra.mxu0 0
        %1322 = vmatpush.bf16.msra.mxu0 0
        %1323 = vmatpush.bf16.msra.mxu0 0
        %1324 = vmatpush.bf16.msra.mxu0 %v1286
        %1325 = vmatmul.bf16.gmra.mxu0 %v1280
        %v1326 = vpop.f32.mrf.mxu0
        %v1327 = vadd.f32 0.0, %v1326
        %v1328 = vpop.f32.mrf.mxu0
        %v1329 = vadd.f32 0.0, %v1328
        %1330 = vdwg.mxu0
        %1331 = vmatpush.bf16.msra.mxu0 0
        %1332 = vmatpush.bf16.msra.mxu0 0
        %1333 = vmatpush.bf16.msra.mxu0 0
        %1334 = vmatpush.bf16.msra.mxu0 0
        %1335 = vmatpush.bf16.msra.mxu0 0
        %1336 = vmatpush.bf16.msra.mxu0 0
        %1337 = vmatpush.bf16.msra.mxu0 0
        %1338 = vmatpush.bf16.msra.mxu0 %v1289
        %1339 = vmatmul.bf16.gmra.mxu0 %v1280
        %v1340 = vpop.f32.mrf.mxu0
        %v1341 = vadd.f32 0.0, %v1340
        %v1342 = vpop.f32.mrf.mxu0
        %v1343 = vadd.f32 0.0, %v1342
        %1344 = vdwg.mxu0
        %1345 = vmatpush.bf16.msra.mxu0 0
        %1346 = vmatpush.bf16.msra.mxu0 0
        %1347 = vmatpush.bf16.msra.mxu0 0
        %1348 = vmatpush.bf16.msra.mxu0 0
        %1349 = vmatpush.bf16.msra.mxu0 0
        %1350 = vmatpush.bf16.msra.mxu0 0
        %1351 = vmatpush.bf16.msra.mxu0 0
        %1352 = vmatpush.bf16.msra.mxu0 %v1292
        %1353 = vmatmul.bf16.gmra.mxu0 %v1280
        %v1354 = vpop.f32.mrf.mxu0
        %v1355 = vadd.f32 0.0, %v1354
        %v1356 = vpop.f32.mrf.mxu0
        %v1357 = vadd.f32 0.0, %v1356
        %1358 = vdwg.mxu0
        %1359 = vmatpush.bf16.msra.mxu0 0
        %1360 = vmatpush.bf16.msra.mxu0 0
        %1361 = vmatpush.bf16.msra.mxu0 0
        %1362 = vmatpush.bf16.msra.mxu0 0
        %1363 = vmatpush.bf16.msra.mxu0 0
        %1364 = vmatpush.bf16.msra.mxu0 0
        %1365 = vmatpush.bf16.msra.mxu0 0
        %1366 = vmatpush.bf16.msra.mxu0 %v1295
        %1367 = vmatmul.bf16.gmra.mxu0 %v1280
        %v1368 = vpop.f32.mrf.mxu0
        %v1369 = vadd.f32 0.0, %v1368
        %v1370 = vpop.f32.mrf.mxu0
        %v1371 = vadd.f32 0.0, %v1370
        %1372 = vdwg.mxu0
        %1373 = vmatpush.bf16.msra.mxu0 0
        %1374 = vmatpush.bf16.msra.mxu0 0
        %1375 = vmatpush.bf16.msra.mxu0 0
        %1376 = vmatpush.bf16.msra.mxu0 0
        %1377 = vmatpush.bf16.msra.mxu0 0
        %1378 = vmatpush.bf16.msra.mxu0 0
        %1379 = vmatpush.bf16.msra.mxu0 0
        %1380 = vmatpush.bf16.msra.mxu0 %v1298
        %1381 = vmatmul.bf16.gmra.mxu0 %v1280
        %v1382 = vpop.f32.mrf.mxu0
        %v1383 = vadd.f32 0.0, %v1382
        %v1384 = vpop.f32.mrf.mxu0
        %v1385 = vadd.f32 0.0, %v1384
        %1386 = vdwg.mxu0
        %1387 = vmatpush.bf16.msra.mxu0 0
        %1388 = vmatpush.bf16.msra.mxu0 0
        %1389 = vmatpush.bf16.msra.mxu0 0
        %1390 = vmatpush.bf16.msra.mxu0 0
        %1391 = vmatpush.bf16.msra.mxu0 0
        %1392 = vmatpush.bf16.msra.mxu0 0
        %1393 = vmatpush.bf16.msra.mxu0 0
        %1394 = vmatpush.bf16.msra.mxu0 %v1301
        %1395 = vmatmul.bf16.gmra.mxu0 %v1280
        %v1396 = vpop.f32.mrf.mxu0
        %v1397 = vadd.f32 0.0, %v1396
        %v1398 = vpop.f32.mrf.mxu0
        %v1399 = vadd.f32 0.0, %v1398
        %1400 = vdwg.mxu0
        %v1401 = vadd.f32 %v1231, %v1313
        %v1402 = vadd.f32 %v1232, %v1327
        %v1403 = vadd.f32 %v1233, %v1341
        %v1404 = vadd.f32 %v1234, %v1355
        %v1405 = vadd.f32 %v1235, %v1369
        %v1406 = vadd.f32 %v1236, %v1383
        %v1407 = vadd.f32 %v1237, %v1397
        %v1408 = vadd.f32 %v1238, %v1315
        %v1409 = vadd.f32 %v1239, %v1329
        %v1410 = vadd.f32 %v1240, %v1343
        %v1411 = vadd.f32 %v1241, %v1357
        %v1412 = vadd.f32 %v1242, %v1371
        %v1413 = vadd.f32 %v1243, %v1385
        %v1414 = vadd.f32 %v1244, %v1399
        %s1415 = scalar_lea.vmem %s1, 48
        %v1416 = vld [vmem:[%s1415] sm:$0xf]
        %v1417 = vld [vmem:[%s1415 + $0x4] sm:$0x3]
        %v1420 = vunpack.c.l.b16 %v1416
        %v1421 = vunpack.c.l.b16 %v1417
        %v1422 = vpack.c.b16 %v1421, %v1420
        %1423 = vrot.lane.b32.xlu0 %v468, 95
        %v1424 = vpop.permute.xlu0 %1423
        %1425 = vrot.lane.b32.xlu0 %v469, 95
        %v1426 = vpop.permute.xlu0 %1425
        %1427 = vrot.lane.b32.xlu0 %v470, 95
        %v1428 = vpop.permute.xlu0 %1427
        %1429 = vrot.lane.b32.xlu0 %v471, 95
        %v1430 = vpop.permute.xlu0 %1429
        %1431 = vrot.lane.b32.xlu0 %v472, 95
        %v1432 = vpop.permute.xlu0 %1431
        %1433 = vrot.lane.b32.xlu0 %v473, 95
        %v1434 = vpop.permute.xlu0 %1433
        %1435 = vrot.lane.b32.xlu0 %v474, 95
        %v1436 = vpop.permute.xlu0 %1435
        %1437 = vrot.lane.b32.xlu0 %v1254, 95
        %v1438 = vpop.permute.xlu0 %1437
        %vm1439 = vcmask 777216
        %v1440 = vsel %vm1439, %v1424, %v1426
        %v1441 = vsel %vm1439, %v1426, %v1428
        %v1442 = vsel %vm1439, %v1428, %v1430
        %v1443 = vsel %vm1439, %v1430, %v1432
        %v1444 = vsel %vm1439, %v1432, %v1434
        %v1445 = vsel %vm1439, %v1434, %v1436
        %v1446 = vsel %vm1439, %v1436, %v1438
        %v1448 = vsel %vm496, %v1422, 0
        %v1451 = vand.u32 %v1440, %v503
        %v1454 = vand.u32 %v1441, %v503
        %v1457 = vand.u32 %v1442, %v503
        %v1460 = vand.u32 %v1443, %v503
        %v1463 = vand.u32 %v1444, %v503
        %v1466 = vand.u32 %v1445, %v503
        %v1469 = vand.u32 %v1446, %v503
        %1471 = vmatpush.bf16.msra.mxu0 0
        %1472 = vmatpush.bf16.msra.mxu0 0
        %1473 = vmatpush.bf16.msra.mxu0 0
        %1474 = vmatpush.bf16.msra.mxu0 0
        %1475 = vmatpush.bf16.msra.mxu0 0
        %1476 = vmatpush.bf16.msra.mxu0 0
        %1477 = vmatpush.bf16.msra.mxu0 0
        %1478 = vmatpush.bf16.msra.mxu0 %v1451
        %1479 = vmatmul.bf16.gmra.mxu0 %v1448
        %v1480 = vpop.f32.mrf.mxu0
        %v1481 = vadd.f32 0.0, %v1480
        %v1482 = vpop.f32.mrf.mxu0
        %v1483 = vadd.f32 0.0, %v1482
        %1484 = vdwg.mxu0
        %1485 = vmatpush.bf16.msra.mxu0 0
        %1486 = vmatpush.bf16.msra.mxu0 0
        %1487 = vmatpush.bf16.msra.mxu0 0
        %1488 = vmatpush.bf16.msra.mxu0 0
        %1489 = vmatpush.bf16.msra.mxu0 0
        %1490 = vmatpush.bf16.msra.mxu0 0
        %1491 = vmatpush.bf16.msra.mxu0 0
        %1492 = vmatpush.bf16.msra.mxu0 %v1454
        %1493 = vmatmul.bf16.gmra.mxu0 %v1448
        %v1494 = vpop.f32.mrf.mxu0
        %v1495 = vadd.f32 0.0, %v1494
        %v1496 = vpop.f32.mrf.mxu0
        %v1497 = vadd.f32 0.0, %v1496
        %1498 = vdwg.mxu0
        %1499 = vmatpush.bf16.msra.mxu0 0
        %1500 = vmatpush.bf16.msra.mxu0 0
        %1501 = vmatpush.bf16.msra.mxu0 0
        %1502 = vmatpush.bf16.msra.mxu0 0
        %1503 = vmatpush.bf16.msra.mxu0 0
        %1504 = vmatpush.bf16.msra.mxu0 0
        %1505 = vmatpush.bf16.msra.mxu0 0
        %1506 = vmatpush.bf16.msra.mxu0 %v1457
        %1507 = vmatmul.bf16.gmra.mxu0 %v1448
        %v1508 = vpop.f32.mrf.mxu0
        %v1509 = vadd.f32 0.0, %v1508
        %v1510 = vpop.f32.mrf.mxu0
        %v1511 = vadd.f32 0.0, %v1510
        %1512 = vdwg.mxu0
        %1513 = vmatpush.bf16.msra.mxu0 0
        %1514 = vmatpush.bf16.msra.mxu0 0
        %1515 = vmatpush.bf16.msra.mxu0 0
        %1516 = vmatpush.bf16.msra.mxu0 0
        %1517 = vmatpush.bf16.msra.mxu0 0
        %1518 = vmatpush.bf16.msra.mxu0 0
        %1519 = vmatpush.bf16.msra.mxu0 0
        %1520 = vmatpush.bf16.msra.mxu0 %v1460
        %1521 = vmatmul.bf16.gmra.mxu0 %v1448
        %v1522 = vpop.f32.mrf.mxu0
        %v1523 = vadd.f32 0.0, %v1522
        %v1524 = vpop.f32.mrf.mxu0
        %v1525 = vadd.f32 0.0, %v1524
        %1526 = vdwg.mxu0
        %1527 = vmatpush.bf16.msra.mxu0 0
        %1528 = vmatpush.bf16.msra.mxu0 0
        %1529 = vmatpush.bf16.msra.mxu0 0
        %1530 = vmatpush.bf16.msra.mxu0 0
        %1531 = vmatpush.bf16.msra.mxu0 0
        %1532 = vmatpush.bf16.msra.mxu0 0
        %1533 = vmatpush.bf16.msra.mxu0 0
        %1534 = vmatpush.bf16.msra.mxu0 %v1463
        %1535 = vmatmul.bf16.gmra.mxu0 %v1448
        %v1536 = vpop.f32.mrf.mxu0
        %v1537 = vadd.f32 0.0, %v1536
        %v1538 = vpop.f32.mrf.mxu0
        %v1539 = vadd.f32 0.0, %v1538
        %1540 = vdwg.mxu0
        %1541 = vmatpush.bf16.msra.mxu0 0
        %1542 = vmatpush.bf16.msra.mxu0 0
        %1543 = vmatpush.bf16.msra.mxu0 0
        %1544 = vmatpush.bf16.msra.mxu0 0
        %1545 = vmatpush.bf16.msra.mxu0 0
        %1546 = vmatpush.bf16.msra.mxu0 0
        %1547 = vmatpush.bf16.msra.mxu0 0
        %1548 = vmatpush.bf16.msra.mxu0 %v1466
        %1549 = vmatmul.bf16.gmra.mxu0 %v1448
        %v1550 = vpop.f32.mrf.mxu0
        %v1551 = vadd.f32 0.0, %v1550
        %v1552 = vpop.f32.mrf.mxu0
        %v1553 = vadd.f32 0.0, %v1552
        %1554 = vdwg.mxu0
        %1555 = vmatpush.bf16.msra.mxu0 0
        %1556 = vmatpush.bf16.msra.mxu0 0
        %1557 = vmatpush.bf16.msra.mxu0 0
        %1558 = vmatpush.bf16.msra.mxu0 0
        %1559 = vmatpush.bf16.msra.mxu0 0
        %1560 = vmatpush.bf16.msra.mxu0 0
        %1561 = vmatpush.bf16.msra.mxu0 0
        %1562 = vmatpush.bf16.msra.mxu0 %v1469
        %1563 = vmatmul.bf16.gmra.mxu0 %v1448
        %v1564 = vpop.f32.mrf.mxu0
        %v1565 = vadd.f32 0.0, %v1564
        %v1566 = vpop.f32.mrf.mxu0
        %v1567 = vadd.f32 0.0, %v1566
        %1568 = vdwg.mxu0
        %v1569 = vadd.f32 %v1401, %v1481
        %v1570 = vadd.f32 %v1402, %v1495
        %v1571 = vadd.f32 %v1403, %v1509
        %v1572 = vadd.f32 %v1404, %v1523
        %v1573 = vadd.f32 %v1405, %v1537
        %v1574 = vadd.f32 %v1406, %v1551
        %v1575 = vadd.f32 %v1407, %v1565
        %v1576 = vadd.f32 %v1408, %v1483
        %v1577 = vadd.f32 %v1409, %v1497
        %v1578 = vadd.f32 %v1410, %v1511
        %v1579 = vadd.f32 %v1411, %v1525
        %v1580 = vadd.f32 %v1412, %v1539
        %v1581 = vadd.f32 %v1413, %v1553
        %v1582 = vadd.f32 %v1414, %v1567
        %s1583 = scalar_lea.vmem %s1, 56
        %v1584 = vld [vmem:[%s1583] sm:$0xf]
        %v1585 = vld [vmem:[%s1583 + $0x4] sm:$0x3]
        %v1588 = vunpack.c.l.b16 %v1584
        %v1589 = vunpack.c.l.b16 %v1585
        %v1590 = vpack.c.b16 %v1589, %v1588
        %1591 = vrot.lane.b32.xlu0 %v468, 94
        %v1592 = vpop.permute.xlu0 %1591
        %1593 = vrot.lane.b32.xlu0 %v469, 94
        %v1594 = vpop.permute.xlu0 %1593
        %1595 = vrot.lane.b32.xlu0 %v470, 94
        %v1596 = vpop.permute.xlu0 %1595
        %1597 = vrot.lane.b32.xlu0 %v471, 94
        %v1598 = vpop.permute.xlu0 %1597
        %1599 = vrot.lane.b32.xlu0 %v472, 94
        %v1600 = vpop.permute.xlu0 %1599
        %1601 = vrot.lane.b32.xlu0 %v473, 94
        %v1602 = vpop.permute.xlu0 %1601
        %1603 = vrot.lane.b32.xlu0 %v474, 94
        %v1604 = vpop.permute.xlu0 %1603
        %1605 = vrot.lane.b32.xlu0 %v1254, 94
        %v1606 = vpop.permute.xlu0 %1605
        %vm1607 = vcmask 769024
        %v1608 = vsel %vm1607, %v1592, %v1594
        %v1609 = vsel %vm1607, %v1594, %v1596
        %v1610 = vsel %vm1607, %v1596, %v1598
        %v1611 = vsel %vm1607, %v1598, %v1600
        %v1612 = vsel %vm1607, %v1600, %v1602
        %v1613 = vsel %vm1607, %v1602, %v1604
        %v1614 = vsel %vm1607, %v1604, %v1606
        %v1616 = vsel %vm496, %v1590, 0
        %v1619 = vand.u32 %v1608, %v503
        %v1622 = vand.u32 %v1609, %v503
        %v1625 = vand.u32 %v1610, %v503
        %v1628 = vand.u32 %v1611, %v503
        %v1631 = vand.u32 %v1612, %v503
        %v1634 = vand.u32 %v1613, %v503
        %v1637 = vand.u32 %v1614, %v503
        %1639 = vmatpush.bf16.msra.mxu0 0
        %1640 = vmatpush.bf16.msra.mxu0 0
        %1641 = vmatpush.bf16.msra.mxu0 0
        %1642 = vmatpush.bf16.msra.mxu0 0
        %1643 = vmatpush.bf16.msra.mxu0 0
        %1644 = vmatpush.bf16.msra.mxu0 0
        %1645 = vmatpush.bf16.msra.mxu0 0
        %1646 = vmatpush.bf16.msra.mxu0 %v1619
        %1647 = vmatmul.bf16.gmra.mxu0 %v1616
        %v1648 = vpop.f32.mrf.mxu0
        %v1649 = vadd.f32 0.0, %v1648
        %v1650 = vpop.f32.mrf.mxu0
        %v1651 = vadd.f32 0.0, %v1650
        %1652 = vdwg.mxu0
        %1653 = vmatpush.bf16.msra.mxu0 0
        %1654 = vmatpush.bf16.msra.mxu0 0
        %1655 = vmatpush.bf16.msra.mxu0 0
        %1656 = vmatpush.bf16.msra.mxu0 0
        %1657 = vmatpush.bf16.msra.mxu0 0
        %1658 = vmatpush.bf16.msra.mxu0 0
        %1659 = vmatpush.bf16.msra.mxu0 0
        %1660 = vmatpush.bf16.msra.mxu0 %v1622
        %1661 = vmatmul.bf16.gmra.mxu0 %v1616
        %v1662 = vpop.f32.mrf.mxu0
        %v1663 = vadd.f32 0.0, %v1662
        %v1664 = vpop.f32.mrf.mxu0
        %v1665 = vadd.f32 0.0, %v1664
        %1666 = vdwg.mxu0
        %1667 = vmatpush.bf16.msra.mxu0 0
        %1668 = vmatpush.bf16.msra.mxu0 0
        %1669 = vmatpush.bf16.msra.mxu0 0
        %1670 = vmatpush.bf16.msra.mxu0 0
        %1671 = vmatpush.bf16.msra.mxu0 0
        %1672 = vmatpush.bf16.msra.mxu0 0
        %1673 = vmatpush.bf16.msra.mxu0 0
        %1674 = vmatpush.bf16.msra.mxu0 %v1625
        %1675 = vmatmul.bf16.gmra.mxu0 %v1616
        %v1676 = vpop.f32.mrf.mxu0
        %v1677 = vadd.f32 0.0, %v1676
        %v1678 = vpop.f32.mrf.mxu0
        %v1679 = vadd.f32 0.0, %v1678
        %1680 = vdwg.mxu0
        %1681 = vmatpush.bf16.msra.mxu0 0
        %1682 = vmatpush.bf16.msra.mxu0 0
        %1683 = vmatpush.bf16.msra.mxu0 0
        %1684 = vmatpush.bf16.msra.mxu0 0
        %1685 = vmatpush.bf16.msra.mxu0 0
        %1686 = vmatpush.bf16.msra.mxu0 0
        %1687 = vmatpush.bf16.msra.mxu0 0
        %1688 = vmatpush.bf16.msra.mxu0 %v1628
        %1689 = vmatmul.bf16.gmra.mxu0 %v1616
        %v1690 = vpop.f32.mrf.mxu0
        %v1691 = vadd.f32 0.0, %v1690
        %v1692 = vpop.f32.mrf.mxu0
        %v1693 = vadd.f32 0.0, %v1692
        %1694 = vdwg.mxu0
        %1695 = vmatpush.bf16.msra.mxu0 0
        %1696 = vmatpush.bf16.msra.mxu0 0
        %1697 = vmatpush.bf16.msra.mxu0 0
        %1698 = vmatpush.bf16.msra.mxu0 0
        %1699 = vmatpush.bf16.msra.mxu0 0
        %1700 = vmatpush.bf16.msra.mxu0 0
        %1701 = vmatpush.bf16.msra.mxu0 0
        %1702 = vmatpush.bf16.msra.mxu0 %v1631
        %1703 = vmatmul.bf16.gmra.mxu0 %v1616
        %v1704 = vpop.f32.mrf.mxu0
        %v1705 = vadd.f32 0.0, %v1704
        %v1706 = vpop.f32.mrf.mxu0
        %v1707 = vadd.f32 0.0, %v1706
        %1708 = vdwg.mxu0
        %1709 = vmatpush.bf16.msra.mxu0 0
        %1710 = vmatpush.bf16.msra.mxu0 0
        %1711 = vmatpush.bf16.msra.mxu0 0
        %1712 = vmatpush.bf16.msra.mxu0 0
        %1713 = vmatpush.bf16.msra.mxu0 0
        %1714 = vmatpush.bf16.msra.mxu0 0
        %1715 = vmatpush.bf16.msra.mxu0 0
        %1716 = vmatpush.bf16.msra.mxu0 %v1634
        %1717 = vmatmul.bf16.gmra.mxu0 %v1616
        %v1718 = vpop.f32.mrf.mxu0
        %v1719 = vadd.f32 0.0, %v1718
        %v1720 = vpop.f32.mrf.mxu0
        %v1721 = vadd.f32 0.0, %v1720
        %1722 = vdwg.mxu0
        %1723 = vmatpush.bf16.msra.mxu0 0
        %1724 = vmatpush.bf16.msra.mxu0 0
        %1725 = vmatpush.bf16.msra.mxu0 0
        %1726 = vmatpush.bf16.msra.mxu0 0
        %1727 = vmatpush.bf16.msra.mxu0 0
        %1728 = vmatpush.bf16.msra.mxu0 0
        %1729 = vmatpush.bf16.msra.mxu0 0
        %1730 = vmatpush.bf16.msra.mxu0 %v1637
        %1731 = vmatmul.bf16.gmra.mxu0 %v1616
        %v1732 = vpop.f32.mrf.mxu0
        %v1733 = vadd.f32 0.0, %v1732
        %v1734 = vpop.f32.mrf.mxu0
        %v1735 = vadd.f32 0.0, %v1734
        %1736 = vdwg.mxu0
        %v1737 = vadd.f32 %v1569, %v1649
        %v1738 = vadd.f32 %v1570, %v1663
        %v1739 = vadd.f32 %v1571, %v1677
        %v1740 = vadd.f32 %v1572, %v1691
        %v1741 = vadd.f32 %v1573, %v1705
        %v1742 = vadd.f32 %v1574, %v1719
        %v1743 = vadd.f32 %v1575, %v1733
        %v1744 = vadd.f32 %v1576, %v1651
        %v1745 = vadd.f32 %v1577, %v1665
        %v1746 = vadd.f32 %v1578, %v1679
        %v1747 = vadd.f32 %v1579, %v1693
        %v1748 = vadd.f32 %v1580, %v1707
        %v1749 = vadd.f32 %v1581, %v1721
        %v1750 = vadd.f32 %v1582, %v1735
        %s1751 = scalar_lea.vmem %s1, 64
        %v1752 = vld [vmem:[%s1751] sm:$0xf]
        %v1753 = vld [vmem:[%s1751 + $0x4] sm:$0x3]
        %v1756 = vunpack.c.l.b16 %v1752
        %v1757 = vunpack.c.l.b16 %v1753
        %v1758 = vpack.c.b16 %v1757, %v1756
        %1759 = vrot.lane.b32.xlu0 %v468, 93
        %v1760 = vpop.permute.xlu0 %1759
        %1761 = vrot.lane.b32.xlu0 %v469, 93
        %v1762 = vpop.permute.xlu0 %1761
        %1763 = vrot.lane.b32.xlu0 %v470, 93
        %v1764 = vpop.permute.xlu0 %1763
        %1765 = vrot.lane.b32.xlu0 %v471, 93
        %v1766 = vpop.permute.xlu0 %1765
        %1767 = vrot.lane.b32.xlu0 %v472, 93
        %v1768 = vpop.permute.xlu0 %1767
        %1769 = vrot.lane.b32.xlu0 %v473, 93
        %v1770 = vpop.permute.xlu0 %1769
        %1771 = vrot.lane.b32.xlu0 %v474, 93
        %v1772 = vpop.permute.xlu0 %1771
        %1773 = vrot.lane.b32.xlu0 %v1254, 93
        %v1774 = vpop.permute.xlu0 %1773
        %vm1775 = vcmask 760832
        %v1776 = vsel %vm1775, %v1760, %v1762
        %v1777 = vsel %vm1775, %v1762, %v1764
        %v1778 = vsel %vm1775, %v1764, %v1766
        %v1779 = vsel %vm1775, %v1766, %v1768
        %v1780 = vsel %vm1775, %v1768, %v1770
        %v1781 = vsel %vm1775, %v1770, %v1772
        %v1782 = vsel %vm1775, %v1772, %v1774
        %v1784 = vsel %vm496, %v1758, 0
        %v1787 = vand.u32 %v1776, %v503
        %v1790 = vand.u32 %v1777, %v503
        %v1793 = vand.u32 %v1778, %v503
        %v1796 = vand.u32 %v1779, %v503
        %v1799 = vand.u32 %v1780, %v503
        %v1802 = vand.u32 %v1781, %v503
        %v1805 = vand.u32 %v1782, %v503
        %1807 = vmatpush.bf16.msra.mxu0 0
        %1808 = vmatpush.bf16.msra.mxu0 0
        %1809 = vmatpush.bf16.msra.mxu0 0
        %1810 = vmatpush.bf16.msra.mxu0 0
        %1811 = vmatpush.bf16.msra.mxu0 0
        %1812 = vmatpush.bf16.msra.mxu0 0
        %1813 = vmatpush.bf16.msra.mxu0 0
        %1814 = vmatpush.bf16.msra.mxu0 %v1787
        %1815 = vmatmul.bf16.gmra.mxu0 %v1784
        %v1816 = vpop.f32.mrf.mxu0
        %v1817 = vadd.f32 0.0, %v1816
        %v1818 = vpop.f32.mrf.mxu0
        %v1819 = vadd.f32 0.0, %v1818
        %1820 = vdwg.mxu0
        %1821 = vmatpush.bf16.msra.mxu0 0
        %1822 = vmatpush.bf16.msra.mxu0 0
        %1823 = vmatpush.bf16.msra.mxu0 0
        %1824 = vmatpush.bf16.msra.mxu0 0
        %1825 = vmatpush.bf16.msra.mxu0 0
        %1826 = vmatpush.bf16.msra.mxu0 0
        %1827 = vmatpush.bf16.msra.mxu0 0
        %1828 = vmatpush.bf16.msra.mxu0 %v1790
        %1829 = vmatmul.bf16.gmra.mxu0 %v1784
        %v1830 = vpop.f32.mrf.mxu0
        %v1831 = vadd.f32 0.0, %v1830
        %v1832 = vpop.f32.mrf.mxu0
        %v1833 = vadd.f32 0.0, %v1832
        %1834 = vdwg.mxu0
        %1835 = vmatpush.bf16.msra.mxu0 0
        %1836 = vmatpush.bf16.msra.mxu0 0
        %1837 = vmatpush.bf16.msra.mxu0 0
        %1838 = vmatpush.bf16.msra.mxu0 0
        %1839 = vmatpush.bf16.msra.mxu0 0
        %1840 = vmatpush.bf16.msra.mxu0 0
        %1841 = vmatpush.bf16.msra.mxu0 0
        %1842 = vmatpush.bf16.msra.mxu0 %v1793
        %1843 = vmatmul.bf16.gmra.mxu0 %v1784
        %v1844 = vpop.f32.mrf.mxu0
        %v1845 = vadd.f32 0.0, %v1844
        %v1846 = vpop.f32.mrf.mxu0
        %v1847 = vadd.f32 0.0, %v1846
        %1848 = vdwg.mxu0
        %1849 = vmatpush.bf16.msra.mxu0 0
        %1850 = vmatpush.bf16.msra.mxu0 0
        %1851 = vmatpush.bf16.msra.mxu0 0
        %1852 = vmatpush.bf16.msra.mxu0 0
        %1853 = vmatpush.bf16.msra.mxu0 0
        %1854 = vmatpush.bf16.msra.mxu0 0
        %1855 = vmatpush.bf16.msra.mxu0 0
        %1856 = vmatpush.bf16.msra.mxu0 %v1796
        %1857 = vmatmul.bf16.gmra.mxu0 %v1784
        %v1858 = vpop.f32.mrf.mxu0
        %v1859 = vadd.f32 0.0, %v1858
        %v1860 = vpop.f32.mrf.mxu0
        %v1861 = vadd.f32 0.0, %v1860
        %1862 = vdwg.mxu0
        %1863 = vmatpush.bf16.msra.mxu0 0
        %1864 = vmatpush.bf16.msra.mxu0 0
        %1865 = vmatpush.bf16.msra.mxu0 0
        %1866 = vmatpush.bf16.msra.mxu0 0
        %1867 = vmatpush.bf16.msra.mxu0 0
        %1868 = vmatpush.bf16.msra.mxu0 0
        %1869 = vmatpush.bf16.msra.mxu0 0
        %1870 = vmatpush.bf16.msra.mxu0 %v1799
        %1871 = vmatmul.bf16.gmra.mxu0 %v1784
        %v1872 = vpop.f32.mrf.mxu0
        %v1873 = vadd.f32 0.0, %v1872
        %v1874 = vpop.f32.mrf.mxu0
        %v1875 = vadd.f32 0.0, %v1874
        %1876 = vdwg.mxu0
        %1877 = vmatpush.bf16.msra.mxu0 0
        %1878 = vmatpush.bf16.msra.mxu0 0
        %1879 = vmatpush.bf16.msra.mxu0 0
        %1880 = vmatpush.bf16.msra.mxu0 0
        %1881 = vmatpush.bf16.msra.mxu0 0
        %1882 = vmatpush.bf16.msra.mxu0 0
        %1883 = vmatpush.bf16.msra.mxu0 0
        %1884 = vmatpush.bf16.msra.mxu0 %v1802
        %1885 = vmatmul.bf16.gmra.mxu0 %v1784
        %v1886 = vpop.f32.mrf.mxu0
        %v1887 = vadd.f32 0.0, %v1886
        %v1888 = vpop.f32.mrf.mxu0
        %v1889 = vadd.f32 0.0, %v1888
        %1890 = vdwg.mxu0
        %1891 = vmatpush.bf16.msra.mxu0 0
        %1892 = vmatpush.bf16.msra.mxu0 0
        %1893 = vmatpush.bf16.msra.mxu0 0
        %1894 = vmatpush.bf16.msra.mxu0 0
        %1895 = vmatpush.bf16.msra.mxu0 0
        %1896 = vmatpush.bf16.msra.mxu0 0
        %1897 = vmatpush.bf16.msra.mxu0 0
        %1898 = vmatpush.bf16.msra.mxu0 %v1805
        %1899 = vmatmul.bf16.gmra.mxu0 %v1784
        %v1900 = vpop.f32.mrf.mxu0
        %v1901 = vadd.f32 0.0, %v1900
        %v1902 = vpop.f32.mrf.mxu0
        %v1903 = vadd.f32 0.0, %v1902
        %1904 = vdwg.mxu0
        %v1905 = vadd.f32 %v1737, %v1817
        %v1906 = vadd.f32 %v1738, %v1831
        %v1907 = vadd.f32 %v1739, %v1845
        %v1908 = vadd.f32 %v1740, %v1859
        %v1909 = vadd.f32 %v1741, %v1873
        %v1910 = vadd.f32 %v1742, %v1887
        %v1911 = vadd.f32 %v1743, %v1901
        %v1912 = vadd.f32 %v1744, %v1819
        %v1913 = vadd.f32 %v1745, %v1833
        %v1914 = vadd.f32 %v1746, %v1847
        %v1915 = vadd.f32 %v1747, %v1861
        %v1916 = vadd.f32 %v1748, %v1875
        %v1917 = vadd.f32 %v1749, %v1889
        %v1918 = vadd.f32 %v1750, %v1903
        %s1919 = scalar_lea.vmem %s1, 72
        %v1920 = vld [vmem:[%s1919] sm:$0xf]
        %v1921 = vld [vmem:[%s1919 + $0x4] sm:$0x3]
        %v1924 = vunpack.c.l.b16 %v1920
        %v1925 = vunpack.c.l.b16 %v1921
        %v1926 = vpack.c.b16 %v1925, %v1924
        %1927 = vrot.lane.b32.xlu0 %v468, 92
        %v1928 = vpop.permute.xlu0 %1927
        %1929 = vrot.lane.b32.xlu0 %v469, 92
        %v1930 = vpop.permute.xlu0 %1929
        %1931 = vrot.lane.b32.xlu0 %v470, 92
        %v1932 = vpop.permute.xlu0 %1931
        %1933 = vrot.lane.b32.xlu0 %v471, 92
        %v1934 = vpop.permute.xlu0 %1933
        %1935 = vrot.lane.b32.xlu0 %v472, 92
        %v1936 = vpop.permute.xlu0 %1935
        %1937 = vrot.lane.b32.xlu0 %v473, 92
        %v1938 = vpop.permute.xlu0 %1937
        %1939 = vrot.lane.b32.xlu0 %v474, 92
        %v1940 = vpop.permute.xlu0 %1939
        %1941 = vrot.lane.b32.xlu0 %v1254, 92
        %v1942 = vpop.permute.xlu0 %1941
        %vm1943 = vcmask 752640
        %v1944 = vsel %vm1943, %v1928, %v1930
        %v1945 = vsel %vm1943, %v1930, %v1932
        %v1946 = vsel %vm1943, %v1932, %v1934
        %v1947 = vsel %vm1943, %v1934, %v1936
        %v1948 = vsel %vm1943, %v1936, %v1938
        %v1949 = vsel %vm1943, %v1938, %v1940
        %v1950 = vsel %vm1943, %v1940, %v1942
        %v1952 = vsel %vm496, %v1926, 0
        %v1955 = vand.u32 %v1944, %v503
        %v1958 = vand.u32 %v1945, %v503
        %v1961 = vand.u32 %v1946, %v503
        %v1964 = vand.u32 %v1947, %v503
        %v1967 = vand.u32 %v1948, %v503
        %v1970 = vand.u32 %v1949, %v503
        %v1973 = vand.u32 %v1950, %v503
        %1975 = vmatpush.bf16.msra.mxu0 0
        %1976 = vmatpush.bf16.msra.mxu0 0
        %1977 = vmatpush.bf16.msra.mxu0 0
        %1978 = vmatpush.bf16.msra.mxu0 0
        %1979 = vmatpush.bf16.msra.mxu0 0
        %1980 = vmatpush.bf16.msra.mxu0 0
        %1981 = vmatpush.bf16.msra.mxu0 0
        %1982 = vmatpush.bf16.msra.mxu0 %v1955
        %1983 = vmatmul.bf16.gmra.mxu0 %v1952
        %v1984 = vpop.f32.mrf.mxu0
        %v1985 = vadd.f32 0.0, %v1984
        %v1986 = vpop.f32.mrf.mxu0
        %v1987 = vadd.f32 0.0, %v1986
        %1988 = vdwg.mxu0
        %1989 = vmatpush.bf16.msra.mxu0 0
        %1990 = vmatpush.bf16.msra.mxu0 0
        %1991 = vmatpush.bf16.msra.mxu0 0
        %1992 = vmatpush.bf16.msra.mxu0 0
        %1993 = vmatpush.bf16.msra.mxu0 0
        %1994 = vmatpush.bf16.msra.mxu0 0
        %1995 = vmatpush.bf16.msra.mxu0 0
        %1996 = vmatpush.bf16.msra.mxu0 %v1958
        %1997 = vmatmul.bf16.gmra.mxu0 %v1952
        %v1998 = vpop.f32.mrf.mxu0
        %v1999 = vadd.f32 0.0, %v1998
        %v2000 = vpop.f32.mrf.mxu0
        %v2001 = vadd.f32 0.0, %v2000
        %2002 = vdwg.mxu0
        %2003 = vmatpush.bf16.msra.mxu0 0
        %2004 = vmatpush.bf16.msra.mxu0 0
        %2005 = vmatpush.bf16.msra.mxu0 0
        %2006 = vmatpush.bf16.msra.mxu0 0
        %2007 = vmatpush.bf16.msra.mxu0 0
        %2008 = vmatpush.bf16.msra.mxu0 0
        %2009 = vmatpush.bf16.msra.mxu0 0
        %2010 = vmatpush.bf16.msra.mxu0 %v1961
        %2011 = vmatmul.bf16.gmra.mxu0 %v1952
        %v2012 = vpop.f32.mrf.mxu0
        %v2013 = vadd.f32 0.0, %v2012
        %v2014 = vpop.f32.mrf.mxu0
        %v2015 = vadd.f32 0.0, %v2014
        %2016 = vdwg.mxu0
        %2017 = vmatpush.bf16.msra.mxu0 0
        %2018 = vmatpush.bf16.msra.mxu0 0
        %2019 = vmatpush.bf16.msra.mxu0 0
        %2020 = vmatpush.bf16.msra.mxu0 0
        %2021 = vmatpush.bf16.msra.mxu0 0
        %2022 = vmatpush.bf16.msra.mxu0 0
        %2023 = vmatpush.bf16.msra.mxu0 0
        %2024 = vmatpush.bf16.msra.mxu0 %v1964
        %2025 = vmatmul.bf16.gmra.mxu0 %v1952
        %v2026 = vpop.f32.mrf.mxu0
        %v2027 = vadd.f32 0.0, %v2026
        %v2028 = vpop.f32.mrf.mxu0
        %v2029 = vadd.f32 0.0, %v2028
        %2030 = vdwg.mxu0
        %2031 = vmatpush.bf16.msra.mxu0 0
        %2032 = vmatpush.bf16.msra.mxu0 0
        %2033 = vmatpush.bf16.msra.mxu0 0
        %2034 = vmatpush.bf16.msra.mxu0 0
        %2035 = vmatpush.bf16.msra.mxu0 0
        %2036 = vmatpush.bf16.msra.mxu0 0
        %2037 = vmatpush.bf16.msra.mxu0 0
        %2038 = vmatpush.bf16.msra.mxu0 %v1967
        %2039 = vmatmul.bf16.gmra.mxu0 %v1952
        %v2040 = vpop.f32.mrf.mxu0
        %v2041 = vadd.f32 0.0, %v2040
        %v2042 = vpop.f32.mrf.mxu0
        %v2043 = vadd.f32 0.0, %v2042
        %2044 = vdwg.mxu0
        %2045 = vmatpush.bf16.msra.mxu0 0
        %2046 = vmatpush.bf16.msra.mxu0 0
        %2047 = vmatpush.bf16.msra.mxu0 0
        %2048 = vmatpush.bf16.msra.mxu0 0
        %2049 = vmatpush.bf16.msra.mxu0 0
        %2050 = vmatpush.bf16.msra.mxu0 0
        %2051 = vmatpush.bf16.msra.mxu0 0
        %2052 = vmatpush.bf16.msra.mxu0 %v1970
        %2053 = vmatmul.bf16.gmra.mxu0 %v1952
        %v2054 = vpop.f32.mrf.mxu0
        %v2055 = vadd.f32 0.0, %v2054
        %v2056 = vpop.f32.mrf.mxu0
        %v2057 = vadd.f32 0.0, %v2056
        %2058 = vdwg.mxu0
        %2059 = vmatpush.bf16.msra.mxu0 0
        %2060 = vmatpush.bf16.msra.mxu0 0
        %2061 = vmatpush.bf16.msra.mxu0 0
        %2062 = vmatpush.bf16.msra.mxu0 0
        %2063 = vmatpush.bf16.msra.mxu0 0
        %2064 = vmatpush.bf16.msra.mxu0 0
        %2065 = vmatpush.bf16.msra.mxu0 0
        %2066 = vmatpush.bf16.msra.mxu0 %v1973
        %2067 = vmatmul.bf16.gmra.mxu0 %v1952
        %v2068 = vpop.f32.mrf.mxu0
        %v2069 = vadd.f32 0.0, %v2068
        %v2070 = vpop.f32.mrf.mxu0
        %v2071 = vadd.f32 0.0, %v2070
        %2072 = vdwg.mxu0
        %v2073 = vadd.f32 %v1905, %v1985
        %v2074 = vadd.f32 %v1906, %v1999
        %v2075 = vadd.f32 %v1907, %v2013
        %v2076 = vadd.f32 %v1908, %v2027
        %v2077 = vadd.f32 %v1909, %v2041
        %v2078 = vadd.f32 %v1910, %v2055
        %v2079 = vadd.f32 %v1911, %v2069
        %v2080 = vadd.f32 %v1912, %v1987
        %v2081 = vadd.f32 %v1913, %v2001
        %v2082 = vadd.f32 %v1914, %v2015
        %v2083 = vadd.f32 %v1915, %v2029
        %v2084 = vadd.f32 %v1916, %v2043
        %v2085 = vadd.f32 %v1917, %v2057
        %v2086 = vadd.f32 %v1918, %v2071
        %s2087 = scalar_lea.vmem %s1, 80
        %v2088 = vld [vmem:[%s2087] sm:$0xf]
        %v2089 = vld [vmem:[%s2087 + $0x4] sm:$0x3]
        %v2092 = vunpack.c.l.b16 %v2088
        %v2093 = vunpack.c.l.b16 %v2089
        %v2094 = vpack.c.b16 %v2093, %v2092
        %2095 = vrot.lane.b32.xlu0 %v468, 64
        %v2096 = vpop.permute.xlu0 %2095
        %2097 = vrot.lane.b32.xlu0 %v469, 64
        %v2098 = vpop.permute.xlu0 %2097
        %2099 = vrot.lane.b32.xlu0 %v470, 64
        %v2100 = vpop.permute.xlu0 %2099
        %2101 = vrot.lane.b32.xlu0 %v471, 64
        %v2102 = vpop.permute.xlu0 %2101
        %2103 = vrot.lane.b32.xlu0 %v472, 64
        %v2104 = vpop.permute.xlu0 %2103
        %2105 = vrot.lane.b32.xlu0 %v473, 64
        %v2106 = vpop.permute.xlu0 %2105
        %2107 = vrot.lane.b32.xlu0 %v474, 64
        %v2108 = vpop.permute.xlu0 %2107
        %2109 = vrot.lane.b32.xlu0 %v1254, 64
        %v2110 = vpop.permute.xlu0 %2109
        %vm2111 = vcmask 523264
        %v2112 = vsel %vm2111, %v2096, %v2098
        %v2113 = vsel %vm2111, %v2098, %v2100
        %v2114 = vsel %vm2111, %v2100, %v2102
        %v2115 = vsel %vm2111, %v2102, %v2104
        %v2116 = vsel %vm2111, %v2104, %v2106
        %v2117 = vsel %vm2111, %v2106, %v2108
        %v2118 = vsel %vm2111, %v2108, %v2110
        %v2120 = vsel %vm496, %v2094, 0
        %v2123 = vand.u32 %v2112, %v503
        %v2126 = vand.u32 %v2113, %v503
        %v2129 = vand.u32 %v2114, %v503
        %v2132 = vand.u32 %v2115, %v503
        %v2135 = vand.u32 %v2116, %v503
        %v2138 = vand.u32 %v2117, %v503
        %v2141 = vand.u32 %v2118, %v503
        %2143 = vmatpush.bf16.msra.mxu0 0
        %2144 = vmatpush.bf16.msra.mxu0 0
        %2145 = vmatpush.bf16.msra.mxu0 0
        %2146 = vmatpush.bf16.msra.mxu0 0
        %2147 = vmatpush.bf16.msra.mxu0 0
        %2148 = vmatpush.bf16.msra.mxu0 0
        %2149 = vmatpush.bf16.msra.mxu0 0
        %2150 = vmatpush.bf16.msra.mxu0 %v2123
        %2151 = vmatmul.bf16.gmra.mxu0 %v2120
        %v2152 = vpop.f32.mrf.mxu0
        %v2153 = vadd.f32 0.0, %v2152
        %v2154 = vpop.f32.mrf.mxu0
        %v2155 = vadd.f32 0.0, %v2154
        %2156 = vdwg.mxu0
        %2157 = vmatpush.bf16.msra.mxu0 0
        %2158 = vmatpush.bf16.msra.mxu0 0
        %2159 = vmatpush.bf16.msra.mxu0 0
        %2160 = vmatpush.bf16.msra.mxu0 0
        %2161 = vmatpush.bf16.msra.mxu0 0
        %2162 = vmatpush.bf16.msra.mxu0 0
        %2163 = vmatpush.bf16.msra.mxu0 0
        %2164 = vmatpush.bf16.msra.mxu0 %v2126
        %2165 = vmatmul.bf16.gmra.mxu0 %v2120
        %v2166 = vpop.f32.mrf.mxu0
        %v2167 = vadd.f32 0.0, %v2166
        %v2168 = vpop.f32.mrf.mxu0
        %v2169 = vadd.f32 0.0, %v2168
        %2170 = vdwg.mxu0
        %2171 = vmatpush.bf16.msra.mxu0 0
        %2172 = vmatpush.bf16.msra.mxu0 0
        %2173 = vmatpush.bf16.msra.mxu0 0
        %2174 = vmatpush.bf16.msra.mxu0 0
        %2175 = vmatpush.bf16.msra.mxu0 0
        %2176 = vmatpush.bf16.msra.mxu0 0
        %2177 = vmatpush.bf16.msra.mxu0 0
        %2178 = vmatpush.bf16.msra.mxu0 %v2129
        %2179 = vmatmul.bf16.gmra.mxu0 %v2120
        %v2180 = vpop.f32.mrf.mxu0
        %v2181 = vadd.f32 0.0, %v2180
        %v2182 = vpop.f32.mrf.mxu0
        %v2183 = vadd.f32 0.0, %v2182
        %2184 = vdwg.mxu0
        %2185 = vmatpush.bf16.msra.mxu0 0
        %2186 = vmatpush.bf16.msra.mxu0 0
        %2187 = vmatpush.bf16.msra.mxu0 0
        %2188 = vmatpush.bf16.msra.mxu0 0
        %2189 = vmatpush.bf16.msra.mxu0 0
        %2190 = vmatpush.bf16.msra.mxu0 0
        %2191 = vmatpush.bf16.msra.mxu0 0
        %2192 = vmatpush.bf16.msra.mxu0 %v2132
        %2193 = vmatmul.bf16.gmra.mxu0 %v2120
        %v2194 = vpop.f32.mrf.mxu0
        %v2195 = vadd.f32 0.0, %v2194
        %v2196 = vpop.f32.mrf.mxu0
        %v2197 = vadd.f32 0.0, %v2196
        %2198 = vdwg.mxu0
        %2199 = vmatpush.bf16.msra.mxu0 0
        %2200 = vmatpush.bf16.msra.mxu0 0
        %2201 = vmatpush.bf16.msra.mxu0 0
        %2202 = vmatpush.bf16.msra.mxu0 0
        %2203 = vmatpush.bf16.msra.mxu0 0
        %2204 = vmatpush.bf16.msra.mxu0 0
        %2205 = vmatpush.bf16.msra.mxu0 0
        %2206 = vmatpush.bf16.msra.mxu0 %v2135
        %2207 = vmatmul.bf16.gmra.mxu0 %v2120
        %v2208 = vpop.f32.mrf.mxu0
        %v2209 = vadd.f32 0.0, %v2208
        %v2210 = vpop.f32.mrf.mxu0
        %v2211 = vadd.f32 0.0, %v2210
        %2212 = vdwg.mxu0
        %2213 = vmatpush.bf16.msra.mxu0 0
        %2214 = vmatpush.bf16.msra.mxu0 0
        %2215 = vmatpush.bf16.msra.mxu0 0
        %2216 = vmatpush.bf16.msra.mxu0 0
        %2217 = vmatpush.bf16.msra.mxu0 0
        %2218 = vmatpush.bf16.msra.mxu0 0
        %2219 = vmatpush.bf16.msra.mxu0 0
        %2220 = vmatpush.bf16.msra.mxu0 %v2138
        %2221 = vmatmul.bf16.gmra.mxu0 %v2120
        %v2222 = vpop.f32.mrf.mxu0
        %v2223 = vadd.f32 0.0, %v2222
        %v2224 = vpop.f32.mrf.mxu0
        %v2225 = vadd.f32 0.0, %v2224
        %2226 = vdwg.mxu0
        %2227 = vmatpush.bf16.msra.mxu0 0
        %2228 = vmatpush.bf16.msra.mxu0 0
        %2229 = vmatpush.bf16.msra.mxu0 0
        %2230 = vmatpush.bf16.msra.mxu0 0
        %2231 = vmatpush.bf16.msra.mxu0 0
        %2232 = vmatpush.bf16.msra.mxu0 0
        %2233 = vmatpush.bf16.msra.mxu0 0
        %2234 = vmatpush.bf16.msra.mxu0 %v2141
        %2235 = vmatmul.bf16.gmra.mxu0 %v2120
        %v2236 = vpop.f32.mrf.mxu0
        %v2237 = vadd.f32 0.0, %v2236
        %v2238 = vpop.f32.mrf.mxu0
        %v2239 = vadd.f32 0.0, %v2238
        %2240 = vdwg.mxu0
        %v2241 = vadd.f32 %v2073, %v2153
        %v2242 = vadd.f32 %v2074, %v2167
        %v2243 = vadd.f32 %v2075, %v2181
        %v2244 = vadd.f32 %v2076, %v2195
        %v2245 = vadd.f32 %v2077, %v2209
        %v2246 = vadd.f32 %v2078, %v2223
        %v2247 = vadd.f32 %v2079, %v2237
        %v2248 = vadd.f32 %v2080, %v2155
        %v2249 = vadd.f32 %v2081, %v2169
        %v2250 = vadd.f32 %v2082, %v2183
        %v2251 = vadd.f32 %v2083, %v2197
        %v2252 = vadd.f32 %v2084, %v2211
        %v2253 = vadd.f32 %v2085, %v2225
        %v2254 = vadd.f32 %v2086, %v2239
        %s2255 = scalar_lea.vmem %s1, 88
        %v2256 = vld [vmem:[%s2255] sm:$0xf]
        %v2257 = vld [vmem:[%s2255 + $0x4] sm:$0x3]
        %v2260 = vunpack.c.l.b16 %v2256
        %v2261 = vunpack.c.l.b16 %v2257
        %v2262 = vpack.c.b16 %v2261, %v2260
        %2263 = vrot.lane.b32.xlu0 %v468, 63
        %v2264 = vpop.permute.xlu0 %2263
        %2265 = vrot.lane.b32.xlu0 %v469, 63
        %v2266 = vpop.permute.xlu0 %2265
        %2267 = vrot.lane.b32.xlu0 %v470, 63
        %v2268 = vpop.permute.xlu0 %2267
        %2269 = vrot.lane.b32.xlu0 %v471, 63
        %v2270 = vpop.permute.xlu0 %2269
        %2271 = vrot.lane.b32.xlu0 %v472, 63
        %v2272 = vpop.permute.xlu0 %2271
        %2273 = vrot.lane.b32.xlu0 %v473, 63
        %v2274 = vpop.permute.xlu0 %2273
        %2275 = vrot.lane.b32.xlu0 %v474, 63
        %v2276 = vpop.permute.xlu0 %2275
        %2277 = vrot.lane.b32.xlu0 %v1254, 63
        %v2278 = vpop.permute.xlu0 %2277
        %vm2279 = vcmask 515072
        %v2280 = vsel %vm2279, %v2264, %v2266
        %v2281 = vsel %vm2279, %v2266, %v2268
        %v2282 = vsel %vm2279, %v2268, %v2270
        %v2283 = vsel %vm2279, %v2270, %v2272
        %v2284 = vsel %vm2279, %v2272, %v2274
        %v2285 = vsel %vm2279, %v2274, %v2276
        %v2286 = vsel %vm2279, %v2276, %v2278
        %v2288 = vsel %vm496, %v2262, 0
        %v2291 = vand.u32 %v2280, %v503
        %v2294 = vand.u32 %v2281, %v503
        %v2297 = vand.u32 %v2282, %v503
        %v2300 = vand.u32 %v2283, %v503
        %v2303 = vand.u32 %v2284, %v503
        %v2306 = vand.u32 %v2285, %v503
        %v2309 = vand.u32 %v2286, %v503
        %2311 = vmatpush.bf16.msra.mxu0 0
        %2312 = vmatpush.bf16.msra.mxu0 0
        %2313 = vmatpush.bf16.msra.mxu0 0
        %2314 = vmatpush.bf16.msra.mxu0 0
        %2315 = vmatpush.bf16.msra.mxu0 0
        %2316 = vmatpush.bf16.msra.mxu0 0
        %2317 = vmatpush.bf16.msra.mxu0 0
        %2318 = vmatpush.bf16.msra.mxu0 %v2291
        %2319 = vmatmul.bf16.gmra.mxu0 %v2288
        %v2320 = vpop.f32.mrf.mxu0
        %v2321 = vadd.f32 0.0, %v2320
        %v2322 = vpop.f32.mrf.mxu0
        %v2323 = vadd.f32 0.0, %v2322
        %2324 = vdwg.mxu0
        %2325 = vmatpush.bf16.msra.mxu0 0
        %2326 = vmatpush.bf16.msra.mxu0 0
        %2327 = vmatpush.bf16.msra.mxu0 0
        %2328 = vmatpush.bf16.msra.mxu0 0
        %2329 = vmatpush.bf16.msra.mxu0 0
        %2330 = vmatpush.bf16.msra.mxu0 0
        %2331 = vmatpush.bf16.msra.mxu0 0
        %2332 = vmatpush.bf16.msra.mxu0 %v2294
        %2333 = vmatmul.bf16.gmra.mxu0 %v2288
        %v2334 = vpop.f32.mrf.mxu0
        %v2335 = vadd.f32 0.0, %v2334
        %v2336 = vpop.f32.mrf.mxu0
        %v2337 = vadd.f32 0.0, %v2336
        %2338 = vdwg.mxu0
        %2339 = vmatpush.bf16.msra.mxu0 0
        %2340 = vmatpush.bf16.msra.mxu0 0
        %2341 = vmatpush.bf16.msra.mxu0 0
        %2342 = vmatpush.bf16.msra.mxu0 0
        %2343 = vmatpush.bf16.msra.mxu0 0
        %2344 = vmatpush.bf16.msra.mxu0 0
        %2345 = vmatpush.bf16.msra.mxu0 0
        %2346 = vmatpush.bf16.msra.mxu0 %v2297
        %2347 = vmatmul.bf16.gmra.mxu0 %v2288
        %v2348 = vpop.f32.mrf.mxu0
        %v2349 = vadd.f32 0.0, %v2348
        %v2350 = vpop.f32.mrf.mxu0
        %v2351 = vadd.f32 0.0, %v2350
        %2352 = vdwg.mxu0
        %2353 = vmatpush.bf16.msra.mxu0 0
        %2354 = vmatpush.bf16.msra.mxu0 0
        %2355 = vmatpush.bf16.msra.mxu0 0
        %2356 = vmatpush.bf16.msra.mxu0 0
        %2357 = vmatpush.bf16.msra.mxu0 0
        %2358 = vmatpush.bf16.msra.mxu0 0
        %2359 = vmatpush.bf16.msra.mxu0 0
        %2360 = vmatpush.bf16.msra.mxu0 %v2300
        %2361 = vmatmul.bf16.gmra.mxu0 %v2288
        %v2362 = vpop.f32.mrf.mxu0
        %v2363 = vadd.f32 0.0, %v2362
        %v2364 = vpop.f32.mrf.mxu0
        %v2365 = vadd.f32 0.0, %v2364
        %2366 = vdwg.mxu0
        %2367 = vmatpush.bf16.msra.mxu0 0
        %2368 = vmatpush.bf16.msra.mxu0 0
        %2369 = vmatpush.bf16.msra.mxu0 0
        %2370 = vmatpush.bf16.msra.mxu0 0
        %2371 = vmatpush.bf16.msra.mxu0 0
        %2372 = vmatpush.bf16.msra.mxu0 0
        %2373 = vmatpush.bf16.msra.mxu0 0
        %2374 = vmatpush.bf16.msra.mxu0 %v2303
        %2375 = vmatmul.bf16.gmra.mxu0 %v2288
        %v2376 = vpop.f32.mrf.mxu0
        %v2377 = vadd.f32 0.0, %v2376
        %v2378 = vpop.f32.mrf.mxu0
        %v2379 = vadd.f32 0.0, %v2378
        %2380 = vdwg.mxu0
        %2381 = vmatpush.bf16.msra.mxu0 0
        %2382 = vmatpush.bf16.msra.mxu0 0
        %2383 = vmatpush.bf16.msra.mxu0 0
        %2384 = vmatpush.bf16.msra.mxu0 0
        %2385 = vmatpush.bf16.msra.mxu0 0
        %2386 = vmatpush.bf16.msra.mxu0 0
        %2387 = vmatpush.bf16.msra.mxu0 0
        %2388 = vmatpush.bf16.msra.mxu0 %v2306
        %2389 = vmatmul.bf16.gmra.mxu0 %v2288
        %v2390 = vpop.f32.mrf.mxu0
        %v2391 = vadd.f32 0.0, %v2390
        %v2392 = vpop.f32.mrf.mxu0
        %v2393 = vadd.f32 0.0, %v2392
        %2394 = vdwg.mxu0
        %2395 = vmatpush.bf16.msra.mxu0 0
        %2396 = vmatpush.bf16.msra.mxu0 0
        %2397 = vmatpush.bf16.msra.mxu0 0
        %2398 = vmatpush.bf16.msra.mxu0 0
        %2399 = vmatpush.bf16.msra.mxu0 0
        %2400 = vmatpush.bf16.msra.mxu0 0
        %2401 = vmatpush.bf16.msra.mxu0 0
        %2402 = vmatpush.bf16.msra.mxu0 %v2309
        %2403 = vmatmul.bf16.gmra.mxu0 %v2288
        %v2404 = vpop.f32.mrf.mxu0
        %v2405 = vadd.f32 0.0, %v2404
        %v2406 = vpop.f32.mrf.mxu0
        %v2407 = vadd.f32 0.0, %v2406
        %2408 = vdwg.mxu0
        %v2409 = vadd.f32 %v2241, %v2321
        %v2410 = vadd.f32 %v2242, %v2335
        %v2411 = vadd.f32 %v2243, %v2349
        %v2412 = vadd.f32 %v2244, %v2363
        %v2413 = vadd.f32 %v2245, %v2377
        %v2414 = vadd.f32 %v2246, %v2391
        %v2415 = vadd.f32 %v2247, %v2405
        %v2416 = vadd.f32 %v2248, %v2323
        %v2417 = vadd.f32 %v2249, %v2337
        %v2418 = vadd.f32 %v2250, %v2351
        %v2419 = vadd.f32 %v2251, %v2365
        %v2420 = vadd.f32 %v2252, %v2379
        %v2421 = vadd.f32 %v2253, %v2393
        %v2422 = vadd.f32 %v2254, %v2407
        %s2423 = scalar_lea.vmem %s1, 96
        %v2424 = vld [vmem:[%s2423] sm:$0xf]
        %v2425 = vld [vmem:[%s2423 + $0x4] sm:$0x3]
        %v2428 = vunpack.c.l.b16 %v2424
        %v2429 = vunpack.c.l.b16 %v2425
        %v2430 = vpack.c.b16 %v2429, %v2428
        %2431 = vrot.lane.b32.xlu0 %v468, 62
        %v2432 = vpop.permute.xlu0 %2431
        %2433 = vrot.lane.b32.xlu0 %v469, 62
        %v2434 = vpop.permute.xlu0 %2433
        %2435 = vrot.lane.b32.xlu0 %v470, 62
        %v2436 = vpop.permute.xlu0 %2435
        %2437 = vrot.lane.b32.xlu0 %v471, 62
        %v2438 = vpop.permute.xlu0 %2437
        %2439 = vrot.lane.b32.xlu0 %v472, 62
        %v2440 = vpop.permute.xlu0 %2439
        %2441 = vrot.lane.b32.xlu0 %v473, 62
        %v2442 = vpop.permute.xlu0 %2441
        %2443 = vrot.lane.b32.xlu0 %v474, 62
        %v2444 = vpop.permute.xlu0 %2443
        %2445 = vrot.lane.b32.xlu0 %v1254, 62
        %v2446 = vpop.permute.xlu0 %2445
        %vm2447 = vcmask 506880
        %v2448 = vsel %vm2447, %v2432, %v2434
        %v2449 = vsel %vm2447, %v2434, %v2436
        %v2450 = vsel %vm2447, %v2436, %v2438
        %v2451 = vsel %vm2447, %v2438, %v2440
        %v2452 = vsel %vm2447, %v2440, %v2442
        %v2453 = vsel %vm2447, %v2442, %v2444
        %v2454 = vsel %vm2447, %v2444, %v2446
        %v2456 = vsel %vm496, %v2430, 0
        %v2459 = vand.u32 %v2448, %v503
        %v2462 = vand.u32 %v2449, %v503
        %v2465 = vand.u32 %v2450, %v503
        %v2468 = vand.u32 %v2451, %v503
        %v2471 = vand.u32 %v2452, %v503
        %v2474 = vand.u32 %v2453, %v503
        %v2477 = vand.u32 %v2454, %v503
        %2479 = vmatpush.bf16.msra.mxu0 0
        %2480 = vmatpush.bf16.msra.mxu0 0
        %2481 = vmatpush.bf16.msra.mxu0 0
        %2482 = vmatpush.bf16.msra.mxu0 0
        %2483 = vmatpush.bf16.msra.mxu0 0
        %2484 = vmatpush.bf16.msra.mxu0 0
        %2485 = vmatpush.bf16.msra.mxu0 0
        %2486 = vmatpush.bf16.msra.mxu0 %v2459
        %2487 = vmatmul.bf16.gmra.mxu0 %v2456
        %v2488 = vpop.f32.mrf.mxu0
        %v2489 = vadd.f32 0.0, %v2488
        %v2490 = vpop.f32.mrf.mxu0
        %v2491 = vadd.f32 0.0, %v2490
        %2492 = vdwg.mxu0
        %2493 = vmatpush.bf16.msra.mxu0 0
        %2494 = vmatpush.bf16.msra.mxu0 0
        %2495 = vmatpush.bf16.msra.mxu0 0
        %2496 = vmatpush.bf16.msra.mxu0 0
        %2497 = vmatpush.bf16.msra.mxu0 0
        %2498 = vmatpush.bf16.msra.mxu0 0
        %2499 = vmatpush.bf16.msra.mxu0 0
        %2500 = vmatpush.bf16.msra.mxu0 %v2462
        %2501 = vmatmul.bf16.gmra.mxu0 %v2456
        %v2502 = vpop.f32.mrf.mxu0
        %v2503 = vadd.f32 0.0, %v2502
        %v2504 = vpop.f32.mrf.mxu0
        %v2505 = vadd.f32 0.0, %v2504
        %2506 = vdwg.mxu0
        %2507 = vmatpush.bf16.msra.mxu0 0
        %2508 = vmatpush.bf16.msra.mxu0 0
        %2509 = vmatpush.bf16.msra.mxu0 0
        %2510 = vmatpush.bf16.msra.mxu0 0
        %2511 = vmatpush.bf16.msra.mxu0 0
        %2512 = vmatpush.bf16.msra.mxu0 0
        %2513 = vmatpush.bf16.msra.mxu0 0
        %2514 = vmatpush.bf16.msra.mxu0 %v2465
        %2515 = vmatmul.bf16.gmra.mxu0 %v2456
        %v2516 = vpop.f32.mrf.mxu0
        %v2517 = vadd.f32 0.0, %v2516
        %v2518 = vpop.f32.mrf.mxu0
        %v2519 = vadd.f32 0.0, %v2518
        %2520 = vdwg.mxu0
        %2521 = vmatpush.bf16.msra.mxu0 0
        %2522 = vmatpush.bf16.msra.mxu0 0
        %2523 = vmatpush.bf16.msra.mxu0 0
        %2524 = vmatpush.bf16.msra.mxu0 0
        %2525 = vmatpush.bf16.msra.mxu0 0
        %2526 = vmatpush.bf16.msra.mxu0 0
        %2527 = vmatpush.bf16.msra.mxu0 0
        %2528 = vmatpush.bf16.msra.mxu0 %v2468
        %2529 = vmatmul.bf16.gmra.mxu0 %v2456
        %v2530 = vpop.f32.mrf.mxu0
        %v2531 = vadd.f32 0.0, %v2530
        %v2532 = vpop.f32.mrf.mxu0
        %v2533 = vadd.f32 0.0, %v2532
        %2534 = vdwg.mxu0
        %2535 = vmatpush.bf16.msra.mxu0 0
        %2536 = vmatpush.bf16.msra.mxu0 0
        %2537 = vmatpush.bf16.msra.mxu0 0
        %2538 = vmatpush.bf16.msra.mxu0 0
        %2539 = vmatpush.bf16.msra.mxu0 0
        %2540 = vmatpush.bf16.msra.mxu0 0
        %2541 = vmatpush.bf16.msra.mxu0 0
        %2542 = vmatpush.bf16.msra.mxu0 %v2471
        %2543 = vmatmul.bf16.gmra.mxu0 %v2456
        %v2544 = vpop.f32.mrf.mxu0
        %v2545 = vadd.f32 0.0, %v2544
        %v2546 = vpop.f32.mrf.mxu0
        %v2547 = vadd.f32 0.0, %v2546
        %2548 = vdwg.mxu0
        %2549 = vmatpush.bf16.msra.mxu0 0
        %2550 = vmatpush.bf16.msra.mxu0 0
        %2551 = vmatpush.bf16.msra.mxu0 0
        %2552 = vmatpush.bf16.msra.mxu0 0
        %2553 = vmatpush.bf16.msra.mxu0 0
        %2554 = vmatpush.bf16.msra.mxu0 0
        %2555 = vmatpush.bf16.msra.mxu0 0
        %2556 = vmatpush.bf16.msra.mxu0 %v2474
        %2557 = vmatmul.bf16.gmra.mxu0 %v2456
        %v2558 = vpop.f32.mrf.mxu0
        %v2559 = vadd.f32 0.0, %v2558
        %v2560 = vpop.f32.mrf.mxu0
        %v2561 = vadd.f32 0.0, %v2560
        %2562 = vdwg.mxu0
        %2563 = vmatpush.bf16.msra.mxu0 0
        %2564 = vmatpush.bf16.msra.mxu0 0
        %2565 = vmatpush.bf16.msra.mxu0 0
        %2566 = vmatpush.bf16.msra.mxu0 0
        %2567 = vmatpush.bf16.msra.mxu0 0
        %2568 = vmatpush.bf16.msra.mxu0 0
        %2569 = vmatpush.bf16.msra.mxu0 0
        %2570 = vmatpush.bf16.msra.mxu0 %v2477
        %2571 = vmatmul.bf16.gmra.mxu0 %v2456
        %v2572 = vpop.f32.mrf.mxu0
        %v2573 = vadd.f32 0.0, %v2572
        %v2574 = vpop.f32.mrf.mxu0
        %v2575 = vadd.f32 0.0, %v2574
        %2576 = vdwg.mxu0
        %v2577 = vadd.f32 %v2409, %v2489
        %v2578 = vadd.f32 %v2410, %v2503
        %v2579 = vadd.f32 %v2411, %v2517
        %v2580 = vadd.f32 %v2412, %v2531
        %v2581 = vadd.f32 %v2413, %v2545
        %v2582 = vadd.f32 %v2414, %v2559
        %v2583 = vadd.f32 %v2415, %v2573
        %v2584 = vadd.f32 %v2416, %v2491
        %v2585 = vadd.f32 %v2417, %v2505
        %v2586 = vadd.f32 %v2418, %v2519
        %v2587 = vadd.f32 %v2419, %v2533
        %v2588 = vadd.f32 %v2420, %v2547
        %v2589 = vadd.f32 %v2421, %v2561
        %v2590 = vadd.f32 %v2422, %v2575
        %s2591 = scalar_lea.vmem %s1, 104
        %v2592 = vld [vmem:[%s2591] sm:$0xf]
        %v2593 = vld [vmem:[%s2591 + $0x4] sm:$0x3]
        %v2596 = vunpack.c.l.b16 %v2592
        %v2597 = vunpack.c.l.b16 %v2593
        %v2598 = vpack.c.b16 %v2597, %v2596
        %2599 = vrot.lane.b32.xlu0 %v468, 61
        %v2600 = vpop.permute.xlu0 %2599
        %2601 = vrot.lane.b32.xlu0 %v469, 61
        %v2602 = vpop.permute.xlu0 %2601
        %2603 = vrot.lane.b32.xlu0 %v470, 61
        %v2604 = vpop.permute.xlu0 %2603
        %2605 = vrot.lane.b32.xlu0 %v471, 61
        %v2606 = vpop.permute.xlu0 %2605
        %2607 = vrot.lane.b32.xlu0 %v472, 61
        %v2608 = vpop.permute.xlu0 %2607
        %2609 = vrot.lane.b32.xlu0 %v473, 61
        %v2610 = vpop.permute.xlu0 %2609
        %2611 = vrot.lane.b32.xlu0 %v474, 61
        %v2612 = vpop.permute.xlu0 %2611
        %2613 = vrot.lane.b32.xlu0 %v1254, 61
        %v2614 = vpop.permute.xlu0 %2613
        %vm2615 = vcmask 498688
        %v2616 = vsel %vm2615, %v2600, %v2602
        %v2617 = vsel %vm2615, %v2602, %v2604
        %v2618 = vsel %vm2615, %v2604, %v2606
        %v2619 = vsel %vm2615, %v2606, %v2608
        %v2620 = vsel %vm2615, %v2608, %v2610
        %v2621 = vsel %vm2615, %v2610, %v2612
        %v2622 = vsel %vm2615, %v2612, %v2614
        %v2624 = vsel %vm496, %v2598, 0
        %v2627 = vand.u32 %v2616, %v503
        %v2630 = vand.u32 %v2617, %v503
        %v2633 = vand.u32 %v2618, %v503
        %v2636 = vand.u32 %v2619, %v503
        %v2639 = vand.u32 %v2620, %v503
        %v2642 = vand.u32 %v2621, %v503
        %v2645 = vand.u32 %v2622, %v503
        %2647 = vmatpush.bf16.msra.mxu0 0
        %2648 = vmatpush.bf16.msra.mxu0 0
        %2649 = vmatpush.bf16.msra.mxu0 0
        %2650 = vmatpush.bf16.msra.mxu0 0
        %2651 = vmatpush.bf16.msra.mxu0 0
        %2652 = vmatpush.bf16.msra.mxu0 0
        %2653 = vmatpush.bf16.msra.mxu0 0
        %2654 = vmatpush.bf16.msra.mxu0 %v2627
        %2655 = vmatmul.bf16.gmra.mxu0 %v2624
        %v2656 = vpop.f32.mrf.mxu0
        %v2657 = vadd.f32 0.0, %v2656
        %v2658 = vpop.f32.mrf.mxu0
        %v2659 = vadd.f32 0.0, %v2658
        %2660 = vdwg.mxu0
        %2661 = vmatpush.bf16.msra.mxu0 0
        %2662 = vmatpush.bf16.msra.mxu0 0
        %2663 = vmatpush.bf16.msra.mxu0 0
        %2664 = vmatpush.bf16.msra.mxu0 0
        %2665 = vmatpush.bf16.msra.mxu0 0
        %2666 = vmatpush.bf16.msra.mxu0 0
        %2667 = vmatpush.bf16.msra.mxu0 0
        %2668 = vmatpush.bf16.msra.mxu0 %v2630
        %2669 = vmatmul.bf16.gmra.mxu0 %v2624
        %v2670 = vpop.f32.mrf.mxu0
        %v2671 = vadd.f32 0.0, %v2670
        %v2672 = vpop.f32.mrf.mxu0
        %v2673 = vadd.f32 0.0, %v2672
        %2674 = vdwg.mxu0
        %2675 = vmatpush.bf16.msra.mxu0 0
        %2676 = vmatpush.bf16.msra.mxu0 0
        %2677 = vmatpush.bf16.msra.mxu0 0
        %2678 = vmatpush.bf16.msra.mxu0 0
        %2679 = vmatpush.bf16.msra.mxu0 0
        %2680 = vmatpush.bf16.msra.mxu0 0
        %2681 = vmatpush.bf16.msra.mxu0 0
        %2682 = vmatpush.bf16.msra.mxu0 %v2633
        %2683 = vmatmul.bf16.gmra.mxu0 %v2624
        %v2684 = vpop.f32.mrf.mxu0
        %v2685 = vadd.f32 0.0, %v2684
        %v2686 = vpop.f32.mrf.mxu0
        %v2687 = vadd.f32 0.0, %v2686
        %2688 = vdwg.mxu0
        %2689 = vmatpush.bf16.msra.mxu0 0
        %2690 = vmatpush.bf16.msra.mxu0 0
        %2691 = vmatpush.bf16.msra.mxu0 0
        %2692 = vmatpush.bf16.msra.mxu0 0
        %2693 = vmatpush.bf16.msra.mxu0 0
        %2694 = vmatpush.bf16.msra.mxu0 0
        %2695 = vmatpush.bf16.msra.mxu0 0
        %2696 = vmatpush.bf16.msra.mxu0 %v2636
        %2697 = vmatmul.bf16.gmra.mxu0 %v2624
        %v2698 = vpop.f32.mrf.mxu0
        %v2699 = vadd.f32 0.0, %v2698
        %v2700 = vpop.f32.mrf.mxu0
        %v2701 = vadd.f32 0.0, %v2700
        %2702 = vdwg.mxu0
        %2703 = vmatpush.bf16.msra.mxu0 0
        %2704 = vmatpush.bf16.msra.mxu0 0
        %2705 = vmatpush.bf16.msra.mxu0 0
        %2706 = vmatpush.bf16.msra.mxu0 0
        %2707 = vmatpush.bf16.msra.mxu0 0
        %2708 = vmatpush.bf16.msra.mxu0 0
        %2709 = vmatpush.bf16.msra.mxu0 0
        %2710 = vmatpush.bf16.msra.mxu0 %v2639
        %2711 = vmatmul.bf16.gmra.mxu0 %v2624
        %v2712 = vpop.f32.mrf.mxu0
        %v2713 = vadd.f32 0.0, %v2712
        %v2714 = vpop.f32.mrf.mxu0
        %v2715 = vadd.f32 0.0, %v2714
        %2716 = vdwg.mxu0
        %2717 = vmatpush.bf16.msra.mxu0 0
        %2718 = vmatpush.bf16.msra.mxu0 0
        %2719 = vmatpush.bf16.msra.mxu0 0
        %2720 = vmatpush.bf16.msra.mxu0 0
        %2721 = vmatpush.bf16.msra.mxu0 0
        %2722 = vmatpush.bf16.msra.mxu0 0
        %2723 = vmatpush.bf16.msra.mxu0 0
        %2724 = vmatpush.bf16.msra.mxu0 %v2642
        %2725 = vmatmul.bf16.gmra.mxu0 %v2624
        %v2726 = vpop.f32.mrf.mxu0
        %v2727 = vadd.f32 0.0, %v2726
        %v2728 = vpop.f32.mrf.mxu0
        %v2729 = vadd.f32 0.0, %v2728
        %2730 = vdwg.mxu0
        %2731 = vmatpush.bf16.msra.mxu0 0
        %2732 = vmatpush.bf16.msra.mxu0 0
        %2733 = vmatpush.bf16.msra.mxu0 0
        %2734 = vmatpush.bf16.msra.mxu0 0
        %2735 = vmatpush.bf16.msra.mxu0 0
        %2736 = vmatpush.bf16.msra.mxu0 0
        %2737 = vmatpush.bf16.msra.mxu0 0
        %2738 = vmatpush.bf16.msra.mxu0 %v2645
        %2739 = vmatmul.bf16.gmra.mxu0 %v2624
        %v2740 = vpop.f32.mrf.mxu0
        %v2741 = vadd.f32 0.0, %v2740
        %v2742 = vpop.f32.mrf.mxu0
        %v2743 = vadd.f32 0.0, %v2742
        %2744 = vdwg.mxu0
        %v2745 = vadd.f32 %v2577, %v2657
        %v2746 = vadd.f32 %v2578, %v2671
        %v2747 = vadd.f32 %v2579, %v2685
        %v2748 = vadd.f32 %v2580, %v2699
        %v2749 = vadd.f32 %v2581, %v2713
        %v2750 = vadd.f32 %v2582, %v2727
        %v2751 = vadd.f32 %v2583, %v2741
        %v2752 = vadd.f32 %v2584, %v2659
        %v2753 = vadd.f32 %v2585, %v2673
        %v2754 = vadd.f32 %v2586, %v2687
        %v2755 = vadd.f32 %v2587, %v2701
        %v2756 = vadd.f32 %v2588, %v2715
        %v2757 = vadd.f32 %v2589, %v2729
        %v2758 = vadd.f32 %v2590, %v2743
        %s2759 = scalar_lea.vmem %s1, 112
        %v2760 = vld [vmem:[%s2759] sm:$0xf]
        %v2761 = vld [vmem:[%s2759 + $0x4] sm:$0x3]
        %v2764 = vunpack.c.l.b16 %v2760
        %v2765 = vunpack.c.l.b16 %v2761
        %v2766 = vpack.c.b16 %v2765, %v2764
        %2767 = vrot.lane.b32.xlu0 %v468, 60
        %v2768 = vpop.permute.xlu0 %2767
        %2769 = vrot.lane.b32.xlu0 %v469, 60
        %v2770 = vpop.permute.xlu0 %2769
        %2771 = vrot.lane.b32.xlu0 %v470, 60
        %v2772 = vpop.permute.xlu0 %2771
        %2773 = vrot.lane.b32.xlu0 %v471, 60
        %v2774 = vpop.permute.xlu0 %2773
        %2775 = vrot.lane.b32.xlu0 %v472, 60
        %v2776 = vpop.permute.xlu0 %2775
        %2777 = vrot.lane.b32.xlu0 %v473, 60
        %v2778 = vpop.permute.xlu0 %2777
        %2779 = vrot.lane.b32.xlu0 %v474, 60
        %v2780 = vpop.permute.xlu0 %2779
        %2781 = vrot.lane.b32.xlu0 %v1254, 60
        %v2782 = vpop.permute.xlu0 %2781
        %vm2783 = vcmask 490496
        %v2784 = vsel %vm2783, %v2768, %v2770
        %v2785 = vsel %vm2783, %v2770, %v2772
        %v2786 = vsel %vm2783, %v2772, %v2774
        %v2787 = vsel %vm2783, %v2774, %v2776
        %v2788 = vsel %vm2783, %v2776, %v2778
        %v2789 = vsel %vm2783, %v2778, %v2780
        %v2790 = vsel %vm2783, %v2780, %v2782
        %v2792 = vsel %vm496, %v2766, 0
        %v2795 = vand.u32 %v2784, %v503
        %v2798 = vand.u32 %v2785, %v503
        %v2801 = vand.u32 %v2786, %v503
        %v2804 = vand.u32 %v2787, %v503
        %v2807 = vand.u32 %v2788, %v503
        %v2810 = vand.u32 %v2789, %v503
        %v2813 = vand.u32 %v2790, %v503
        %2815 = vmatpush.bf16.msra.mxu0 0
        %2816 = vmatpush.bf16.msra.mxu0 0
        %2817 = vmatpush.bf16.msra.mxu0 0
        %2818 = vmatpush.bf16.msra.mxu0 0
        %2819 = vmatpush.bf16.msra.mxu0 0
        %2820 = vmatpush.bf16.msra.mxu0 0
        %2821 = vmatpush.bf16.msra.mxu0 0
        %2822 = vmatpush.bf16.msra.mxu0 %v2795
        %2823 = vmatmul.bf16.gmra.mxu0 %v2792
        %v2824 = vpop.f32.mrf.mxu0
        %v2825 = vadd.f32 0.0, %v2824
        %v2826 = vpop.f32.mrf.mxu0
        %v2827 = vadd.f32 0.0, %v2826
        %2828 = vdwg.mxu0
        %2829 = vmatpush.bf16.msra.mxu0 0
        %2830 = vmatpush.bf16.msra.mxu0 0
        %2831 = vmatpush.bf16.msra.mxu0 0
        %2832 = vmatpush.bf16.msra.mxu0 0
        %2833 = vmatpush.bf16.msra.mxu0 0
        %2834 = vmatpush.bf16.msra.mxu0 0
        %2835 = vmatpush.bf16.msra.mxu0 0
        %2836 = vmatpush.bf16.msra.mxu0 %v2798
        %2837 = vmatmul.bf16.gmra.mxu0 %v2792
        %v2838 = vpop.f32.mrf.mxu0
        %v2839 = vadd.f32 0.0, %v2838
        %v2840 = vpop.f32.mrf.mxu0
        %v2841 = vadd.f32 0.0, %v2840
        %2842 = vdwg.mxu0
        %2843 = vmatpush.bf16.msra.mxu0 0
        %2844 = vmatpush.bf16.msra.mxu0 0
        %2845 = vmatpush.bf16.msra.mxu0 0
        %2846 = vmatpush.bf16.msra.mxu0 0
        %2847 = vmatpush.bf16.msra.mxu0 0
        %2848 = vmatpush.bf16.msra.mxu0 0
        %2849 = vmatpush.bf16.msra.mxu0 0
        %2850 = vmatpush.bf16.msra.mxu0 %v2801
        %2851 = vmatmul.bf16.gmra.mxu0 %v2792
        %v2852 = vpop.f32.mrf.mxu0
        %v2853 = vadd.f32 0.0, %v2852
        %v2854 = vpop.f32.mrf.mxu0
        %v2855 = vadd.f32 0.0, %v2854
        %2856 = vdwg.mxu0
        %2857 = vmatpush.bf16.msra.mxu0 0
        %2858 = vmatpush.bf16.msra.mxu0 0
        %2859 = vmatpush.bf16.msra.mxu0 0
        %2860 = vmatpush.bf16.msra.mxu0 0
        %2861 = vmatpush.bf16.msra.mxu0 0
        %2862 = vmatpush.bf16.msra.mxu0 0
        %2863 = vmatpush.bf16.msra.mxu0 0
        %2864 = vmatpush.bf16.msra.mxu0 %v2804
        %2865 = vmatmul.bf16.gmra.mxu0 %v2792
        %v2866 = vpop.f32.mrf.mxu0
        %v2867 = vadd.f32 0.0, %v2866
        %v2868 = vpop.f32.mrf.mxu0
        %v2869 = vadd.f32 0.0, %v2868
        %2870 = vdwg.mxu0
        %2871 = vmatpush.bf16.msra.mxu0 0
        %2872 = vmatpush.bf16.msra.mxu0 0
        %2873 = vmatpush.bf16.msra.mxu0 0
        %2874 = vmatpush.bf16.msra.mxu0 0
        %2875 = vmatpush.bf16.msra.mxu0 0
        %2876 = vmatpush.bf16.msra.mxu0 0
        %2877 = vmatpush.bf16.msra.mxu0 0
        %2878 = vmatpush.bf16.msra.mxu0 %v2807
        %2879 = vmatmul.bf16.gmra.mxu0 %v2792
        %v2880 = vpop.f32.mrf.mxu0
        %v2881 = vadd.f32 0.0, %v2880
        %v2882 = vpop.f32.mrf.mxu0
        %v2883 = vadd.f32 0.0, %v2882
        %2884 = vdwg.mxu0
        %2885 = vmatpush.bf16.msra.mxu0 0
        %2886 = vmatpush.bf16.msra.mxu0 0
        %2887 = vmatpush.bf16.msra.mxu0 0
        %2888 = vmatpush.bf16.msra.mxu0 0
        %2889 = vmatpush.bf16.msra.mxu0 0
        %2890 = vmatpush.bf16.msra.mxu0 0
        %2891 = vmatpush.bf16.msra.mxu0 0
        %2892 = vmatpush.bf16.msra.mxu0 %v2810
        %2893 = vmatmul.bf16.gmra.mxu0 %v2792
        %v2894 = vpop.f32.mrf.mxu0
        %v2895 = vadd.f32 0.0, %v2894
        %v2896 = vpop.f32.mrf.mxu0
        %v2897 = vadd.f32 0.0, %v2896
        %2898 = vdwg.mxu0
        %2899 = vmatpush.bf16.msra.mxu0 0
        %2900 = vmatpush.bf16.msra.mxu0 0
        %2901 = vmatpush.bf16.msra.mxu0 0
        %2902 = vmatpush.bf16.msra.mxu0 0
        %2903 = vmatpush.bf16.msra.mxu0 0
        %2904 = vmatpush.bf16.msra.mxu0 0
        %2905 = vmatpush.bf16.msra.mxu0 0
        %2906 = vmatpush.bf16.msra.mxu0 %v2813
        %2907 = vmatmul.bf16.gmra.mxu0 %v2792
        %v2908 = vpop.f32.mrf.mxu0
        %v2909 = vadd.f32 0.0, %v2908
        %v2910 = vpop.f32.mrf.mxu0
        %v2911 = vadd.f32 0.0, %v2910
        %2912 = vdwg.mxu0
        %v2913 = vadd.f32 %v2745, %v2825
        %v2914 = vadd.f32 %v2746, %v2839
        %v2915 = vadd.f32 %v2747, %v2853
        %v2916 = vadd.f32 %v2748, %v2867
        %v2917 = vadd.f32 %v2749, %v2881
        %v2918 = vadd.f32 %v2750, %v2895
        %v2919 = vadd.f32 %v2751, %v2909
        %v2920 = vadd.f32 %v2752, %v2827
        %v2921 = vadd.f32 %v2753, %v2841
        %v2922 = vadd.f32 %v2754, %v2855
        %v2923 = vadd.f32 %v2755, %v2869
        %v2924 = vadd.f32 %v2756, %v2883
        %v2925 = vadd.f32 %v2757, %v2897
        %v2926 = vadd.f32 %v2758, %v2911
        %s2927 = scalar_lea.vmem %s1, 120
        %v2928 = vld [vmem:[%s2927] sm:$0xf]
        %v2929 = vld [vmem:[%s2927 + $0x4] sm:$0x3]
        %v2932 = vunpack.c.l.b16 %v2928
        %v2933 = vunpack.c.l.b16 %v2929
        %v2934 = vpack.c.b16 %v2933, %v2932
        %2935 = vrot.lane.b32.xlu0 %v468, 32
        %v2936 = vpop.permute.xlu0 %2935
        %2937 = vrot.lane.b32.xlu0 %v469, 32
        %v2938 = vpop.permute.xlu0 %2937
        %2939 = vrot.lane.b32.xlu0 %v470, 32
        %v2940 = vpop.permute.xlu0 %2939
        %2941 = vrot.lane.b32.xlu0 %v471, 32
        %v2942 = vpop.permute.xlu0 %2941
        %2943 = vrot.lane.b32.xlu0 %v472, 32
        %v2944 = vpop.permute.xlu0 %2943
        %2945 = vrot.lane.b32.xlu0 %v473, 32
        %v2946 = vpop.permute.xlu0 %2945
        %2947 = vrot.lane.b32.xlu0 %v474, 32
        %v2948 = vpop.permute.xlu0 %2947
        %2949 = vrot.lane.b32.xlu0 %v1254, 32
        %v2950 = vpop.permute.xlu0 %2949
        %vm2951 = vcmask 261120
        %v2952 = vsel %vm2951, %v2936, %v2938
        %v2953 = vsel %vm2951, %v2938, %v2940
        %v2954 = vsel %vm2951, %v2940, %v2942
        %v2955 = vsel %vm2951, %v2942, %v2944
        %v2956 = vsel %vm2951, %v2944, %v2946
        %v2957 = vsel %vm2951, %v2946, %v2948
        %v2958 = vsel %vm2951, %v2948, %v2950
        %v2960 = vsel %vm496, %v2934, 0
        %v2963 = vand.u32 %v2952, %v503
        %v2966 = vand.u32 %v2953, %v503
        %v2969 = vand.u32 %v2954, %v503
        %v2972 = vand.u32 %v2955, %v503
        %v2975 = vand.u32 %v2956, %v503
        %v2978 = vand.u32 %v2957, %v503
        %v2981 = vand.u32 %v2958, %v503
        %2983 = vmatpush.bf16.msra.mxu0 0
        %2984 = vmatpush.bf16.msra.mxu0 0
        %2985 = vmatpush.bf16.msra.mxu0 0
        %2986 = vmatpush.bf16.msra.mxu0 0
        %2987 = vmatpush.bf16.msra.mxu0 0
        %2988 = vmatpush.bf16.msra.mxu0 0
        %2989 = vmatpush.bf16.msra.mxu0 0
        %2990 = vmatpush.bf16.msra.mxu0 %v2963
        %2991 = vmatmul.bf16.gmra.mxu0 %v2960
        %v2992 = vpop.f32.mrf.mxu0
        %v2993 = vadd.f32 0.0, %v2992
        %v2994 = vpop.f32.mrf.mxu0
        %v2995 = vadd.f32 0.0, %v2994
        %2996 = vdwg.mxu0
        %2997 = vmatpush.bf16.msra.mxu0 0
        %2998 = vmatpush.bf16.msra.mxu0 0
        %2999 = vmatpush.bf16.msra.mxu0 0
        %3000 = vmatpush.bf16.msra.mxu0 0
        %3001 = vmatpush.bf16.msra.mxu0 0
        %3002 = vmatpush.bf16.msra.mxu0 0
        %3003 = vmatpush.bf16.msra.mxu0 0
        %3004 = vmatpush.bf16.msra.mxu0 %v2966
        %3005 = vmatmul.bf16.gmra.mxu0 %v2960
        %v3006 = vpop.f32.mrf.mxu0
        %v3007 = vadd.f32 0.0, %v3006
        %v3008 = vpop.f32.mrf.mxu0
        %v3009 = vadd.f32 0.0, %v3008
        %3010 = vdwg.mxu0
        %3011 = vmatpush.bf16.msra.mxu0 0
        %3012 = vmatpush.bf16.msra.mxu0 0
        %3013 = vmatpush.bf16.msra.mxu0 0
        %3014 = vmatpush.bf16.msra.mxu0 0
        %3015 = vmatpush.bf16.msra.mxu0 0
        %3016 = vmatpush.bf16.msra.mxu0 0
        %3017 = vmatpush.bf16.msra.mxu0 0
        %3018 = vmatpush.bf16.msra.mxu0 %v2969
        %3019 = vmatmul.bf16.gmra.mxu0 %v2960
        %v3020 = vpop.f32.mrf.mxu0
        %v3021 = vadd.f32 0.0, %v3020
        %v3022 = vpop.f32.mrf.mxu0
        %v3023 = vadd.f32 0.0, %v3022
        %3024 = vdwg.mxu0
        %3025 = vmatpush.bf16.msra.mxu0 0
        %3026 = vmatpush.bf16.msra.mxu0 0
        %3027 = vmatpush.bf16.msra.mxu0 0
        %3028 = vmatpush.bf16.msra.mxu0 0
        %3029 = vmatpush.bf16.msra.mxu0 0
        %3030 = vmatpush.bf16.msra.mxu0 0
        %3031 = vmatpush.bf16.msra.mxu0 0
        %3032 = vmatpush.bf16.msra.mxu0 %v2972
        %3033 = vmatmul.bf16.gmra.mxu0 %v2960
        %v3034 = vpop.f32.mrf.mxu0
        %v3035 = vadd.f32 0.0, %v3034
        %v3036 = vpop.f32.mrf.mxu0
        %v3037 = vadd.f32 0.0, %v3036
        %3038 = vdwg.mxu0
        %3039 = vmatpush.bf16.msra.mxu0 0
        %3040 = vmatpush.bf16.msra.mxu0 0
        %3041 = vmatpush.bf16.msra.mxu0 0
        %3042 = vmatpush.bf16.msra.mxu0 0
        %3043 = vmatpush.bf16.msra.mxu0 0
        %3044 = vmatpush.bf16.msra.mxu0 0
        %3045 = vmatpush.bf16.msra.mxu0 0
        %3046 = vmatpush.bf16.msra.mxu0 %v2975
        %3047 = vmatmul.bf16.gmra.mxu0 %v2960
        %v3048 = vpop.f32.mrf.mxu0
        %v3049 = vadd.f32 0.0, %v3048
        %v3050 = vpop.f32.mrf.mxu0
        %v3051 = vadd.f32 0.0, %v3050
        %3052 = vdwg.mxu0
        %3053 = vmatpush.bf16.msra.mxu0 0
        %3054 = vmatpush.bf16.msra.mxu0 0
        %3055 = vmatpush.bf16.msra.mxu0 0
        %3056 = vmatpush.bf16.msra.mxu0 0
        %3057 = vmatpush.bf16.msra.mxu0 0
        %3058 = vmatpush.bf16.msra.mxu0 0
        %3059 = vmatpush.bf16.msra.mxu0 0
        %3060 = vmatpush.bf16.msra.mxu0 %v2978
        %3061 = vmatmul.bf16.gmra.mxu0 %v2960
        %v3062 = vpop.f32.mrf.mxu0
        %v3063 = vadd.f32 0.0, %v3062
        %v3064 = vpop.f32.mrf.mxu0
        %v3065 = vadd.f32 0.0, %v3064
        %3066 = vdwg.mxu0
        %3067 = vmatpush.bf16.msra.mxu0 0
        %3068 = vmatpush.bf16.msra.mxu0 0
        %3069 = vmatpush.bf16.msra.mxu0 0
        %3070 = vmatpush.bf16.msra.mxu0 0
        %3071 = vmatpush.bf16.msra.mxu0 0
        %3072 = vmatpush.bf16.msra.mxu0 0
        %3073 = vmatpush.bf16.msra.mxu0 0
        %3074 = vmatpush.bf16.msra.mxu0 %v2981
        %3075 = vmatmul.bf16.gmra.mxu0 %v2960
        %v3076 = vpop.f32.mrf.mxu0
        %v3077 = vadd.f32 0.0, %v3076
        %v3078 = vpop.f32.mrf.mxu0
        %v3079 = vadd.f32 0.0, %v3078
        %3080 = vdwg.mxu0
        %v3081 = vadd.f32 %v2913, %v2993
        %v3082 = vadd.f32 %v2914, %v3007
        %v3083 = vadd.f32 %v2915, %v3021
        %v3084 = vadd.f32 %v2916, %v3035
        %v3085 = vadd.f32 %v2917, %v3049
        %v3086 = vadd.f32 %v2918, %v3063
        %v3087 = vadd.f32 %v2919, %v3077
        %v3088 = vadd.f32 %v2920, %v2995
        %v3089 = vadd.f32 %v2921, %v3009
        %v3090 = vadd.f32 %v2922, %v3023
        %v3091 = vadd.f32 %v2923, %v3037
        %v3092 = vadd.f32 %v2924, %v3051
        %v3093 = vadd.f32 %v2925, %v3065
        %v3094 = vadd.f32 %v2926, %v3079
        %s3095 = scalar_lea.vmem %s1, 128
        %v3096 = vld [vmem:[%s3095] sm:$0xf]
        %v3097 = vld [vmem:[%s3095 + $0x4] sm:$0x3]
        %v3100 = vunpack.c.l.b16 %v3096
        %v3101 = vunpack.c.l.b16 %v3097
        %v3102 = vpack.c.b16 %v3101, %v3100
        %3103 = vrot.lane.b32.xlu0 %v468, 31
        %v3104 = vpop.permute.xlu0 %3103
        %3105 = vrot.lane.b32.xlu0 %v469, 31
        %v3106 = vpop.permute.xlu0 %3105
        %3107 = vrot.lane.b32.xlu0 %v470, 31
        %v3108 = vpop.permute.xlu0 %3107
        %3109 = vrot.lane.b32.xlu0 %v471, 31
        %v3110 = vpop.permute.xlu0 %3109
        %3111 = vrot.lane.b32.xlu0 %v472, 31
        %v3112 = vpop.permute.xlu0 %3111
        %3113 = vrot.lane.b32.xlu0 %v473, 31
        %v3114 = vpop.permute.xlu0 %3113
        %3115 = vrot.lane.b32.xlu0 %v474, 31
        %v3116 = vpop.permute.xlu0 %3115
        %3117 = vrot.lane.b32.xlu0 %v1254, 31
        %v3118 = vpop.permute.xlu0 %3117
        %vm3119 = vcmask 252928
        %v3120 = vsel %vm3119, %v3104, %v3106
        %v3121 = vsel %vm3119, %v3106, %v3108
        %v3122 = vsel %vm3119, %v3108, %v3110
        %v3123 = vsel %vm3119, %v3110, %v3112
        %v3124 = vsel %vm3119, %v3112, %v3114
        %v3125 = vsel %vm3119, %v3114, %v3116
        %v3126 = vsel %vm3119, %v3116, %v3118
        %v3128 = vsel %vm496, %v3102, 0
        %v3131 = vand.u32 %v3120, %v503
        %v3134 = vand.u32 %v3121, %v503
        %v3137 = vand.u32 %v3122, %v503
        %v3140 = vand.u32 %v3123, %v503
        %v3143 = vand.u32 %v3124, %v503
        %v3146 = vand.u32 %v3125, %v503
        %v3149 = vand.u32 %v3126, %v503
        %3151 = vmatpush.bf16.msra.mxu0 0
        %3152 = vmatpush.bf16.msra.mxu0 0
        %3153 = vmatpush.bf16.msra.mxu0 0
        %3154 = vmatpush.bf16.msra.mxu0 0
        %3155 = vmatpush.bf16.msra.mxu0 0
        %3156 = vmatpush.bf16.msra.mxu0 0
        %3157 = vmatpush.bf16.msra.mxu0 0
        %3158 = vmatpush.bf16.msra.mxu0 %v3131
        %3159 = vmatmul.bf16.gmra.mxu0 %v3128
        %v3160 = vpop.f32.mrf.mxu0
        %v3161 = vadd.f32 0.0, %v3160
        %v3162 = vpop.f32.mrf.mxu0
        %v3163 = vadd.f32 0.0, %v3162
        %3164 = vdwg.mxu0
        %3165 = vmatpush.bf16.msra.mxu0 0
        %3166 = vmatpush.bf16.msra.mxu0 0
        %3167 = vmatpush.bf16.msra.mxu0 0
        %3168 = vmatpush.bf16.msra.mxu0 0
        %3169 = vmatpush.bf16.msra.mxu0 0
        %3170 = vmatpush.bf16.msra.mxu0 0
        %3171 = vmatpush.bf16.msra.mxu0 0
        %3172 = vmatpush.bf16.msra.mxu0 %v3134
        %3173 = vmatmul.bf16.gmra.mxu0 %v3128
        %v3174 = vpop.f32.mrf.mxu0
        %v3175 = vadd.f32 0.0, %v3174
        %v3176 = vpop.f32.mrf.mxu0
        %v3177 = vadd.f32 0.0, %v3176
        %3178 = vdwg.mxu0
        %3179 = vmatpush.bf16.msra.mxu0 0
        %3180 = vmatpush.bf16.msra.mxu0 0
        %3181 = vmatpush.bf16.msra.mxu0 0
        %3182 = vmatpush.bf16.msra.mxu0 0
        %3183 = vmatpush.bf16.msra.mxu0 0
        %3184 = vmatpush.bf16.msra.mxu0 0
        %3185 = vmatpush.bf16.msra.mxu0 0
        %3186 = vmatpush.bf16.msra.mxu0 %v3137
        %3187 = vmatmul.bf16.gmra.mxu0 %v3128
        %v3188 = vpop.f32.mrf.mxu0
        %v3189 = vadd.f32 0.0, %v3188
        %v3190 = vpop.f32.mrf.mxu0
        %v3191 = vadd.f32 0.0, %v3190
        %3192 = vdwg.mxu0
        %3193 = vmatpush.bf16.msra.mxu0 0
        %3194 = vmatpush.bf16.msra.mxu0 0
        %3195 = vmatpush.bf16.msra.mxu0 0
        %3196 = vmatpush.bf16.msra.mxu0 0
        %3197 = vmatpush.bf16.msra.mxu0 0
        %3198 = vmatpush.bf16.msra.mxu0 0
        %3199 = vmatpush.bf16.msra.mxu0 0
        %3200 = vmatpush.bf16.msra.mxu0 %v3140
        %3201 = vmatmul.bf16.gmra.mxu0 %v3128
        %v3202 = vpop.f32.mrf.mxu0
        %v3203 = vadd.f32 0.0, %v3202
        %v3204 = vpop.f32.mrf.mxu0
        %v3205 = vadd.f32 0.0, %v3204
        %3206 = vdwg.mxu0
        %3207 = vmatpush.bf16.msra.mxu0 0
        %3208 = vmatpush.bf16.msra.mxu0 0
        %3209 = vmatpush.bf16.msra.mxu0 0
        %3210 = vmatpush.bf16.msra.mxu0 0
        %3211 = vmatpush.bf16.msra.mxu0 0
        %3212 = vmatpush.bf16.msra.mxu0 0
        %3213 = vmatpush.bf16.msra.mxu0 0
        %3214 = vmatpush.bf16.msra.mxu0 %v3143
        %3215 = vmatmul.bf16.gmra.mxu0 %v3128
        %v3216 = vpop.f32.mrf.mxu0
        %v3217 = vadd.f32 0.0, %v3216
        %v3218 = vpop.f32.mrf.mxu0
        %v3219 = vadd.f32 0.0, %v3218
        %3220 = vdwg.mxu0
        %3221 = vmatpush.bf16.msra.mxu0 0
        %3222 = vmatpush.bf16.msra.mxu0 0
        %3223 = vmatpush.bf16.msra.mxu0 0
        %3224 = vmatpush.bf16.msra.mxu0 0
        %3225 = vmatpush.bf16.msra.mxu0 0
        %3226 = vmatpush.bf16.msra.mxu0 0
        %3227 = vmatpush.bf16.msra.mxu0 0
        %3228 = vmatpush.bf16.msra.mxu0 %v3146
        %3229 = vmatmul.bf16.gmra.mxu0 %v3128
        %v3230 = vpop.f32.mrf.mxu0
        %v3231 = vadd.f32 0.0, %v3230
        %v3232 = vpop.f32.mrf.mxu0
        %v3233 = vadd.f32 0.0, %v3232
        %3234 = vdwg.mxu0
        %3235 = vmatpush.bf16.msra.mxu0 0
        %3236 = vmatpush.bf16.msra.mxu0 0
        %3237 = vmatpush.bf16.msra.mxu0 0
        %3238 = vmatpush.bf16.msra.mxu0 0
        %3239 = vmatpush.bf16.msra.mxu0 0
        %3240 = vmatpush.bf16.msra.mxu0 0
        %3241 = vmatpush.bf16.msra.mxu0 0
        %3242 = vmatpush.bf16.msra.mxu0 %v3149
        %3243 = vmatmul.bf16.gmra.mxu0 %v3128
        %v3244 = vpop.f32.mrf.mxu0
        %v3245 = vadd.f32 0.0, %v3244
        %v3246 = vpop.f32.mrf.mxu0
        %v3247 = vadd.f32 0.0, %v3246
        %3248 = vdwg.mxu0
        %v3249 = vadd.f32 %v3081, %v3161
        %v3250 = vadd.f32 %v3082, %v3175
        %v3251 = vadd.f32 %v3083, %v3189
        %v3252 = vadd.f32 %v3084, %v3203
        %v3253 = vadd.f32 %v3085, %v3217
        %v3254 = vadd.f32 %v3086, %v3231
        %v3255 = vadd.f32 %v3087, %v3245
        %v3256 = vadd.f32 %v3088, %v3163
        %v3257 = vadd.f32 %v3089, %v3177
        %v3258 = vadd.f32 %v3090, %v3191
        %v3259 = vadd.f32 %v3091, %v3205
        %v3260 = vadd.f32 %v3092, %v3219
        %v3261 = vadd.f32 %v3093, %v3233
        %v3262 = vadd.f32 %v3094, %v3247
        %s3263 = scalar_lea.vmem %s1, 136
        %v3264 = vld [vmem:[%s3263] sm:$0xf]
        %v3265 = vld [vmem:[%s3263 + $0x4] sm:$0x3]
        %v3268 = vunpack.c.l.b16 %v3264
        %v3269 = vunpack.c.l.b16 %v3265
        %v3270 = vpack.c.b16 %v3269, %v3268
        %3271 = vrot.lane.b32.xlu0 %v468, 30
        %v3272 = vpop.permute.xlu0 %3271
        %3273 = vrot.lane.b32.xlu0 %v469, 30
        %v3274 = vpop.permute.xlu0 %3273
        %3275 = vrot.lane.b32.xlu0 %v470, 30
        %v3276 = vpop.permute.xlu0 %3275
        %3277 = vrot.lane.b32.xlu0 %v471, 30
        %v3278 = vpop.permute.xlu0 %3277
        %3279 = vrot.lane.b32.xlu0 %v472, 30
        %v3280 = vpop.permute.xlu0 %3279
        %3281 = vrot.lane.b32.xlu0 %v473, 30
        %v3282 = vpop.permute.xlu0 %3281
        %3283 = vrot.lane.b32.xlu0 %v474, 30
        %v3284 = vpop.permute.xlu0 %3283
        %3285 = vrot.lane.b32.xlu0 %v1254, 30
        %v3286 = vpop.permute.xlu0 %3285
        %vm3287 = vcmask 244736
        %v3288 = vsel %vm3287, %v3272, %v3274
        %v3289 = vsel %vm3287, %v3274, %v3276
        %v3290 = vsel %vm3287, %v3276, %v3278
        %v3291 = vsel %vm3287, %v3278, %v3280
        %v3292 = vsel %vm3287, %v3280, %v3282
        %v3293 = vsel %vm3287, %v3282, %v3284
        %v3294 = vsel %vm3287, %v3284, %v3286
        %v3296 = vsel %vm496, %v3270, 0
        %v3299 = vand.u32 %v3288, %v503
        %v3302 = vand.u32 %v3289, %v503
        %v3305 = vand.u32 %v3290, %v503
        %v3308 = vand.u32 %v3291, %v503
        %v3311 = vand.u32 %v3292, %v503
        %v3314 = vand.u32 %v3293, %v503
        %v3317 = vand.u32 %v3294, %v503
        %3319 = vmatpush.bf16.msra.mxu0 0
        %3320 = vmatpush.bf16.msra.mxu0 0
        %3321 = vmatpush.bf16.msra.mxu0 0
        %3322 = vmatpush.bf16.msra.mxu0 0
        %3323 = vmatpush.bf16.msra.mxu0 0
        %3324 = vmatpush.bf16.msra.mxu0 0
        %3325 = vmatpush.bf16.msra.mxu0 0
        %3326 = vmatpush.bf16.msra.mxu0 %v3299
        %3327 = vmatmul.bf16.gmra.mxu0 %v3296
        %v3328 = vpop.f32.mrf.mxu0
        %v3329 = vadd.f32 0.0, %v3328
        %v3330 = vpop.f32.mrf.mxu0
        %v3331 = vadd.f32 0.0, %v3330
        %3332 = vdwg.mxu0
        %3333 = vmatpush.bf16.msra.mxu0 0
        %3334 = vmatpush.bf16.msra.mxu0 0
        %3335 = vmatpush.bf16.msra.mxu0 0
        %3336 = vmatpush.bf16.msra.mxu0 0
        %3337 = vmatpush.bf16.msra.mxu0 0
        %3338 = vmatpush.bf16.msra.mxu0 0
        %3339 = vmatpush.bf16.msra.mxu0 0
        %3340 = vmatpush.bf16.msra.mxu0 %v3302
        %3341 = vmatmul.bf16.gmra.mxu0 %v3296
        %v3342 = vpop.f32.mrf.mxu0
        %v3343 = vadd.f32 0.0, %v3342
        %v3344 = vpop.f32.mrf.mxu0
        %v3345 = vadd.f32 0.0, %v3344
        %3346 = vdwg.mxu0
        %3347 = vmatpush.bf16.msra.mxu0 0
        %3348 = vmatpush.bf16.msra.mxu0 0
        %3349 = vmatpush.bf16.msra.mxu0 0
        %3350 = vmatpush.bf16.msra.mxu0 0
        %3351 = vmatpush.bf16.msra.mxu0 0
        %3352 = vmatpush.bf16.msra.mxu0 0
        %3353 = vmatpush.bf16.msra.mxu0 0
        %3354 = vmatpush.bf16.msra.mxu0 %v3305
        %3355 = vmatmul.bf16.gmra.mxu0 %v3296
        %v3356 = vpop.f32.mrf.mxu0
        %v3357 = vadd.f32 0.0, %v3356
        %v3358 = vpop.f32.mrf.mxu0
        %v3359 = vadd.f32 0.0, %v3358
        %3360 = vdwg.mxu0
        %3361 = vmatpush.bf16.msra.mxu0 0
        %3362 = vmatpush.bf16.msra.mxu0 0
        %3363 = vmatpush.bf16.msra.mxu0 0
        %3364 = vmatpush.bf16.msra.mxu0 0
        %3365 = vmatpush.bf16.msra.mxu0 0
        %3366 = vmatpush.bf16.msra.mxu0 0
        %3367 = vmatpush.bf16.msra.mxu0 0
        %3368 = vmatpush.bf16.msra.mxu0 %v3308
        %3369 = vmatmul.bf16.gmra.mxu0 %v3296
        %v3370 = vpop.f32.mrf.mxu0
        %v3371 = vadd.f32 0.0, %v3370
        %v3372 = vpop.f32.mrf.mxu0
        %v3373 = vadd.f32 0.0, %v3372
        %3374 = vdwg.mxu0
        %3375 = vmatpush.bf16.msra.mxu0 0
        %3376 = vmatpush.bf16.msra.mxu0 0
        %3377 = vmatpush.bf16.msra.mxu0 0
        %3378 = vmatpush.bf16.msra.mxu0 0
        %3379 = vmatpush.bf16.msra.mxu0 0
        %3380 = vmatpush.bf16.msra.mxu0 0
        %3381 = vmatpush.bf16.msra.mxu0 0
        %3382 = vmatpush.bf16.msra.mxu0 %v3311
        %3383 = vmatmul.bf16.gmra.mxu0 %v3296
        %v3384 = vpop.f32.mrf.mxu0
        %v3385 = vadd.f32 0.0, %v3384
        %v3386 = vpop.f32.mrf.mxu0
        %v3387 = vadd.f32 0.0, %v3386
        %3388 = vdwg.mxu0
        %3389 = vmatpush.bf16.msra.mxu0 0
        %3390 = vmatpush.bf16.msra.mxu0 0
        %3391 = vmatpush.bf16.msra.mxu0 0
        %3392 = vmatpush.bf16.msra.mxu0 0
        %3393 = vmatpush.bf16.msra.mxu0 0
        %3394 = vmatpush.bf16.msra.mxu0 0
        %3395 = vmatpush.bf16.msra.mxu0 0
        %3396 = vmatpush.bf16.msra.mxu0 %v3314
        %3397 = vmatmul.bf16.gmra.mxu0 %v3296
        %v3398 = vpop.f32.mrf.mxu0
        %v3399 = vadd.f32 0.0, %v3398
        %v3400 = vpop.f32.mrf.mxu0
        %v3401 = vadd.f32 0.0, %v3400
        %3402 = vdwg.mxu0
        %3403 = vmatpush.bf16.msra.mxu0 0
        %3404 = vmatpush.bf16.msra.mxu0 0
        %3405 = vmatpush.bf16.msra.mxu0 0
        %3406 = vmatpush.bf16.msra.mxu0 0
        %3407 = vmatpush.bf16.msra.mxu0 0
        %3408 = vmatpush.bf16.msra.mxu0 0
        %3409 = vmatpush.bf16.msra.mxu0 0
        %3410 = vmatpush.bf16.msra.mxu0 %v3317
        %3411 = vmatmul.bf16.gmra.mxu0 %v3296
        %v3412 = vpop.f32.mrf.mxu0
        %v3413 = vadd.f32 0.0, %v3412
        %v3414 = vpop.f32.mrf.mxu0
        %v3415 = vadd.f32 0.0, %v3414
        %3416 = vdwg.mxu0
        %v3417 = vadd.f32 %v3249, %v3329
        %v3418 = vadd.f32 %v3250, %v3343
        %v3419 = vadd.f32 %v3251, %v3357
        %v3420 = vadd.f32 %v3252, %v3371
        %v3421 = vadd.f32 %v3253, %v3385
        %v3422 = vadd.f32 %v3254, %v3399
        %v3423 = vadd.f32 %v3255, %v3413
        %v3424 = vadd.f32 %v3256, %v3331
        %v3425 = vadd.f32 %v3257, %v3345
        %v3426 = vadd.f32 %v3258, %v3359
        %v3427 = vadd.f32 %v3259, %v3373
        %v3428 = vadd.f32 %v3260, %v3387
        %v3429 = vadd.f32 %v3261, %v3401
        %v3430 = vadd.f32 %v3262, %v3415
        %s3431 = scalar_lea.vmem %s1, 144
        %v3432 = vld [vmem:[%s3431] sm:$0xf]
        %v3433 = vld [vmem:[%s3431 + $0x4] sm:$0x3]
        %v3436 = vunpack.c.l.b16 %v3432
        %v3437 = vunpack.c.l.b16 %v3433
        %v3438 = vpack.c.b16 %v3437, %v3436
        %3439 = vrot.lane.b32.xlu0 %v468, 29
        %v3440 = vpop.permute.xlu0 %3439
        %3441 = vrot.lane.b32.xlu0 %v469, 29
        %v3442 = vpop.permute.xlu0 %3441
        %3443 = vrot.lane.b32.xlu0 %v470, 29
        %v3444 = vpop.permute.xlu0 %3443
        %3445 = vrot.lane.b32.xlu0 %v471, 29
        %v3446 = vpop.permute.xlu0 %3445
        %3447 = vrot.lane.b32.xlu0 %v472, 29
        %v3448 = vpop.permute.xlu0 %3447
        %3449 = vrot.lane.b32.xlu0 %v473, 29
        %v3450 = vpop.permute.xlu0 %3449
        %3451 = vrot.lane.b32.xlu0 %v474, 29
        %v3452 = vpop.permute.xlu0 %3451
        %3453 = vrot.lane.b32.xlu0 %v1254, 29
        %v3454 = vpop.permute.xlu0 %3453
        %vm3455 = vcmask 236544
        %v3456 = vsel %vm3455, %v3440, %v3442
        %v3457 = vsel %vm3455, %v3442, %v3444
        %v3458 = vsel %vm3455, %v3444, %v3446
        %v3459 = vsel %vm3455, %v3446, %v3448
        %v3460 = vsel %vm3455, %v3448, %v3450
        %v3461 = vsel %vm3455, %v3450, %v3452
        %v3462 = vsel %vm3455, %v3452, %v3454
        %v3464 = vsel %vm496, %v3438, 0
        %v3467 = vand.u32 %v3456, %v503
        %v3470 = vand.u32 %v3457, %v503
        %v3473 = vand.u32 %v3458, %v503
        %v3476 = vand.u32 %v3459, %v503
        %v3479 = vand.u32 %v3460, %v503
        %v3482 = vand.u32 %v3461, %v503
        %v3485 = vand.u32 %v3462, %v503
        %3487 = vmatpush.bf16.msra.mxu0 0
        %3488 = vmatpush.bf16.msra.mxu0 0
        %3489 = vmatpush.bf16.msra.mxu0 0
        %3490 = vmatpush.bf16.msra.mxu0 0
        %3491 = vmatpush.bf16.msra.mxu0 0
        %3492 = vmatpush.bf16.msra.mxu0 0
        %3493 = vmatpush.bf16.msra.mxu0 0
        %3494 = vmatpush.bf16.msra.mxu0 %v3467
        %3495 = vmatmul.bf16.gmra.mxu0 %v3464
        %v3496 = vpop.f32.mrf.mxu0
        %v3497 = vadd.f32 0.0, %v3496
        %v3498 = vpop.f32.mrf.mxu0
        %v3499 = vadd.f32 0.0, %v3498
        %3500 = vdwg.mxu0
        %3501 = vmatpush.bf16.msra.mxu0 0
        %3502 = vmatpush.bf16.msra.mxu0 0
        %3503 = vmatpush.bf16.msra.mxu0 0
        %3504 = vmatpush.bf16.msra.mxu0 0
        %3505 = vmatpush.bf16.msra.mxu0 0
        %3506 = vmatpush.bf16.msra.mxu0 0
        %3507 = vmatpush.bf16.msra.mxu0 0
        %3508 = vmatpush.bf16.msra.mxu0 %v3470
        %3509 = vmatmul.bf16.gmra.mxu0 %v3464
        %v3510 = vpop.f32.mrf.mxu0
        %v3511 = vadd.f32 0.0, %v3510
        %v3512 = vpop.f32.mrf.mxu0
        %v3513 = vadd.f32 0.0, %v3512
        %3514 = vdwg.mxu0
        %3515 = vmatpush.bf16.msra.mxu0 0
        %3516 = vmatpush.bf16.msra.mxu0 0
        %3517 = vmatpush.bf16.msra.mxu0 0
        %3518 = vmatpush.bf16.msra.mxu0 0
        %3519 = vmatpush.bf16.msra.mxu0 0
        %3520 = vmatpush.bf16.msra.mxu0 0
        %3521 = vmatpush.bf16.msra.mxu0 0
        %3522 = vmatpush.bf16.msra.mxu0 %v3473
        %3523 = vmatmul.bf16.gmra.mxu0 %v3464
        %v3524 = vpop.f32.mrf.mxu0
        %v3525 = vadd.f32 0.0, %v3524
        %v3526 = vpop.f32.mrf.mxu0
        %v3527 = vadd.f32 0.0, %v3526
        %3528 = vdwg.mxu0
        %3529 = vmatpush.bf16.msra.mxu0 0
        %3530 = vmatpush.bf16.msra.mxu0 0
        %3531 = vmatpush.bf16.msra.mxu0 0
        %3532 = vmatpush.bf16.msra.mxu0 0
        %3533 = vmatpush.bf16.msra.mxu0 0
        %3534 = vmatpush.bf16.msra.mxu0 0
        %3535 = vmatpush.bf16.msra.mxu0 0
        %3536 = vmatpush.bf16.msra.mxu0 %v3476
        %3537 = vmatmul.bf16.gmra.mxu0 %v3464
        %v3538 = vpop.f32.mrf.mxu0
        %v3539 = vadd.f32 0.0, %v3538
        %v3540 = vpop.f32.mrf.mxu0
        %v3541 = vadd.f32 0.0, %v3540
        %3542 = vdwg.mxu0
        %3543 = vmatpush.bf16.msra.mxu0 0
        %3544 = vmatpush.bf16.msra.mxu0 0
        %3545 = vmatpush.bf16.msra.mxu0 0
        %3546 = vmatpush.bf16.msra.mxu0 0
        %3547 = vmatpush.bf16.msra.mxu0 0
        %3548 = vmatpush.bf16.msra.mxu0 0
        %3549 = vmatpush.bf16.msra.mxu0 0
        %3550 = vmatpush.bf16.msra.mxu0 %v3479
        %3551 = vmatmul.bf16.gmra.mxu0 %v3464
        %v3552 = vpop.f32.mrf.mxu0
        %v3553 = vadd.f32 0.0, %v3552
        %v3554 = vpop.f32.mrf.mxu0
        %v3555 = vadd.f32 0.0, %v3554
        %3556 = vdwg.mxu0
        %3557 = vmatpush.bf16.msra.mxu0 0
        %3558 = vmatpush.bf16.msra.mxu0 0
        %3559 = vmatpush.bf16.msra.mxu0 0
        %3560 = vmatpush.bf16.msra.mxu0 0
        %3561 = vmatpush.bf16.msra.mxu0 0
        %3562 = vmatpush.bf16.msra.mxu0 0
        %3563 = vmatpush.bf16.msra.mxu0 0
        %3564 = vmatpush.bf16.msra.mxu0 %v3482
        %3565 = vmatmul.bf16.gmra.mxu0 %v3464
        %v3566 = vpop.f32.mrf.mxu0
        %v3567 = vadd.f32 0.0, %v3566
        %v3568 = vpop.f32.mrf.mxu0
        %v3569 = vadd.f32 0.0, %v3568
        %3570 = vdwg.mxu0
        %3571 = vmatpush.bf16.msra.mxu0 0
        %3572 = vmatpush.bf16.msra.mxu0 0
        %3573 = vmatpush.bf16.msra.mxu0 0
        %3574 = vmatpush.bf16.msra.mxu0 0
        %3575 = vmatpush.bf16.msra.mxu0 0
        %3576 = vmatpush.bf16.msra.mxu0 0
        %3577 = vmatpush.bf16.msra.mxu0 0
        %3578 = vmatpush.bf16.msra.mxu0 %v3485
        %3579 = vmatmul.bf16.gmra.mxu0 %v3464
        %v3580 = vpop.f32.mrf.mxu0
        %v3581 = vadd.f32 0.0, %v3580
        %v3582 = vpop.f32.mrf.mxu0
        %v3583 = vadd.f32 0.0, %v3582
        %3584 = vdwg.mxu0
        %v3585 = vadd.f32 %v3417, %v3497
        %v3586 = vadd.f32 %v3418, %v3511
        %v3587 = vadd.f32 %v3419, %v3525
        %v3588 = vadd.f32 %v3420, %v3539
        %v3589 = vadd.f32 %v3421, %v3553
        %v3590 = vadd.f32 %v3422, %v3567
        %v3591 = vadd.f32 %v3423, %v3581
        %v3592 = vadd.f32 %v3424, %v3499
        %v3593 = vadd.f32 %v3425, %v3513
        %v3594 = vadd.f32 %v3426, %v3527
        %v3595 = vadd.f32 %v3427, %v3541
        %v3596 = vadd.f32 %v3428, %v3555
        %v3597 = vadd.f32 %v3429, %v3569
        %v3598 = vadd.f32 %v3430, %v3583
        %s3599 = scalar_lea.vmem %s1, 152
        %v3600 = vld [vmem:[%s3599] sm:$0xf]
        %v3601 = vld [vmem:[%s3599 + $0x4] sm:$0x3]
        %v3604 = vunpack.c.l.b16 %v3600
        %v3605 = vunpack.c.l.b16 %v3601
        %v3606 = vpack.c.b16 %v3605, %v3604
        %3607 = vrot.lane.b32.xlu0 %v468, 28
        %v3608 = vpop.permute.xlu0 %3607
        %3609 = vrot.lane.b32.xlu0 %v469, 28
        %v3610 = vpop.permute.xlu0 %3609
        %3611 = vrot.lane.b32.xlu0 %v470, 28
        %v3612 = vpop.permute.xlu0 %3611
        %3613 = vrot.lane.b32.xlu0 %v471, 28
        %v3614 = vpop.permute.xlu0 %3613
        %3615 = vrot.lane.b32.xlu0 %v472, 28
        %v3616 = vpop.permute.xlu0 %3615
        %3617 = vrot.lane.b32.xlu0 %v473, 28
        %v3618 = vpop.permute.xlu0 %3617
        %3619 = vrot.lane.b32.xlu0 %v474, 28
        %v3620 = vpop.permute.xlu0 %3619
        %3621 = vrot.lane.b32.xlu0 %v1254, 28
        %v3622 = vpop.permute.xlu0 %3621
        %vm3623 = vcmask 228352
        %v3624 = vsel %vm3623, %v3608, %v3610
        %v3625 = vsel %vm3623, %v3610, %v3612
        %v3626 = vsel %vm3623, %v3612, %v3614
        %v3627 = vsel %vm3623, %v3614, %v3616
        %v3628 = vsel %vm3623, %v3616, %v3618
        %v3629 = vsel %vm3623, %v3618, %v3620
        %v3630 = vsel %vm3623, %v3620, %v3622
        %v3632 = vsel %vm496, %v3606, 0
        %v3635 = vand.u32 %v3624, %v503
        %v3638 = vand.u32 %v3625, %v503
        %v3641 = vand.u32 %v3626, %v503
        %v3644 = vand.u32 %v3627, %v503
        %v3647 = vand.u32 %v3628, %v503
        %v3650 = vand.u32 %v3629, %v503
        %v3653 = vand.u32 %v3630, %v503
        %3655 = vmatpush.bf16.msra.mxu0 0
        %3656 = vmatpush.bf16.msra.mxu0 0
        %3657 = vmatpush.bf16.msra.mxu0 0
        %3658 = vmatpush.bf16.msra.mxu0 0
        %3659 = vmatpush.bf16.msra.mxu0 0
        %3660 = vmatpush.bf16.msra.mxu0 0
        %3661 = vmatpush.bf16.msra.mxu0 0
        %3662 = vmatpush.bf16.msra.mxu0 %v3635
        %3663 = vmatmul.bf16.gmra.mxu0 %v3632
        %v3664 = vpop.f32.mrf.mxu0
        %v3665 = vadd.f32 0.0, %v3664
        %v3666 = vpop.f32.mrf.mxu0
        %v3667 = vadd.f32 0.0, %v3666
        %3668 = vdwg.mxu0
        %3669 = vmatpush.bf16.msra.mxu0 0
        %3670 = vmatpush.bf16.msra.mxu0 0
        %3671 = vmatpush.bf16.msra.mxu0 0
        %3672 = vmatpush.bf16.msra.mxu0 0
        %3673 = vmatpush.bf16.msra.mxu0 0
        %3674 = vmatpush.bf16.msra.mxu0 0
        %3675 = vmatpush.bf16.msra.mxu0 0
        %3676 = vmatpush.bf16.msra.mxu0 %v3638
        %3677 = vmatmul.bf16.gmra.mxu0 %v3632
        %v3678 = vpop.f32.mrf.mxu0
        %v3679 = vadd.f32 0.0, %v3678
        %v3680 = vpop.f32.mrf.mxu0
        %v3681 = vadd.f32 0.0, %v3680
        %3682 = vdwg.mxu0
        %3683 = vmatpush.bf16.msra.mxu0 0
        %3684 = vmatpush.bf16.msra.mxu0 0
        %3685 = vmatpush.bf16.msra.mxu0 0
        %3686 = vmatpush.bf16.msra.mxu0 0
        %3687 = vmatpush.bf16.msra.mxu0 0
        %3688 = vmatpush.bf16.msra.mxu0 0
        %3689 = vmatpush.bf16.msra.mxu0 0
        %3690 = vmatpush.bf16.msra.mxu0 %v3641
        %3691 = vmatmul.bf16.gmra.mxu0 %v3632
        %v3692 = vpop.f32.mrf.mxu0
        %v3693 = vadd.f32 0.0, %v3692
        %v3694 = vpop.f32.mrf.mxu0
        %v3695 = vadd.f32 0.0, %v3694
        %3696 = vdwg.mxu0
        %3697 = vmatpush.bf16.msra.mxu0 0
        %3698 = vmatpush.bf16.msra.mxu0 0
        %3699 = vmatpush.bf16.msra.mxu0 0
        %3700 = vmatpush.bf16.msra.mxu0 0
        %3701 = vmatpush.bf16.msra.mxu0 0
        %3702 = vmatpush.bf16.msra.mxu0 0
        %3703 = vmatpush.bf16.msra.mxu0 0
        %3704 = vmatpush.bf16.msra.mxu0 %v3644
        %3705 = vmatmul.bf16.gmra.mxu0 %v3632
        %v3706 = vpop.f32.mrf.mxu0
        %v3707 = vadd.f32 0.0, %v3706
        %v3708 = vpop.f32.mrf.mxu0
        %v3709 = vadd.f32 0.0, %v3708
        %3710 = vdwg.mxu0
        %3711 = vmatpush.bf16.msra.mxu0 0
        %3712 = vmatpush.bf16.msra.mxu0 0
        %3713 = vmatpush.bf16.msra.mxu0 0
        %3714 = vmatpush.bf16.msra.mxu0 0
        %3715 = vmatpush.bf16.msra.mxu0 0
        %3716 = vmatpush.bf16.msra.mxu0 0
        %3717 = vmatpush.bf16.msra.mxu0 0
        %3718 = vmatpush.bf16.msra.mxu0 %v3647
        %3719 = vmatmul.bf16.gmra.mxu0 %v3632
        %v3720 = vpop.f32.mrf.mxu0
        %v3721 = vadd.f32 0.0, %v3720
        %v3722 = vpop.f32.mrf.mxu0
        %v3723 = vadd.f32 0.0, %v3722
        %3724 = vdwg.mxu0
        %3725 = vmatpush.bf16.msra.mxu0 0
        %3726 = vmatpush.bf16.msra.mxu0 0
        %3727 = vmatpush.bf16.msra.mxu0 0
        %3728 = vmatpush.bf16.msra.mxu0 0
        %3729 = vmatpush.bf16.msra.mxu0 0
        %3730 = vmatpush.bf16.msra.mxu0 0
        %3731 = vmatpush.bf16.msra.mxu0 0
        %3732 = vmatpush.bf16.msra.mxu0 %v3650
        %3733 = vmatmul.bf16.gmra.mxu0 %v3632
        %v3734 = vpop.f32.mrf.mxu0
        %v3735 = vadd.f32 0.0, %v3734
        %v3736 = vpop.f32.mrf.mxu0
        %v3737 = vadd.f32 0.0, %v3736
        %3738 = vdwg.mxu0
        %3739 = vmatpush.bf16.msra.mxu0 0
        %3740 = vmatpush.bf16.msra.mxu0 0
        %3741 = vmatpush.bf16.msra.mxu0 0
        %3742 = vmatpush.bf16.msra.mxu0 0
        %3743 = vmatpush.bf16.msra.mxu0 0
        %3744 = vmatpush.bf16.msra.mxu0 0
        %3745 = vmatpush.bf16.msra.mxu0 0
        %3746 = vmatpush.bf16.msra.mxu0 %v3653
        %3747 = vmatmul.bf16.gmra.mxu0 %v3632
        %v3748 = vpop.f32.mrf.mxu0
        %v3749 = vadd.f32 0.0, %v3748
        %v3750 = vpop.f32.mrf.mxu0
        %v3751 = vadd.f32 0.0, %v3750
        %3752 = vdwg.mxu0
        %v3753 = vadd.f32 %v3585, %v3665
        %v3754 = vadd.f32 %v3586, %v3679
        %v3755 = vadd.f32 %v3587, %v3693
        %v3756 = vadd.f32 %v3588, %v3707
        %v3757 = vadd.f32 %v3589, %v3721
        %v3758 = vadd.f32 %v3590, %v3735
        %v3759 = vadd.f32 %v3591, %v3749
        %v3760 = vadd.f32 %v3592, %v3667
        %v3761 = vadd.f32 %v3593, %v3681
        %v3762 = vadd.f32 %v3594, %v3695
        %v3763 = vadd.f32 %v3595, %v3709
        %v3764 = vadd.f32 %v3596, %v3723
        %v3765 = vadd.f32 %v3597, %v3737
        %v3766 = vadd.f32 %v3598, %v3751
        %s3767 = scalar_lea.vmem %s1, 160
        %v3768 = vld [vmem:[%s3767] sm:$0xf]
        %v3769 = vld [vmem:[%s3767 + $0x4] sm:$0x3]
        %v3772 = vunpack.c.l.b16 %v3768
        %v3773 = vunpack.c.l.b16 %v3769
        %v3774 = vpack.c.b16 %v3773, %v3772
        %v3776 = vsel %vm496, %v3774, 0
        %v3779 = vand.u32 %v1254, %v503
        %3781 = vmatpush.bf16.msra.mxu0 0
        %3782 = vmatpush.bf16.msra.mxu0 0
        %3783 = vmatpush.bf16.msra.mxu0 0
        %3784 = vmatpush.bf16.msra.mxu0 0
        %3785 = vmatpush.bf16.msra.mxu0 0
        %3786 = vmatpush.bf16.msra.mxu0 0
        %3787 = vmatpush.bf16.msra.mxu0 0
        %3788 = vmatpush.bf16.msra.mxu0 %v635
        %3789 = vmatmul.bf16.gmra.mxu0 %v3776
        %v3790 = vpop.f32.mrf.mxu0
        %v3791 = vadd.f32 0.0, %v3790
        %v3792 = vpop.f32.mrf.mxu0
        %v3793 = vadd.f32 0.0, %v3792
        %3794 = vdwg.mxu0
        %3795 = vmatpush.bf16.msra.mxu0 0
        %3796 = vmatpush.bf16.msra.mxu0 0
        %3797 = vmatpush.bf16.msra.mxu0 0
        %3798 = vmatpush.bf16.msra.mxu0 0
        %3799 = vmatpush.bf16.msra.mxu0 0
        %3800 = vmatpush.bf16.msra.mxu0 0
        %3801 = vmatpush.bf16.msra.mxu0 0
        %3802 = vmatpush.bf16.msra.mxu0 %v638
        %3803 = vmatmul.bf16.gmra.mxu0 %v3776
        %v3804 = vpop.f32.mrf.mxu0
        %v3805 = vadd.f32 0.0, %v3804
        %v3806 = vpop.f32.mrf.mxu0
        %v3807 = vadd.f32 0.0, %v3806
        %3808 = vdwg.mxu0
        %3809 = vmatpush.bf16.msra.mxu0 0
        %3810 = vmatpush.bf16.msra.mxu0 0
        %3811 = vmatpush.bf16.msra.mxu0 0
        %3812 = vmatpush.bf16.msra.mxu0 0
        %3813 = vmatpush.bf16.msra.mxu0 0
        %3814 = vmatpush.bf16.msra.mxu0 0
        %3815 = vmatpush.bf16.msra.mxu0 0
        %3816 = vmatpush.bf16.msra.mxu0 %v641
        %3817 = vmatmul.bf16.gmra.mxu0 %v3776
        %v3818 = vpop.f32.mrf.mxu0
        %v3819 = vadd.f32 0.0, %v3818
        %v3820 = vpop.f32.mrf.mxu0
        %v3821 = vadd.f32 0.0, %v3820
        %3822 = vdwg.mxu0
        %3823 = vmatpush.bf16.msra.mxu0 0
        %3824 = vmatpush.bf16.msra.mxu0 0
        %3825 = vmatpush.bf16.msra.mxu0 0
        %3826 = vmatpush.bf16.msra.mxu0 0
        %3827 = vmatpush.bf16.msra.mxu0 0
        %3828 = vmatpush.bf16.msra.mxu0 0
        %3829 = vmatpush.bf16.msra.mxu0 0
        %3830 = vmatpush.bf16.msra.mxu0 %v644
        %3831 = vmatmul.bf16.gmra.mxu0 %v3776
        %v3832 = vpop.f32.mrf.mxu0
        %v3833 = vadd.f32 0.0, %v3832
        %v3834 = vpop.f32.mrf.mxu0
        %v3835 = vadd.f32 0.0, %v3834
        %3836 = vdwg.mxu0
        %3837 = vmatpush.bf16.msra.mxu0 0
        %3838 = vmatpush.bf16.msra.mxu0 0
        %3839 = vmatpush.bf16.msra.mxu0 0
        %3840 = vmatpush.bf16.msra.mxu0 0
        %3841 = vmatpush.bf16.msra.mxu0 0
        %3842 = vmatpush.bf16.msra.mxu0 0
        %3843 = vmatpush.bf16.msra.mxu0 0
        %3844 = vmatpush.bf16.msra.mxu0 %v647
        %3845 = vmatmul.bf16.gmra.mxu0 %v3776
        %v3846 = vpop.f32.mrf.mxu0
        %v3847 = vadd.f32 0.0, %v3846
        %v3848 = vpop.f32.mrf.mxu0
        %v3849 = vadd.f32 0.0, %v3848
        %3850 = vdwg.mxu0
        %3851 = vmatpush.bf16.msra.mxu0 0
        %3852 = vmatpush.bf16.msra.mxu0 0
        %3853 = vmatpush.bf16.msra.mxu0 0
        %3854 = vmatpush.bf16.msra.mxu0 0
        %3855 = vmatpush.bf16.msra.mxu0 0
        %3856 = vmatpush.bf16.msra.mxu0 0
        %3857 = vmatpush.bf16.msra.mxu0 0
        %3858 = vmatpush.bf16.msra.mxu0 %v650
        %3859 = vmatmul.bf16.gmra.mxu0 %v3776
        %v3860 = vpop.f32.mrf.mxu0
        %v3861 = vadd.f32 0.0, %v3860
        %v3862 = vpop.f32.mrf.mxu0
        %v3863 = vadd.f32 0.0, %v3862
        %3864 = vdwg.mxu0
        %3865 = vmatpush.bf16.msra.mxu0 0
        %3866 = vmatpush.bf16.msra.mxu0 0
        %3867 = vmatpush.bf16.msra.mxu0 0
        %3868 = vmatpush.bf16.msra.mxu0 0
        %3869 = vmatpush.bf16.msra.mxu0 0
        %3870 = vmatpush.bf16.msra.mxu0 0
        %3871 = vmatpush.bf16.msra.mxu0 0
        %3872 = vmatpush.bf16.msra.mxu0 %v3779
        %3873 = vmatmul.bf16.gmra.mxu0 %v3776
        %v3874 = vpop.f32.mrf.mxu0
        %v3875 = vadd.f32 0.0, %v3874
        %v3876 = vpop.f32.mrf.mxu0
        %v3877 = vadd.f32 0.0, %v3876
        %3878 = vdwg.mxu0
        %v3879 = vadd.f32 %v3753, %v3791
        %v3880 = vadd.f32 %v3754, %v3805
        %v3881 = vadd.f32 %v3755, %v3819
        %v3882 = vadd.f32 %v3756, %v3833
        %v3883 = vadd.f32 %v3757, %v3847
        %v3884 = vadd.f32 %v3758, %v3861
        %v3885 = vadd.f32 %v3759, %v3875
        %v3886 = vadd.f32 %v3760, %v3793
        %v3887 = vadd.f32 %v3761, %v3807
        %v3888 = vadd.f32 %v3762, %v3821
        %v3889 = vadd.f32 %v3763, %v3835
        %v3890 = vadd.f32 %v3764, %v3849
        %v3891 = vadd.f32 %v3765, %v3863
        %v3892 = vadd.f32 %v3766, %v3877
        %s3893 = scalar_lea.vmem %s1, 168
        %v3894 = vld [vmem:[%s3893] sm:$0xf]
        %v3895 = vld [vmem:[%s3893 + $0x4] sm:$0x3]
        %v3898 = vunpack.c.l.b16 %v3894
        %v3899 = vunpack.c.l.b16 %v3895
        %v3900 = vpack.c.b16 %v3899, %v3898
        %3901 = vrot.lane.b32.xlu0 %v1254, 127
        %v3902 = vpop.permute.xlu0 %3901
        %v3903 = vsel %vm489, %v488, %v3902
        %v3905 = vsel %vm496, %v3900, 0
        %v3908 = vand.u32 %v3903, %v503
        %v3911 = vand.u32 %v3902, %v503
        %3913 = vmatpush.bf16.msra.mxu0 0
        %3914 = vmatpush.bf16.msra.mxu0 0
        %3915 = vmatpush.bf16.msra.mxu0 0
        %3916 = vmatpush.bf16.msra.mxu0 0
        %3917 = vmatpush.bf16.msra.mxu0 0
        %3918 = vmatpush.bf16.msra.mxu0 0
        %3919 = vmatpush.bf16.msra.mxu0 0
        %3920 = vmatpush.bf16.msra.mxu0 %v508
        %3921 = vmatmul.bf16.gmra.mxu0 %v3905
        %v3922 = vpop.f32.mrf.mxu0
        %v3923 = vadd.f32 0.0, %v3922
        %v3924 = vpop.f32.mrf.mxu0
        %v3925 = vadd.f32 0.0, %v3924
        %3926 = vdwg.mxu0
        %3927 = vmatpush.bf16.msra.mxu0 0
        %3928 = vmatpush.bf16.msra.mxu0 0
        %3929 = vmatpush.bf16.msra.mxu0 0
        %3930 = vmatpush.bf16.msra.mxu0 0
        %3931 = vmatpush.bf16.msra.mxu0 0
        %3932 = vmatpush.bf16.msra.mxu0 0
        %3933 = vmatpush.bf16.msra.mxu0 0
        %3934 = vmatpush.bf16.msra.mxu0 %v511
        %3935 = vmatmul.bf16.gmra.mxu0 %v3905
        %v3936 = vpop.f32.mrf.mxu0
        %v3937 = vadd.f32 0.0, %v3936
        %v3938 = vpop.f32.mrf.mxu0
        %v3939 = vadd.f32 0.0, %v3938
        %3940 = vdwg.mxu0
        %3941 = vmatpush.bf16.msra.mxu0 0
        %3942 = vmatpush.bf16.msra.mxu0 0
        %3943 = vmatpush.bf16.msra.mxu0 0
        %3944 = vmatpush.bf16.msra.mxu0 0
        %3945 = vmatpush.bf16.msra.mxu0 0
        %3946 = vmatpush.bf16.msra.mxu0 0
        %3947 = vmatpush.bf16.msra.mxu0 0
        %3948 = vmatpush.bf16.msra.mxu0 %v514
        %3949 = vmatmul.bf16.gmra.mxu0 %v3905
        %v3950 = vpop.f32.mrf.mxu0
        %v3951 = vadd.f32 0.0, %v3950
        %v3952 = vpop.f32.mrf.mxu0
        %v3953 = vadd.f32 0.0, %v3952
        %3954 = vdwg.mxu0
        %3955 = vmatpush.bf16.msra.mxu0 0
        %3956 = vmatpush.bf16.msra.mxu0 0
        %3957 = vmatpush.bf16.msra.mxu0 0
        %3958 = vmatpush.bf16.msra.mxu0 0
        %3959 = vmatpush.bf16.msra.mxu0 0
        %3960 = vmatpush.bf16.msra.mxu0 0
        %3961 = vmatpush.bf16.msra.mxu0 0
        %3962 = vmatpush.bf16.msra.mxu0 %v517
        %3963 = vmatmul.bf16.gmra.mxu0 %v3905
        %v3964 = vpop.f32.mrf.mxu0
        %v3965 = vadd.f32 0.0, %v3964
        %v3966 = vpop.f32.mrf.mxu0
        %v3967 = vadd.f32 0.0, %v3966
        %3968 = vdwg.mxu0
        %3969 = vmatpush.bf16.msra.mxu0 0
        %3970 = vmatpush.bf16.msra.mxu0 0
        %3971 = vmatpush.bf16.msra.mxu0 0
        %3972 = vmatpush.bf16.msra.mxu0 0
        %3973 = vmatpush.bf16.msra.mxu0 0
        %3974 = vmatpush.bf16.msra.mxu0 0
        %3975 = vmatpush.bf16.msra.mxu0 0
        %3976 = vmatpush.bf16.msra.mxu0 %v520
        %3977 = vmatmul.bf16.gmra.mxu0 %v3905
        %v3978 = vpop.f32.mrf.mxu0
        %v3979 = vadd.f32 0.0, %v3978
        %v3980 = vpop.f32.mrf.mxu0
        %v3981 = vadd.f32 0.0, %v3980
        %3982 = vdwg.mxu0
        %3983 = vmatpush.bf16.msra.mxu0 0
        %3984 = vmatpush.bf16.msra.mxu0 0
        %3985 = vmatpush.bf16.msra.mxu0 0
        %3986 = vmatpush.bf16.msra.mxu0 0
        %3987 = vmatpush.bf16.msra.mxu0 0
        %3988 = vmatpush.bf16.msra.mxu0 0
        %3989 = vmatpush.bf16.msra.mxu0 0
        %3990 = vmatpush.bf16.msra.mxu0 %v3908
        %3991 = vmatmul.bf16.gmra.mxu0 %v3905
        %v3992 = vpop.f32.mrf.mxu0
        %v3993 = vadd.f32 0.0, %v3992
        %v3994 = vpop.f32.mrf.mxu0
        %v3995 = vadd.f32 0.0, %v3994
        %3996 = vdwg.mxu0
        %3997 = vmatpush.bf16.msra.mxu0 0
        %3998 = vmatpush.bf16.msra.mxu0 0
        %3999 = vmatpush.bf16.msra.mxu0 0
        %4000 = vmatpush.bf16.msra.mxu0 0
        %4001 = vmatpush.bf16.msra.mxu0 0
        %4002 = vmatpush.bf16.msra.mxu0 0
        %4003 = vmatpush.bf16.msra.mxu0 0
        %4004 = vmatpush.bf16.msra.mxu0 %v3911
        %4005 = vmatmul.bf16.gmra.mxu0 %v3905
        %v4006 = vpop.f32.mrf.mxu0
        %v4007 = vadd.f32 0.0, %v4006
        %v4008 = vpop.f32.mrf.mxu0
        %v4009 = vadd.f32 0.0, %v4008
        %4010 = vdwg.mxu0
        %v4011 = vadd.f32 %v3879, %v3923
        %v4012 = vadd.f32 %v3880, %v3937
        %v4013 = vadd.f32 %v3881, %v3951
        %v4014 = vadd.f32 %v3882, %v3965
        %v4015 = vadd.f32 %v3883, %v3979
        %v4016 = vadd.f32 %v3884, %v3993
        %v4017 = vadd.f32 %v3885, %v4007
        %v4018 = vadd.f32 %v3886, %v3925
        %v4019 = vadd.f32 %v3887, %v3939
        %v4020 = vadd.f32 %v3888, %v3953
        %v4021 = vadd.f32 %v3889, %v3967
        %v4022 = vadd.f32 %v3890, %v3981
        %v4023 = vadd.f32 %v3891, %v3995
        %v4024 = vadd.f32 %v3892, %v4009
        %s4025 = scalar_lea.vmem %s1, 176
        %v4026 = vld [vmem:[%s4025] sm:$0xf]
        %v4027 = vld [vmem:[%s4025 + $0x4] sm:$0x3]
        %v4030 = vunpack.c.l.b16 %v4026
        %v4031 = vunpack.c.l.b16 %v4027
        %v4032 = vpack.c.b16 %v4031, %v4030
        %4033 = vrot.lane.b32.xlu0 %v1254, 126
        %v4034 = vpop.permute.xlu0 %4033
        %v4035 = vsel %vm772, %v771, %v4034
        %v4037 = vsel %vm496, %v4032, 0
        %v4040 = vand.u32 %v4035, %v503
        %v4043 = vand.u32 %v4034, %v503
        %4045 = vmatpush.bf16.msra.mxu0 0
        %4046 = vmatpush.bf16.msra.mxu0 0
        %4047 = vmatpush.bf16.msra.mxu0 0
        %4048 = vmatpush.bf16.msra.mxu0 0
        %4049 = vmatpush.bf16.msra.mxu0 0
        %4050 = vmatpush.bf16.msra.mxu0 0
        %4051 = vmatpush.bf16.msra.mxu0 0
        %4052 = vmatpush.bf16.msra.mxu0 %v786
        %4053 = vmatmul.bf16.gmra.mxu0 %v4037
        %v4054 = vpop.f32.mrf.mxu0
        %v4055 = vadd.f32 0.0, %v4054
        %v4056 = vpop.f32.mrf.mxu0
        %v4057 = vadd.f32 0.0, %v4056
        %4058 = vdwg.mxu0
        %4059 = vmatpush.bf16.msra.mxu0 0
        %4060 = vmatpush.bf16.msra.mxu0 0
        %4061 = vmatpush.bf16.msra.mxu0 0
        %4062 = vmatpush.bf16.msra.mxu0 0
        %4063 = vmatpush.bf16.msra.mxu0 0
        %4064 = vmatpush.bf16.msra.mxu0 0
        %4065 = vmatpush.bf16.msra.mxu0 0
        %4066 = vmatpush.bf16.msra.mxu0 %v789
        %4067 = vmatmul.bf16.gmra.mxu0 %v4037
        %v4068 = vpop.f32.mrf.mxu0
        %v4069 = vadd.f32 0.0, %v4068
        %v4070 = vpop.f32.mrf.mxu0
        %v4071 = vadd.f32 0.0, %v4070
        %4072 = vdwg.mxu0
        %4073 = vmatpush.bf16.msra.mxu0 0
        %4074 = vmatpush.bf16.msra.mxu0 0
        %4075 = vmatpush.bf16.msra.mxu0 0
        %4076 = vmatpush.bf16.msra.mxu0 0
        %4077 = vmatpush.bf16.msra.mxu0 0
        %4078 = vmatpush.bf16.msra.mxu0 0
        %4079 = vmatpush.bf16.msra.mxu0 0
        %4080 = vmatpush.bf16.msra.mxu0 %v792
        %4081 = vmatmul.bf16.gmra.mxu0 %v4037
        %v4082 = vpop.f32.mrf.mxu0
        %v4083 = vadd.f32 0.0, %v4082
        %v4084 = vpop.f32.mrf.mxu0
        %v4085 = vadd.f32 0.0, %v4084
        %4086 = vdwg.mxu0
        %4087 = vmatpush.bf16.msra.mxu0 0
        %4088 = vmatpush.bf16.msra.mxu0 0
        %4089 = vmatpush.bf16.msra.mxu0 0
        %4090 = vmatpush.bf16.msra.mxu0 0
        %4091 = vmatpush.bf16.msra.mxu0 0
        %4092 = vmatpush.bf16.msra.mxu0 0
        %4093 = vmatpush.bf16.msra.mxu0 0
        %4094 = vmatpush.bf16.msra.mxu0 %v795
        %4095 = vmatmul.bf16.gmra.mxu0 %v4037
        %v4096 = vpop.f32.mrf.mxu0
        %v4097 = vadd.f32 0.0, %v4096
        %v4098 = vpop.f32.mrf.mxu0
        %v4099 = vadd.f32 0.0, %v4098
        %4100 = vdwg.mxu0
        %4101 = vmatpush.bf16.msra.mxu0 0
        %4102 = vmatpush.bf16.msra.mxu0 0
        %4103 = vmatpush.bf16.msra.mxu0 0
        %4104 = vmatpush.bf16.msra.mxu0 0
        %4105 = vmatpush.bf16.msra.mxu0 0
        %4106 = vmatpush.bf16.msra.mxu0 0
        %4107 = vmatpush.bf16.msra.mxu0 0
        %4108 = vmatpush.bf16.msra.mxu0 %v798
        %4109 = vmatmul.bf16.gmra.mxu0 %v4037
        %v4110 = vpop.f32.mrf.mxu0
        %v4111 = vadd.f32 0.0, %v4110
        %v4112 = vpop.f32.mrf.mxu0
        %v4113 = vadd.f32 0.0, %v4112
        %4114 = vdwg.mxu0
        %4115 = vmatpush.bf16.msra.mxu0 0
        %4116 = vmatpush.bf16.msra.mxu0 0
        %4117 = vmatpush.bf16.msra.mxu0 0
        %4118 = vmatpush.bf16.msra.mxu0 0
        %4119 = vmatpush.bf16.msra.mxu0 0
        %4120 = vmatpush.bf16.msra.mxu0 0
        %4121 = vmatpush.bf16.msra.mxu0 0
        %4122 = vmatpush.bf16.msra.mxu0 %v4040
        %4123 = vmatmul.bf16.gmra.mxu0 %v4037
        %v4124 = vpop.f32.mrf.mxu0
        %v4125 = vadd.f32 0.0, %v4124
        %v4126 = vpop.f32.mrf.mxu0
        %v4127 = vadd.f32 0.0, %v4126
        %4128 = vdwg.mxu0
        %4129 = vmatpush.bf16.msra.mxu0 0
        %4130 = vmatpush.bf16.msra.mxu0 0
        %4131 = vmatpush.bf16.msra.mxu0 0
        %4132 = vmatpush.bf16.msra.mxu0 0
        %4133 = vmatpush.bf16.msra.mxu0 0
        %4134 = vmatpush.bf16.msra.mxu0 0
        %4135 = vmatpush.bf16.msra.mxu0 0
        %4136 = vmatpush.bf16.msra.mxu0 %v4043
        %4137 = vmatmul.bf16.gmra.mxu0 %v4037
        %v4138 = vpop.f32.mrf.mxu0
        %v4139 = vadd.f32 0.0, %v4138
        %v4140 = vpop.f32.mrf.mxu0
        %v4141 = vadd.f32 0.0, %v4140
        %4142 = vdwg.mxu0
        %v4143 = vadd.f32 %v4011, %v4055
        %v4144 = vadd.f32 %v4012, %v4069
        %v4145 = vadd.f32 %v4013, %v4083
        %v4146 = vadd.f32 %v4014, %v4097
        %v4147 = vadd.f32 %v4015, %v4111
        %v4148 = vadd.f32 %v4016, %v4125
        %v4149 = vadd.f32 %v4017, %v4139
        %v4150 = vadd.f32 %v4018, %v4057
        %v4151 = vadd.f32 %v4019, %v4071
        %v4152 = vadd.f32 %v4020, %v4085
        %v4153 = vadd.f32 %v4021, %v4099
        %v4154 = vadd.f32 %v4022, %v4113
        %v4155 = vadd.f32 %v4023, %v4127
        %v4156 = vadd.f32 %v4024, %v4141
        %s4157 = scalar_lea.vmem %s1, 184
        %v4158 = vld [vmem:[%s4157] sm:$0xf]
        %v4159 = vld [vmem:[%s4157 + $0x4] sm:$0x3]
        %v4162 = vunpack.c.l.b16 %v4158
        %v4163 = vunpack.c.l.b16 %v4159
        %v4164 = vpack.c.b16 %v4163, %v4162
        %4165 = vrot.lane.b32.xlu0 %v1254, 125
        %v4166 = vpop.permute.xlu0 %4165
        %v4167 = vsel %vm937, %v936, %v4166
        %v4169 = vsel %vm496, %v4164, 0
        %v4172 = vand.u32 %v4167, %v503
        %v4175 = vand.u32 %v4166, %v503
        %4177 = vmatpush.bf16.msra.mxu0 0
        %4178 = vmatpush.bf16.msra.mxu0 0
        %4179 = vmatpush.bf16.msra.mxu0 0
        %4180 = vmatpush.bf16.msra.mxu0 0
        %4181 = vmatpush.bf16.msra.mxu0 0
        %4182 = vmatpush.bf16.msra.mxu0 0
        %4183 = vmatpush.bf16.msra.mxu0 0
        %4184 = vmatpush.bf16.msra.mxu0 %v951
        %4185 = vmatmul.bf16.gmra.mxu0 %v4169
        %v4186 = vpop.f32.mrf.mxu0
        %v4187 = vadd.f32 0.0, %v4186
        %v4188 = vpop.f32.mrf.mxu0
        %v4189 = vadd.f32 0.0, %v4188
        %4190 = vdwg.mxu0
        %4191 = vmatpush.bf16.msra.mxu0 0
        %4192 = vmatpush.bf16.msra.mxu0 0
        %4193 = vmatpush.bf16.msra.mxu0 0
        %4194 = vmatpush.bf16.msra.mxu0 0
        %4195 = vmatpush.bf16.msra.mxu0 0
        %4196 = vmatpush.bf16.msra.mxu0 0
        %4197 = vmatpush.bf16.msra.mxu0 0
        %4198 = vmatpush.bf16.msra.mxu0 %v954
        %4199 = vmatmul.bf16.gmra.mxu0 %v4169
        %v4200 = vpop.f32.mrf.mxu0
        %v4201 = vadd.f32 0.0, %v4200
        %v4202 = vpop.f32.mrf.mxu0
        %v4203 = vadd.f32 0.0, %v4202
        %4204 = vdwg.mxu0
        %4205 = vmatpush.bf16.msra.mxu0 0
        %4206 = vmatpush.bf16.msra.mxu0 0
        %4207 = vmatpush.bf16.msra.mxu0 0
        %4208 = vmatpush.bf16.msra.mxu0 0
        %4209 = vmatpush.bf16.msra.mxu0 0
        %4210 = vmatpush.bf16.msra.mxu0 0
        %4211 = vmatpush.bf16.msra.mxu0 0
        %4212 = vmatpush.bf16.msra.mxu0 %v957
        %4213 = vmatmul.bf16.gmra.mxu0 %v4169
        %v4214 = vpop.f32.mrf.mxu0
        %v4215 = vadd.f32 0.0, %v4214
        %v4216 = vpop.f32.mrf.mxu0
        %v4217 = vadd.f32 0.0, %v4216
        %4218 = vdwg.mxu0
        %4219 = vmatpush.bf16.msra.mxu0 0
        %4220 = vmatpush.bf16.msra.mxu0 0
        %4221 = vmatpush.bf16.msra.mxu0 0
        %4222 = vmatpush.bf16.msra.mxu0 0
        %4223 = vmatpush.bf16.msra.mxu0 0
        %4224 = vmatpush.bf16.msra.mxu0 0
        %4225 = vmatpush.bf16.msra.mxu0 0
        %4226 = vmatpush.bf16.msra.mxu0 %v960
        %4227 = vmatmul.bf16.gmra.mxu0 %v4169
        %v4228 = vpop.f32.mrf.mxu0
        %v4229 = vadd.f32 0.0, %v4228
        %v4230 = vpop.f32.mrf.mxu0
        %v4231 = vadd.f32 0.0, %v4230
        %4232 = vdwg.mxu0
        %4233 = vmatpush.bf16.msra.mxu0 0
        %4234 = vmatpush.bf16.msra.mxu0 0
        %4235 = vmatpush.bf16.msra.mxu0 0
        %4236 = vmatpush.bf16.msra.mxu0 0
        %4237 = vmatpush.bf16.msra.mxu0 0
        %4238 = vmatpush.bf16.msra.mxu0 0
        %4239 = vmatpush.bf16.msra.mxu0 0
        %4240 = vmatpush.bf16.msra.mxu0 %v963
        %4241 = vmatmul.bf16.gmra.mxu0 %v4169
        %v4242 = vpop.f32.mrf.mxu0
        %v4243 = vadd.f32 0.0, %v4242
        %v4244 = vpop.f32.mrf.mxu0
        %v4245 = vadd.f32 0.0, %v4244
        %4246 = vdwg.mxu0
        %4247 = vmatpush.bf16.msra.mxu0 0
        %4248 = vmatpush.bf16.msra.mxu0 0
        %4249 = vmatpush.bf16.msra.mxu0 0
        %4250 = vmatpush.bf16.msra.mxu0 0
        %4251 = vmatpush.bf16.msra.mxu0 0
        %4252 = vmatpush.bf16.msra.mxu0 0
        %4253 = vmatpush.bf16.msra.mxu0 0
        %4254 = vmatpush.bf16.msra.mxu0 %v4172
        %4255 = vmatmul.bf16.gmra.mxu0 %v4169
        %v4256 = vpop.f32.mrf.mxu0
        %v4257 = vadd.f32 0.0, %v4256
        %v4258 = vpop.f32.mrf.mxu0
        %v4259 = vadd.f32 0.0, %v4258
        %4260 = vdwg.mxu0
        %4261 = vmatpush.bf16.msra.mxu0 0
        %4262 = vmatpush.bf16.msra.mxu0 0
        %4263 = vmatpush.bf16.msra.mxu0 0
        %4264 = vmatpush.bf16.msra.mxu0 0
        %4265 = vmatpush.bf16.msra.mxu0 0
        %4266 = vmatpush.bf16.msra.mxu0 0
        %4267 = vmatpush.bf16.msra.mxu0 0
        %4268 = vmatpush.bf16.msra.mxu0 %v4175
        %4269 = vmatmul.bf16.gmra.mxu0 %v4169
        %v4270 = vpop.f32.mrf.mxu0
        %v4271 = vadd.f32 0.0, %v4270
        %v4272 = vpop.f32.mrf.mxu0
        %v4273 = vadd.f32 0.0, %v4272
        %4274 = vdwg.mxu0
        %v4275 = vadd.f32 %v4143, %v4187
        %v4276 = vadd.f32 %v4144, %v4201
        %v4277 = vadd.f32 %v4145, %v4215
        %v4278 = vadd.f32 %v4146, %v4229
        %v4279 = vadd.f32 %v4147, %v4243
        %v4280 = vadd.f32 %v4148, %v4257
        %v4281 = vadd.f32 %v4149, %v4271
        %v4282 = vadd.f32 %v4150, %v4189
        %v4283 = vadd.f32 %v4151, %v4203
        %v4284 = vadd.f32 %v4152, %v4217
        %v4285 = vadd.f32 %v4153, %v4231
        %v4286 = vadd.f32 %v4154, %v4245
        %v4287 = vadd.f32 %v4155, %v4259
        %v4288 = vadd.f32 %v4156, %v4273
        %s4289 = scalar_lea.vmem %s1, 192
        %v4290 = vld [vmem:[%s4289] sm:$0xf]
        %v4291 = vld [vmem:[%s4289 + $0x4] sm:$0x3]
        %v4294 = vunpack.c.l.b16 %v4290
        %v4295 = vunpack.c.l.b16 %v4291
        %v4296 = vpack.c.b16 %v4295, %v4294
        %4297 = vrot.lane.b32.xlu0 %v1254, 124
        %v4298 = vpop.permute.xlu0 %4297
        %v4299 = vsel %vm1102, %v1101, %v4298
        %v4301 = vsel %vm496, %v4296, 0
        %v4304 = vand.u32 %v4299, %v503
        %v4307 = vand.u32 %v4298, %v503
        %4309 = vmatpush.bf16.msra.mxu0 0
        %4310 = vmatpush.bf16.msra.mxu0 0
        %4311 = vmatpush.bf16.msra.mxu0 0
        %4312 = vmatpush.bf16.msra.mxu0 0
        %4313 = vmatpush.bf16.msra.mxu0 0
        %4314 = vmatpush.bf16.msra.mxu0 0
        %4315 = vmatpush.bf16.msra.mxu0 0
        %4316 = vmatpush.bf16.msra.mxu0 %v1116
        %4317 = vmatmul.bf16.gmra.mxu0 %v4301
        %v4318 = vpop.f32.mrf.mxu0
        %v4319 = vadd.f32 0.0, %v4318
        %v4320 = vpop.f32.mrf.mxu0
        %v4321 = vadd.f32 0.0, %v4320
        %4322 = vdwg.mxu0
        %4323 = vmatpush.bf16.msra.mxu0 0
        %4324 = vmatpush.bf16.msra.mxu0 0
        %4325 = vmatpush.bf16.msra.mxu0 0
        %4326 = vmatpush.bf16.msra.mxu0 0
        %4327 = vmatpush.bf16.msra.mxu0 0
        %4328 = vmatpush.bf16.msra.mxu0 0
        %4329 = vmatpush.bf16.msra.mxu0 0
        %4330 = vmatpush.bf16.msra.mxu0 %v1119
        %4331 = vmatmul.bf16.gmra.mxu0 %v4301
        %v4332 = vpop.f32.mrf.mxu0
        %v4333 = vadd.f32 0.0, %v4332
        %v4334 = vpop.f32.mrf.mxu0
        %v4335 = vadd.f32 0.0, %v4334
        %4336 = vdwg.mxu0
        %4337 = vmatpush.bf16.msra.mxu0 0
        %4338 = vmatpush.bf16.msra.mxu0 0
        %4339 = vmatpush.bf16.msra.mxu0 0
        %4340 = vmatpush.bf16.msra.mxu0 0
        %4341 = vmatpush.bf16.msra.mxu0 0
        %4342 = vmatpush.bf16.msra.mxu0 0
        %4343 = vmatpush.bf16.msra.mxu0 0
        %4344 = vmatpush.bf16.msra.mxu0 %v1122
        %4345 = vmatmul.bf16.gmra.mxu0 %v4301
        %v4346 = vpop.f32.mrf.mxu0
        %v4347 = vadd.f32 0.0, %v4346
        %v4348 = vpop.f32.mrf.mxu0
        %v4349 = vadd.f32 0.0, %v4348
        %4350 = vdwg.mxu0
        %4351 = vmatpush.bf16.msra.mxu0 0
        %4352 = vmatpush.bf16.msra.mxu0 0
        %4353 = vmatpush.bf16.msra.mxu0 0
        %4354 = vmatpush.bf16.msra.mxu0 0
        %4355 = vmatpush.bf16.msra.mxu0 0
        %4356 = vmatpush.bf16.msra.mxu0 0
        %4357 = vmatpush.bf16.msra.mxu0 0
        %4358 = vmatpush.bf16.msra.mxu0 %v1125
        %4359 = vmatmul.bf16.gmra.mxu0 %v4301
        %v4360 = vpop.f32.mrf.mxu0
        %v4361 = vadd.f32 0.0, %v4360
        %v4362 = vpop.f32.mrf.mxu0
        %v4363 = vadd.f32 0.0, %v4362
        %4364 = vdwg.mxu0
        %4365 = vmatpush.bf16.msra.mxu0 0
        %4366 = vmatpush.bf16.msra.mxu0 0
        %4367 = vmatpush.bf16.msra.mxu0 0
        %4368 = vmatpush.bf16.msra.mxu0 0
        %4369 = vmatpush.bf16.msra.mxu0 0
        %4370 = vmatpush.bf16.msra.mxu0 0
        %4371 = vmatpush.bf16.msra.mxu0 0
        %4372 = vmatpush.bf16.msra.mxu0 %v1128
        %4373 = vmatmul.bf16.gmra.mxu0 %v4301
        %v4374 = vpop.f32.mrf.mxu0
        %v4375 = vadd.f32 0.0, %v4374
        %v4376 = vpop.f32.mrf.mxu0
        %v4377 = vadd.f32 0.0, %v4376
        %4378 = vdwg.mxu0
        %4379 = vmatpush.bf16.msra.mxu0 0
        %4380 = vmatpush.bf16.msra.mxu0 0
        %4381 = vmatpush.bf16.msra.mxu0 0
        %4382 = vmatpush.bf16.msra.mxu0 0
        %4383 = vmatpush.bf16.msra.mxu0 0
        %4384 = vmatpush.bf16.msra.mxu0 0
        %4385 = vmatpush.bf16.msra.mxu0 0
        %4386 = vmatpush.bf16.msra.mxu0 %v4304
        %4387 = vmatmul.bf16.gmra.mxu0 %v4301
        %v4388 = vpop.f32.mrf.mxu0
        %v4389 = vadd.f32 0.0, %v4388
        %v4390 = vpop.f32.mrf.mxu0
        %v4391 = vadd.f32 0.0, %v4390
        %4392 = vdwg.mxu0
        %4393 = vmatpush.bf16.msra.mxu0 0
        %4394 = vmatpush.bf16.msra.mxu0 0
        %4395 = vmatpush.bf16.msra.mxu0 0
        %4396 = vmatpush.bf16.msra.mxu0 0
        %4397 = vmatpush.bf16.msra.mxu0 0
        %4398 = vmatpush.bf16.msra.mxu0 0
        %4399 = vmatpush.bf16.msra.mxu0 0
        %4400 = vmatpush.bf16.msra.mxu0 %v4307
        %4401 = vmatmul.bf16.gmra.mxu0 %v4301
        %v4402 = vpop.f32.mrf.mxu0
        %v4403 = vadd.f32 0.0, %v4402
        %v4404 = vpop.f32.mrf.mxu0
        %v4405 = vadd.f32 0.0, %v4404
        %4406 = vdwg.mxu0
        %v4407 = vadd.f32 %v4275, %v4319
        %v4408 = vadd.f32 %v4276, %v4333
        %v4409 = vadd.f32 %v4277, %v4347
        %v4410 = vadd.f32 %v4278, %v4361
        %v4411 = vadd.f32 %v4279, %v4375
        %v4412 = vadd.f32 %v4280, %v4389
        %v4413 = vadd.f32 %v4281, %v4403
        %v4414 = vadd.f32 %v4282, %v4321
        %v4415 = vadd.f32 %v4283, %v4335
        %v4416 = vadd.f32 %v4284, %v4349
        %v4417 = vadd.f32 %v4285, %v4363
        %v4418 = vadd.f32 %v4286, %v4377
        %v4419 = vadd.f32 %v4287, %v4391
        %v4420 = vadd.f32 %v4288, %v4405
        %v4421 = vld [vmem:[%s2] sm:$0xff]
        %v4422 = vld [vmem:[%s2 + $0x8] sm:$0xf]
        %4424 = vset.pattern.permute.xlu0 0
        %4425 = vperm.xlu0 %4424, %v4421
        %v4426 = vpop.permute.xlu0 %4425
        %4429 = vset.pattern.permute.xlu0 0
        %4430 = vperm.xlu0 %4429, %v4422
        %v4431 = vpop.permute.xlu0 %4430
        %v4433 = vadd.f32 %v4407, %v4426
        %v4434 = vadd.f32 %v4408, %v4426
        %v4435 = vadd.f32 %v4409, %v4426
        %v4436 = vadd.f32 %v4410, %v4426
        %v4437 = vadd.f32 %v4411, %v4426
        %v4438 = vadd.f32 %v4412, %v4426
        %v4439 = vadd.f32 %v4413, %v4426
        %v4440 = vadd.f32 %v4414, %v4431
        %v4441 = vadd.f32 %v4415, %v4431
        %v4442 = vadd.f32 %v4416, %v4431
        %v4443 = vadd.f32 %v4417, %v4431
        %v4444 = vadd.f32 %v4418, %v4431
        %v4445 = vadd.f32 %v4419, %v4431
        %v4446 = vadd.f32 %v4420, %v4431
        %v4447 = vmax.f32 %v4433, 0.0
        %v4448 = vmax.f32 %v4434, 0.0
        %v4449 = vmax.f32 %v4435, 0.0
        %v4450 = vmax.f32 %v4436, 0.0
        %v4451 = vmax.f32 %v4437, 0.0
        %v4452 = vmax.f32 %v4438, 0.0
        %v4453 = vmax.f32 %v4439, 0.0
        %v4454 = vmax.f32 %v4440, 0.0
        %v4455 = vmax.f32 %v4441, 0.0
        %v4456 = vmax.f32 %v4442, 0.0
        %v4457 = vmax.f32 %v4443, 0.0
        %v4458 = vmax.f32 %v4444, 0.0
        %v4459 = vmax.f32 %v4445, 0.0
        %v4460 = vmax.f32 %v4446, 0.0
        %4475 = vrot.lane.b32.xlu0 %v4447, 127
        %v4476 = vpop.permute.xlu0 %4475
        %4477 = vrot.lane.b32.xlu0 %v4448, 127
        %v4478 = vpop.permute.xlu0 %4477
        %4479 = vrot.lane.b32.xlu0 %v4449, 127
        %v4480 = vpop.permute.xlu0 %4479
        %4481 = vrot.lane.b32.xlu0 %v4450, 127
        %v4482 = vpop.permute.xlu0 %4481
        %4483 = vrot.lane.b32.xlu0 %v4451, 127
        %v4484 = vpop.permute.xlu0 %4483
        %4485 = vrot.lane.b32.xlu0 %v4452, 127
        %v4486 = vpop.permute.xlu0 %4485
        %4487 = vrot.lane.b32.xlu0 %v4453, 127
        %v4488 = vpop.permute.xlu0 %4487
        %4489 = vrot.lane.b32.xlu0 %v4454, 127
        %v4490 = vpop.permute.xlu0 %4489
        %4491 = vrot.lane.b32.xlu0 %v4455, 127
        %v4492 = vpop.permute.xlu0 %4491
        %4493 = vrot.lane.b32.xlu0 %v4456, 127
        %v4494 = vpop.permute.xlu0 %4493
        %4495 = vrot.lane.b32.xlu0 %v4457, 127
        %v4496 = vpop.permute.xlu0 %4495
        %4497 = vrot.lane.b32.xlu0 %v4458, 127
        %v4498 = vpop.permute.xlu0 %4497
        %4499 = vrot.lane.b32.xlu0 %v4459, 127
        %v4500 = vpop.permute.xlu0 %4499
        %4501 = vrot.lane.b32.xlu0 %v4460, 127
        %v4502 = vpop.permute.xlu0 %4501
        %vm4503 = vcmask 1039360
        %v4504 = vsel %vm4503, %v4476, %v4478
        %v4505 = vsel %vm4503, %v4478, %v4480
        %v4506 = vsel %vm4503, %v4480, %v4482
        %v4507 = vsel %vm4503, %v4482, %v4484
        %v4508 = vsel %vm4503, %v4484, %v4486
        %v4509 = vsel %vm4503, %v4486, %v4488
        %v4510 = vsel %vm4503, %v4490, %v4492
        %v4511 = vsel %vm4503, %v4492, %v4494
        %v4512 = vsel %vm4503, %v4494, %v4496
        %v4513 = vsel %vm4503, %v4496, %v4498
        %v4514 = vsel %vm4503, %v4498, %v4500
        %v4515 = vsel %vm4503, %v4500, %v4502
        %v4530 = vmax.f32 %v4447, %v4504
        %v4531 = vmax.f32 %v4448, %v4505
        %v4532 = vmax.f32 %v4449, %v4506
        %v4533 = vmax.f32 %v4450, %v4507
        %v4534 = vmax.f32 %v4451, %v4508
        %v4535 = vmax.f32 %v4452, %v4509
        %v4536 = vmax.f32 %v4453, %v4488
        %v4537 = vmax.f32 %v4454, %v4510
        %v4538 = vmax.f32 %v4455, %v4511
        %v4539 = vmax.f32 %v4456, %v4512
        %v4540 = vmax.f32 %v4457, %v4513
        %v4541 = vmax.f32 %v4458, %v4514
        %v4542 = vmax.f32 %v4459, %v4515
        %v4543 = vmax.f32 %v4460, %v4502
        %4558 = vrot.lane.b32.xlu0 %v4530, 96
        %v4559 = vpop.permute.xlu0 %4558
        %4560 = vrot.lane.b32.xlu0 %v4531, 96
        %v4561 = vpop.permute.xlu0 %4560
        %4562 = vrot.lane.b32.xlu0 %v4532, 96
        %v4563 = vpop.permute.xlu0 %4562
        %4564 = vrot.lane.b32.xlu0 %v4533, 96
        %v4565 = vpop.permute.xlu0 %4564
        %4566 = vrot.lane.b32.xlu0 %v4534, 96
        %v4567 = vpop.permute.xlu0 %4566
        %4568 = vrot.lane.b32.xlu0 %v4535, 96
        %v4569 = vpop.permute.xlu0 %4568
        %4570 = vrot.lane.b32.xlu0 %v4536, 96
        %v4571 = vpop.permute.xlu0 %4570
        %4572 = vrot.lane.b32.xlu0 %v4537, 96
        %v4573 = vpop.permute.xlu0 %4572
        %4574 = vrot.lane.b32.xlu0 %v4538, 96
        %v4575 = vpop.permute.xlu0 %4574
        %4576 = vrot.lane.b32.xlu0 %v4539, 96
        %v4577 = vpop.permute.xlu0 %4576
        %4578 = vrot.lane.b32.xlu0 %v4540, 96
        %v4579 = vpop.permute.xlu0 %4578
        %4580 = vrot.lane.b32.xlu0 %v4541, 96
        %v4581 = vpop.permute.xlu0 %4580
        %4582 = vrot.lane.b32.xlu0 %v4542, 96
        %v4583 = vpop.permute.xlu0 %4582
        %4584 = vrot.lane.b32.xlu0 %v4543, 96
        %v4585 = vpop.permute.xlu0 %4584
        %vm4586 = vcmask 785408
        %v4587 = vsel %vm4586, %v4559, %v4561
        %v4588 = vsel %vm4586, %v4561, %v4563
        %v4589 = vsel %vm4586, %v4563, %v4565
        %v4590 = vsel %vm4586, %v4565, %v4567
        %v4591 = vsel %vm4586, %v4567, %v4569
        %v4592 = vsel %vm4586, %v4569, %v4571
        %v4593 = vsel %vm4586, %v4573, %v4575
        %v4594 = vsel %vm4586, %v4575, %v4577
        %v4595 = vsel %vm4586, %v4577, %v4579
        %v4596 = vsel %vm4586, %v4579, %v4581
        %v4597 = vsel %vm4586, %v4581, %v4583
        %v4598 = vsel %vm4586, %v4583, %v4585
        %v4613 = vmax.f32 %v4530, %v4587
        %v4614 = vmax.f32 %v4531, %v4588
        %v4615 = vmax.f32 %v4532, %v4589
        %v4616 = vmax.f32 %v4533, %v4590
        %v4617 = vmax.f32 %v4534, %v4591
        %v4618 = vmax.f32 %v4535, %v4592
        %v4619 = vmax.f32 %v4536, %v4571
        %v4620 = vmax.f32 %v4537, %v4593
        %v4621 = vmax.f32 %v4538, %v4594
        %v4622 = vmax.f32 %v4539, %v4595
        %v4623 = vmax.f32 %v4540, %v4596
        %v4624 = vmax.f32 %v4541, %v4597
        %v4625 = vmax.f32 %v4542, %v4598
        %v4626 = vmax.f32 %v4543, %v4585
        %v4627 = vpack.c.bf16 %v4614, %v4613
        %v4628 = vpack.c.bf16 %v4616, %v4615
        %v4629 = vpack.c.bf16 %v4618, %v4617
        %v4630 = vpack.c.bf16 %v4619, %v4619
        %v4631 = vpack.c.bf16 %v4621, %v4620
        %v4632 = vpack.c.bf16 %v4623, %v4622
        %v4633 = vpack.c.bf16 %v4625, %v4624
        %v4634 = vpack.c.bf16 %v4626, %v4626
        %v4635 = vld [vmem:[%s3] sm:$0xf]
        %v4636 = vld [vmem:[%s3 + $0x4] sm:$0xf]
        %v4637 = vld [vmem:[%s3 + $0x8] sm:$0xf]
        %s4638 = scalar_lea.vmem %s3, 12
        %v4639 = vld [vmem:[%s4638] sm:$0xf]
        %v4640 = vld [vmem:[%s4638 + $0x4] sm:$0xf]
        %v4641 = vld [vmem:[%s4638 + $0x8] sm:$0xf]
        %v4645 = vunpack.c.l.b16 %v4639
        %v4646 = vunpack.c.l.b16 %v4640
        %v4647 = vunpack.c.l.b16 %v4641
        %v4648 = vpack.c.b16 %v4646, %v4645
        %v4649 = vpack.c.b16 %v4647, %v4647
        %v4656 = vunpack.c.l.b16 %v4627
        %v4657 = vunpack.c.h.b16 %v4627
        %v4658 = vunpack.c.l.b16 %v4628
        %v4659 = vunpack.c.h.b16 %v4628
        %v4660 = vunpack.c.l.b16 %v4629
        %v4661 = vunpack.c.l.b16 %v4631
        %v4662 = vunpack.c.h.b16 %v4631
        %v4663 = vunpack.c.l.b16 %v4632
        %v4664 = vunpack.c.h.b16 %v4632
        %v4665 = vunpack.c.l.b16 %v4633
        %v4666 = vpack.c.b16 %v4661, %v4656
        %v4667 = vpack.c.b16 %v4662, %v4657
        %v4668 = vpack.c.b16 %v4663, %v4658
        %v4669 = vpack.c.b16 %v4664, %v4659
        %v4670 = vpack.c.b16 %v4665, %v4660
        %4671 = vrot.lane.b32.xlu0 %v4666, 126
        %v4672 = vpop.permute.xlu0 %4671
        %4673 = vrot.lane.b32.xlu0 %v4667, 126
        %v4674 = vpop.permute.xlu0 %4673
        %4675 = vrot.lane.b32.xlu0 %v4668, 126
        %v4676 = vpop.permute.xlu0 %4675
        %4677 = vrot.lane.b32.xlu0 %v4669, 126
        %v4678 = vpop.permute.xlu0 %4677
        %4679 = vrot.lane.b32.xlu0 %v4670, 126
        %v4680 = vpop.permute.xlu0 %4679
        %v4681 = vsel %vm772, %v4672, %v4674
        %v4682 = vsel %vm772, %v4674, %v4676
        %v4683 = vsel %vm772, %v4676, %v4678
        %v4684 = vsel %vm772, %v4678, %v4680
        %vm4685 = vcmask 97280
        %v4687 = vsel %vm4685, %v4648, 0
        %v4690 = vsel %vm4685, %v4649, 0
        %vm4692 = vcmask 1045504
        %v4694 = vsel %vm4692, %v4681, 0
        %v4697 = vsel %vm4692, %v4682, 0
        %v4700 = vsel %vm4692, %v4683, 0
        %v4703 = vsel %vm4692, %v4684, 0
        %v4706 = vsel %vm4692, %v4680, 0
        %4708 = vmatpush.bf16.msra.mxu0 0
        %4709 = vmatpush.bf16.msra.mxu0 0
        %4710 = vmatpush.bf16.msra.mxu0 0
        %4711 = vmatpush.bf16.msra.mxu0 0
        %4712 = vmatpush.bf16.msra.mxu0 0
        %4713 = vmatpush.bf16.msra.mxu0 0
        %4714 = vmatpush.bf16.msra.mxu0 0
        %4715 = vmatpush.bf16.msra.mxu0 %v4694
        %4716 = vmatmul.bf16.gmra.mxu0 %v4687
        %v4717 = vpop.f32.mrf.mxu0
        %v4718 = vadd.f32 0.0, %v4717
        %v4719 = vpop.f32.mrf.mxu0
        %v4720 = vadd.f32 0.0, %v4719
        %4721 = vmatmul.bf16.gmra.mxu0 %v4690
        %v4722 = vpop.f32.mrf.mxu0
        %v4723 = vadd.f32 0.0, %v4722
        %v4724 = vpop.f32.mrf.mxu0
        %4725 = vdwg.mxu0
        %4726 = vmatpush.bf16.msra.mxu0 0
        %4727 = vmatpush.bf16.msra.mxu0 0
        %4728 = vmatpush.bf16.msra.mxu0 0
        %4729 = vmatpush.bf16.msra.mxu0 0
        %4730 = vmatpush.bf16.msra.mxu0 0
        %4731 = vmatpush.bf16.msra.mxu0 0
        %4732 = vmatpush.bf16.msra.mxu0 0
        %4733 = vmatpush.bf16.msra.mxu0 %v4697
        %4734 = vmatmul.bf16.gmra.mxu0 %v4687
        %v4735 = vpop.f32.mrf.mxu0
        %v4736 = vadd.f32 0.0, %v4735
        %v4737 = vpop.f32.mrf.mxu0
        %v4738 = vadd.f32 0.0, %v4737
        %4739 = vmatmul.bf16.gmra.mxu0 %v4690
        %v4740 = vpop.f32.mrf.mxu0
        %v4741 = vadd.f32 0.0, %v4740
        %v4742 = vpop.f32.mrf.mxu0
        %4743 = vdwg.mxu0
        %4744 = vmatpush.bf16.msra.mxu0 0
        %4745 = vmatpush.bf16.msra.mxu0 0
        %4746 = vmatpush.bf16.msra.mxu0 0
        %4747 = vmatpush.bf16.msra.mxu0 0
        %4748 = vmatpush.bf16.msra.mxu0 0
        %4749 = vmatpush.bf16.msra.mxu0 0
        %4750 = vmatpush.bf16.msra.mxu0 0
        %4751 = vmatpush.bf16.msra.mxu0 %v4700
        %4752 = vmatmul.bf16.gmra.mxu0 %v4687
        %v4753 = vpop.f32.mrf.mxu0
        %v4754 = vadd.f32 0.0, %v4753
        %v4755 = vpop.f32.mrf.mxu0
        %v4756 = vadd.f32 0.0, %v4755
        %4757 = vmatmul.bf16.gmra.mxu0 %v4690
        %v4758 = vpop.f32.mrf.mxu0
        %v4759 = vadd.f32 0.0, %v4758
        %v4760 = vpop.f32.mrf.mxu0
        %4761 = vdwg.mxu0
        %4762 = vmatpush.bf16.msra.mxu0 0
        %4763 = vmatpush.bf16.msra.mxu0 0
        %4764 = vmatpush.bf16.msra.mxu0 0
        %4765 = vmatpush.bf16.msra.mxu0 0
        %4766 = vmatpush.bf16.msra.mxu0 0
        %4767 = vmatpush.bf16.msra.mxu0 0
        %4768 = vmatpush.bf16.msra.mxu0 0
        %4769 = vmatpush.bf16.msra.mxu0 %v4703
        %4770 = vmatmul.bf16.gmra.mxu0 %v4687
        %v4771 = vpop.f32.mrf.mxu0
        %v4772 = vadd.f32 0.0, %v4771
        %v4773 = vpop.f32.mrf.mxu0
        %v4774 = vadd.f32 0.0, %v4773
        %4775 = vmatmul.bf16.gmra.mxu0 %v4690
        %v4776 = vpop.f32.mrf.mxu0
        %v4777 = vadd.f32 0.0, %v4776
        %v4778 = vpop.f32.mrf.mxu0
        %4779 = vdwg.mxu0
        %4780 = vmatpush.bf16.msra.mxu0 0
        %4781 = vmatpush.bf16.msra.mxu0 0
        %4782 = vmatpush.bf16.msra.mxu0 0
        %4783 = vmatpush.bf16.msra.mxu0 0
        %4784 = vmatpush.bf16.msra.mxu0 0
        %4785 = vmatpush.bf16.msra.mxu0 0
        %4786 = vmatpush.bf16.msra.mxu0 0
        %4787 = vmatpush.bf16.msra.mxu0 %v4706
        %4788 = vmatmul.bf16.gmra.mxu0 %v4687
        %v4789 = vpop.f32.mrf.mxu0
        %v4790 = vadd.f32 0.0, %v4789
        %v4791 = vpop.f32.mrf.mxu0
        %v4792 = vadd.f32 0.0, %v4791
        %4793 = vmatmul.bf16.gmra.mxu0 %v4690
        %v4794 = vpop.f32.mrf.mxu0
        %v4795 = vadd.f32 0.0, %v4794
        %v4796 = vpop.f32.mrf.mxu0
        %4797 = vdwg.mxu0
        %v4801 = vunpack.c.l.b16 %v4635
        %v4802 = vunpack.c.l.b16 %v4636
        %v4803 = vunpack.c.l.b16 %v4637
        %v4804 = vpack.c.b16 %v4802, %v4801
        %v4805 = vpack.c.b16 %v4803, %v4803
        %v4807 = vsel %vm4685, %v4804, 0
        %v4810 = vsel %vm4685, %v4805, 0
        %v4813 = vsel %vm4692, %v4666, 0
        %v4816 = vsel %vm4692, %v4667, 0
        %v4819 = vsel %vm4692, %v4668, 0
        %v4822 = vsel %vm4692, %v4669, 0
        %v4825 = vsel %vm4692, %v4670, 0
        %4827 = vmatpush.bf16.msra.mxu0 0
        %4828 = vmatpush.bf16.msra.mxu0 0
        %4829 = vmatpush.bf16.msra.mxu0 0
        %4830 = vmatpush.bf16.msra.mxu0 0
        %4831 = vmatpush.bf16.msra.mxu0 0
        %4832 = vmatpush.bf16.msra.mxu0 0
        %4833 = vmatpush.bf16.msra.mxu0 0
        %4834 = vmatpush.bf16.msra.mxu0 %v4813
        %4835 = vmatmul.bf16.gmra.mxu0 %v4807
        %v4836 = vpop.f32.mrf.mxu0
        %v4837 = vadd.f32 %v4718, %v4836
        %v4838 = vpop.f32.mrf.mxu0
        %v4839 = vadd.f32 %v4720, %v4838
        %4840 = vmatmul.bf16.gmra.mxu0 %v4810
        %v4841 = vpop.f32.mrf.mxu0
        %v4842 = vadd.f32 %v4723, %v4841
        %v4843 = vpop.f32.mrf.mxu0
        %4844 = vdwg.mxu0
        %4845 = vmatpush.bf16.msra.mxu0 0
        %4846 = vmatpush.bf16.msra.mxu0 0
        %4847 = vmatpush.bf16.msra.mxu0 0
        %4848 = vmatpush.bf16.msra.mxu0 0
        %4849 = vmatpush.bf16.msra.mxu0 0
        %4850 = vmatpush.bf16.msra.mxu0 0
        %4851 = vmatpush.bf16.msra.mxu0 0
        %4852 = vmatpush.bf16.msra.mxu0 %v4816
        %4853 = vmatmul.bf16.gmra.mxu0 %v4807
        %v4854 = vpop.f32.mrf.mxu0
        %v4855 = vadd.f32 %v4736, %v4854
        %v4856 = vpop.f32.mrf.mxu0
        %v4857 = vadd.f32 %v4738, %v4856
        %4858 = vmatmul.bf16.gmra.mxu0 %v4810
        %v4859 = vpop.f32.mrf.mxu0
        %v4860 = vadd.f32 %v4741, %v4859
        %v4861 = vpop.f32.mrf.mxu0
        %4862 = vdwg.mxu0
        %4863 = vmatpush.bf16.msra.mxu0 0
        %4864 = vmatpush.bf16.msra.mxu0 0
        %4865 = vmatpush.bf16.msra.mxu0 0
        %4866 = vmatpush.bf16.msra.mxu0 0
        %4867 = vmatpush.bf16.msra.mxu0 0
        %4868 = vmatpush.bf16.msra.mxu0 0
        %4869 = vmatpush.bf16.msra.mxu0 0
        %4870 = vmatpush.bf16.msra.mxu0 %v4819
        %4871 = vmatmul.bf16.gmra.mxu0 %v4807
        %v4872 = vpop.f32.mrf.mxu0
        %v4873 = vadd.f32 %v4754, %v4872
        %v4874 = vpop.f32.mrf.mxu0
        %v4875 = vadd.f32 %v4756, %v4874
        %4876 = vmatmul.bf16.gmra.mxu0 %v4810
        %v4877 = vpop.f32.mrf.mxu0
        %v4878 = vadd.f32 %v4759, %v4877
        %v4879 = vpop.f32.mrf.mxu0
        %4880 = vdwg.mxu0
        %4881 = vmatpush.bf16.msra.mxu0 0
        %4882 = vmatpush.bf16.msra.mxu0 0
        %4883 = vmatpush.bf16.msra.mxu0 0
        %4884 = vmatpush.bf16.msra.mxu0 0
        %4885 = vmatpush.bf16.msra.mxu0 0
        %4886 = vmatpush.bf16.msra.mxu0 0
        %4887 = vmatpush.bf16.msra.mxu0 0
        %4888 = vmatpush.bf16.msra.mxu0 %v4822
        %4889 = vmatmul.bf16.gmra.mxu0 %v4807
        %v4890 = vpop.f32.mrf.mxu0
        %v4891 = vadd.f32 %v4772, %v4890
        %v4892 = vpop.f32.mrf.mxu0
        %v4893 = vadd.f32 %v4774, %v4892
        %4894 = vmatmul.bf16.gmra.mxu0 %v4810
        %v4895 = vpop.f32.mrf.mxu0
        %v4896 = vadd.f32 %v4777, %v4895
        %v4897 = vpop.f32.mrf.mxu0
        %4898 = vdwg.mxu0
        %4899 = vmatpush.bf16.msra.mxu0 0
        %4900 = vmatpush.bf16.msra.mxu0 0
        %4901 = vmatpush.bf16.msra.mxu0 0
        %4902 = vmatpush.bf16.msra.mxu0 0
        %4903 = vmatpush.bf16.msra.mxu0 0
        %4904 = vmatpush.bf16.msra.mxu0 0
        %4905 = vmatpush.bf16.msra.mxu0 0
        %4906 = vmatpush.bf16.msra.mxu0 %v4825
        %4907 = vmatmul.bf16.gmra.mxu0 %v4807
        %v4908 = vpop.f32.mrf.mxu0
        %v4909 = vadd.f32 %v4790, %v4908
        %v4910 = vpop.f32.mrf.mxu0
        %v4911 = vadd.f32 %v4792, %v4910
        %4912 = vmatmul.bf16.gmra.mxu0 %v4810
        %v4913 = vpop.f32.mrf.mxu0
        %v4914 = vadd.f32 %v4795, %v4913
        %v4915 = vpop.f32.mrf.mxu0
        %4916 = vdwg.mxu0
        %s4917 = scalar_lea.vmem %s3, 24
        %v4918 = vld [vmem:[%s4917] sm:$0xf]
        %v4919 = vld [vmem:[%s4917 + $0x4] sm:$0xf]
        %v4920 = vld [vmem:[%s4917 + $0x8] sm:$0xf]
        %v4924 = vunpack.c.l.b16 %v4918
        %v4925 = vunpack.c.l.b16 %v4919
        %v4926 = vunpack.c.l.b16 %v4920
        %v4927 = vpack.c.b16 %v4925, %v4924
        %v4928 = vpack.c.b16 %v4926, %v4926
        %4929 = vrot.lane.b32.xlu0 %v4666, 124
        %v4930 = vpop.permute.xlu0 %4929
        %4931 = vrot.lane.b32.xlu0 %v4667, 124
        %v4932 = vpop.permute.xlu0 %4931
        %4933 = vrot.lane.b32.xlu0 %v4668, 124
        %v4934 = vpop.permute.xlu0 %4933
        %4935 = vrot.lane.b32.xlu0 %v4669, 124
        %v4936 = vpop.permute.xlu0 %4935
        %4937 = vrot.lane.b32.xlu0 %v4670, 124
        %v4938 = vpop.permute.xlu0 %4937
        %v4939 = vsel %vm1102, %v4930, %v4932
        %v4940 = vsel %vm1102, %v4932, %v4934
        %v4941 = vsel %vm1102, %v4934, %v4936
        %v4942 = vsel %vm1102, %v4936, %v4938
        %v4944 = vsel %vm4685, %v4927, 0
        %v4947 = vsel %vm4685, %v4928, 0
        %v4950 = vsel %vm4692, %v4939, 0
        %v4953 = vsel %vm4692, %v4940, 0
        %v4956 = vsel %vm4692, %v4941, 0
        %v4959 = vsel %vm4692, %v4942, 0
        %v4962 = vsel %vm4692, %v4938, 0
        %4964 = vmatpush.bf16.msra.mxu0 0
        %4965 = vmatpush.bf16.msra.mxu0 0
        %4966 = vmatpush.bf16.msra.mxu0 0
        %4967 = vmatpush.bf16.msra.mxu0 0
        %4968 = vmatpush.bf16.msra.mxu0 0
        %4969 = vmatpush.bf16.msra.mxu0 0
        %4970 = vmatpush.bf16.msra.mxu0 0
        %4971 = vmatpush.bf16.msra.mxu0 %v4950
        %4972 = vmatmul.bf16.gmra.mxu0 %v4944
        %v4973 = vpop.f32.mrf.mxu0
        %v4974 = vadd.f32 0.0, %v4973
        %v4975 = vpop.f32.mrf.mxu0
        %v4976 = vadd.f32 0.0, %v4975
        %4977 = vmatmul.bf16.gmra.mxu0 %v4947
        %v4978 = vpop.f32.mrf.mxu0
        %v4979 = vadd.f32 0.0, %v4978
        %v4980 = vpop.f32.mrf.mxu0
        %4981 = vdwg.mxu0
        %4982 = vmatpush.bf16.msra.mxu0 0
        %4983 = vmatpush.bf16.msra.mxu0 0
        %4984 = vmatpush.bf16.msra.mxu0 0
        %4985 = vmatpush.bf16.msra.mxu0 0
        %4986 = vmatpush.bf16.msra.mxu0 0
        %4987 = vmatpush.bf16.msra.mxu0 0
        %4988 = vmatpush.bf16.msra.mxu0 0
        %4989 = vmatpush.bf16.msra.mxu0 %v4953
        %4990 = vmatmul.bf16.gmra.mxu0 %v4944
        %v4991 = vpop.f32.mrf.mxu0
        %v4992 = vadd.f32 0.0, %v4991
        %v4993 = vpop.f32.mrf.mxu0
        %v4994 = vadd.f32 0.0, %v4993
        %4995 = vmatmul.bf16.gmra.mxu0 %v4947
        %v4996 = vpop.f32.mrf.mxu0
        %v4997 = vadd.f32 0.0, %v4996
        %v4998 = vpop.f32.mrf.mxu0
        %4999 = vdwg.mxu0
        %5000 = vmatpush.bf16.msra.mxu0 0
        %5001 = vmatpush.bf16.msra.mxu0 0
        %5002 = vmatpush.bf16.msra.mxu0 0
        %5003 = vmatpush.bf16.msra.mxu0 0
        %5004 = vmatpush.bf16.msra.mxu0 0
        %5005 = vmatpush.bf16.msra.mxu0 0
        %5006 = vmatpush.bf16.msra.mxu0 0
        %5007 = vmatpush.bf16.msra.mxu0 %v4956
        %5008 = vmatmul.bf16.gmra.mxu0 %v4944
        %v5009 = vpop.f32.mrf.mxu0
        %v5010 = vadd.f32 0.0, %v5009
        %v5011 = vpop.f32.mrf.mxu0
        %v5012 = vadd.f32 0.0, %v5011
        %5013 = vmatmul.bf16.gmra.mxu0 %v4947
        %v5014 = vpop.f32.mrf.mxu0
        %v5015 = vadd.f32 0.0, %v5014
        %v5016 = vpop.f32.mrf.mxu0
        %5017 = vdwg.mxu0
        %5018 = vmatpush.bf16.msra.mxu0 0
        %5019 = vmatpush.bf16.msra.mxu0 0
        %5020 = vmatpush.bf16.msra.mxu0 0
        %5021 = vmatpush.bf16.msra.mxu0 0
        %5022 = vmatpush.bf16.msra.mxu0 0
        %5023 = vmatpush.bf16.msra.mxu0 0
        %5024 = vmatpush.bf16.msra.mxu0 0
        %5025 = vmatpush.bf16.msra.mxu0 %v4959
        %5026 = vmatmul.bf16.gmra.mxu0 %v4944
        %v5027 = vpop.f32.mrf.mxu0
        %v5028 = vadd.f32 0.0, %v5027
        %v5029 = vpop.f32.mrf.mxu0
        %v5030 = vadd.f32 0.0, %v5029
        %5031 = vmatmul.bf16.gmra.mxu0 %v4947
        %v5032 = vpop.f32.mrf.mxu0
        %v5033 = vadd.f32 0.0, %v5032
        %v5034 = vpop.f32.mrf.mxu0
        %5035 = vdwg.mxu0
        %5036 = vmatpush.bf16.msra.mxu0 0
        %5037 = vmatpush.bf16.msra.mxu0 0
        %5038 = vmatpush.bf16.msra.mxu0 0
        %5039 = vmatpush.bf16.msra.mxu0 0
        %5040 = vmatpush.bf16.msra.mxu0 0
        %5041 = vmatpush.bf16.msra.mxu0 0
        %5042 = vmatpush.bf16.msra.mxu0 0
        %5043 = vmatpush.bf16.msra.mxu0 %v4962
        %5044 = vmatmul.bf16.gmra.mxu0 %v4944
        %v5045 = vpop.f32.mrf.mxu0
        %v5046 = vadd.f32 0.0, %v5045
        %v5047 = vpop.f32.mrf.mxu0
        %v5048 = vadd.f32 0.0, %v5047
        %5049 = vmatmul.bf16.gmra.mxu0 %v4947
        %v5050 = vpop.f32.mrf.mxu0
        %v5051 = vadd.f32 0.0, %v5050
        %v5052 = vpop.f32.mrf.mxu0
        %5053 = vdwg.mxu0
        %v5054 = vadd.f32 %v4837, %v4974
        %v5055 = vadd.f32 %v4855, %v4992
        %v5056 = vadd.f32 %v4873, %v5010
        %v5057 = vadd.f32 %v4891, %v5028
        %v5058 = vadd.f32 %v4909, %v5046
        %v5059 = vadd.f32 %v4839, %v4976
        %v5060 = vadd.f32 %v4857, %v4994
        %v5061 = vadd.f32 %v4875, %v5012
        %v5062 = vadd.f32 %v4893, %v5030
        %v5063 = vadd.f32 %v4911, %v5048
        %v5064 = vadd.f32 %v4842, %v4979
        %v5065 = vadd.f32 %v4860, %v4997
        %v5066 = vadd.f32 %v4878, %v5015
        %v5067 = vadd.f32 %v4896, %v5033
        %v5068 = vadd.f32 %v4914, %v5051
        %s5069 = scalar_lea.vmem %s3, 36
        %v5070 = vld [vmem:[%s5069] sm:$0xf]
        %v5071 = vld [vmem:[%s5069 + $0x4] sm:$0xf]
        %v5072 = vld [vmem:[%s5069 + $0x8] sm:$0xf]
        %v5076 = vunpack.c.l.b16 %v5070
        %v5077 = vunpack.c.l.b16 %v5071
        %v5078 = vunpack.c.l.b16 %v5072
        %v5079 = vpack.c.b16 %v5077, %v5076
        %v5080 = vpack.c.b16 %v5078, %v5078
        %5081 = vrot.lane.b32.xlu0 %v4666, 122
        %v5082 = vpop.permute.xlu0 %5081
        %5083 = vrot.lane.b32.xlu0 %v4667, 122
        %v5084 = vpop.permute.xlu0 %5083
        %5085 = vrot.lane.b32.xlu0 %v4668, 122
        %v5086 = vpop.permute.xlu0 %5085
        %5087 = vrot.lane.b32.xlu0 %v4669, 122
        %v5088 = vpop.permute.xlu0 %5087
        %5089 = vrot.lane.b32.xlu0 %v4670, 122
        %v5090 = vpop.permute.xlu0 %5089
        %vm5091 = vcmask 998400
        %v5092 = vsel %vm5091, %v5082, %v5084
        %v5093 = vsel %vm5091, %v5084, %v5086
        %v5094 = vsel %vm5091, %v5086, %v5088
        %v5095 = vsel %vm5091, %v5088, %v5090
        %v5097 = vsel %vm4685, %v5079, 0
        %v5100 = vsel %vm4685, %v5080, 0
        %v5103 = vsel %vm4692, %v5092, 0
        %v5106 = vsel %vm4692, %v5093, 0
        %v5109 = vsel %vm4692, %v5094, 0
        %v5112 = vsel %vm4692, %v5095, 0
        %v5115 = vsel %vm4692, %v5090, 0
        %5117 = vmatpush.bf16.msra.mxu0 0
        %5118 = vmatpush.bf16.msra.mxu0 0
        %5119 = vmatpush.bf16.msra.mxu0 0
        %5120 = vmatpush.bf16.msra.mxu0 0
        %5121 = vmatpush.bf16.msra.mxu0 0
        %5122 = vmatpush.bf16.msra.mxu0 0
        %5123 = vmatpush.bf16.msra.mxu0 0
        %5124 = vmatpush.bf16.msra.mxu0 %v5103
        %5125 = vmatmul.bf16.gmra.mxu0 %v5097
        %v5126 = vpop.f32.mrf.mxu0
        %v5127 = vadd.f32 0.0, %v5126
        %v5128 = vpop.f32.mrf.mxu0
        %v5129 = vadd.f32 0.0, %v5128
        %5130 = vmatmul.bf16.gmra.mxu0 %v5100
        %v5131 = vpop.f32.mrf.mxu0
        %v5132 = vadd.f32 0.0, %v5131
        %v5133 = vpop.f32.mrf.mxu0
        %5134 = vdwg.mxu0
        %5135 = vmatpush.bf16.msra.mxu0 0
        %5136 = vmatpush.bf16.msra.mxu0 0
        %5137 = vmatpush.bf16.msra.mxu0 0
        %5138 = vmatpush.bf16.msra.mxu0 0
        %5139 = vmatpush.bf16.msra.mxu0 0
        %5140 = vmatpush.bf16.msra.mxu0 0
        %5141 = vmatpush.bf16.msra.mxu0 0
        %5142 = vmatpush.bf16.msra.mxu0 %v5106
        %5143 = vmatmul.bf16.gmra.mxu0 %v5097
        %v5144 = vpop.f32.mrf.mxu0
        %v5145 = vadd.f32 0.0, %v5144
        %v5146 = vpop.f32.mrf.mxu0
        %v5147 = vadd.f32 0.0, %v5146
        %5148 = vmatmul.bf16.gmra.mxu0 %v5100
        %v5149 = vpop.f32.mrf.mxu0
        %v5150 = vadd.f32 0.0, %v5149
        %v5151 = vpop.f32.mrf.mxu0
        %5152 = vdwg.mxu0
        %5153 = vmatpush.bf16.msra.mxu0 0
        %5154 = vmatpush.bf16.msra.mxu0 0
        %5155 = vmatpush.bf16.msra.mxu0 0
        %5156 = vmatpush.bf16.msra.mxu0 0
        %5157 = vmatpush.bf16.msra.mxu0 0
        %5158 = vmatpush.bf16.msra.mxu0 0
        %5159 = vmatpush.bf16.msra.mxu0 0
        %5160 = vmatpush.bf16.msra.mxu0 %v5109
        %5161 = vmatmul.bf16.gmra.mxu0 %v5097
        %v5162 = vpop.f32.mrf.mxu0
        %v5163 = vadd.f32 0.0, %v5162
        %v5164 = vpop.f32.mrf.mxu0
        %v5165 = vadd.f32 0.0, %v5164
        %5166 = vmatmul.bf16.gmra.mxu0 %v5100
        %v5167 = vpop.f32.mrf.mxu0
        %v5168 = vadd.f32 0.0, %v5167
        %v5169 = vpop.f32.mrf.mxu0
        %5170 = vdwg.mxu0
        %5171 = vmatpush.bf16.msra.mxu0 0
        %5172 = vmatpush.bf16.msra.mxu0 0
        %5173 = vmatpush.bf16.msra.mxu0 0
        %5174 = vmatpush.bf16.msra.mxu0 0
        %5175 = vmatpush.bf16.msra.mxu0 0
        %5176 = vmatpush.bf16.msra.mxu0 0
        %5177 = vmatpush.bf16.msra.mxu0 0
        %5178 = vmatpush.bf16.msra.mxu0 %v5112
        %5179 = vmatmul.bf16.gmra.mxu0 %v5097
        %v5180 = vpop.f32.mrf.mxu0
        %v5181 = vadd.f32 0.0, %v5180
        %v5182 = vpop.f32.mrf.mxu0
        %v5183 = vadd.f32 0.0, %v5182
        %5184 = vmatmul.bf16.gmra.mxu0 %v5100
        %v5185 = vpop.f32.mrf.mxu0
        %v5186 = vadd.f32 0.0, %v5185
        %v5187 = vpop.f32.mrf.mxu0
        %5188 = vdwg.mxu0
        %5189 = vmatpush.bf16.msra.mxu0 0
        %5190 = vmatpush.bf16.msra.mxu0 0
        %5191 = vmatpush.bf16.msra.mxu0 0
        %5192 = vmatpush.bf16.msra.mxu0 0
        %5193 = vmatpush.bf16.msra.mxu0 0
        %5194 = vmatpush.bf16.msra.mxu0 0
        %5195 = vmatpush.bf16.msra.mxu0 0
        %5196 = vmatpush.bf16.msra.mxu0 %v5115
        %5197 = vmatmul.bf16.gmra.mxu0 %v5097
        %v5198 = vpop.f32.mrf.mxu0
        %v5199 = vadd.f32 0.0, %v5198
        %v5200 = vpop.f32.mrf.mxu0
        %v5201 = vadd.f32 0.0, %v5200
        %5202 = vmatmul.bf16.gmra.mxu0 %v5100
        %v5203 = vpop.f32.mrf.mxu0
        %v5204 = vadd.f32 0.0, %v5203
        %v5205 = vpop.f32.mrf.mxu0
        %5206 = vdwg.mxu0
        %v5207 = vadd.f32 %v5054, %v5127
        %v5208 = vadd.f32 %v5055, %v5145
        %v5209 = vadd.f32 %v5056, %v5163
        %v5210 = vadd.f32 %v5057, %v5181
        %v5211 = vadd.f32 %v5058, %v5199
        %v5212 = vadd.f32 %v5059, %v5129
        %v5213 = vadd.f32 %v5060, %v5147
        %v5214 = vadd.f32 %v5061, %v5165
        %v5215 = vadd.f32 %v5062, %v5183
        %v5216 = vadd.f32 %v5063, %v5201
        %v5217 = vadd.f32 %v5064, %v5132
        %v5218 = vadd.f32 %v5065, %v5150
        %v5219 = vadd.f32 %v5066, %v5168
        %v5220 = vadd.f32 %v5067, %v5186
        %v5221 = vadd.f32 %v5068, %v5204
        %s5222 = scalar_lea.vmem %s3, 48
        %v5223 = vld [vmem:[%s5222] sm:$0xf]
        %v5224 = vld [vmem:[%s5222 + $0x4] sm:$0xf]
        %v5225 = vld [vmem:[%s5222 + $0x8] sm:$0xf]
        %v5229 = vunpack.c.l.b16 %v5223
        %v5230 = vunpack.c.l.b16 %v5224
        %v5231 = vunpack.c.l.b16 %v5225
        %v5232 = vpack.c.b16 %v5230, %v5229
        %v5233 = vpack.c.b16 %v5231, %v5231
        %5234 = vrot.lane.b32.xlu0 %v4666, 120
        %v5235 = vpop.permute.xlu0 %5234
        %5236 = vrot.lane.b32.xlu0 %v4667, 120
        %v5237 = vpop.permute.xlu0 %5236
        %5238 = vrot.lane.b32.xlu0 %v4668, 120
        %v5239 = vpop.permute.xlu0 %5238
        %5240 = vrot.lane.b32.xlu0 %v4669, 120
        %v5241 = vpop.permute.xlu0 %5240
        %5242 = vrot.lane.b32.xlu0 %v4670, 120
        %v5243 = vpop.permute.xlu0 %5242
        %vm5244 = vcmask 982016
        %v5245 = vsel %vm5244, %v5235, %v5237
        %v5246 = vsel %vm5244, %v5237, %v5239
        %v5247 = vsel %vm5244, %v5239, %v5241
        %v5248 = vsel %vm5244, %v5241, %v5243
        %v5250 = vsel %vm4685, %v5232, 0
        %v5253 = vsel %vm4685, %v5233, 0
        %v5256 = vsel %vm4692, %v5245, 0
        %v5259 = vsel %vm4692, %v5246, 0
        %v5262 = vsel %vm4692, %v5247, 0
        %v5265 = vsel %vm4692, %v5248, 0
        %v5268 = vsel %vm4692, %v5243, 0
        %5270 = vmatpush.bf16.msra.mxu0 0
        %5271 = vmatpush.bf16.msra.mxu0 0
        %5272 = vmatpush.bf16.msra.mxu0 0
        %5273 = vmatpush.bf16.msra.mxu0 0
        %5274 = vmatpush.bf16.msra.mxu0 0
        %5275 = vmatpush.bf16.msra.mxu0 0
        %5276 = vmatpush.bf16.msra.mxu0 0
        %5277 = vmatpush.bf16.msra.mxu0 %v5256
        %5278 = vmatmul.bf16.gmra.mxu0 %v5250
        %v5279 = vpop.f32.mrf.mxu0
        %v5280 = vadd.f32 0.0, %v5279
        %v5281 = vpop.f32.mrf.mxu0
        %v5282 = vadd.f32 0.0, %v5281
        %5283 = vmatmul.bf16.gmra.mxu0 %v5253
        %v5284 = vpop.f32.mrf.mxu0
        %v5285 = vadd.f32 0.0, %v5284
        %v5286 = vpop.f32.mrf.mxu0
        %5287 = vdwg.mxu0
        %5288 = vmatpush.bf16.msra.mxu0 0
        %5289 = vmatpush.bf16.msra.mxu0 0
        %5290 = vmatpush.bf16.msra.mxu0 0
        %5291 = vmatpush.bf16.msra.mxu0 0
        %5292 = vmatpush.bf16.msra.mxu0 0
        %5293 = vmatpush.bf16.msra.mxu0 0
        %5294 = vmatpush.bf16.msra.mxu0 0
        %5295 = vmatpush.bf16.msra.mxu0 %v5259
        %5296 = vmatmul.bf16.gmra.mxu0 %v5250
        %v5297 = vpop.f32.mrf.mxu0
        %v5298 = vadd.f32 0.0, %v5297
        %v5299 = vpop.f32.mrf.mxu0
        %v5300 = vadd.f32 0.0, %v5299
        %5301 = vmatmul.bf16.gmra.mxu0 %v5253
        %v5302 = vpop.f32.mrf.mxu0
        %v5303 = vadd.f32 0.0, %v5302
        %v5304 = vpop.f32.mrf.mxu0
        %5305 = vdwg.mxu0
        %5306 = vmatpush.bf16.msra.mxu0 0
        %5307 = vmatpush.bf16.msra.mxu0 0
        %5308 = vmatpush.bf16.msra.mxu0 0
        %5309 = vmatpush.bf16.msra.mxu0 0
        %5310 = vmatpush.bf16.msra.mxu0 0
        %5311 = vmatpush.bf16.msra.mxu0 0
        %5312 = vmatpush.bf16.msra.mxu0 0
        %5313 = vmatpush.bf16.msra.mxu0 %v5262
        %5314 = vmatmul.bf16.gmra.mxu0 %v5250
        %v5315 = vpop.f32.mrf.mxu0
        %v5316 = vadd.f32 0.0, %v5315
        %v5317 = vpop.f32.mrf.mxu0
        %v5318 = vadd.f32 0.0, %v5317
        %5319 = vmatmul.bf16.gmra.mxu0 %v5253
        %v5320 = vpop.f32.mrf.mxu0
        %v5321 = vadd.f32 0.0, %v5320
        %v5322 = vpop.f32.mrf.mxu0
        %5323 = vdwg.mxu0
        %5324 = vmatpush.bf16.msra.mxu0 0
        %5325 = vmatpush.bf16.msra.mxu0 0
        %5326 = vmatpush.bf16.msra.mxu0 0
        %5327 = vmatpush.bf16.msra.mxu0 0
        %5328 = vmatpush.bf16.msra.mxu0 0
        %5329 = vmatpush.bf16.msra.mxu0 0
        %5330 = vmatpush.bf16.msra.mxu0 0
        %5331 = vmatpush.bf16.msra.mxu0 %v5265
        %5332 = vmatmul.bf16.gmra.mxu0 %v5250
        %v5333 = vpop.f32.mrf.mxu0
        %v5334 = vadd.f32 0.0, %v5333
        %v5335 = vpop.f32.mrf.mxu0
        %v5336 = vadd.f32 0.0, %v5335
        %5337 = vmatmul.bf16.gmra.mxu0 %v5253
        %v5338 = vpop.f32.mrf.mxu0
        %v5339 = vadd.f32 0.0, %v5338
        %v5340 = vpop.f32.mrf.mxu0
        %5341 = vdwg.mxu0
        %5342 = vmatpush.bf16.msra.mxu0 0
        %5343 = vmatpush.bf16.msra.mxu0 0
        %5344 = vmatpush.bf16.msra.mxu0 0
        %5345 = vmatpush.bf16.msra.mxu0 0
        %5346 = vmatpush.bf16.msra.mxu0 0
        %5347 = vmatpush.bf16.msra.mxu0 0
        %5348 = vmatpush.bf16.msra.mxu0 0
        %5349 = vmatpush.bf16.msra.mxu0 %v5268
        %5350 = vmatmul.bf16.gmra.mxu0 %v5250
        %v5351 = vpop.f32.mrf.mxu0
        %v5352 = vadd.f32 0.0, %v5351
        %v5353 = vpop.f32.mrf.mxu0
        %v5354 = vadd.f32 0.0, %v5353
        %5355 = vmatmul.bf16.gmra.mxu0 %v5253
        %v5356 = vpop.f32.mrf.mxu0
        %v5357 = vadd.f32 0.0, %v5356
        %v5358 = vpop.f32.mrf.mxu0
        %5359 = vdwg.mxu0
        %v5360 = vadd.f32 %v5207, %v5280
        %v5361 = vadd.f32 %v5208, %v5298
        %v5362 = vadd.f32 %v5209, %v5316
        %v5363 = vadd.f32 %v5210, %v5334
        %v5364 = vadd.f32 %v5211, %v5352
        %v5365 = vadd.f32 %v5212, %v5282
        %v5366 = vadd.f32 %v5213, %v5300
        %v5367 = vadd.f32 %v5214, %v5318
        %v5368 = vadd.f32 %v5215, %v5336
        %v5369 = vadd.f32 %v5216, %v5354
        %v5370 = vadd.f32 %v5217, %v5285
        %v5371 = vadd.f32 %v5218, %v5303
        %v5372 = vadd.f32 %v5219, %v5321
        %v5373 = vadd.f32 %v5220, %v5339
        %v5374 = vadd.f32 %v5221, %v5357
        %s5375 = scalar_lea.vmem %s3, 60
        %v5376 = vld [vmem:[%s5375] sm:$0xf]
        %v5377 = vld [vmem:[%s5375 + $0x4] sm:$0xf]
        %v5378 = vld [vmem:[%s5375 + $0x8] sm:$0xf]
        %v5382 = vunpack.c.l.b16 %v5376
        %v5383 = vunpack.c.l.b16 %v5377
        %v5384 = vunpack.c.l.b16 %v5378
        %v5385 = vpack.c.b16 %v5383, %v5382
        %v5386 = vpack.c.b16 %v5384, %v5384
        %v5387 = vunpack.c.h.b16 %v4629
        %v5388 = vunpack.c.h.b16 %v4633
        %v5389 = vpack.c.b16 %v5388, %v5387
        %5390 = vrot.lane.b32.xlu0 %v4666, 64
        %v5391 = vpop.permute.xlu0 %5390
        %5392 = vrot.lane.b32.xlu0 %v4667, 64
        %v5393 = vpop.permute.xlu0 %5392
        %5394 = vrot.lane.b32.xlu0 %v4668, 64
        %v5395 = vpop.permute.xlu0 %5394
        %5396 = vrot.lane.b32.xlu0 %v4669, 64
        %v5397 = vpop.permute.xlu0 %5396
        %5398 = vrot.lane.b32.xlu0 %v4670, 64
        %v5399 = vpop.permute.xlu0 %5398
        %5400 = vrot.lane.b32.xlu0 %v5389, 64
        %v5401 = vpop.permute.xlu0 %5400
        %v5402 = vsel %vm2111, %v5391, %v5393
        %v5403 = vsel %vm2111, %v5393, %v5395
        %v5404 = vsel %vm2111, %v5395, %v5397
        %v5405 = vsel %vm2111, %v5397, %v5399
        %v5406 = vsel %vm2111, %v5399, %v5401
        %v5408 = vsel %vm4685, %v5385, 0
        %v5411 = vsel %vm4685, %v5386, 0
        %v5414 = vsel %vm4692, %v5402, 0
        %v5417 = vsel %vm4692, %v5403, 0
        %v5420 = vsel %vm4692, %v5404, 0
        %v5423 = vsel %vm4692, %v5405, 0
        %v5426 = vsel %vm4692, %v5406, 0
        %5428 = vmatpush.bf16.msra.mxu0 0
        %5429 = vmatpush.bf16.msra.mxu0 0
        %5430 = vmatpush.bf16.msra.mxu0 0
        %5431 = vmatpush.bf16.msra.mxu0 0
        %5432 = vmatpush.bf16.msra.mxu0 0
        %5433 = vmatpush.bf16.msra.mxu0 0
        %5434 = vmatpush.bf16.msra.mxu0 0
        %5435 = vmatpush.bf16.msra.mxu0 %v5414
        %5436 = vmatmul.bf16.gmra.mxu0 %v5408
        %v5437 = vpop.f32.mrf.mxu0
        %v5438 = vadd.f32 0.0, %v5437
        %v5439 = vpop.f32.mrf.mxu0
        %v5440 = vadd.f32 0.0, %v5439
        %5441 = vmatmul.bf16.gmra.mxu0 %v5411
        %v5442 = vpop.f32.mrf.mxu0
        %v5443 = vadd.f32 0.0, %v5442
        %v5444 = vpop.f32.mrf.mxu0
        %5445 = vdwg.mxu0
        %5446 = vmatpush.bf16.msra.mxu0 0
        %5447 = vmatpush.bf16.msra.mxu0 0
        %5448 = vmatpush.bf16.msra.mxu0 0
        %5449 = vmatpush.bf16.msra.mxu0 0
        %5450 = vmatpush.bf16.msra.mxu0 0
        %5451 = vmatpush.bf16.msra.mxu0 0
        %5452 = vmatpush.bf16.msra.mxu0 0
        %5453 = vmatpush.bf16.msra.mxu0 %v5417
        %5454 = vmatmul.bf16.gmra.mxu0 %v5408
        %v5455 = vpop.f32.mrf.mxu0
        %v5456 = vadd.f32 0.0, %v5455
        %v5457 = vpop.f32.mrf.mxu0
        %v5458 = vadd.f32 0.0, %v5457
        %5459 = vmatmul.bf16.gmra.mxu0 %v5411
        %v5460 = vpop.f32.mrf.mxu0
        %v5461 = vadd.f32 0.0, %v5460
        %v5462 = vpop.f32.mrf.mxu0
        %5463 = vdwg.mxu0
        %5464 = vmatpush.bf16.msra.mxu0 0
        %5465 = vmatpush.bf16.msra.mxu0 0
        %5466 = vmatpush.bf16.msra.mxu0 0
        %5467 = vmatpush.bf16.msra.mxu0 0
        %5468 = vmatpush.bf16.msra.mxu0 0
        %5469 = vmatpush.bf16.msra.mxu0 0
        %5470 = vmatpush.bf16.msra.mxu0 0
        %5471 = vmatpush.bf16.msra.mxu0 %v5420
        %5472 = vmatmul.bf16.gmra.mxu0 %v5408
        %v5473 = vpop.f32.mrf.mxu0
        %v5474 = vadd.f32 0.0, %v5473
        %v5475 = vpop.f32.mrf.mxu0
        %v5476 = vadd.f32 0.0, %v5475
        %5477 = vmatmul.bf16.gmra.mxu0 %v5411
        %v5478 = vpop.f32.mrf.mxu0
        %v5479 = vadd.f32 0.0, %v5478
        %v5480 = vpop.f32.mrf.mxu0
        %5481 = vdwg.mxu0
        %5482 = vmatpush.bf16.msra.mxu0 0
        %5483 = vmatpush.bf16.msra.mxu0 0
        %5484 = vmatpush.bf16.msra.mxu0 0
        %5485 = vmatpush.bf16.msra.mxu0 0
        %5486 = vmatpush.bf16.msra.mxu0 0
        %5487 = vmatpush.bf16.msra.mxu0 0
        %5488 = vmatpush.bf16.msra.mxu0 0
        %5489 = vmatpush.bf16.msra.mxu0 %v5423
        %5490 = vmatmul.bf16.gmra.mxu0 %v5408
        %v5491 = vpop.f32.mrf.mxu0
        %v5492 = vadd.f32 0.0, %v5491
        %v5493 = vpop.f32.mrf.mxu0
        %v5494 = vadd.f32 0.0, %v5493
        %5495 = vmatmul.bf16.gmra.mxu0 %v5411
        %v5496 = vpop.f32.mrf.mxu0
        %v5497 = vadd.f32 0.0, %v5496
        %v5498 = vpop.f32.mrf.mxu0
        %5499 = vdwg.mxu0
        %5500 = vmatpush.bf16.msra.mxu0 0
        %5501 = vmatpush.bf16.msra.mxu0 0
        %5502 = vmatpush.bf16.msra.mxu0 0
        %5503 = vmatpush.bf16.msra.mxu0 0
        %5504 = vmatpush.bf16.msra.mxu0 0
        %5505 = vmatpush.bf16.msra.mxu0 0
        %5506 = vmatpush.bf16.msra.mxu0 0
        %5507 = vmatpush.bf16.msra.mxu0 %v5426
        %5508 = vmatmul.bf16.gmra.mxu0 %v5408
        %v5509 = vpop.f32.mrf.mxu0
        %v5510 = vadd.f32 0.0, %v5509
        %v5511 = vpop.f32.mrf.mxu0
        %v5512 = vadd.f32 0.0, %v5511
        %5513 = vmatmul.bf16.gmra.mxu0 %v5411
        %v5514 = vpop.f32.mrf.mxu0
        %v5515 = vadd.f32 0.0, %v5514
        %v5516 = vpop.f32.mrf.mxu0
        %5517 = vdwg.mxu0
        %v5518 = vadd.f32 %v5360, %v5438
        %v5519 = vadd.f32 %v5361, %v5456
        %v5520 = vadd.f32 %v5362, %v5474
        %v5521 = vadd.f32 %v5363, %v5492
        %v5522 = vadd.f32 %v5364, %v5510
        %v5523 = vadd.f32 %v5365, %v5440
        %v5524 = vadd.f32 %v5366, %v5458
        %v5525 = vadd.f32 %v5367, %v5476
        %v5526 = vadd.f32 %v5368, %v5494
        %v5527 = vadd.f32 %v5369, %v5512
        %v5528 = vadd.f32 %v5370, %v5443
        %v5529 = vadd.f32 %v5371, %v5461
        %v5530 = vadd.f32 %v5372, %v5479
        %v5531 = vadd.f32 %v5373, %v5497
        %v5532 = vadd.f32 %v5374, %v5515
        %s5533 = scalar_lea.vmem %s3, 72
        %v5534 = vld [vmem:[%s5533] sm:$0xf]
        %v5535 = vld [vmem:[%s5533 + $0x4] sm:$0xf]
        %v5536 = vld [vmem:[%s5533 + $0x8] sm:$0xf]
        %v5540 = vunpack.c.l.b16 %v5534
        %v5541 = vunpack.c.l.b16 %v5535
        %v5542 = vunpack.c.l.b16 %v5536
        %v5543 = vpack.c.b16 %v5541, %v5540
        %v5544 = vpack.c.b16 %v5542, %v5542
        %5545 = vrot.lane.b32.xlu0 %v4666, 62
        %v5546 = vpop.permute.xlu0 %5545
        %5547 = vrot.lane.b32.xlu0 %v4667, 62
        %v5548 = vpop.permute.xlu0 %5547
        %5549 = vrot.lane.b32.xlu0 %v4668, 62
        %v5550 = vpop.permute.xlu0 %5549
        %5551 = vrot.lane.b32.xlu0 %v4669, 62
        %v5552 = vpop.permute.xlu0 %5551
        %5553 = vrot.lane.b32.xlu0 %v4670, 62
        %v5554 = vpop.permute.xlu0 %5553
        %5555 = vrot.lane.b32.xlu0 %v5389, 62
        %v5556 = vpop.permute.xlu0 %5555
        %v5557 = vsel %vm2447, %v5546, %v5548
        %v5558 = vsel %vm2447, %v5548, %v5550
        %v5559 = vsel %vm2447, %v5550, %v5552
        %v5560 = vsel %vm2447, %v5552, %v5554
        %v5561 = vsel %vm2447, %v5554, %v5556
        %v5563 = vsel %vm4685, %v5543, 0
        %v5566 = vsel %vm4685, %v5544, 0
        %v5569 = vsel %vm4692, %v5557, 0
        %v5572 = vsel %vm4692, %v5558, 0
        %v5575 = vsel %vm4692, %v5559, 0
        %v5578 = vsel %vm4692, %v5560, 0
        %v5581 = vsel %vm4692, %v5561, 0
        %5583 = vmatpush.bf16.msra.mxu0 0
        %5584 = vmatpush.bf16.msra.mxu0 0
        %5585 = vmatpush.bf16.msra.mxu0 0
        %5586 = vmatpush.bf16.msra.mxu0 0
        %5587 = vmatpush.bf16.msra.mxu0 0
        %5588 = vmatpush.bf16.msra.mxu0 0
        %5589 = vmatpush.bf16.msra.mxu0 0
        %5590 = vmatpush.bf16.msra.mxu0 %v5569
        %5591 = vmatmul.bf16.gmra.mxu0 %v5563
        %v5592 = vpop.f32.mrf.mxu0
        %v5593 = vadd.f32 0.0, %v5592
        %v5594 = vpop.f32.mrf.mxu0
        %v5595 = vadd.f32 0.0, %v5594
        %5596 = vmatmul.bf16.gmra.mxu0 %v5566
        %v5597 = vpop.f32.mrf.mxu0
        %v5598 = vadd.f32 0.0, %v5597
        %v5599 = vpop.f32.mrf.mxu0
        %5600 = vdwg.mxu0
        %5601 = vmatpush.bf16.msra.mxu0 0
        %5602 = vmatpush.bf16.msra.mxu0 0
        %5603 = vmatpush.bf16.msra.mxu0 0
        %5604 = vmatpush.bf16.msra.mxu0 0
        %5605 = vmatpush.bf16.msra.mxu0 0
        %5606 = vmatpush.bf16.msra.mxu0 0
        %5607 = vmatpush.bf16.msra.mxu0 0
        %5608 = vmatpush.bf16.msra.mxu0 %v5572
        %5609 = vmatmul.bf16.gmra.mxu0 %v5563
        %v5610 = vpop.f32.mrf.mxu0
        %v5611 = vadd.f32 0.0, %v5610
        %v5612 = vpop.f32.mrf.mxu0
        %v5613 = vadd.f32 0.0, %v5612
        %5614 = vmatmul.bf16.gmra.mxu0 %v5566
        %v5615 = vpop.f32.mrf.mxu0
        %v5616 = vadd.f32 0.0, %v5615
        %v5617 = vpop.f32.mrf.mxu0
        %5618 = vdwg.mxu0
        %5619 = vmatpush.bf16.msra.mxu0 0
        %5620 = vmatpush.bf16.msra.mxu0 0
        %5621 = vmatpush.bf16.msra.mxu0 0
        %5622 = vmatpush.bf16.msra.mxu0 0
        %5623 = vmatpush.bf16.msra.mxu0 0
        %5624 = vmatpush.bf16.msra.mxu0 0
        %5625 = vmatpush.bf16.msra.mxu0 0
        %5626 = vmatpush.bf16.msra.mxu0 %v5575
        %5627 = vmatmul.bf16.gmra.mxu0 %v5563
        %v5628 = vpop.f32.mrf.mxu0
        %v5629 = vadd.f32 0.0, %v5628
        %v5630 = vpop.f32.mrf.mxu0
        %v5631 = vadd.f32 0.0, %v5630
        %5632 = vmatmul.bf16.gmra.mxu0 %v5566
        %v5633 = vpop.f32.mrf.mxu0
        %v5634 = vadd.f32 0.0, %v5633
        %v5635 = vpop.f32.mrf.mxu0
        %5636 = vdwg.mxu0
        %5637 = vmatpush.bf16.msra.mxu0 0
        %5638 = vmatpush.bf16.msra.mxu0 0
        %5639 = vmatpush.bf16.msra.mxu0 0
        %5640 = vmatpush.bf16.msra.mxu0 0
        %5641 = vmatpush.bf16.msra.mxu0 0
        %5642 = vmatpush.bf16.msra.mxu0 0
        %5643 = vmatpush.bf16.msra.mxu0 0
        %5644 = vmatpush.bf16.msra.mxu0 %v5578
        %5645 = vmatmul.bf16.gmra.mxu0 %v5563
        %v5646 = vpop.f32.mrf.mxu0
        %v5647 = vadd.f32 0.0, %v5646
        %v5648 = vpop.f32.mrf.mxu0
        %v5649 = vadd.f32 0.0, %v5648
        %5650 = vmatmul.bf16.gmra.mxu0 %v5566
        %v5651 = vpop.f32.mrf.mxu0
        %v5652 = vadd.f32 0.0, %v5651
        %v5653 = vpop.f32.mrf.mxu0
        %5654 = vdwg.mxu0
        %5655 = vmatpush.bf16.msra.mxu0 0
        %5656 = vmatpush.bf16.msra.mxu0 0
        %5657 = vmatpush.bf16.msra.mxu0 0
        %5658 = vmatpush.bf16.msra.mxu0 0
        %5659 = vmatpush.bf16.msra.mxu0 0
        %5660 = vmatpush.bf16.msra.mxu0 0
        %5661 = vmatpush.bf16.msra.mxu0 0
        %5662 = vmatpush.bf16.msra.mxu0 %v5581
        %5663 = vmatmul.bf16.gmra.mxu0 %v5563
        %v5664 = vpop.f32.mrf.mxu0
        %v5665 = vadd.f32 0.0, %v5664
        %v5666 = vpop.f32.mrf.mxu0
        %v5667 = vadd.f32 0.0, %v5666
        %5668 = vmatmul.bf16.gmra.mxu0 %v5566
        %v5669 = vpop.f32.mrf.mxu0
        %v5670 = vadd.f32 0.0, %v5669
        %v5671 = vpop.f32.mrf.mxu0
        %5672 = vdwg.mxu0
        %v5673 = vadd.f32 %v5518, %v5593
        %v5674 = vadd.f32 %v5519, %v5611
        %v5675 = vadd.f32 %v5520, %v5629
        %v5676 = vadd.f32 %v5521, %v5647
        %v5677 = vadd.f32 %v5522, %v5665
        %v5678 = vadd.f32 %v5523, %v5595
        %v5679 = vadd.f32 %v5524, %v5613
        %v5680 = vadd.f32 %v5525, %v5631
        %v5681 = vadd.f32 %v5526, %v5649
        %v5682 = vadd.f32 %v5527, %v5667
        %v5683 = vadd.f32 %v5528, %v5598
        %v5684 = vadd.f32 %v5529, %v5616
        %v5685 = vadd.f32 %v5530, %v5634
        %v5686 = vadd.f32 %v5531, %v5652
        %v5687 = vadd.f32 %v5532, %v5670
        %s5688 = scalar_lea.vmem %s3, 84
        %v5689 = vld [vmem:[%s5688] sm:$0xf]
        %v5690 = vld [vmem:[%s5688 + $0x4] sm:$0xf]
        %v5691 = vld [vmem:[%s5688 + $0x8] sm:$0xf]
        %v5695 = vunpack.c.l.b16 %v5689
        %v5696 = vunpack.c.l.b16 %v5690
        %v5697 = vunpack.c.l.b16 %v5691
        %v5698 = vpack.c.b16 %v5696, %v5695
        %v5699 = vpack.c.b16 %v5697, %v5697
        %5700 = vrot.lane.b32.xlu0 %v4666, 60
        %v5701 = vpop.permute.xlu0 %5700
        %5702 = vrot.lane.b32.xlu0 %v4667, 60
        %v5703 = vpop.permute.xlu0 %5702
        %5704 = vrot.lane.b32.xlu0 %v4668, 60
        %v5705 = vpop.permute.xlu0 %5704
        %5706 = vrot.lane.b32.xlu0 %v4669, 60
        %v5707 = vpop.permute.xlu0 %5706
        %5708 = vrot.lane.b32.xlu0 %v4670, 60
        %v5709 = vpop.permute.xlu0 %5708
        %5710 = vrot.lane.b32.xlu0 %v5389, 60
        %v5711 = vpop.permute.xlu0 %5710
        %v5712 = vsel %vm2783, %v5701, %v5703
        %v5713 = vsel %vm2783, %v5703, %v5705
        %v5714 = vsel %vm2783, %v5705, %v5707
        %v5715 = vsel %vm2783, %v5707, %v5709
        %v5716 = vsel %vm2783, %v5709, %v5711
        %v5718 = vsel %vm4685, %v5698, 0
        %v5721 = vsel %vm4685, %v5699, 0
        %v5724 = vsel %vm4692, %v5712, 0
        %v5727 = vsel %vm4692, %v5713, 0
        %v5730 = vsel %vm4692, %v5714, 0
        %v5733 = vsel %vm4692, %v5715, 0
        %v5736 = vsel %vm4692, %v5716, 0
        %5738 = vmatpush.bf16.msra.mxu0 0
        %5739 = vmatpush.bf16.msra.mxu0 0
        %5740 = vmatpush.bf16.msra.mxu0 0
        %5741 = vmatpush.bf16.msra.mxu0 0
        %5742 = vmatpush.bf16.msra.mxu0 0
        %5743 = vmatpush.bf16.msra.mxu0 0
        %5744 = vmatpush.bf16.msra.mxu0 0
        %5745 = vmatpush.bf16.msra.mxu0 %v5724
        %5746 = vmatmul.bf16.gmra.mxu0 %v5718
        %v5747 = vpop.f32.mrf.mxu0
        %v5748 = vadd.f32 0.0, %v5747
        %v5749 = vpop.f32.mrf.mxu0
        %v5750 = vadd.f32 0.0, %v5749
        %5751 = vmatmul.bf16.gmra.mxu0 %v5721
        %v5752 = vpop.f32.mrf.mxu0
        %v5753 = vadd.f32 0.0, %v5752
        %v5754 = vpop.f32.mrf.mxu0
        %5755 = vdwg.mxu0
        %5756 = vmatpush.bf16.msra.mxu0 0
        %5757 = vmatpush.bf16.msra.mxu0 0
        %5758 = vmatpush.bf16.msra.mxu0 0
        %5759 = vmatpush.bf16.msra.mxu0 0
        %5760 = vmatpush.bf16.msra.mxu0 0
        %5761 = vmatpush.bf16.msra.mxu0 0
        %5762 = vmatpush.bf16.msra.mxu0 0
        %5763 = vmatpush.bf16.msra.mxu0 %v5727
        %5764 = vmatmul.bf16.gmra.mxu0 %v5718
        %v5765 = vpop.f32.mrf.mxu0
        %v5766 = vadd.f32 0.0, %v5765
        %v5767 = vpop.f32.mrf.mxu0
        %v5768 = vadd.f32 0.0, %v5767
        %5769 = vmatmul.bf16.gmra.mxu0 %v5721
        %v5770 = vpop.f32.mrf.mxu0
        %v5771 = vadd.f32 0.0, %v5770
        %v5772 = vpop.f32.mrf.mxu0
        %5773 = vdwg.mxu0
        %5774 = vmatpush.bf16.msra.mxu0 0
        %5775 = vmatpush.bf16.msra.mxu0 0
        %5776 = vmatpush.bf16.msra.mxu0 0
        %5777 = vmatpush.bf16.msra.mxu0 0
        %5778 = vmatpush.bf16.msra.mxu0 0
        %5779 = vmatpush.bf16.msra.mxu0 0
        %5780 = vmatpush.bf16.msra.mxu0 0
        %5781 = vmatpush.bf16.msra.mxu0 %v5730
        %5782 = vmatmul.bf16.gmra.mxu0 %v5718
        %v5783 = vpop.f32.mrf.mxu0
        %v5784 = vadd.f32 0.0, %v5783
        %v5785 = vpop.f32.mrf.mxu0
        %v5786 = vadd.f32 0.0, %v5785
        %5787 = vmatmul.bf16.gmra.mxu0 %v5721
        %v5788 = vpop.f32.mrf.mxu0
        %v5789 = vadd.f32 0.0, %v5788
        %v5790 = vpop.f32.mrf.mxu0
        %5791 = vdwg.mxu0
        %5792 = vmatpush.bf16.msra.mxu0 0
        %5793 = vmatpush.bf16.msra.mxu0 0
        %5794 = vmatpush.bf16.msra.mxu0 0
        %5795 = vmatpush.bf16.msra.mxu0 0
        %5796 = vmatpush.bf16.msra.mxu0 0
        %5797 = vmatpush.bf16.msra.mxu0 0
        %5798 = vmatpush.bf16.msra.mxu0 0
        %5799 = vmatpush.bf16.msra.mxu0 %v5733
        %5800 = vmatmul.bf16.gmra.mxu0 %v5718
        %v5801 = vpop.f32.mrf.mxu0
        %v5802 = vadd.f32 0.0, %v5801
        %v5803 = vpop.f32.mrf.mxu0
        %v5804 = vadd.f32 0.0, %v5803
        %5805 = vmatmul.bf16.gmra.mxu0 %v5721
        %v5806 = vpop.f32.mrf.mxu0
        %v5807 = vadd.f32 0.0, %v5806
        %v5808 = vpop.f32.mrf.mxu0
        %5809 = vdwg.mxu0
        %5810 = vmatpush.bf16.msra.mxu0 0
        %5811 = vmatpush.bf16.msra.mxu0 0
        %5812 = vmatpush.bf16.msra.mxu0 0
        %5813 = vmatpush.bf16.msra.mxu0 0
        %5814 = vmatpush.bf16.msra.mxu0 0
        %5815 = vmatpush.bf16.msra.mxu0 0
        %5816 = vmatpush.bf16.msra.mxu0 0
        %5817 = vmatpush.bf16.msra.mxu0 %v5736
        %5818 = vmatmul.bf16.gmra.mxu0 %v5718
        %v5819 = vpop.f32.mrf.mxu0
        %v5820 = vadd.f32 0.0, %v5819
        %v5821 = vpop.f32.mrf.mxu0
        %v5822 = vadd.f32 0.0, %v5821
        %5823 = vmatmul.bf16.gmra.mxu0 %v5721
        %v5824 = vpop.f32.mrf.mxu0
        %v5825 = vadd.f32 0.0, %v5824
        %v5826 = vpop.f32.mrf.mxu0
        %5827 = vdwg.mxu0
        %v5828 = vadd.f32 %v5673, %v5748
        %v5829 = vadd.f32 %v5674, %v5766
        %v5830 = vadd.f32 %v5675, %v5784
        %v5831 = vadd.f32 %v5676, %v5802
        %v5832 = vadd.f32 %v5677, %v5820
        %v5833 = vadd.f32 %v5678, %v5750
        %v5834 = vadd.f32 %v5679, %v5768
        %v5835 = vadd.f32 %v5680, %v5786
        %v5836 = vadd.f32 %v5681, %v5804
        %v5837 = vadd.f32 %v5682, %v5822
        %v5838 = vadd.f32 %v5683, %v5753
        %v5839 = vadd.f32 %v5684, %v5771
        %v5840 = vadd.f32 %v5685, %v5789
        %v5841 = vadd.f32 %v5686, %v5807
        %v5842 = vadd.f32 %v5687, %v5825
        %s5843 = scalar_lea.vmem %s3, 96
        %v5844 = vld [vmem:[%s5843] sm:$0xf]
        %v5845 = vld [vmem:[%s5843 + $0x4] sm:$0xf]
        %v5846 = vld [vmem:[%s5843 + $0x8] sm:$0xf]
        %v5850 = vunpack.c.l.b16 %v5844
        %v5851 = vunpack.c.l.b16 %v5845
        %v5852 = vunpack.c.l.b16 %v5846
        %v5853 = vpack.c.b16 %v5851, %v5850
        %v5854 = vpack.c.b16 %v5852, %v5852
        %5855 = vrot.lane.b32.xlu0 %v4666, 58
        %v5856 = vpop.permute.xlu0 %5855
        %5857 = vrot.lane.b32.xlu0 %v4667, 58
        %v5858 = vpop.permute.xlu0 %5857
        %5859 = vrot.lane.b32.xlu0 %v4668, 58
        %v5860 = vpop.permute.xlu0 %5859
        %5861 = vrot.lane.b32.xlu0 %v4669, 58
        %v5862 = vpop.permute.xlu0 %5861
        %5863 = vrot.lane.b32.xlu0 %v4670, 58
        %v5864 = vpop.permute.xlu0 %5863
        %5865 = vrot.lane.b32.xlu0 %v5389, 58
        %v5866 = vpop.permute.xlu0 %5865
        %vm5867 = vcmask 474112
        %v5868 = vsel %vm5867, %v5856, %v5858
        %v5869 = vsel %vm5867, %v5858, %v5860
        %v5870 = vsel %vm5867, %v5860, %v5862
        %v5871 = vsel %vm5867, %v5862, %v5864
        %v5872 = vsel %vm5867, %v5864, %v5866
        %v5874 = vsel %vm4685, %v5853, 0
        %v5877 = vsel %vm4685, %v5854, 0
        %v5880 = vsel %vm4692, %v5868, 0
        %v5883 = vsel %vm4692, %v5869, 0
        %v5886 = vsel %vm4692, %v5870, 0
        %v5889 = vsel %vm4692, %v5871, 0
        %v5892 = vsel %vm4692, %v5872, 0
        %5894 = vmatpush.bf16.msra.mxu0 0
        %5895 = vmatpush.bf16.msra.mxu0 0
        %5896 = vmatpush.bf16.msra.mxu0 0
        %5897 = vmatpush.bf16.msra.mxu0 0
        %5898 = vmatpush.bf16.msra.mxu0 0
        %5899 = vmatpush.bf16.msra.mxu0 0
        %5900 = vmatpush.bf16.msra.mxu0 0
        %5901 = vmatpush.bf16.msra.mxu0 %v5880
        %5902 = vmatmul.bf16.gmra.mxu0 %v5874
        %v5903 = vpop.f32.mrf.mxu0
        %v5904 = vadd.f32 0.0, %v5903
        %v5905 = vpop.f32.mrf.mxu0
        %v5906 = vadd.f32 0.0, %v5905
        %5907 = vmatmul.bf16.gmra.mxu0 %v5877
        %v5908 = vpop.f32.mrf.mxu0
        %v5909 = vadd.f32 0.0, %v5908
        %v5910 = vpop.f32.mrf.mxu0
        %5911 = vdwg.mxu0
        %5912 = vmatpush.bf16.msra.mxu0 0
        %5913 = vmatpush.bf16.msra.mxu0 0
        %5914 = vmatpush.bf16.msra.mxu0 0
        %5915 = vmatpush.bf16.msra.mxu0 0
        %5916 = vmatpush.bf16.msra.mxu0 0
        %5917 = vmatpush.bf16.msra.mxu0 0
        %5918 = vmatpush.bf16.msra.mxu0 0
        %5919 = vmatpush.bf16.msra.mxu0 %v5883
        %5920 = vmatmul.bf16.gmra.mxu0 %v5874
        %v5921 = vpop.f32.mrf.mxu0
        %v5922 = vadd.f32 0.0, %v5921
        %v5923 = vpop.f32.mrf.mxu0
        %v5924 = vadd.f32 0.0, %v5923
        %5925 = vmatmul.bf16.gmra.mxu0 %v5877
        %v5926 = vpop.f32.mrf.mxu0
        %v5927 = vadd.f32 0.0, %v5926
        %v5928 = vpop.f32.mrf.mxu0
        %5929 = vdwg.mxu0
        %5930 = vmatpush.bf16.msra.mxu0 0
        %5931 = vmatpush.bf16.msra.mxu0 0
        %5932 = vmatpush.bf16.msra.mxu0 0
        %5933 = vmatpush.bf16.msra.mxu0 0
        %5934 = vmatpush.bf16.msra.mxu0 0
        %5935 = vmatpush.bf16.msra.mxu0 0
        %5936 = vmatpush.bf16.msra.mxu0 0
        %5937 = vmatpush.bf16.msra.mxu0 %v5886
        %5938 = vmatmul.bf16.gmra.mxu0 %v5874
        %v5939 = vpop.f32.mrf.mxu0
        %v5940 = vadd.f32 0.0, %v5939
        %v5941 = vpop.f32.mrf.mxu0
        %v5942 = vadd.f32 0.0, %v5941
        %5943 = vmatmul.bf16.gmra.mxu0 %v5877
        %v5944 = vpop.f32.mrf.mxu0
        %v5945 = vadd.f32 0.0, %v5944
        %v5946 = vpop.f32.mrf.mxu0
        %5947 = vdwg.mxu0
        %5948 = vmatpush.bf16.msra.mxu0 0
        %5949 = vmatpush.bf16.msra.mxu0 0
        %5950 = vmatpush.bf16.msra.mxu0 0
        %5951 = vmatpush.bf16.msra.mxu0 0
        %5952 = vmatpush.bf16.msra.mxu0 0
        %5953 = vmatpush.bf16.msra.mxu0 0
        %5954 = vmatpush.bf16.msra.mxu0 0
        %5955 = vmatpush.bf16.msra.mxu0 %v5889
        %5956 = vmatmul.bf16.gmra.mxu0 %v5874
        %v5957 = vpop.f32.mrf.mxu0
        %v5958 = vadd.f32 0.0, %v5957
        %v5959 = vpop.f32.mrf.mxu0
        %v5960 = vadd.f32 0.0, %v5959
        %5961 = vmatmul.bf16.gmra.mxu0 %v5877
        %v5962 = vpop.f32.mrf.mxu0
        %v5963 = vadd.f32 0.0, %v5962
        %v5964 = vpop.f32.mrf.mxu0
        %5965 = vdwg.mxu0
        %5966 = vmatpush.bf16.msra.mxu0 0
        %5967 = vmatpush.bf16.msra.mxu0 0
        %5968 = vmatpush.bf16.msra.mxu0 0
        %5969 = vmatpush.bf16.msra.mxu0 0
        %5970 = vmatpush.bf16.msra.mxu0 0
        %5971 = vmatpush.bf16.msra.mxu0 0
        %5972 = vmatpush.bf16.msra.mxu0 0
        %5973 = vmatpush.bf16.msra.mxu0 %v5892
        %5974 = vmatmul.bf16.gmra.mxu0 %v5874
        %v5975 = vpop.f32.mrf.mxu0
        %v5976 = vadd.f32 0.0, %v5975
        %v5977 = vpop.f32.mrf.mxu0
        %v5978 = vadd.f32 0.0, %v5977
        %5979 = vmatmul.bf16.gmra.mxu0 %v5877
        %v5980 = vpop.f32.mrf.mxu0
        %v5981 = vadd.f32 0.0, %v5980
        %v5982 = vpop.f32.mrf.mxu0
        %5983 = vdwg.mxu0
        %v5984 = vadd.f32 %v5828, %v5904
        %v5985 = vadd.f32 %v5829, %v5922
        %v5986 = vadd.f32 %v5830, %v5940
        %v5987 = vadd.f32 %v5831, %v5958
        %v5988 = vadd.f32 %v5832, %v5976
        %v5989 = vadd.f32 %v5833, %v5906
        %v5990 = vadd.f32 %v5834, %v5924
        %v5991 = vadd.f32 %v5835, %v5942
        %v5992 = vadd.f32 %v5836, %v5960
        %v5993 = vadd.f32 %v5837, %v5978
        %v5994 = vadd.f32 %v5838, %v5909
        %v5995 = vadd.f32 %v5839, %v5927
        %v5996 = vadd.f32 %v5840, %v5945
        %v5997 = vadd.f32 %v5841, %v5963
        %v5998 = vadd.f32 %v5842, %v5981
        %s5999 = scalar_lea.vmem %s3, 108
        %v6000 = vld [vmem:[%s5999] sm:$0xf]
        %v6001 = vld [vmem:[%s5999 + $0x4] sm:$0xf]
        %v6002 = vld [vmem:[%s5999 + $0x8] sm:$0xf]
        %v6006 = vunpack.c.l.b16 %v6000
        %v6007 = vunpack.c.l.b16 %v6001
        %v6008 = vunpack.c.l.b16 %v6002
        %v6009 = vpack.c.b16 %v6007, %v6006
        %v6010 = vpack.c.b16 %v6008, %v6008
        %6011 = vrot.lane.b32.xlu0 %v4666, 56
        %v6012 = vpop.permute.xlu0 %6011
        %6013 = vrot.lane.b32.xlu0 %v4667, 56
        %v6014 = vpop.permute.xlu0 %6013
        %6015 = vrot.lane.b32.xlu0 %v4668, 56
        %v6016 = vpop.permute.xlu0 %6015
        %6017 = vrot.lane.b32.xlu0 %v4669, 56
        %v6018 = vpop.permute.xlu0 %6017
        %6019 = vrot.lane.b32.xlu0 %v4670, 56
        %v6020 = vpop.permute.xlu0 %6019
        %6021 = vrot.lane.b32.xlu0 %v5389, 56
        %v6022 = vpop.permute.xlu0 %6021
        %vm6023 = vcmask 457728
        %v6024 = vsel %vm6023, %v6012, %v6014
        %v6025 = vsel %vm6023, %v6014, %v6016
        %v6026 = vsel %vm6023, %v6016, %v6018
        %v6027 = vsel %vm6023, %v6018, %v6020
        %v6028 = vsel %vm6023, %v6020, %v6022
        %v6030 = vsel %vm4685, %v6009, 0
        %v6033 = vsel %vm4685, %v6010, 0
        %v6036 = vsel %vm4692, %v6024, 0
        %v6039 = vsel %vm4692, %v6025, 0
        %v6042 = vsel %vm4692, %v6026, 0
        %v6045 = vsel %vm4692, %v6027, 0
        %v6048 = vsel %vm4692, %v6028, 0
        %6050 = vmatpush.bf16.msra.mxu0 0
        %6051 = vmatpush.bf16.msra.mxu0 0
        %6052 = vmatpush.bf16.msra.mxu0 0
        %6053 = vmatpush.bf16.msra.mxu0 0
        %6054 = vmatpush.bf16.msra.mxu0 0
        %6055 = vmatpush.bf16.msra.mxu0 0
        %6056 = vmatpush.bf16.msra.mxu0 0
        %6057 = vmatpush.bf16.msra.mxu0 %v6036
        %6058 = vmatmul.bf16.gmra.mxu0 %v6030
        %v6059 = vpop.f32.mrf.mxu0
        %v6060 = vadd.f32 0.0, %v6059
        %v6061 = vpop.f32.mrf.mxu0
        %v6062 = vadd.f32 0.0, %v6061
        %6063 = vmatmul.bf16.gmra.mxu0 %v6033
        %v6064 = vpop.f32.mrf.mxu0
        %v6065 = vadd.f32 0.0, %v6064
        %v6066 = vpop.f32.mrf.mxu0
        %6067 = vdwg.mxu0
        %6068 = vmatpush.bf16.msra.mxu0 0
        %6069 = vmatpush.bf16.msra.mxu0 0
        %6070 = vmatpush.bf16.msra.mxu0 0
        %6071 = vmatpush.bf16.msra.mxu0 0
        %6072 = vmatpush.bf16.msra.mxu0 0
        %6073 = vmatpush.bf16.msra.mxu0 0
        %6074 = vmatpush.bf16.msra.mxu0 0
        %6075 = vmatpush.bf16.msra.mxu0 %v6039
        %6076 = vmatmul.bf16.gmra.mxu0 %v6030
        %v6077 = vpop.f32.mrf.mxu0
        %v6078 = vadd.f32 0.0, %v6077
        %v6079 = vpop.f32.mrf.mxu0
        %v6080 = vadd.f32 0.0, %v6079
        %6081 = vmatmul.bf16.gmra.mxu0 %v6033
        %v6082 = vpop.f32.mrf.mxu0
        %v6083 = vadd.f32 0.0, %v6082
        %v6084 = vpop.f32.mrf.mxu0
        %6085 = vdwg.mxu0
        %6086 = vmatpush.bf16.msra.mxu0 0
        %6087 = vmatpush.bf16.msra.mxu0 0
        %6088 = vmatpush.bf16.msra.mxu0 0
        %6089 = vmatpush.bf16.msra.mxu0 0
        %6090 = vmatpush.bf16.msra.mxu0 0
        %6091 = vmatpush.bf16.msra.mxu0 0
        %6092 = vmatpush.bf16.msra.mxu0 0
        %6093 = vmatpush.bf16.msra.mxu0 %v6042
        %6094 = vmatmul.bf16.gmra.mxu0 %v6030
        %v6095 = vpop.f32.mrf.mxu0
        %v6096 = vadd.f32 0.0, %v6095
        %v6097 = vpop.f32.mrf.mxu0
        %v6098 = vadd.f32 0.0, %v6097
        %6099 = vmatmul.bf16.gmra.mxu0 %v6033
        %v6100 = vpop.f32.mrf.mxu0
        %v6101 = vadd.f32 0.0, %v6100
        %v6102 = vpop.f32.mrf.mxu0
        %6103 = vdwg.mxu0
        %6104 = vmatpush.bf16.msra.mxu0 0
        %6105 = vmatpush.bf16.msra.mxu0 0
        %6106 = vmatpush.bf16.msra.mxu0 0
        %6107 = vmatpush.bf16.msra.mxu0 0
        %6108 = vmatpush.bf16.msra.mxu0 0
        %6109 = vmatpush.bf16.msra.mxu0 0
        %6110 = vmatpush.bf16.msra.mxu0 0
        %6111 = vmatpush.bf16.msra.mxu0 %v6045
        %6112 = vmatmul.bf16.gmra.mxu0 %v6030
        %v6113 = vpop.f32.mrf.mxu0
        %v6114 = vadd.f32 0.0, %v6113
        %v6115 = vpop.f32.mrf.mxu0
        %v6116 = vadd.f32 0.0, %v6115
        %6117 = vmatmul.bf16.gmra.mxu0 %v6033
        %v6118 = vpop.f32.mrf.mxu0
        %v6119 = vadd.f32 0.0, %v6118
        %v6120 = vpop.f32.mrf.mxu0
        %6121 = vdwg.mxu0
        %6122 = vmatpush.bf16.msra.mxu0 0
        %6123 = vmatpush.bf16.msra.mxu0 0
        %6124 = vmatpush.bf16.msra.mxu0 0
        %6125 = vmatpush.bf16.msra.mxu0 0
        %6126 = vmatpush.bf16.msra.mxu0 0
        %6127 = vmatpush.bf16.msra.mxu0 0
        %6128 = vmatpush.bf16.msra.mxu0 0
        %6129 = vmatpush.bf16.msra.mxu0 %v6048
        %6130 = vmatmul.bf16.gmra.mxu0 %v6030
        %v6131 = vpop.f32.mrf.mxu0
        %v6132 = vadd.f32 0.0, %v6131
        %v6133 = vpop.f32.mrf.mxu0
        %v6134 = vadd.f32 0.0, %v6133
        %6135 = vmatmul.bf16.gmra.mxu0 %v6033
        %v6136 = vpop.f32.mrf.mxu0
        %v6137 = vadd.f32 0.0, %v6136
        %v6138 = vpop.f32.mrf.mxu0
        %6139 = vdwg.mxu0
        %v6140 = vadd.f32 %v5984, %v6060
        %v6141 = vadd.f32 %v5985, %v6078
        %v6142 = vadd.f32 %v5986, %v6096
        %v6143 = vadd.f32 %v5987, %v6114
        %v6144 = vadd.f32 %v5988, %v6132
        %v6145 = vadd.f32 %v5989, %v6062
        %v6146 = vadd.f32 %v5990, %v6080
        %v6147 = vadd.f32 %v5991, %v6098
        %v6148 = vadd.f32 %v5992, %v6116
        %v6149 = vadd.f32 %v5993, %v6134
        %v6150 = vadd.f32 %v5994, %v6065
        %v6151 = vadd.f32 %v5995, %v6083
        %v6152 = vadd.f32 %v5996, %v6101
        %v6153 = vadd.f32 %v5997, %v6119
        %v6154 = vadd.f32 %v5998, %v6137
        %s6155 = scalar_lea.vmem %s3, 120
        %v6156 = vld [vmem:[%s6155] sm:$0xf]
        %v6157 = vld [vmem:[%s6155 + $0x4] sm:$0xf]
        %v6158 = vld [vmem:[%s6155 + $0x8] sm:$0xf]
        %v6162 = vunpack.c.l.b16 %v6156
        %v6163 = vunpack.c.l.b16 %v6157
        %v6164 = vunpack.c.l.b16 %v6158
        %v6165 = vpack.c.b16 %v6163, %v6162
        %v6166 = vpack.c.b16 %v6164, %v6164
        %v6168 = vsel %vm4685, %v6165, 0
        %v6171 = vsel %vm4685, %v6166, 0
        %v6174 = vsel %vm4692, %v5389, 0
        %6176 = vmatpush.bf16.msra.mxu0 0
        %6177 = vmatpush.bf16.msra.mxu0 0
        %6178 = vmatpush.bf16.msra.mxu0 0
        %6179 = vmatpush.bf16.msra.mxu0 0
        %6180 = vmatpush.bf16.msra.mxu0 0
        %6181 = vmatpush.bf16.msra.mxu0 0
        %6182 = vmatpush.bf16.msra.mxu0 0
        %6183 = vmatpush.bf16.msra.mxu0 %v4816
        %6184 = vmatmul.bf16.gmra.mxu0 %v6168
        %v6185 = vpop.f32.mrf.mxu0
        %v6186 = vadd.f32 0.0, %v6185
        %v6187 = vpop.f32.mrf.mxu0
        %v6188 = vadd.f32 0.0, %v6187
        %6189 = vmatmul.bf16.gmra.mxu0 %v6171
        %v6190 = vpop.f32.mrf.mxu0
        %v6191 = vadd.f32 0.0, %v6190
        %v6192 = vpop.f32.mrf.mxu0
        %6193 = vdwg.mxu0
        %6194 = vmatpush.bf16.msra.mxu0 0
        %6195 = vmatpush.bf16.msra.mxu0 0
        %6196 = vmatpush.bf16.msra.mxu0 0
        %6197 = vmatpush.bf16.msra.mxu0 0
        %6198 = vmatpush.bf16.msra.mxu0 0
        %6199 = vmatpush.bf16.msra.mxu0 0
        %6200 = vmatpush.bf16.msra.mxu0 0
        %6201 = vmatpush.bf16.msra.mxu0 %v4819
        %6202 = vmatmul.bf16.gmra.mxu0 %v6168
        %v6203 = vpop.f32.mrf.mxu0
        %v6204 = vadd.f32 0.0, %v6203
        %v6205 = vpop.f32.mrf.mxu0
        %v6206 = vadd.f32 0.0, %v6205
        %6207 = vmatmul.bf16.gmra.mxu0 %v6171
        %v6208 = vpop.f32.mrf.mxu0
        %v6209 = vadd.f32 0.0, %v6208
        %v6210 = vpop.f32.mrf.mxu0
        %6211 = vdwg.mxu0
        %6212 = vmatpush.bf16.msra.mxu0 0
        %6213 = vmatpush.bf16.msra.mxu0 0
        %6214 = vmatpush.bf16.msra.mxu0 0
        %6215 = vmatpush.bf16.msra.mxu0 0
        %6216 = vmatpush.bf16.msra.mxu0 0
        %6217 = vmatpush.bf16.msra.mxu0 0
        %6218 = vmatpush.bf16.msra.mxu0 0
        %6219 = vmatpush.bf16.msra.mxu0 %v4822
        %6220 = vmatmul.bf16.gmra.mxu0 %v6168
        %v6221 = vpop.f32.mrf.mxu0
        %v6222 = vadd.f32 0.0, %v6221
        %v6223 = vpop.f32.mrf.mxu0
        %v6224 = vadd.f32 0.0, %v6223
        %6225 = vmatmul.bf16.gmra.mxu0 %v6171
        %v6226 = vpop.f32.mrf.mxu0
        %v6227 = vadd.f32 0.0, %v6226
        %v6228 = vpop.f32.mrf.mxu0
        %6229 = vdwg.mxu0
        %6230 = vmatpush.bf16.msra.mxu0 0
        %6231 = vmatpush.bf16.msra.mxu0 0
        %6232 = vmatpush.bf16.msra.mxu0 0
        %6233 = vmatpush.bf16.msra.mxu0 0
        %6234 = vmatpush.bf16.msra.mxu0 0
        %6235 = vmatpush.bf16.msra.mxu0 0
        %6236 = vmatpush.bf16.msra.mxu0 0
        %6237 = vmatpush.bf16.msra.mxu0 %v4825
        %6238 = vmatmul.bf16.gmra.mxu0 %v6168
        %v6239 = vpop.f32.mrf.mxu0
        %v6240 = vadd.f32 0.0, %v6239
        %v6241 = vpop.f32.mrf.mxu0
        %v6242 = vadd.f32 0.0, %v6241
        %6243 = vmatmul.bf16.gmra.mxu0 %v6171
        %v6244 = vpop.f32.mrf.mxu0
        %v6245 = vadd.f32 0.0, %v6244
        %v6246 = vpop.f32.mrf.mxu0
        %6247 = vdwg.mxu0
        %6248 = vmatpush.bf16.msra.mxu0 0
        %6249 = vmatpush.bf16.msra.mxu0 0
        %6250 = vmatpush.bf16.msra.mxu0 0
        %6251 = vmatpush.bf16.msra.mxu0 0
        %6252 = vmatpush.bf16.msra.mxu0 0
        %6253 = vmatpush.bf16.msra.mxu0 0
        %6254 = vmatpush.bf16.msra.mxu0 0
        %6255 = vmatpush.bf16.msra.mxu0 %v6174
        %6256 = vmatmul.bf16.gmra.mxu0 %v6168
        %v6257 = vpop.f32.mrf.mxu0
        %v6258 = vadd.f32 0.0, %v6257
        %v6259 = vpop.f32.mrf.mxu0
        %v6260 = vadd.f32 0.0, %v6259
        %6261 = vmatmul.bf16.gmra.mxu0 %v6171
        %v6262 = vpop.f32.mrf.mxu0
        %v6263 = vadd.f32 0.0, %v6262
        %v6264 = vpop.f32.mrf.mxu0
        %6265 = vdwg.mxu0
        %v6266 = vadd.f32 %v6140, %v6186
        %v6267 = vadd.f32 %v6141, %v6204
        %v6268 = vadd.f32 %v6142, %v6222
        %v6269 = vadd.f32 %v6143, %v6240
        %v6270 = vadd.f32 %v6144, %v6258
        %v6271 = vadd.f32 %v6145, %v6188
        %v6272 = vadd.f32 %v6146, %v6206
        %v6273 = vadd.f32 %v6147, %v6224
        %v6274 = vadd.f32 %v6148, %v6242
        %v6275 = vadd.f32 %v6149, %v6260
        %v6276 = vadd.f32 %v6150, %v6191
        %v6277 = vadd.f32 %v6151, %v6209
        %v6278 = vadd.f32 %v6152, %v6227
        %v6279 = vadd.f32 %v6153, %v6245
        %v6280 = vadd.f32 %v6154, %v6263
        %s6281 = scalar_lea.vmem %s3, 132
        %v6282 = vld [vmem:[%s6281] sm:$0xf]
        %v6283 = vld [vmem:[%s6281 + $0x4] sm:$0xf]
        %v6284 = vld [vmem:[%s6281 + $0x8] sm:$0xf]
        %v6288 = vunpack.c.l.b16 %v6282
        %v6289 = vunpack.c.l.b16 %v6283
        %v6290 = vunpack.c.l.b16 %v6284
        %v6291 = vpack.c.b16 %v6289, %v6288
        %v6292 = vpack.c.b16 %v6290, %v6290
        %6293 = vrot.lane.b32.xlu0 %v5389, 126
        %v6294 = vpop.permute.xlu0 %6293
        %v6295 = vsel %vm772, %v4680, %v6294
        %v6297 = vsel %vm4685, %v6291, 0
        %v6300 = vsel %vm4685, %v6292, 0
        %v6303 = vsel %vm4692, %v6295, 0
        %v6306 = vsel %vm4692, %v6294, 0
        %6308 = vmatpush.bf16.msra.mxu0 0
        %6309 = vmatpush.bf16.msra.mxu0 0
        %6310 = vmatpush.bf16.msra.mxu0 0
        %6311 = vmatpush.bf16.msra.mxu0 0
        %6312 = vmatpush.bf16.msra.mxu0 0
        %6313 = vmatpush.bf16.msra.mxu0 0
        %6314 = vmatpush.bf16.msra.mxu0 0
        %6315 = vmatpush.bf16.msra.mxu0 %v4697
        %6316 = vmatmul.bf16.gmra.mxu0 %v6297
        %v6317 = vpop.f32.mrf.mxu0
        %v6318 = vadd.f32 0.0, %v6317
        %v6319 = vpop.f32.mrf.mxu0
        %v6320 = vadd.f32 0.0, %v6319
        %6321 = vmatmul.bf16.gmra.mxu0 %v6300
        %v6322 = vpop.f32.mrf.mxu0
        %v6323 = vadd.f32 0.0, %v6322
        %v6324 = vpop.f32.mrf.mxu0
        %6325 = vdwg.mxu0
        %6326 = vmatpush.bf16.msra.mxu0 0
        %6327 = vmatpush.bf16.msra.mxu0 0
        %6328 = vmatpush.bf16.msra.mxu0 0
        %6329 = vmatpush.bf16.msra.mxu0 0
        %6330 = vmatpush.bf16.msra.mxu0 0
        %6331 = vmatpush.bf16.msra.mxu0 0
        %6332 = vmatpush.bf16.msra.mxu0 0
        %6333 = vmatpush.bf16.msra.mxu0 %v4700
        %6334 = vmatmul.bf16.gmra.mxu0 %v6297
        %v6335 = vpop.f32.mrf.mxu0
        %v6336 = vadd.f32 0.0, %v6335
        %v6337 = vpop.f32.mrf.mxu0
        %v6338 = vadd.f32 0.0, %v6337
        %6339 = vmatmul.bf16.gmra.mxu0 %v6300
        %v6340 = vpop.f32.mrf.mxu0
        %v6341 = vadd.f32 0.0, %v6340
        %v6342 = vpop.f32.mrf.mxu0
        %6343 = vdwg.mxu0
        %6344 = vmatpush.bf16.msra.mxu0 0
        %6345 = vmatpush.bf16.msra.mxu0 0
        %6346 = vmatpush.bf16.msra.mxu0 0
        %6347 = vmatpush.bf16.msra.mxu0 0
        %6348 = vmatpush.bf16.msra.mxu0 0
        %6349 = vmatpush.bf16.msra.mxu0 0
        %6350 = vmatpush.bf16.msra.mxu0 0
        %6351 = vmatpush.bf16.msra.mxu0 %v4703
        %6352 = vmatmul.bf16.gmra.mxu0 %v6297
        %v6353 = vpop.f32.mrf.mxu0
        %v6354 = vadd.f32 0.0, %v6353
        %v6355 = vpop.f32.mrf.mxu0
        %v6356 = vadd.f32 0.0, %v6355
        %6357 = vmatmul.bf16.gmra.mxu0 %v6300
        %v6358 = vpop.f32.mrf.mxu0
        %v6359 = vadd.f32 0.0, %v6358
        %v6360 = vpop.f32.mrf.mxu0
        %6361 = vdwg.mxu0
        %6362 = vmatpush.bf16.msra.mxu0 0
        %6363 = vmatpush.bf16.msra.mxu0 0
        %6364 = vmatpush.bf16.msra.mxu0 0
        %6365 = vmatpush.bf16.msra.mxu0 0
        %6366 = vmatpush.bf16.msra.mxu0 0
        %6367 = vmatpush.bf16.msra.mxu0 0
        %6368 = vmatpush.bf16.msra.mxu0 0
        %6369 = vmatpush.bf16.msra.mxu0 %v6303
        %6370 = vmatmul.bf16.gmra.mxu0 %v6297
        %v6371 = vpop.f32.mrf.mxu0
        %v6372 = vadd.f32 0.0, %v6371
        %v6373 = vpop.f32.mrf.mxu0
        %v6374 = vadd.f32 0.0, %v6373
        %6375 = vmatmul.bf16.gmra.mxu0 %v6300
        %v6376 = vpop.f32.mrf.mxu0
        %v6377 = vadd.f32 0.0, %v6376
        %v6378 = vpop.f32.mrf.mxu0
        %6379 = vdwg.mxu0
        %6380 = vmatpush.bf16.msra.mxu0 0
        %6381 = vmatpush.bf16.msra.mxu0 0
        %6382 = vmatpush.bf16.msra.mxu0 0
        %6383 = vmatpush.bf16.msra.mxu0 0
        %6384 = vmatpush.bf16.msra.mxu0 0
        %6385 = vmatpush.bf16.msra.mxu0 0
        %6386 = vmatpush.bf16.msra.mxu0 0
        %6387 = vmatpush.bf16.msra.mxu0 %v6306
        %6388 = vmatmul.bf16.gmra.mxu0 %v6297
        %v6389 = vpop.f32.mrf.mxu0
        %v6390 = vadd.f32 0.0, %v6389
        %v6391 = vpop.f32.mrf.mxu0
        %v6392 = vadd.f32 0.0, %v6391
        %6393 = vmatmul.bf16.gmra.mxu0 %v6300
        %v6394 = vpop.f32.mrf.mxu0
        %v6395 = vadd.f32 0.0, %v6394
        %v6396 = vpop.f32.mrf.mxu0
        %6397 = vdwg.mxu0
        %v6398 = vadd.f32 %v6266, %v6318
        %v6399 = vadd.f32 %v6267, %v6336
        %v6400 = vadd.f32 %v6268, %v6354
        %v6401 = vadd.f32 %v6269, %v6372
        %v6402 = vadd.f32 %v6270, %v6390
        %v6403 = vadd.f32 %v6271, %v6320
        %v6404 = vadd.f32 %v6272, %v6338
        %v6405 = vadd.f32 %v6273, %v6356
        %v6406 = vadd.f32 %v6274, %v6374
        %v6407 = vadd.f32 %v6275, %v6392
        %v6408 = vadd.f32 %v6276, %v6323
        %v6409 = vadd.f32 %v6277, %v6341
        %v6410 = vadd.f32 %v6278, %v6359
        %v6411 = vadd.f32 %v6279, %v6377
        %v6412 = vadd.f32 %v6280, %v6395
        %s6413 = scalar_lea.vmem %s3, 144
        %v6414 = vld [vmem:[%s6413] sm:$0xf]
        %v6415 = vld [vmem:[%s6413 + $0x4] sm:$0xf]
        %v6416 = vld [vmem:[%s6413 + $0x8] sm:$0xf]
        %v6420 = vunpack.c.l.b16 %v6414
        %v6421 = vunpack.c.l.b16 %v6415
        %v6422 = vunpack.c.l.b16 %v6416
        %v6423 = vpack.c.b16 %v6421, %v6420
        %v6424 = vpack.c.b16 %v6422, %v6422
        %6425 = vrot.lane.b32.xlu0 %v5389, 124
        %v6426 = vpop.permute.xlu0 %6425
        %v6427 = vsel %vm1102, %v4938, %v6426
        %v6429 = vsel %vm4685, %v6423, 0
        %v6432 = vsel %vm4685, %v6424, 0
        %v6435 = vsel %vm4692, %v6427, 0
        %v6438 = vsel %vm4692, %v6426, 0
        %6440 = vmatpush.bf16.msra.mxu0 0
        %6441 = vmatpush.bf16.msra.mxu0 0
        %6442 = vmatpush.bf16.msra.mxu0 0
        %6443 = vmatpush.bf16.msra.mxu0 0
        %6444 = vmatpush.bf16.msra.mxu0 0
        %6445 = vmatpush.bf16.msra.mxu0 0
        %6446 = vmatpush.bf16.msra.mxu0 0
        %6447 = vmatpush.bf16.msra.mxu0 %v4953
        %6448 = vmatmul.bf16.gmra.mxu0 %v6429
        %v6449 = vpop.f32.mrf.mxu0
        %v6450 = vadd.f32 0.0, %v6449
        %v6451 = vpop.f32.mrf.mxu0
        %v6452 = vadd.f32 0.0, %v6451
        %6453 = vmatmul.bf16.gmra.mxu0 %v6432
        %v6454 = vpop.f32.mrf.mxu0
        %v6455 = vadd.f32 0.0, %v6454
        %v6456 = vpop.f32.mrf.mxu0
        %6457 = vdwg.mxu0
        %6458 = vmatpush.bf16.msra.mxu0 0
        %6459 = vmatpush.bf16.msra.mxu0 0
        %6460 = vmatpush.bf16.msra.mxu0 0
        %6461 = vmatpush.bf16.msra.mxu0 0
        %6462 = vmatpush.bf16.msra.mxu0 0
        %6463 = vmatpush.bf16.msra.mxu0 0
        %6464 = vmatpush.bf16.msra.mxu0 0
        %6465 = vmatpush.bf16.msra.mxu0 %v4956
        %6466 = vmatmul.bf16.gmra.mxu0 %v6429
        %v6467 = vpop.f32.mrf.mxu0
        %v6468 = vadd.f32 0.0, %v6467
        %v6469 = vpop.f32.mrf.mxu0
        %v6470 = vadd.f32 0.0, %v6469
        %6471 = vmatmul.bf16.gmra.mxu0 %v6432
        %v6472 = vpop.f32.mrf.mxu0
        %v6473 = vadd.f32 0.0, %v6472
        %v6474 = vpop.f32.mrf.mxu0
        %6475 = vdwg.mxu0
        %6476 = vmatpush.bf16.msra.mxu0 0
        %6477 = vmatpush.bf16.msra.mxu0 0
        %6478 = vmatpush.bf16.msra.mxu0 0
        %6479 = vmatpush.bf16.msra.mxu0 0
        %6480 = vmatpush.bf16.msra.mxu0 0
        %6481 = vmatpush.bf16.msra.mxu0 0
        %6482 = vmatpush.bf16.msra.mxu0 0
        %6483 = vmatpush.bf16.msra.mxu0 %v4959
        %6484 = vmatmul.bf16.gmra.mxu0 %v6429
        %v6485 = vpop.f32.mrf.mxu0
        %v6486 = vadd.f32 0.0, %v6485
        %v6487 = vpop.f32.mrf.mxu0
        %v6488 = vadd.f32 0.0, %v6487
        %6489 = vmatmul.bf16.gmra.mxu0 %v6432
        %v6490 = vpop.f32.mrf.mxu0
        %v6491 = vadd.f32 0.0, %v6490
        %v6492 = vpop.f32.mrf.mxu0
        %6493 = vdwg.mxu0
        %6494 = vmatpush.bf16.msra.mxu0 0
        %6495 = vmatpush.bf16.msra.mxu0 0
        %6496 = vmatpush.bf16.msra.mxu0 0
        %6497 = vmatpush.bf16.msra.mxu0 0
        %6498 = vmatpush.bf16.msra.mxu0 0
        %6499 = vmatpush.bf16.msra.mxu0 0
        %6500 = vmatpush.bf16.msra.mxu0 0
        %6501 = vmatpush.bf16.msra.mxu0 %v6435
        %6502 = vmatmul.bf16.gmra.mxu0 %v6429
        %v6503 = vpop.f32.mrf.mxu0
        %v6504 = vadd.f32 0.0, %v6503
        %v6505 = vpop.f32.mrf.mxu0
        %v6506 = vadd.f32 0.0, %v6505
        %6507 = vmatmul.bf16.gmra.mxu0 %v6432
        %v6508 = vpop.f32.mrf.mxu0
        %v6509 = vadd.f32 0.0, %v6508
        %v6510 = vpop.f32.mrf.mxu0
        %6511 = vdwg.mxu0
        %6512 = vmatpush.bf16.msra.mxu0 0
        %6513 = vmatpush.bf16.msra.mxu0 0
        %6514 = vmatpush.bf16.msra.mxu0 0
        %6515 = vmatpush.bf16.msra.mxu0 0
        %6516 = vmatpush.bf16.msra.mxu0 0
        %6517 = vmatpush.bf16.msra.mxu0 0
        %6518 = vmatpush.bf16.msra.mxu0 0
        %6519 = vmatpush.bf16.msra.mxu0 %v6438
        %6520 = vmatmul.bf16.gmra.mxu0 %v6429
        %v6521 = vpop.f32.mrf.mxu0
        %v6522 = vadd.f32 0.0, %v6521
        %v6523 = vpop.f32.mrf.mxu0
        %v6524 = vadd.f32 0.0, %v6523
        %6525 = vmatmul.bf16.gmra.mxu0 %v6432
        %v6526 = vpop.f32.mrf.mxu0
        %v6527 = vadd.f32 0.0, %v6526
        %v6528 = vpop.f32.mrf.mxu0
        %6529 = vdwg.mxu0
        %v6530 = vadd.f32 %v6398, %v6450
        %v6531 = vadd.f32 %v6399, %v6468
        %v6532 = vadd.f32 %v6400, %v6486
        %v6533 = vadd.f32 %v6401, %v6504
        %v6534 = vadd.f32 %v6402, %v6522
        %v6535 = vadd.f32 %v6403, %v6452
        %v6536 = vadd.f32 %v6404, %v6470
        %v6537 = vadd.f32 %v6405, %v6488
        %v6538 = vadd.f32 %v6406, %v6506
        %v6539 = vadd.f32 %v6407, %v6524
        %v6540 = vadd.f32 %v6408, %v6455
        %v6541 = vadd.f32 %v6409, %v6473
        %v6542 = vadd.f32 %v6410, %v6491
        %v6543 = vadd.f32 %v6411, %v6509
        %v6544 = vadd.f32 %v6412, %v6527
        %s6545 = scalar_lea.vmem %s3, 156
        %v6546 = vld [vmem:[%s6545] sm:$0xf]
        %v6547 = vld [vmem:[%s6545 + $0x4] sm:$0xf]
        %v6548 = vld [vmem:[%s6545 + $0x8] sm:$0xf]
        %v6552 = vunpack.c.l.b16 %v6546
        %v6553 = vunpack.c.l.b16 %v6547
        %v6554 = vunpack.c.l.b16 %v6548
        %v6555 = vpack.c.b16 %v6553, %v6552
        %v6556 = vpack.c.b16 %v6554, %v6554
        %6557 = vrot.lane.b32.xlu0 %v5389, 122
        %v6558 = vpop.permute.xlu0 %6557
        %v6559 = vsel %vm5091, %v5090, %v6558
        %v6561 = vsel %vm4685, %v6555, 0
        %v6564 = vsel %vm4685, %v6556, 0
        %v6567 = vsel %vm4692, %v6559, 0
        %v6570 = vsel %vm4692, %v6558, 0
        %6572 = vmatpush.bf16.msra.mxu0 0
        %6573 = vmatpush.bf16.msra.mxu0 0
        %6574 = vmatpush.bf16.msra.mxu0 0
        %6575 = vmatpush.bf16.msra.mxu0 0
        %6576 = vmatpush.bf16.msra.mxu0 0
        %6577 = vmatpush.bf16.msra.mxu0 0
        %6578 = vmatpush.bf16.msra.mxu0 0
        %6579 = vmatpush.bf16.msra.mxu0 %v5106
        %6580 = vmatmul.bf16.gmra.mxu0 %v6561
        %v6581 = vpop.f32.mrf.mxu0
        %v6582 = vadd.f32 0.0, %v6581
        %v6583 = vpop.f32.mrf.mxu0
        %v6584 = vadd.f32 0.0, %v6583
        %6585 = vmatmul.bf16.gmra.mxu0 %v6564
        %v6586 = vpop.f32.mrf.mxu0
        %v6587 = vadd.f32 0.0, %v6586
        %v6588 = vpop.f32.mrf.mxu0
        %6589 = vdwg.mxu0
        %6590 = vmatpush.bf16.msra.mxu0 0
        %6591 = vmatpush.bf16.msra.mxu0 0
        %6592 = vmatpush.bf16.msra.mxu0 0
        %6593 = vmatpush.bf16.msra.mxu0 0
        %6594 = vmatpush.bf16.msra.mxu0 0
        %6595 = vmatpush.bf16.msra.mxu0 0
        %6596 = vmatpush.bf16.msra.mxu0 0
        %6597 = vmatpush.bf16.msra.mxu0 %v5109
        %6598 = vmatmul.bf16.gmra.mxu0 %v6561
        %v6599 = vpop.f32.mrf.mxu0
        %v6600 = vadd.f32 0.0, %v6599
        %v6601 = vpop.f32.mrf.mxu0
        %v6602 = vadd.f32 0.0, %v6601
        %6603 = vmatmul.bf16.gmra.mxu0 %v6564
        %v6604 = vpop.f32.mrf.mxu0
        %v6605 = vadd.f32 0.0, %v6604
        %v6606 = vpop.f32.mrf.mxu0
        %6607 = vdwg.mxu0
        %6608 = vmatpush.bf16.msra.mxu0 0
        %6609 = vmatpush.bf16.msra.mxu0 0
        %6610 = vmatpush.bf16.msra.mxu0 0
        %6611 = vmatpush.bf16.msra.mxu0 0
        %6612 = vmatpush.bf16.msra.mxu0 0
        %6613 = vmatpush.bf16.msra.mxu0 0
        %6614 = vmatpush.bf16.msra.mxu0 0
        %6615 = vmatpush.bf16.msra.mxu0 %v5112
        %6616 = vmatmul.bf16.gmra.mxu0 %v6561
        %v6617 = vpop.f32.mrf.mxu0
        %v6618 = vadd.f32 0.0, %v6617
        %v6619 = vpop.f32.mrf.mxu0
        %v6620 = vadd.f32 0.0, %v6619
        %6621 = vmatmul.bf16.gmra.mxu0 %v6564
        %v6622 = vpop.f32.mrf.mxu0
        %v6623 = vadd.f32 0.0, %v6622
        %v6624 = vpop.f32.mrf.mxu0
        %6625 = vdwg.mxu0
        %6626 = vmatpush.bf16.msra.mxu0 0
        %6627 = vmatpush.bf16.msra.mxu0 0
        %6628 = vmatpush.bf16.msra.mxu0 0
        %6629 = vmatpush.bf16.msra.mxu0 0
        %6630 = vmatpush.bf16.msra.mxu0 0
        %6631 = vmatpush.bf16.msra.mxu0 0
        %6632 = vmatpush.bf16.msra.mxu0 0
        %6633 = vmatpush.bf16.msra.mxu0 %v6567
        %6634 = vmatmul.bf16.gmra.mxu0 %v6561
        %v6635 = vpop.f32.mrf.mxu0
        %v6636 = vadd.f32 0.0, %v6635
        %v6637 = vpop.f32.mrf.mxu0
        %v6638 = vadd.f32 0.0, %v6637
        %6639 = vmatmul.bf16.gmra.mxu0 %v6564
        %v6640 = vpop.f32.mrf.mxu0
        %v6641 = vadd.f32 0.0, %v6640
        %v6642 = vpop.f32.mrf.mxu0
        %6643 = vdwg.mxu0
        %6644 = vmatpush.bf16.msra.mxu0 0
        %6645 = vmatpush.bf16.msra.mxu0 0
        %6646 = vmatpush.bf16.msra.mxu0 0
        %6647 = vmatpush.bf16.msra.mxu0 0
        %6648 = vmatpush.bf16.msra.mxu0 0
        %6649 = vmatpush.bf16.msra.mxu0 0
        %6650 = vmatpush.bf16.msra.mxu0 0
        %6651 = vmatpush.bf16.msra.mxu0 %v6570
        %6652 = vmatmul.bf16.gmra.mxu0 %v6561
        %v6653 = vpop.f32.mrf.mxu0
        %v6654 = vadd.f32 0.0, %v6653
        %v6655 = vpop.f32.mrf.mxu0
        %v6656 = vadd.f32 0.0, %v6655
        %6657 = vmatmul.bf16.gmra.mxu0 %v6564
        %v6658 = vpop.f32.mrf.mxu0
        %v6659 = vadd.f32 0.0, %v6658
        %v6660 = vpop.f32.mrf.mxu0
        %6661 = vdwg.mxu0
        %v6662 = vadd.f32 %v6530, %v6582
        %v6663 = vadd.f32 %v6531, %v6600
        %v6664 = vadd.f32 %v6532, %v6618
        %v6665 = vadd.f32 %v6533, %v6636
        %v6666 = vadd.f32 %v6534, %v6654
        %v6667 = vadd.f32 %v6535, %v6584
        %v6668 = vadd.f32 %v6536, %v6602
        %v6669 = vadd.f32 %v6537, %v6620
        %v6670 = vadd.f32 %v6538, %v6638
        %v6671 = vadd.f32 %v6539, %v6656
        %v6672 = vadd.f32 %v6540, %v6587
        %v6673 = vadd.f32 %v6541, %v6605
        %v6674 = vadd.f32 %v6542, %v6623
        %v6675 = vadd.f32 %v6543, %v6641
        %v6676 = vadd.f32 %v6544, %v6659
        %s6677 = scalar_lea.vmem %s3, 168
        %v6678 = vld [vmem:[%s6677] sm:$0xf]
        %v6679 = vld [vmem:[%s6677 + $0x4] sm:$0xf]
        %v6680 = vld [vmem:[%s6677 + $0x8] sm:$0xf]
        %v6684 = vunpack.c.l.b16 %v6678
        %v6685 = vunpack.c.l.b16 %v6679
        %v6686 = vunpack.c.l.b16 %v6680
        %v6687 = vpack.c.b16 %v6685, %v6684
        %v6688 = vpack.c.b16 %v6686, %v6686
        %6689 = vrot.lane.b32.xlu0 %v5389, 120
        %v6690 = vpop.permute.xlu0 %6689
        %v6691 = vsel %vm5244, %v5243, %v6690
        %v6693 = vsel %vm4685, %v6687, 0
        %v6696 = vsel %vm4685, %v6688, 0
        %v6699 = vsel %vm4692, %v6691, 0
        %v6702 = vsel %vm4692, %v6690, 0
        %6704 = vmatpush.bf16.msra.mxu0 0
        %6705 = vmatpush.bf16.msra.mxu0 0
        %6706 = vmatpush.bf16.msra.mxu0 0
        %6707 = vmatpush.bf16.msra.mxu0 0
        %6708 = vmatpush.bf16.msra.mxu0 0
        %6709 = vmatpush.bf16.msra.mxu0 0
        %6710 = vmatpush.bf16.msra.mxu0 0
        %6711 = vmatpush.bf16.msra.mxu0 %v5259
        %6712 = vmatmul.bf16.gmra.mxu0 %v6693
        %v6713 = vpop.f32.mrf.mxu0
        %v6714 = vadd.f32 0.0, %v6713
        %v6715 = vpop.f32.mrf.mxu0
        %v6716 = vadd.f32 0.0, %v6715
        %6717 = vmatmul.bf16.gmra.mxu0 %v6696
        %v6718 = vpop.f32.mrf.mxu0
        %v6719 = vadd.f32 0.0, %v6718
        %v6720 = vpop.f32.mrf.mxu0
        %6721 = vdwg.mxu0
        %6722 = vmatpush.bf16.msra.mxu0 0
        %6723 = vmatpush.bf16.msra.mxu0 0
        %6724 = vmatpush.bf16.msra.mxu0 0
        %6725 = vmatpush.bf16.msra.mxu0 0
        %6726 = vmatpush.bf16.msra.mxu0 0
        %6727 = vmatpush.bf16.msra.mxu0 0
        %6728 = vmatpush.bf16.msra.mxu0 0
        %6729 = vmatpush.bf16.msra.mxu0 %v5262
        %6730 = vmatmul.bf16.gmra.mxu0 %v6693
        %v6731 = vpop.f32.mrf.mxu0
        %v6732 = vadd.f32 0.0, %v6731
        %v6733 = vpop.f32.mrf.mxu0
        %v6734 = vadd.f32 0.0, %v6733
        %6735 = vmatmul.bf16.gmra.mxu0 %v6696
        %v6736 = vpop.f32.mrf.mxu0
        %v6737 = vadd.f32 0.0, %v6736
        %v6738 = vpop.f32.mrf.mxu0
        %6739 = vdwg.mxu0
        %6740 = vmatpush.bf16.msra.mxu0 0
        %6741 = vmatpush.bf16.msra.mxu0 0
        %6742 = vmatpush.bf16.msra.mxu0 0
        %6743 = vmatpush.bf16.msra.mxu0 0
        %6744 = vmatpush.bf16.msra.mxu0 0
        %6745 = vmatpush.bf16.msra.mxu0 0
        %6746 = vmatpush.bf16.msra.mxu0 0
        %6747 = vmatpush.bf16.msra.mxu0 %v5265
        %6748 = vmatmul.bf16.gmra.mxu0 %v6693
        %v6749 = vpop.f32.mrf.mxu0
        %v6750 = vadd.f32 0.0, %v6749
        %v6751 = vpop.f32.mrf.mxu0
        %v6752 = vadd.f32 0.0, %v6751
        %6753 = vmatmul.bf16.gmra.mxu0 %v6696
        %v6754 = vpop.f32.mrf.mxu0
        %v6755 = vadd.f32 0.0, %v6754
        %v6756 = vpop.f32.mrf.mxu0
        %6757 = vdwg.mxu0
        %6758 = vmatpush.bf16.msra.mxu0 0
        %6759 = vmatpush.bf16.msra.mxu0 0
        %6760 = vmatpush.bf16.msra.mxu0 0
        %6761 = vmatpush.bf16.msra.mxu0 0
        %6762 = vmatpush.bf16.msra.mxu0 0
        %6763 = vmatpush.bf16.msra.mxu0 0
        %6764 = vmatpush.bf16.msra.mxu0 0
        %6765 = vmatpush.bf16.msra.mxu0 %v6699
        %6766 = vmatmul.bf16.gmra.mxu0 %v6693
        %v6767 = vpop.f32.mrf.mxu0
        %v6768 = vadd.f32 0.0, %v6767
        %v6769 = vpop.f32.mrf.mxu0
        %v6770 = vadd.f32 0.0, %v6769
        %6771 = vmatmul.bf16.gmra.mxu0 %v6696
        %v6772 = vpop.f32.mrf.mxu0
        %v6773 = vadd.f32 0.0, %v6772
        %v6774 = vpop.f32.mrf.mxu0
        %6775 = vdwg.mxu0
        %6776 = vmatpush.bf16.msra.mxu0 0
        %6777 = vmatpush.bf16.msra.mxu0 0
        %6778 = vmatpush.bf16.msra.mxu0 0
        %6779 = vmatpush.bf16.msra.mxu0 0
        %6780 = vmatpush.bf16.msra.mxu0 0
        %6781 = vmatpush.bf16.msra.mxu0 0
        %6782 = vmatpush.bf16.msra.mxu0 0
        %6783 = vmatpush.bf16.msra.mxu0 %v6702
        %6784 = vmatmul.bf16.gmra.mxu0 %v6693
        %v6785 = vpop.f32.mrf.mxu0
        %v6786 = vadd.f32 0.0, %v6785
        %v6787 = vpop.f32.mrf.mxu0
        %v6788 = vadd.f32 0.0, %v6787
        %6789 = vmatmul.bf16.gmra.mxu0 %v6696
        %v6790 = vpop.f32.mrf.mxu0
        %v6791 = vadd.f32 0.0, %v6790
        %v6792 = vpop.f32.mrf.mxu0
        %6793 = vdwg.mxu0
        %v6794 = vadd.f32 %v6662, %v6714
        %v6795 = vadd.f32 %v6663, %v6732
        %v6796 = vadd.f32 %v6664, %v6750
        %v6797 = vadd.f32 %v6665, %v6768
        %v6798 = vadd.f32 %v6666, %v6786
        %v6799 = vadd.f32 %v6667, %v6716
        %v6800 = vadd.f32 %v6668, %v6734
        %v6801 = vadd.f32 %v6669, %v6752
        %v6802 = vadd.f32 %v6670, %v6770
        %v6803 = vadd.f32 %v6671, %v6788
        %v6804 = vadd.f32 %v6672, %v6719
        %v6805 = vadd.f32 %v6673, %v6737
        %v6806 = vadd.f32 %v6674, %v6755
        %v6807 = vadd.f32 %v6675, %v6773
        %v6808 = vadd.f32 %v6676, %v6791
        %s6809 = scalar_lea.vmem %s3, 180
        %v6810 = vld [vmem:[%s6809] sm:$0xf]
        %v6811 = vld [vmem:[%s6809 + $0x4] sm:$0xf]
        %v6812 = vld [vmem:[%s6809 + $0x8] sm:$0xf]
        %v6816 = vunpack.c.l.b16 %v6810
        %v6817 = vunpack.c.l.b16 %v6811
        %v6818 = vunpack.c.l.b16 %v6812
        %v6819 = vpack.c.b16 %v6817, %v6816
        %v6820 = vpack.c.b16 %v6818, %v6818
        %v6823 = vunpack.c.l.b16 %v4630
        %v6824 = vunpack.c.l.b16 %v4634
        %v6825 = vpack.c.b16 %v6824, %v6823
        %6826 = vrot.lane.b32.xlu0 %v6825, 64
        %v6827 = vpop.permute.xlu0 %6826
        %v6828 = vsel %vm2111, %v5401, %v6827
        %v6830 = vsel %vm4685, %v6819, 0
        %v6833 = vsel %vm4685, %v6820, 0
        %v6836 = vsel %vm4692, %v6828, 0
        %6838 = vmatpush.bf16.msra.mxu0 0
        %6839 = vmatpush.bf16.msra.mxu0 0
        %6840 = vmatpush.bf16.msra.mxu0 0
        %6841 = vmatpush.bf16.msra.mxu0 0
        %6842 = vmatpush.bf16.msra.mxu0 0
        %6843 = vmatpush.bf16.msra.mxu0 0
        %6844 = vmatpush.bf16.msra.mxu0 0
        %6845 = vmatpush.bf16.msra.mxu0 %v5417
        %6846 = vmatmul.bf16.gmra.mxu0 %v6830
        %v6847 = vpop.f32.mrf.mxu0
        %v6848 = vadd.f32 0.0, %v6847
        %v6849 = vpop.f32.mrf.mxu0
        %v6850 = vadd.f32 0.0, %v6849
        %6851 = vmatmul.bf16.gmra.mxu0 %v6833
        %v6852 = vpop.f32.mrf.mxu0
        %v6853 = vadd.f32 0.0, %v6852
        %v6854 = vpop.f32.mrf.mxu0
        %6855 = vdwg.mxu0
        %6856 = vmatpush.bf16.msra.mxu0 0
        %6857 = vmatpush.bf16.msra.mxu0 0
        %6858 = vmatpush.bf16.msra.mxu0 0
        %6859 = vmatpush.bf16.msra.mxu0 0
        %6860 = vmatpush.bf16.msra.mxu0 0
        %6861 = vmatpush.bf16.msra.mxu0 0
        %6862 = vmatpush.bf16.msra.mxu0 0
        %6863 = vmatpush.bf16.msra.mxu0 %v5420
        %6864 = vmatmul.bf16.gmra.mxu0 %v6830
        %v6865 = vpop.f32.mrf.mxu0
        %v6866 = vadd.f32 0.0, %v6865
        %v6867 = vpop.f32.mrf.mxu0
        %v6868 = vadd.f32 0.0, %v6867
        %6869 = vmatmul.bf16.gmra.mxu0 %v6833
        %v6870 = vpop.f32.mrf.mxu0
        %v6871 = vadd.f32 0.0, %v6870
        %v6872 = vpop.f32.mrf.mxu0
        %6873 = vdwg.mxu0
        %6874 = vmatpush.bf16.msra.mxu0 0
        %6875 = vmatpush.bf16.msra.mxu0 0
        %6876 = vmatpush.bf16.msra.mxu0 0
        %6877 = vmatpush.bf16.msra.mxu0 0
        %6878 = vmatpush.bf16.msra.mxu0 0
        %6879 = vmatpush.bf16.msra.mxu0 0
        %6880 = vmatpush.bf16.msra.mxu0 0
        %6881 = vmatpush.bf16.msra.mxu0 %v5423
        %6882 = vmatmul.bf16.gmra.mxu0 %v6830
        %v6883 = vpop.f32.mrf.mxu0
        %v6884 = vadd.f32 0.0, %v6883
        %v6885 = vpop.f32.mrf.mxu0
        %v6886 = vadd.f32 0.0, %v6885
        %6887 = vmatmul.bf16.gmra.mxu0 %v6833
        %v6888 = vpop.f32.mrf.mxu0
        %v6889 = vadd.f32 0.0, %v6888
        %v6890 = vpop.f32.mrf.mxu0
        %6891 = vdwg.mxu0
        %6892 = vmatpush.bf16.msra.mxu0 0
        %6893 = vmatpush.bf16.msra.mxu0 0
        %6894 = vmatpush.bf16.msra.mxu0 0
        %6895 = vmatpush.bf16.msra.mxu0 0
        %6896 = vmatpush.bf16.msra.mxu0 0
        %6897 = vmatpush.bf16.msra.mxu0 0
        %6898 = vmatpush.bf16.msra.mxu0 0
        %6899 = vmatpush.bf16.msra.mxu0 %v5426
        %6900 = vmatmul.bf16.gmra.mxu0 %v6830
        %v6901 = vpop.f32.mrf.mxu0
        %v6902 = vadd.f32 0.0, %v6901
        %v6903 = vpop.f32.mrf.mxu0
        %v6904 = vadd.f32 0.0, %v6903
        %6905 = vmatmul.bf16.gmra.mxu0 %v6833
        %v6906 = vpop.f32.mrf.mxu0
        %v6907 = vadd.f32 0.0, %v6906
        %v6908 = vpop.f32.mrf.mxu0
        %6909 = vdwg.mxu0
        %6910 = vmatpush.bf16.msra.mxu0 0
        %6911 = vmatpush.bf16.msra.mxu0 0
        %6912 = vmatpush.bf16.msra.mxu0 0
        %6913 = vmatpush.bf16.msra.mxu0 0
        %6914 = vmatpush.bf16.msra.mxu0 0
        %6915 = vmatpush.bf16.msra.mxu0 0
        %6916 = vmatpush.bf16.msra.mxu0 0
        %6917 = vmatpush.bf16.msra.mxu0 %v6836
        %6918 = vmatmul.bf16.gmra.mxu0 %v6830
        %v6919 = vpop.f32.mrf.mxu0
        %v6920 = vadd.f32 0.0, %v6919
        %v6921 = vpop.f32.mrf.mxu0
        %v6922 = vadd.f32 0.0, %v6921
        %6923 = vmatmul.bf16.gmra.mxu0 %v6833
        %v6924 = vpop.f32.mrf.mxu0
        %v6925 = vadd.f32 0.0, %v6924
        %v6926 = vpop.f32.mrf.mxu0
        %6927 = vdwg.mxu0
        %v6928 = vadd.f32 %v6794, %v6848
        %v6929 = vadd.f32 %v6795, %v6866
        %v6930 = vadd.f32 %v6796, %v6884
        %v6931 = vadd.f32 %v6797, %v6902
        %v6932 = vadd.f32 %v6798, %v6920
        %v6933 = vadd.f32 %v6799, %v6850
        %v6934 = vadd.f32 %v6800, %v6868
        %v6935 = vadd.f32 %v6801, %v6886
        %v6936 = vadd.f32 %v6802, %v6904
        %v6937 = vadd.f32 %v6803, %v6922
        %v6938 = vadd.f32 %v6804, %v6853
        %v6939 = vadd.f32 %v6805, %v6871
        %v6940 = vadd.f32 %v6806, %v6889
        %v6941 = vadd.f32 %v6807, %v6907
        %v6942 = vadd.f32 %v6808, %v6925
        %s6943 = scalar_lea.vmem %s3, 192
        %v6944 = vld [vmem:[%s6943] sm:$0xf]
        %v6945 = vld [vmem:[%s6943 + $0x4] sm:$0xf]
        %v6946 = vld [vmem:[%s6943 + $0x8] sm:$0xf]
        %v6950 = vunpack.c.l.b16 %v6944
        %v6951 = vunpack.c.l.b16 %v6945
        %v6952 = vunpack.c.l.b16 %v6946
        %v6953 = vpack.c.b16 %v6951, %v6950
        %v6954 = vpack.c.b16 %v6952, %v6952
        %6955 = vrot.lane.b32.xlu0 %v6825, 62
        %v6956 = vpop.permute.xlu0 %6955
        %v6957 = vsel %vm2447, %v5556, %v6956
        %v6959 = vsel %vm4685, %v6953, 0
        %v6962 = vsel %vm4685, %v6954, 0
        %v6965 = vsel %vm4692, %v6957, 0
        %6967 = vmatpush.bf16.msra.mxu0 0
        %6968 = vmatpush.bf16.msra.mxu0 0
        %6969 = vmatpush.bf16.msra.mxu0 0
        %6970 = vmatpush.bf16.msra.mxu0 0
        %6971 = vmatpush.bf16.msra.mxu0 0
        %6972 = vmatpush.bf16.msra.mxu0 0
        %6973 = vmatpush.bf16.msra.mxu0 0
        %6974 = vmatpush.bf16.msra.mxu0 %v5572
        %6975 = vmatmul.bf16.gmra.mxu0 %v6959
        %v6976 = vpop.f32.mrf.mxu0
        %v6977 = vadd.f32 0.0, %v6976
        %v6978 = vpop.f32.mrf.mxu0
        %v6979 = vadd.f32 0.0, %v6978
        %6980 = vmatmul.bf16.gmra.mxu0 %v6962
        %v6981 = vpop.f32.mrf.mxu0
        %v6982 = vadd.f32 0.0, %v6981
        %v6983 = vpop.f32.mrf.mxu0
        %6984 = vdwg.mxu0
        %6985 = vmatpush.bf16.msra.mxu0 0
        %6986 = vmatpush.bf16.msra.mxu0 0
        %6987 = vmatpush.bf16.msra.mxu0 0
        %6988 = vmatpush.bf16.msra.mxu0 0
        %6989 = vmatpush.bf16.msra.mxu0 0
        %6990 = vmatpush.bf16.msra.mxu0 0
        %6991 = vmatpush.bf16.msra.mxu0 0
        %6992 = vmatpush.bf16.msra.mxu0 %v5575
        %6993 = vmatmul.bf16.gmra.mxu0 %v6959
        %v6994 = vpop.f32.mrf.mxu0
        %v6995 = vadd.f32 0.0, %v6994
        %v6996 = vpop.f32.mrf.mxu0
        %v6997 = vadd.f32 0.0, %v6996
        %6998 = vmatmul.bf16.gmra.mxu0 %v6962
        %v6999 = vpop.f32.mrf.mxu0
        %v7000 = vadd.f32 0.0, %v6999
        %v7001 = vpop.f32.mrf.mxu0
        %7002 = vdwg.mxu0
        %7003 = vmatpush.bf16.msra.mxu0 0
        %7004 = vmatpush.bf16.msra.mxu0 0
        %7005 = vmatpush.bf16.msra.mxu0 0
        %7006 = vmatpush.bf16.msra.mxu0 0
        %7007 = vmatpush.bf16.msra.mxu0 0
        %7008 = vmatpush.bf16.msra.mxu0 0
        %7009 = vmatpush.bf16.msra.mxu0 0
        %7010 = vmatpush.bf16.msra.mxu0 %v5578
        %7011 = vmatmul.bf16.gmra.mxu0 %v6959
        %v7012 = vpop.f32.mrf.mxu0
        %v7013 = vadd.f32 0.0, %v7012
        %v7014 = vpop.f32.mrf.mxu0
        %v7015 = vadd.f32 0.0, %v7014
        %7016 = vmatmul.bf16.gmra.mxu0 %v6962
        %v7017 = vpop.f32.mrf.mxu0
        %v7018 = vadd.f32 0.0, %v7017
        %v7019 = vpop.f32.mrf.mxu0
        %7020 = vdwg.mxu0
        %7021 = vmatpush.bf16.msra.mxu0 0
        %7022 = vmatpush.bf16.msra.mxu0 0
        %7023 = vmatpush.bf16.msra.mxu0 0
        %7024 = vmatpush.bf16.msra.mxu0 0
        %7025 = vmatpush.bf16.msra.mxu0 0
        %7026 = vmatpush.bf16.msra.mxu0 0
        %7027 = vmatpush.bf16.msra.mxu0 0
        %7028 = vmatpush.bf16.msra.mxu0 %v5581
        %7029 = vmatmul.bf16.gmra.mxu0 %v6959
        %v7030 = vpop.f32.mrf.mxu0
        %v7031 = vadd.f32 0.0, %v7030
        %v7032 = vpop.f32.mrf.mxu0
        %v7033 = vadd.f32 0.0, %v7032
        %7034 = vmatmul.bf16.gmra.mxu0 %v6962
        %v7035 = vpop.f32.mrf.mxu0
        %v7036 = vadd.f32 0.0, %v7035
        %v7037 = vpop.f32.mrf.mxu0
        %7038 = vdwg.mxu0
        %7039 = vmatpush.bf16.msra.mxu0 0
        %7040 = vmatpush.bf16.msra.mxu0 0
        %7041 = vmatpush.bf16.msra.mxu0 0
        %7042 = vmatpush.bf16.msra.mxu0 0
        %7043 = vmatpush.bf16.msra.mxu0 0
        %7044 = vmatpush.bf16.msra.mxu0 0
        %7045 = vmatpush.bf16.msra.mxu0 0
        %7046 = vmatpush.bf16.msra.mxu0 %v6965
        %7047 = vmatmul.bf16.gmra.mxu0 %v6959
        %v7048 = vpop.f32.mrf.mxu0
        %v7049 = vadd.f32 0.0, %v7048
        %v7050 = vpop.f32.mrf.mxu0
        %v7051 = vadd.f32 0.0, %v7050
        %7052 = vmatmul.bf16.gmra.mxu0 %v6962
        %v7053 = vpop.f32.mrf.mxu0
        %v7054 = vadd.f32 0.0, %v7053
        %v7055 = vpop.f32.mrf.mxu0
        %7056 = vdwg.mxu0
        %v7057 = vadd.f32 %v6928, %v6977
        %v7058 = vadd.f32 %v6929, %v6995
        %v7059 = vadd.f32 %v6930, %v7013
        %v7060 = vadd.f32 %v6931, %v7031
        %v7061 = vadd.f32 %v6932, %v7049
        %v7062 = vadd.f32 %v6933, %v6979
        %v7063 = vadd.f32 %v6934, %v6997
        %v7064 = vadd.f32 %v6935, %v7015
        %v7065 = vadd.f32 %v6936, %v7033
        %v7066 = vadd.f32 %v6937, %v7051
        %v7067 = vadd.f32 %v6938, %v6982
        %v7068 = vadd.f32 %v6939, %v7000
        %v7069 = vadd.f32 %v6940, %v7018
        %v7070 = vadd.f32 %v6941, %v7036
        %v7071 = vadd.f32 %v6942, %v7054
        %s7072 = scalar_lea.vmem %s3, 204
        %v7073 = vld [vmem:[%s7072] sm:$0xf]
        %v7074 = vld [vmem:[%s7072 + $0x4] sm:$0xf]
        %v7075 = vld [vmem:[%s7072 + $0x8] sm:$0xf]
        %v7079 = vunpack.c.l.b16 %v7073
        %v7080 = vunpack.c.l.b16 %v7074
        %v7081 = vunpack.c.l.b16 %v7075
        %v7082 = vpack.c.b16 %v7080, %v7079
        %v7083 = vpack.c.b16 %v7081, %v7081
        %7084 = vrot.lane.b32.xlu0 %v6825, 60
        %v7085 = vpop.permute.xlu0 %7084
        %v7086 = vsel %vm2783, %v5711, %v7085
        %v7088 = vsel %vm4685, %v7082, 0
        %v7091 = vsel %vm4685, %v7083, 0
        %v7094 = vsel %vm4692, %v7086, 0
        %7096 = vmatpush.bf16.msra.mxu0 0
        %7097 = vmatpush.bf16.msra.mxu0 0
        %7098 = vmatpush.bf16.msra.mxu0 0
        %7099 = vmatpush.bf16.msra.mxu0 0
        %7100 = vmatpush.bf16.msra.mxu0 0
        %7101 = vmatpush.bf16.msra.mxu0 0
        %7102 = vmatpush.bf16.msra.mxu0 0
        %7103 = vmatpush.bf16.msra.mxu0 %v5727
        %7104 = vmatmul.bf16.gmra.mxu0 %v7088
        %v7105 = vpop.f32.mrf.mxu0
        %v7106 = vadd.f32 0.0, %v7105
        %v7107 = vpop.f32.mrf.mxu0
        %v7108 = vadd.f32 0.0, %v7107
        %7109 = vmatmul.bf16.gmra.mxu0 %v7091
        %v7110 = vpop.f32.mrf.mxu0
        %v7111 = vadd.f32 0.0, %v7110
        %v7112 = vpop.f32.mrf.mxu0
        %7113 = vdwg.mxu0
        %7114 = vmatpush.bf16.msra.mxu0 0
        %7115 = vmatpush.bf16.msra.mxu0 0
        %7116 = vmatpush.bf16.msra.mxu0 0
        %7117 = vmatpush.bf16.msra.mxu0 0
        %7118 = vmatpush.bf16.msra.mxu0 0
        %7119 = vmatpush.bf16.msra.mxu0 0
        %7120 = vmatpush.bf16.msra.mxu0 0
        %7121 = vmatpush.bf16.msra.mxu0 %v5730
        %7122 = vmatmul.bf16.gmra.mxu0 %v7088
        %v7123 = vpop.f32.mrf.mxu0
        %v7124 = vadd.f32 0.0, %v7123
        %v7125 = vpop.f32.mrf.mxu0
        %v7126 = vadd.f32 0.0, %v7125
        %7127 = vmatmul.bf16.gmra.mxu0 %v7091
        %v7128 = vpop.f32.mrf.mxu0
        %v7129 = vadd.f32 0.0, %v7128
        %v7130 = vpop.f32.mrf.mxu0
        %7131 = vdwg.mxu0
        %7132 = vmatpush.bf16.msra.mxu0 0
        %7133 = vmatpush.bf16.msra.mxu0 0
        %7134 = vmatpush.bf16.msra.mxu0 0
        %7135 = vmatpush.bf16.msra.mxu0 0
        %7136 = vmatpush.bf16.msra.mxu0 0
        %7137 = vmatpush.bf16.msra.mxu0 0
        %7138 = vmatpush.bf16.msra.mxu0 0
        %7139 = vmatpush.bf16.msra.mxu0 %v5733
        %7140 = vmatmul.bf16.gmra.mxu0 %v7088
        %v7141 = vpop.f32.mrf.mxu0
        %v7142 = vadd.f32 0.0, %v7141
        %v7143 = vpop.f32.mrf.mxu0
        %v7144 = vadd.f32 0.0, %v7143
        %7145 = vmatmul.bf16.gmra.mxu0 %v7091
        %v7146 = vpop.f32.mrf.mxu0
        %v7147 = vadd.f32 0.0, %v7146
        %v7148 = vpop.f32.mrf.mxu0
        %7149 = vdwg.mxu0
        %7150 = vmatpush.bf16.msra.mxu0 0
        %7151 = vmatpush.bf16.msra.mxu0 0
        %7152 = vmatpush.bf16.msra.mxu0 0
        %7153 = vmatpush.bf16.msra.mxu0 0
        %7154 = vmatpush.bf16.msra.mxu0 0
        %7155 = vmatpush.bf16.msra.mxu0 0
        %7156 = vmatpush.bf16.msra.mxu0 0
        %7157 = vmatpush.bf16.msra.mxu0 %v5736
        %7158 = vmatmul.bf16.gmra.mxu0 %v7088
        %v7159 = vpop.f32.mrf.mxu0
        %v7160 = vadd.f32 0.0, %v7159
        %v7161 = vpop.f32.mrf.mxu0
        %v7162 = vadd.f32 0.0, %v7161
        %7163 = vmatmul.bf16.gmra.mxu0 %v7091
        %v7164 = vpop.f32.mrf.mxu0
        %v7165 = vadd.f32 0.0, %v7164
        %v7166 = vpop.f32.mrf.mxu0
        %7167 = vdwg.mxu0
        %7168 = vmatpush.bf16.msra.mxu0 0
        %7169 = vmatpush.bf16.msra.mxu0 0
        %7170 = vmatpush.bf16.msra.mxu0 0
        %7171 = vmatpush.bf16.msra.mxu0 0
        %7172 = vmatpush.bf16.msra.mxu0 0
        %7173 = vmatpush.bf16.msra.mxu0 0
        %7174 = vmatpush.bf16.msra.mxu0 0
        %7175 = vmatpush.bf16.msra.mxu0 %v7094
        %7176 = vmatmul.bf16.gmra.mxu0 %v7088
        %v7177 = vpop.f32.mrf.mxu0
        %v7178 = vadd.f32 0.0, %v7177
        %v7179 = vpop.f32.mrf.mxu0
        %v7180 = vadd.f32 0.0, %v7179
        %7181 = vmatmul.bf16.gmra.mxu0 %v7091
        %v7182 = vpop.f32.mrf.mxu0
        %v7183 = vadd.f32 0.0, %v7182
        %v7184 = vpop.f32.mrf.mxu0
        %7185 = vdwg.mxu0
        %v7186 = vadd.f32 %v7057, %v7106
        %v7187 = vadd.f32 %v7058, %v7124
        %v7188 = vadd.f32 %v7059, %v7142
        %v7189 = vadd.f32 %v7060, %v7160
        %v7190 = vadd.f32 %v7061, %v7178
        %v7191 = vadd.f32 %v7062, %v7108
        %v7192 = vadd.f32 %v7063, %v7126
        %v7193 = vadd.f32 %v7064, %v7144
        %v7194 = vadd.f32 %v7065, %v7162
        %v7195 = vadd.f32 %v7066, %v7180
        %v7196 = vadd.f32 %v7067, %v7111
        %v7197 = vadd.f32 %v7068, %v7129
        %v7198 = vadd.f32 %v7069, %v7147
        %v7199 = vadd.f32 %v7070, %v7165
        %v7200 = vadd.f32 %v7071, %v7183
        %s7201 = scalar_lea.vmem %s3, 216
        %v7202 = vld [vmem:[%s7201] sm:$0xf]
        %v7203 = vld [vmem:[%s7201 + $0x4] sm:$0xf]
        %v7204 = vld [vmem:[%s7201 + $0x8] sm:$0xf]
        %v7208 = vunpack.c.l.b16 %v7202
        %v7209 = vunpack.c.l.b16 %v7203
        %v7210 = vunpack.c.l.b16 %v7204
        %v7211 = vpack.c.b16 %v7209, %v7208
        %v7212 = vpack.c.b16 %v7210, %v7210
        %7213 = vrot.lane.b32.xlu0 %v6825, 58
        %v7214 = vpop.permute.xlu0 %7213
        %v7215 = vsel %vm5867, %v5866, %v7214
        %v7217 = vsel %vm4685, %v7211, 0
        %v7220 = vsel %vm4685, %v7212, 0
        %v7223 = vsel %vm4692, %v7215, 0
        %7225 = vmatpush.bf16.msra.mxu0 0
        %7226 = vmatpush.bf16.msra.mxu0 0
        %7227 = vmatpush.bf16.msra.mxu0 0
        %7228 = vmatpush.bf16.msra.mxu0 0
        %7229 = vmatpush.bf16.msra.mxu0 0
        %7230 = vmatpush.bf16.msra.mxu0 0
        %7231 = vmatpush.bf16.msra.mxu0 0
        %7232 = vmatpush.bf16.msra.mxu0 %v5883
        %7233 = vmatmul.bf16.gmra.mxu0 %v7217
        %v7234 = vpop.f32.mrf.mxu0
        %v7235 = vadd.f32 0.0, %v7234
        %v7236 = vpop.f32.mrf.mxu0
        %v7237 = vadd.f32 0.0, %v7236
        %7238 = vmatmul.bf16.gmra.mxu0 %v7220
        %v7239 = vpop.f32.mrf.mxu0
        %v7240 = vadd.f32 0.0, %v7239
        %v7241 = vpop.f32.mrf.mxu0
        %7242 = vdwg.mxu0
        %7243 = vmatpush.bf16.msra.mxu0 0
        %7244 = vmatpush.bf16.msra.mxu0 0
        %7245 = vmatpush.bf16.msra.mxu0 0
        %7246 = vmatpush.bf16.msra.mxu0 0
        %7247 = vmatpush.bf16.msra.mxu0 0
        %7248 = vmatpush.bf16.msra.mxu0 0
        %7249 = vmatpush.bf16.msra.mxu0 0
        %7250 = vmatpush.bf16.msra.mxu0 %v5886
        %7251 = vmatmul.bf16.gmra.mxu0 %v7217
        %v7252 = vpop.f32.mrf.mxu0
        %v7253 = vadd.f32 0.0, %v7252
        %v7254 = vpop.f32.mrf.mxu0
        %v7255 = vadd.f32 0.0, %v7254
        %7256 = vmatmul.bf16.gmra.mxu0 %v7220
        %v7257 = vpop.f32.mrf.mxu0
        %v7258 = vadd.f32 0.0, %v7257
        %v7259 = vpop.f32.mrf.mxu0
        %7260 = vdwg.mxu0
        %7261 = vmatpush.bf16.msra.mxu0 0
        %7262 = vmatpush.bf16.msra.mxu0 0
        %7263 = vmatpush.bf16.msra.mxu0 0
        %7264 = vmatpush.bf16.msra.mxu0 0
        %7265 = vmatpush.bf16.msra.mxu0 0
        %7266 = vmatpush.bf16.msra.mxu0 0
        %7267 = vmatpush.bf16.msra.mxu0 0
        %7268 = vmatpush.bf16.msra.mxu0 %v5889
        %7269 = vmatmul.bf16.gmra.mxu0 %v7217
        %v7270 = vpop.f32.mrf.mxu0
        %v7271 = vadd.f32 0.0, %v7270
        %v7272 = vpop.f32.mrf.mxu0
        %v7273 = vadd.f32 0.0, %v7272
        %7274 = vmatmul.bf16.gmra.mxu0 %v7220
        %v7275 = vpop.f32.mrf.mxu0
        %v7276 = vadd.f32 0.0, %v7275
        %v7277 = vpop.f32.mrf.mxu0
        %7278 = vdwg.mxu0
        %7279 = vmatpush.bf16.msra.mxu0 0
        %7280 = vmatpush.bf16.msra.mxu0 0
        %7281 = vmatpush.bf16.msra.mxu0 0
        %7282 = vmatpush.bf16.msra.mxu0 0
        %7283 = vmatpush.bf16.msra.mxu0 0
        %7284 = vmatpush.bf16.msra.mxu0 0
        %7285 = vmatpush.bf16.msra.mxu0 0
        %7286 = vmatpush.bf16.msra.mxu0 %v5892
        %7287 = vmatmul.bf16.gmra.mxu0 %v7217
        %v7288 = vpop.f32.mrf.mxu0
        %v7289 = vadd.f32 0.0, %v7288
        %v7290 = vpop.f32.mrf.mxu0
        %v7291 = vadd.f32 0.0, %v7290
        %7292 = vmatmul.bf16.gmra.mxu0 %v7220
        %v7293 = vpop.f32.mrf.mxu0
        %v7294 = vadd.f32 0.0, %v7293
        %v7295 = vpop.f32.mrf.mxu0
        %7296 = vdwg.mxu0
        %7297 = vmatpush.bf16.msra.mxu0 0
        %7298 = vmatpush.bf16.msra.mxu0 0
        %7299 = vmatpush.bf16.msra.mxu0 0
        %7300 = vmatpush.bf16.msra.mxu0 0
        %7301 = vmatpush.bf16.msra.mxu0 0
        %7302 = vmatpush.bf16.msra.mxu0 0
        %7303 = vmatpush.bf16.msra.mxu0 0
        %7304 = vmatpush.bf16.msra.mxu0 %v7223
        %7305 = vmatmul.bf16.gmra.mxu0 %v7217
        %v7306 = vpop.f32.mrf.mxu0
        %v7307 = vadd.f32 0.0, %v7306
        %v7308 = vpop.f32.mrf.mxu0
        %v7309 = vadd.f32 0.0, %v7308
        %7310 = vmatmul.bf16.gmra.mxu0 %v7220
        %v7311 = vpop.f32.mrf.mxu0
        %v7312 = vadd.f32 0.0, %v7311
        %v7313 = vpop.f32.mrf.mxu0
        %7314 = vdwg.mxu0
        %v7315 = vadd.f32 %v7186, %v7235
        %v7316 = vadd.f32 %v7187, %v7253
        %v7317 = vadd.f32 %v7188, %v7271
        %v7318 = vadd.f32 %v7189, %v7289
        %v7319 = vadd.f32 %v7190, %v7307
        %v7320 = vadd.f32 %v7191, %v7237
        %v7321 = vadd.f32 %v7192, %v7255
        %v7322 = vadd.f32 %v7193, %v7273
        %v7323 = vadd.f32 %v7194, %v7291
        %v7324 = vadd.f32 %v7195, %v7309
        %v7325 = vadd.f32 %v7196, %v7240
        %v7326 = vadd.f32 %v7197, %v7258
        %v7327 = vadd.f32 %v7198, %v7276
        %v7328 = vadd.f32 %v7199, %v7294
        %v7329 = vadd.f32 %v7200, %v7312
        %s7330 = scalar_lea.vmem %s3, 228
        %v7331 = vld [vmem:[%s7330] sm:$0xf]
        %v7332 = vld [vmem:[%s7330 + $0x4] sm:$0xf]
        %v7333 = vld [vmem:[%s7330 + $0x8] sm:$0xf]
        %v7337 = vunpack.c.l.b16 %v7331
        %v7338 = vunpack.c.l.b16 %v7332
        %v7339 = vunpack.c.l.b16 %v7333
        %v7340 = vpack.c.b16 %v7338, %v7337
        %v7341 = vpack.c.b16 %v7339, %v7339
        %7342 = vrot.lane.b32.xlu0 %v6825, 56
        %v7343 = vpop.permute.xlu0 %7342
        %v7344 = vsel %vm6023, %v6022, %v7343
        %v7346 = vsel %vm4685, %v7340, 0
        %v7349 = vsel %vm4685, %v7341, 0
        %v7352 = vsel %vm4692, %v7344, 0
        %7354 = vmatpush.bf16.msra.mxu0 0
        %7355 = vmatpush.bf16.msra.mxu0 0
        %7356 = vmatpush.bf16.msra.mxu0 0
        %7357 = vmatpush.bf16.msra.mxu0 0
        %7358 = vmatpush.bf16.msra.mxu0 0
        %7359 = vmatpush.bf16.msra.mxu0 0
        %7360 = vmatpush.bf16.msra.mxu0 0
        %7361 = vmatpush.bf16.msra.mxu0 %v6039
        %7362 = vmatmul.bf16.gmra.mxu0 %v7346
        %v7363 = vpop.f32.mrf.mxu0
        %v7364 = vadd.f32 0.0, %v7363
        %v7365 = vpop.f32.mrf.mxu0
        %v7366 = vadd.f32 0.0, %v7365
        %7367 = vmatmul.bf16.gmra.mxu0 %v7349
        %v7368 = vpop.f32.mrf.mxu0
        %v7369 = vadd.f32 0.0, %v7368
        %v7370 = vpop.f32.mrf.mxu0
        %7371 = vdwg.mxu0
        %7372 = vmatpush.bf16.msra.mxu0 0
        %7373 = vmatpush.bf16.msra.mxu0 0
        %7374 = vmatpush.bf16.msra.mxu0 0
        %7375 = vmatpush.bf16.msra.mxu0 0
        %7376 = vmatpush.bf16.msra.mxu0 0
        %7377 = vmatpush.bf16.msra.mxu0 0
        %7378 = vmatpush.bf16.msra.mxu0 0
        %7379 = vmatpush.bf16.msra.mxu0 %v6042
        %7380 = vmatmul.bf16.gmra.mxu0 %v7346
        %v7381 = vpop.f32.mrf.mxu0
        %v7382 = vadd.f32 0.0, %v7381
        %v7383 = vpop.f32.mrf.mxu0
        %v7384 = vadd.f32 0.0, %v7383
        %7385 = vmatmul.bf16.gmra.mxu0 %v7349
        %v7386 = vpop.f32.mrf.mxu0
        %v7387 = vadd.f32 0.0, %v7386
        %v7388 = vpop.f32.mrf.mxu0
        %7389 = vdwg.mxu0
        %7390 = vmatpush.bf16.msra.mxu0 0
        %7391 = vmatpush.bf16.msra.mxu0 0
        %7392 = vmatpush.bf16.msra.mxu0 0
        %7393 = vmatpush.bf16.msra.mxu0 0
        %7394 = vmatpush.bf16.msra.mxu0 0
        %7395 = vmatpush.bf16.msra.mxu0 0
        %7396 = vmatpush.bf16.msra.mxu0 0
        %7397 = vmatpush.bf16.msra.mxu0 %v6045
        %7398 = vmatmul.bf16.gmra.mxu0 %v7346
        %v7399 = vpop.f32.mrf.mxu0
        %v7400 = vadd.f32 0.0, %v7399
        %v7401 = vpop.f32.mrf.mxu0
        %v7402 = vadd.f32 0.0, %v7401
        %7403 = vmatmul.bf16.gmra.mxu0 %v7349
        %v7404 = vpop.f32.mrf.mxu0
        %v7405 = vadd.f32 0.0, %v7404
        %v7406 = vpop.f32.mrf.mxu0
        %7407 = vdwg.mxu0
        %7408 = vmatpush.bf16.msra.mxu0 0
        %7409 = vmatpush.bf16.msra.mxu0 0
        %7410 = vmatpush.bf16.msra.mxu0 0
        %7411 = vmatpush.bf16.msra.mxu0 0
        %7412 = vmatpush.bf16.msra.mxu0 0
        %7413 = vmatpush.bf16.msra.mxu0 0
        %7414 = vmatpush.bf16.msra.mxu0 0
        %7415 = vmatpush.bf16.msra.mxu0 %v6048
        %7416 = vmatmul.bf16.gmra.mxu0 %v7346
        %v7417 = vpop.f32.mrf.mxu0
        %v7418 = vadd.f32 0.0, %v7417
        %v7419 = vpop.f32.mrf.mxu0
        %v7420 = vadd.f32 0.0, %v7419
        %7421 = vmatmul.bf16.gmra.mxu0 %v7349
        %v7422 = vpop.f32.mrf.mxu0
        %v7423 = vadd.f32 0.0, %v7422
        %v7424 = vpop.f32.mrf.mxu0
        %7425 = vdwg.mxu0
        %7426 = vmatpush.bf16.msra.mxu0 0
        %7427 = vmatpush.bf16.msra.mxu0 0
        %7428 = vmatpush.bf16.msra.mxu0 0
        %7429 = vmatpush.bf16.msra.mxu0 0
        %7430 = vmatpush.bf16.msra.mxu0 0
        %7431 = vmatpush.bf16.msra.mxu0 0
        %7432 = vmatpush.bf16.msra.mxu0 0
        %7433 = vmatpush.bf16.msra.mxu0 %v7352
        %7434 = vmatmul.bf16.gmra.mxu0 %v7346
        %v7435 = vpop.f32.mrf.mxu0
        %v7436 = vadd.f32 0.0, %v7435
        %v7437 = vpop.f32.mrf.mxu0
        %v7438 = vadd.f32 0.0, %v7437
        %7439 = vmatmul.bf16.gmra.mxu0 %v7349
        %v7440 = vpop.f32.mrf.mxu0
        %v7441 = vadd.f32 0.0, %v7440
        %v7442 = vpop.f32.mrf.mxu0
        %7443 = vdwg.mxu0
        %v7444 = vadd.f32 %v7315, %v7364
        %v7445 = vadd.f32 %v7316, %v7382
        %v7446 = vadd.f32 %v7317, %v7400
        %v7447 = vadd.f32 %v7318, %v7418
        %v7448 = vadd.f32 %v7319, %v7436
        %v7449 = vadd.f32 %v7320, %v7366
        %v7450 = vadd.f32 %v7321, %v7384
        %v7451 = vadd.f32 %v7322, %v7402
        %v7452 = vadd.f32 %v7323, %v7420
        %v7453 = vadd.f32 %v7324, %v7438
        %v7454 = vadd.f32 %v7325, %v7369
        %v7455 = vadd.f32 %v7326, %v7387
        %v7456 = vadd.f32 %v7327, %v7405
        %v7457 = vadd.f32 %v7328, %v7423
        %v7458 = vadd.f32 %v7329, %v7441
        %s7459 = scalar_lea.vmem %s3, 240
        %v7460 = vld [vmem:[%s7459] sm:$0xf]
        %v7461 = vld [vmem:[%s7459 + $0x4] sm:$0xf]
        %v7462 = vld [vmem:[%s7459 + $0x8] sm:$0xf]
        %v7466 = vunpack.c.l.b16 %v7460
        %v7467 = vunpack.c.l.b16 %v7461
        %v7468 = vunpack.c.l.b16 %v7462
        %v7469 = vpack.c.b16 %v7467, %v7466
        %v7470 = vpack.c.b16 %v7468, %v7468
        %v7472 = vsel %vm4685, %v7469, 0
        %v7475 = vsel %vm4685, %v7470, 0
        %v7478 = vsel %vm4692, %v6825, 0
        %7480 = vmatpush.bf16.msra.mxu0 0
        %7481 = vmatpush.bf16.msra.mxu0 0
        %7482 = vmatpush.bf16.msra.mxu0 0
        %7483 = vmatpush.bf16.msra.mxu0 0
        %7484 = vmatpush.bf16.msra.mxu0 0
        %7485 = vmatpush.bf16.msra.mxu0 0
        %7486 = vmatpush.bf16.msra.mxu0 0
        %7487 = vmatpush.bf16.msra.mxu0 %v4819
        %7488 = vmatmul.bf16.gmra.mxu0 %v7472
        %v7489 = vpop.f32.mrf.mxu0
        %v7490 = vadd.f32 0.0, %v7489
        %v7491 = vpop.f32.mrf.mxu0
        %v7492 = vadd.f32 0.0, %v7491
        %7493 = vmatmul.bf16.gmra.mxu0 %v7475
        %v7494 = vpop.f32.mrf.mxu0
        %v7495 = vadd.f32 0.0, %v7494
        %v7496 = vpop.f32.mrf.mxu0
        %7497 = vdwg.mxu0
        %7498 = vmatpush.bf16.msra.mxu0 0
        %7499 = vmatpush.bf16.msra.mxu0 0
        %7500 = vmatpush.bf16.msra.mxu0 0
        %7501 = vmatpush.bf16.msra.mxu0 0
        %7502 = vmatpush.bf16.msra.mxu0 0
        %7503 = vmatpush.bf16.msra.mxu0 0
        %7504 = vmatpush.bf16.msra.mxu0 0
        %7505 = vmatpush.bf16.msra.mxu0 %v4822
        %7506 = vmatmul.bf16.gmra.mxu0 %v7472
        %v7507 = vpop.f32.mrf.mxu0
        %v7508 = vadd.f32 0.0, %v7507
        %v7509 = vpop.f32.mrf.mxu0
        %v7510 = vadd.f32 0.0, %v7509
        %7511 = vmatmul.bf16.gmra.mxu0 %v7475
        %v7512 = vpop.f32.mrf.mxu0
        %v7513 = vadd.f32 0.0, %v7512
        %v7514 = vpop.f32.mrf.mxu0
        %7515 = vdwg.mxu0
        %7516 = vmatpush.bf16.msra.mxu0 0
        %7517 = vmatpush.bf16.msra.mxu0 0
        %7518 = vmatpush.bf16.msra.mxu0 0
        %7519 = vmatpush.bf16.msra.mxu0 0
        %7520 = vmatpush.bf16.msra.mxu0 0
        %7521 = vmatpush.bf16.msra.mxu0 0
        %7522 = vmatpush.bf16.msra.mxu0 0
        %7523 = vmatpush.bf16.msra.mxu0 %v4825
        %7524 = vmatmul.bf16.gmra.mxu0 %v7472
        %v7525 = vpop.f32.mrf.mxu0
        %v7526 = vadd.f32 0.0, %v7525
        %v7527 = vpop.f32.mrf.mxu0
        %v7528 = vadd.f32 0.0, %v7527
        %7529 = vmatmul.bf16.gmra.mxu0 %v7475
        %v7530 = vpop.f32.mrf.mxu0
        %v7531 = vadd.f32 0.0, %v7530
        %v7532 = vpop.f32.mrf.mxu0
        %7533 = vdwg.mxu0
        %7534 = vmatpush.bf16.msra.mxu0 0
        %7535 = vmatpush.bf16.msra.mxu0 0
        %7536 = vmatpush.bf16.msra.mxu0 0
        %7537 = vmatpush.bf16.msra.mxu0 0
        %7538 = vmatpush.bf16.msra.mxu0 0
        %7539 = vmatpush.bf16.msra.mxu0 0
        %7540 = vmatpush.bf16.msra.mxu0 0
        %7541 = vmatpush.bf16.msra.mxu0 %v6174
        %7542 = vmatmul.bf16.gmra.mxu0 %v7472
        %v7543 = vpop.f32.mrf.mxu0
        %v7544 = vadd.f32 0.0, %v7543
        %v7545 = vpop.f32.mrf.mxu0
        %v7546 = vadd.f32 0.0, %v7545
        %7547 = vmatmul.bf16.gmra.mxu0 %v7475
        %v7548 = vpop.f32.mrf.mxu0
        %v7549 = vadd.f32 0.0, %v7548
        %v7550 = vpop.f32.mrf.mxu0
        %7551 = vdwg.mxu0
        %7552 = vmatpush.bf16.msra.mxu0 0
        %7553 = vmatpush.bf16.msra.mxu0 0
        %7554 = vmatpush.bf16.msra.mxu0 0
        %7555 = vmatpush.bf16.msra.mxu0 0
        %7556 = vmatpush.bf16.msra.mxu0 0
        %7557 = vmatpush.bf16.msra.mxu0 0
        %7558 = vmatpush.bf16.msra.mxu0 0
        %7559 = vmatpush.bf16.msra.mxu0 %v7478
        %7560 = vmatmul.bf16.gmra.mxu0 %v7472
        %v7561 = vpop.f32.mrf.mxu0
        %v7562 = vadd.f32 0.0, %v7561
        %v7563 = vpop.f32.mrf.mxu0
        %v7564 = vadd.f32 0.0, %v7563
        %7565 = vmatmul.bf16.gmra.mxu0 %v7475
        %v7566 = vpop.f32.mrf.mxu0
        %v7567 = vadd.f32 0.0, %v7566
        %v7568 = vpop.f32.mrf.mxu0
        %7569 = vdwg.mxu0
        %v7570 = vadd.f32 %v7444, %v7490
        %v7571 = vadd.f32 %v7445, %v7508
        %v7572 = vadd.f32 %v7446, %v7526
        %v7573 = vadd.f32 %v7447, %v7544
        %v7574 = vadd.f32 %v7448, %v7562
        %v7575 = vadd.f32 %v7449, %v7492
        %v7576 = vadd.f32 %v7450, %v7510
        %v7577 = vadd.f32 %v7451, %v7528
        %v7578 = vadd.f32 %v7452, %v7546
        %v7579 = vadd.f32 %v7453, %v7564
        %v7580 = vadd.f32 %v7454, %v7495
        %v7581 = vadd.f32 %v7455, %v7513
        %v7582 = vadd.f32 %v7456, %v7531
        %v7583 = vadd.f32 %v7457, %v7549
        %v7584 = vadd.f32 %v7458, %v7567
        %s7585 = scalar_lea.vmem %s3, 252
        %v7586 = vld [vmem:[%s7585] sm:$0xf]
        %v7587 = vld [vmem:[%s7585 + $0x4] sm:$0xf]
        %v7588 = vld [vmem:[%s7585 + $0x8] sm:$0xf]
        %v7592 = vunpack.c.l.b16 %v7586
        %v7593 = vunpack.c.l.b16 %v7587
        %v7594 = vunpack.c.l.b16 %v7588
        %v7595 = vpack.c.b16 %v7593, %v7592
        %v7596 = vpack.c.b16 %v7594, %v7594
        %7597 = vrot.lane.b32.xlu0 %v6825, 126
        %v7598 = vpop.permute.xlu0 %7597
        %v7599 = vsel %vm772, %v6294, %v7598
        %v7601 = vsel %vm4685, %v7595, 0
        %v7604 = vsel %vm4685, %v7596, 0
        %v7607 = vsel %vm4692, %v7599, 0
        %v7610 = vsel %vm4692, %v7598, 0
        %7612 = vmatpush.bf16.msra.mxu0 0
        %7613 = vmatpush.bf16.msra.mxu0 0
        %7614 = vmatpush.bf16.msra.mxu0 0
        %7615 = vmatpush.bf16.msra.mxu0 0
        %7616 = vmatpush.bf16.msra.mxu0 0
        %7617 = vmatpush.bf16.msra.mxu0 0
        %7618 = vmatpush.bf16.msra.mxu0 0
        %7619 = vmatpush.bf16.msra.mxu0 %v4700
        %7620 = vmatmul.bf16.gmra.mxu0 %v7601
        %v7621 = vpop.f32.mrf.mxu0
        %v7622 = vadd.f32 0.0, %v7621
        %v7623 = vpop.f32.mrf.mxu0
        %v7624 = vadd.f32 0.0, %v7623
        %7625 = vmatmul.bf16.gmra.mxu0 %v7604
        %v7626 = vpop.f32.mrf.mxu0
        %v7627 = vadd.f32 0.0, %v7626
        %v7628 = vpop.f32.mrf.mxu0
        %7629 = vdwg.mxu0
        %7630 = vmatpush.bf16.msra.mxu0 0
        %7631 = vmatpush.bf16.msra.mxu0 0
        %7632 = vmatpush.bf16.msra.mxu0 0
        %7633 = vmatpush.bf16.msra.mxu0 0
        %7634 = vmatpush.bf16.msra.mxu0 0
        %7635 = vmatpush.bf16.msra.mxu0 0
        %7636 = vmatpush.bf16.msra.mxu0 0
        %7637 = vmatpush.bf16.msra.mxu0 %v4703
        %7638 = vmatmul.bf16.gmra.mxu0 %v7601
        %v7639 = vpop.f32.mrf.mxu0
        %v7640 = vadd.f32 0.0, %v7639
        %v7641 = vpop.f32.mrf.mxu0
        %v7642 = vadd.f32 0.0, %v7641
        %7643 = vmatmul.bf16.gmra.mxu0 %v7604
        %v7644 = vpop.f32.mrf.mxu0
        %v7645 = vadd.f32 0.0, %v7644
        %v7646 = vpop.f32.mrf.mxu0
        %7647 = vdwg.mxu0
        %7648 = vmatpush.bf16.msra.mxu0 0
        %7649 = vmatpush.bf16.msra.mxu0 0
        %7650 = vmatpush.bf16.msra.mxu0 0
        %7651 = vmatpush.bf16.msra.mxu0 0
        %7652 = vmatpush.bf16.msra.mxu0 0
        %7653 = vmatpush.bf16.msra.mxu0 0
        %7654 = vmatpush.bf16.msra.mxu0 0
        %7655 = vmatpush.bf16.msra.mxu0 %v6303
        %7656 = vmatmul.bf16.gmra.mxu0 %v7601
        %v7657 = vpop.f32.mrf.mxu0
        %v7658 = vadd.f32 0.0, %v7657
        %v7659 = vpop.f32.mrf.mxu0
        %v7660 = vadd.f32 0.0, %v7659
        %7661 = vmatmul.bf16.gmra.mxu0 %v7604
        %v7662 = vpop.f32.mrf.mxu0
        %v7663 = vadd.f32 0.0, %v7662
        %v7664 = vpop.f32.mrf.mxu0
        %7665 = vdwg.mxu0
        %7666 = vmatpush.bf16.msra.mxu0 0
        %7667 = vmatpush.bf16.msra.mxu0 0
        %7668 = vmatpush.bf16.msra.mxu0 0
        %7669 = vmatpush.bf16.msra.mxu0 0
        %7670 = vmatpush.bf16.msra.mxu0 0
        %7671 = vmatpush.bf16.msra.mxu0 0
        %7672 = vmatpush.bf16.msra.mxu0 0
        %7673 = vmatpush.bf16.msra.mxu0 %v7607
        %7674 = vmatmul.bf16.gmra.mxu0 %v7601
        %v7675 = vpop.f32.mrf.mxu0
        %v7676 = vadd.f32 0.0, %v7675
        %v7677 = vpop.f32.mrf.mxu0
        %v7678 = vadd.f32 0.0, %v7677
        %7679 = vmatmul.bf16.gmra.mxu0 %v7604
        %v7680 = vpop.f32.mrf.mxu0
        %v7681 = vadd.f32 0.0, %v7680
        %v7682 = vpop.f32.mrf.mxu0
        %7683 = vdwg.mxu0
        %7684 = vmatpush.bf16.msra.mxu0 0
        %7685 = vmatpush.bf16.msra.mxu0 0
        %7686 = vmatpush.bf16.msra.mxu0 0
        %7687 = vmatpush.bf16.msra.mxu0 0
        %7688 = vmatpush.bf16.msra.mxu0 0
        %7689 = vmatpush.bf16.msra.mxu0 0
        %7690 = vmatpush.bf16.msra.mxu0 0
        %7691 = vmatpush.bf16.msra.mxu0 %v7610
        %7692 = vmatmul.bf16.gmra.mxu0 %v7601
        %v7693 = vpop.f32.mrf.mxu0
        %v7694 = vadd.f32 0.0, %v7693
        %v7695 = vpop.f32.mrf.mxu0
        %v7696 = vadd.f32 0.0, %v7695
        %7697 = vmatmul.bf16.gmra.mxu0 %v7604
        %v7698 = vpop.f32.mrf.mxu0
        %v7699 = vadd.f32 0.0, %v7698
        %v7700 = vpop.f32.mrf.mxu0
        %7701 = vdwg.mxu0
        %v7702 = vadd.f32 %v7570, %v7622
        %v7703 = vadd.f32 %v7571, %v7640
        %v7704 = vadd.f32 %v7572, %v7658
        %v7705 = vadd.f32 %v7573, %v7676
        %v7706 = vadd.f32 %v7574, %v7694
        %v7707 = vadd.f32 %v7575, %v7624
        %v7708 = vadd.f32 %v7576, %v7642
        %v7709 = vadd.f32 %v7577, %v7660
        %v7710 = vadd.f32 %v7578, %v7678
        %v7711 = vadd.f32 %v7579, %v7696
        %v7712 = vadd.f32 %v7580, %v7627
        %v7713 = vadd.f32 %v7581, %v7645
        %v7714 = vadd.f32 %v7582, %v7663
        %v7715 = vadd.f32 %v7583, %v7681
        %v7716 = vadd.f32 %v7584, %v7699
        %s7717 = scalar_lea.vmem %s3, 264
        %v7718 = vld [vmem:[%s7717] sm:$0xf]
        %v7719 = vld [vmem:[%s7717 + $0x4] sm:$0xf]
        %v7720 = vld [vmem:[%s7717 + $0x8] sm:$0xf]
        %v7724 = vunpack.c.l.b16 %v7718
        %v7725 = vunpack.c.l.b16 %v7719
        %v7726 = vunpack.c.l.b16 %v7720
        %v7727 = vpack.c.b16 %v7725, %v7724
        %v7728 = vpack.c.b16 %v7726, %v7726
        %7729 = vrot.lane.b32.xlu0 %v6825, 124
        %v7730 = vpop.permute.xlu0 %7729
        %v7731 = vsel %vm1102, %v6426, %v7730
        %v7733 = vsel %vm4685, %v7727, 0
        %v7736 = vsel %vm4685, %v7728, 0
        %v7739 = vsel %vm4692, %v7731, 0
        %v7742 = vsel %vm4692, %v7730, 0
        %7744 = vmatpush.bf16.msra.mxu0 0
        %7745 = vmatpush.bf16.msra.mxu0 0
        %7746 = vmatpush.bf16.msra.mxu0 0
        %7747 = vmatpush.bf16.msra.mxu0 0
        %7748 = vmatpush.bf16.msra.mxu0 0
        %7749 = vmatpush.bf16.msra.mxu0 0
        %7750 = vmatpush.bf16.msra.mxu0 0
        %7751 = vmatpush.bf16.msra.mxu0 %v4956
        %7752 = vmatmul.bf16.gmra.mxu0 %v7733
        %v7753 = vpop.f32.mrf.mxu0
        %v7754 = vadd.f32 0.0, %v7753
        %v7755 = vpop.f32.mrf.mxu0
        %v7756 = vadd.f32 0.0, %v7755
        %7757 = vmatmul.bf16.gmra.mxu0 %v7736
        %v7758 = vpop.f32.mrf.mxu0
        %v7759 = vadd.f32 0.0, %v7758
        %v7760 = vpop.f32.mrf.mxu0
        %7761 = vdwg.mxu0
        %7762 = vmatpush.bf16.msra.mxu0 0
        %7763 = vmatpush.bf16.msra.mxu0 0
        %7764 = vmatpush.bf16.msra.mxu0 0
        %7765 = vmatpush.bf16.msra.mxu0 0
        %7766 = vmatpush.bf16.msra.mxu0 0
        %7767 = vmatpush.bf16.msra.mxu0 0
        %7768 = vmatpush.bf16.msra.mxu0 0
        %7769 = vmatpush.bf16.msra.mxu0 %v4959
        %7770 = vmatmul.bf16.gmra.mxu0 %v7733
        %v7771 = vpop.f32.mrf.mxu0
        %v7772 = vadd.f32 0.0, %v7771
        %v7773 = vpop.f32.mrf.mxu0
        %v7774 = vadd.f32 0.0, %v7773
        %7775 = vmatmul.bf16.gmra.mxu0 %v7736
        %v7776 = vpop.f32.mrf.mxu0
        %v7777 = vadd.f32 0.0, %v7776
        %v7778 = vpop.f32.mrf.mxu0
        %7779 = vdwg.mxu0
        %7780 = vmatpush.bf16.msra.mxu0 0
        %7781 = vmatpush.bf16.msra.mxu0 0
        %7782 = vmatpush.bf16.msra.mxu0 0
        %7783 = vmatpush.bf16.msra.mxu0 0
        %7784 = vmatpush.bf16.msra.mxu0 0
        %7785 = vmatpush.bf16.msra.mxu0 0
        %7786 = vmatpush.bf16.msra.mxu0 0
        %7787 = vmatpush.bf16.msra.mxu0 %v6435
        %7788 = vmatmul.bf16.gmra.mxu0 %v7733
        %v7789 = vpop.f32.mrf.mxu0
        %v7790 = vadd.f32 0.0, %v7789
        %v7791 = vpop.f32.mrf.mxu0
        %v7792 = vadd.f32 0.0, %v7791
        %7793 = vmatmul.bf16.gmra.mxu0 %v7736
        %v7794 = vpop.f32.mrf.mxu0
        %v7795 = vadd.f32 0.0, %v7794
        %v7796 = vpop.f32.mrf.mxu0
        %7797 = vdwg.mxu0
        %7798 = vmatpush.bf16.msra.mxu0 0
        %7799 = vmatpush.bf16.msra.mxu0 0
        %7800 = vmatpush.bf16.msra.mxu0 0
        %7801 = vmatpush.bf16.msra.mxu0 0
        %7802 = vmatpush.bf16.msra.mxu0 0
        %7803 = vmatpush.bf16.msra.mxu0 0
        %7804 = vmatpush.bf16.msra.mxu0 0
        %7805 = vmatpush.bf16.msra.mxu0 %v7739
        %7806 = vmatmul.bf16.gmra.mxu0 %v7733
        %v7807 = vpop.f32.mrf.mxu0
        %v7808 = vadd.f32 0.0, %v7807
        %v7809 = vpop.f32.mrf.mxu0
        %v7810 = vadd.f32 0.0, %v7809
        %7811 = vmatmul.bf16.gmra.mxu0 %v7736
        %v7812 = vpop.f32.mrf.mxu0
        %v7813 = vadd.f32 0.0, %v7812
        %v7814 = vpop.f32.mrf.mxu0
        %7815 = vdwg.mxu0
        %7816 = vmatpush.bf16.msra.mxu0 0
        %7817 = vmatpush.bf16.msra.mxu0 0
        %7818 = vmatpush.bf16.msra.mxu0 0
        %7819 = vmatpush.bf16.msra.mxu0 0
        %7820 = vmatpush.bf16.msra.mxu0 0
        %7821 = vmatpush.bf16.msra.mxu0 0
        %7822 = vmatpush.bf16.msra.mxu0 0
        %7823 = vmatpush.bf16.msra.mxu0 %v7742
        %7824 = vmatmul.bf16.gmra.mxu0 %v7733
        %v7825 = vpop.f32.mrf.mxu0
        %v7826 = vadd.f32 0.0, %v7825
        %v7827 = vpop.f32.mrf.mxu0
        %v7828 = vadd.f32 0.0, %v7827
        %7829 = vmatmul.bf16.gmra.mxu0 %v7736
        %v7830 = vpop.f32.mrf.mxu0
        %v7831 = vadd.f32 0.0, %v7830
        %v7832 = vpop.f32.mrf.mxu0
        %7833 = vdwg.mxu0
        %v7834 = vadd.f32 %v7702, %v7754
        %v7835 = vadd.f32 %v7703, %v7772
        %v7836 = vadd.f32 %v7704, %v7790
        %v7837 = vadd.f32 %v7705, %v7808
        %v7838 = vadd.f32 %v7706, %v7826
        %v7839 = vadd.f32 %v7707, %v7756
        %v7840 = vadd.f32 %v7708, %v7774
        %v7841 = vadd.f32 %v7709, %v7792
        %v7842 = vadd.f32 %v7710, %v7810
        %v7843 = vadd.f32 %v7711, %v7828
        %v7844 = vadd.f32 %v7712, %v7759
        %v7845 = vadd.f32 %v7713, %v7777
        %v7846 = vadd.f32 %v7714, %v7795
        %v7847 = vadd.f32 %v7715, %v7813
        %v7848 = vadd.f32 %v7716, %v7831
        %s7849 = scalar_lea.vmem %s3, 276
        %v7850 = vld [vmem:[%s7849] sm:$0xf]
        %v7851 = vld [vmem:[%s7849 + $0x4] sm:$0xf]
        %v7852 = vld [vmem:[%s7849 + $0x8] sm:$0xf]
        %v7856 = vunpack.c.l.b16 %v7850
        %v7857 = vunpack.c.l.b16 %v7851
        %v7858 = vunpack.c.l.b16 %v7852
        %v7859 = vpack.c.b16 %v7857, %v7856
        %v7860 = vpack.c.b16 %v7858, %v7858
        %7861 = vrot.lane.b32.xlu0 %v6825, 122
        %v7862 = vpop.permute.xlu0 %7861
        %v7863 = vsel %vm5091, %v6558, %v7862
        %v7865 = vsel %vm4685, %v7859, 0
        %v7868 = vsel %vm4685, %v7860, 0
        %v7871 = vsel %vm4692, %v7863, 0
        %v7874 = vsel %vm4692, %v7862, 0
        %7876 = vmatpush.bf16.msra.mxu0 0
        %7877 = vmatpush.bf16.msra.mxu0 0
        %7878 = vmatpush.bf16.msra.mxu0 0
        %7879 = vmatpush.bf16.msra.mxu0 0
        %7880 = vmatpush.bf16.msra.mxu0 0
        %7881 = vmatpush.bf16.msra.mxu0 0
        %7882 = vmatpush.bf16.msra.mxu0 0
        %7883 = vmatpush.bf16.msra.mxu0 %v5109
        %7884 = vmatmul.bf16.gmra.mxu0 %v7865
        %v7885 = vpop.f32.mrf.mxu0
        %v7886 = vadd.f32 0.0, %v7885
        %v7887 = vpop.f32.mrf.mxu0
        %v7888 = vadd.f32 0.0, %v7887
        %7889 = vmatmul.bf16.gmra.mxu0 %v7868
        %v7890 = vpop.f32.mrf.mxu0
        %v7891 = vadd.f32 0.0, %v7890
        %v7892 = vpop.f32.mrf.mxu0
        %7893 = vdwg.mxu0
        %7894 = vmatpush.bf16.msra.mxu0 0
        %7895 = vmatpush.bf16.msra.mxu0 0
        %7896 = vmatpush.bf16.msra.mxu0 0
        %7897 = vmatpush.bf16.msra.mxu0 0
        %7898 = vmatpush.bf16.msra.mxu0 0
        %7899 = vmatpush.bf16.msra.mxu0 0
        %7900 = vmatpush.bf16.msra.mxu0 0
        %7901 = vmatpush.bf16.msra.mxu0 %v5112
        %7902 = vmatmul.bf16.gmra.mxu0 %v7865
        %v7903 = vpop.f32.mrf.mxu0
        %v7904 = vadd.f32 0.0, %v7903
        %v7905 = vpop.f32.mrf.mxu0
        %v7906 = vadd.f32 0.0, %v7905
        %7907 = vmatmul.bf16.gmra.mxu0 %v7868
        %v7908 = vpop.f32.mrf.mxu0
        %v7909 = vadd.f32 0.0, %v7908
        %v7910 = vpop.f32.mrf.mxu0
        %7911 = vdwg.mxu0
        %7912 = vmatpush.bf16.msra.mxu0 0
        %7913 = vmatpush.bf16.msra.mxu0 0
        %7914 = vmatpush.bf16.msra.mxu0 0
        %7915 = vmatpush.bf16.msra.mxu0 0
        %7916 = vmatpush.bf16.msra.mxu0 0
        %7917 = vmatpush.bf16.msra.mxu0 0
        %7918 = vmatpush.bf16.msra.mxu0 0
        %7919 = vmatpush.bf16.msra.mxu0 %v6567
        %7920 = vmatmul.bf16.gmra.mxu0 %v7865
        %v7921 = vpop.f32.mrf.mxu0
        %v7922 = vadd.f32 0.0, %v7921
        %v7923 = vpop.f32.mrf.mxu0
        %v7924 = vadd.f32 0.0, %v7923
        %7925 = vmatmul.bf16.gmra.mxu0 %v7868
        %v7926 = vpop.f32.mrf.mxu0
        %v7927 = vadd.f32 0.0, %v7926
        %v7928 = vpop.f32.mrf.mxu0
        %7929 = vdwg.mxu0
        %7930 = vmatpush.bf16.msra.mxu0 0
        %7931 = vmatpush.bf16.msra.mxu0 0
        %7932 = vmatpush.bf16.msra.mxu0 0
        %7933 = vmatpush.bf16.msra.mxu0 0
        %7934 = vmatpush.bf16.msra.mxu0 0
        %7935 = vmatpush.bf16.msra.mxu0 0
        %7936 = vmatpush.bf16.msra.mxu0 0
        %7937 = vmatpush.bf16.msra.mxu0 %v7871
        %7938 = vmatmul.bf16.gmra.mxu0 %v7865
        %v7939 = vpop.f32.mrf.mxu0
        %v7940 = vadd.f32 0.0, %v7939
        %v7941 = vpop.f32.mrf.mxu0
        %v7942 = vadd.f32 0.0, %v7941
        %7943 = vmatmul.bf16.gmra.mxu0 %v7868
        %v7944 = vpop.f32.mrf.mxu0
        %v7945 = vadd.f32 0.0, %v7944
        %v7946 = vpop.f32.mrf.mxu0
        %7947 = vdwg.mxu0
        %7948 = vmatpush.bf16.msra.mxu0 0
        %7949 = vmatpush.bf16.msra.mxu0 0
        %7950 = vmatpush.bf16.msra.mxu0 0
        %7951 = vmatpush.bf16.msra.mxu0 0
        %7952 = vmatpush.bf16.msra.mxu0 0
        %7953 = vmatpush.bf16.msra.mxu0 0
        %7954 = vmatpush.bf16.msra.mxu0 0
        %7955 = vmatpush.bf16.msra.mxu0 %v7874
        %7956 = vmatmul.bf16.gmra.mxu0 %v7865
        %v7957 = vpop.f32.mrf.mxu0
        %v7958 = vadd.f32 0.0, %v7957
        %v7959 = vpop.f32.mrf.mxu0
        %v7960 = vadd.f32 0.0, %v7959
        %7961 = vmatmul.bf16.gmra.mxu0 %v7868
        %v7962 = vpop.f32.mrf.mxu0
        %v7963 = vadd.f32 0.0, %v7962
        %v7964 = vpop.f32.mrf.mxu0
        %7965 = vdwg.mxu0
        %v7966 = vadd.f32 %v7834, %v7886
        %v7967 = vadd.f32 %v7835, %v7904
        %v7968 = vadd.f32 %v7836, %v7922
        %v7969 = vadd.f32 %v7837, %v7940
        %v7970 = vadd.f32 %v7838, %v7958
        %v7971 = vadd.f32 %v7839, %v7888
        %v7972 = vadd.f32 %v7840, %v7906
        %v7973 = vadd.f32 %v7841, %v7924
        %v7974 = vadd.f32 %v7842, %v7942
        %v7975 = vadd.f32 %v7843, %v7960
        %v7976 = vadd.f32 %v7844, %v7891
        %v7977 = vadd.f32 %v7845, %v7909
        %v7978 = vadd.f32 %v7846, %v7927
        %v7979 = vadd.f32 %v7847, %v7945
        %v7980 = vadd.f32 %v7848, %v7963
        %s7981 = scalar_lea.vmem %s3, 288
        %v7982 = vld [vmem:[%s7981] sm:$0xf]
        %v7983 = vld [vmem:[%s7981 + $0x4] sm:$0xf]
        %v7984 = vld [vmem:[%s7981 + $0x8] sm:$0xf]
        %v7988 = vunpack.c.l.b16 %v7982
        %v7989 = vunpack.c.l.b16 %v7983
        %v7990 = vunpack.c.l.b16 %v7984
        %v7991 = vpack.c.b16 %v7989, %v7988
        %v7992 = vpack.c.b16 %v7990, %v7990
        %7993 = vrot.lane.b32.xlu0 %v6825, 120
        %v7994 = vpop.permute.xlu0 %7993
        %v7995 = vsel %vm5244, %v6690, %v7994
        %v7997 = vsel %vm4685, %v7991, 0
        %v8000 = vsel %vm4685, %v7992, 0
        %v8003 = vsel %vm4692, %v7995, 0
        %v8006 = vsel %vm4692, %v7994, 0
        %8008 = vmatpush.bf16.msra.mxu0 0
        %8009 = vmatpush.bf16.msra.mxu0 0
        %8010 = vmatpush.bf16.msra.mxu0 0
        %8011 = vmatpush.bf16.msra.mxu0 0
        %8012 = vmatpush.bf16.msra.mxu0 0
        %8013 = vmatpush.bf16.msra.mxu0 0
        %8014 = vmatpush.bf16.msra.mxu0 0
        %8015 = vmatpush.bf16.msra.mxu0 %v5262
        %8016 = vmatmul.bf16.gmra.mxu0 %v7997
        %v8017 = vpop.f32.mrf.mxu0
        %v8018 = vadd.f32 0.0, %v8017
        %v8019 = vpop.f32.mrf.mxu0
        %v8020 = vadd.f32 0.0, %v8019
        %8021 = vmatmul.bf16.gmra.mxu0 %v8000
        %v8022 = vpop.f32.mrf.mxu0
        %v8023 = vadd.f32 0.0, %v8022
        %v8024 = vpop.f32.mrf.mxu0
        %8025 = vdwg.mxu0
        %8026 = vmatpush.bf16.msra.mxu0 0
        %8027 = vmatpush.bf16.msra.mxu0 0
        %8028 = vmatpush.bf16.msra.mxu0 0
        %8029 = vmatpush.bf16.msra.mxu0 0
        %8030 = vmatpush.bf16.msra.mxu0 0
        %8031 = vmatpush.bf16.msra.mxu0 0
        %8032 = vmatpush.bf16.msra.mxu0 0
        %8033 = vmatpush.bf16.msra.mxu0 %v5265
        %8034 = vmatmul.bf16.gmra.mxu0 %v7997
        %v8035 = vpop.f32.mrf.mxu0
        %v8036 = vadd.f32 0.0, %v8035
        %v8037 = vpop.f32.mrf.mxu0
        %v8038 = vadd.f32 0.0, %v8037
        %8039 = vmatmul.bf16.gmra.mxu0 %v8000
        %v8040 = vpop.f32.mrf.mxu0
        %v8041 = vadd.f32 0.0, %v8040
        %v8042 = vpop.f32.mrf.mxu0
        %8043 = vdwg.mxu0
        %8044 = vmatpush.bf16.msra.mxu0 0
        %8045 = vmatpush.bf16.msra.mxu0 0
        %8046 = vmatpush.bf16.msra.mxu0 0
        %8047 = vmatpush.bf16.msra.mxu0 0
        %8048 = vmatpush.bf16.msra.mxu0 0
        %8049 = vmatpush.bf16.msra.mxu0 0
        %8050 = vmatpush.bf16.msra.mxu0 0
        %8051 = vmatpush.bf16.msra.mxu0 %v6699
        %8052 = vmatmul.bf16.gmra.mxu0 %v7997
        %v8053 = vpop.f32.mrf.mxu0
        %v8054 = vadd.f32 0.0, %v8053
        %v8055 = vpop.f32.mrf.mxu0
        %v8056 = vadd.f32 0.0, %v8055
        %8057 = vmatmul.bf16.gmra.mxu0 %v8000
        %v8058 = vpop.f32.mrf.mxu0
        %v8059 = vadd.f32 0.0, %v8058
        %v8060 = vpop.f32.mrf.mxu0
        %8061 = vdwg.mxu0
        %8062 = vmatpush.bf16.msra.mxu0 0
        %8063 = vmatpush.bf16.msra.mxu0 0
        %8064 = vmatpush.bf16.msra.mxu0 0
        %8065 = vmatpush.bf16.msra.mxu0 0
        %8066 = vmatpush.bf16.msra.mxu0 0
        %8067 = vmatpush.bf16.msra.mxu0 0
        %8068 = vmatpush.bf16.msra.mxu0 0
        %8069 = vmatpush.bf16.msra.mxu0 %v8003
        %8070 = vmatmul.bf16.gmra.mxu0 %v7997
        %v8071 = vpop.f32.mrf.mxu0
        %v8072 = vadd.f32 0.0, %v8071
        %v8073 = vpop.f32.mrf.mxu0
        %v8074 = vadd.f32 0.0, %v8073
        %8075 = vmatmul.bf16.gmra.mxu0 %v8000
        %v8076 = vpop.f32.mrf.mxu0
        %v8077 = vadd.f32 0.0, %v8076
        %v8078 = vpop.f32.mrf.mxu0
        %8079 = vdwg.mxu0
        %8080 = vmatpush.bf16.msra.mxu0 0
        %8081 = vmatpush.bf16.msra.mxu0 0
        %8082 = vmatpush.bf16.msra.mxu0 0
        %8083 = vmatpush.bf16.msra.mxu0 0
        %8084 = vmatpush.bf16.msra.mxu0 0
        %8085 = vmatpush.bf16.msra.mxu0 0
        %8086 = vmatpush.bf16.msra.mxu0 0
        %8087 = vmatpush.bf16.msra.mxu0 %v8006
        %8088 = vmatmul.bf16.gmra.mxu0 %v7997
        %v8089 = vpop.f32.mrf.mxu0
        %v8090 = vadd.f32 0.0, %v8089
        %v8091 = vpop.f32.mrf.mxu0
        %v8092 = vadd.f32 0.0, %v8091
        %8093 = vmatmul.bf16.gmra.mxu0 %v8000
        %v8094 = vpop.f32.mrf.mxu0
        %v8095 = vadd.f32 0.0, %v8094
        %v8096 = vpop.f32.mrf.mxu0
        %8097 = vdwg.mxu0
        %v8098 = vadd.f32 %v7966, %v8018
        %v8099 = vadd.f32 %v7967, %v8036
        %v8100 = vadd.f32 %v7968, %v8054
        %v8101 = vadd.f32 %v7969, %v8072
        %v8102 = vadd.f32 %v7970, %v8090
        %v8103 = vadd.f32 %v7971, %v8020
        %v8104 = vadd.f32 %v7972, %v8038
        %v8105 = vadd.f32 %v7973, %v8056
        %v8106 = vadd.f32 %v7974, %v8074
        %v8107 = vadd.f32 %v7975, %v8092
        %v8108 = vadd.f32 %v7976, %v8023
        %v8109 = vadd.f32 %v7977, %v8041
        %v8110 = vadd.f32 %v7978, %v8059
        %v8111 = vadd.f32 %v7979, %v8077
        %v8112 = vadd.f32 %v7980, %v8095
        %v8113 = vld [vmem:[%s4] sm:$0xff]
        %v8114 = vld [vmem:[%s4 + $0x8] sm:$0xff]
        %v8115 = vld [vmem:[%s4 + $0x10] sm:$0xff]
        %8117 = vset.pattern.permute.xlu0 0
        %8118 = vperm.xlu0 %8117, %v8113
        %v8119 = vpop.permute.xlu0 %8118
        %8122 = vset.pattern.permute.xlu0 0
        %8123 = vperm.xlu0 %8122, %v8114
        %v8124 = vpop.permute.xlu0 %8123
        %8127 = vset.pattern.permute.xlu0 0
        %8128 = vperm.xlu0 %8127, %v8115
        %v8129 = vpop.permute.xlu0 %8128
        %v8131 = vadd.f32 %v8098, %v8119
        %v8132 = vadd.f32 %v8099, %v8119
        %v8133 = vadd.f32 %v8100, %v8119
        %v8134 = vadd.f32 %v8101, %v8119
        %v8135 = vadd.f32 %v8102, %v8119
        %v8136 = vadd.f32 %v8103, %v8124
        %v8137 = vadd.f32 %v8104, %v8124
        %v8138 = vadd.f32 %v8105, %v8124
        %v8139 = vadd.f32 %v8106, %v8124
        %v8140 = vadd.f32 %v8107, %v8124
        %v8141 = vadd.f32 %v8108, %v8129
        %v8142 = vadd.f32 %v8109, %v8129
        %v8143 = vadd.f32 %v8110, %v8129
        %v8144 = vadd.f32 %v8111, %v8129
        %v8145 = vadd.f32 %v8112, %v8129
        %v8146 = vmax.f32 %v8131, 0.0
        %v8147 = vmax.f32 %v8132, 0.0
        %v8148 = vmax.f32 %v8133, 0.0
        %v8149 = vmax.f32 %v8134, 0.0
        %v8150 = vmax.f32 %v8135, 0.0
        %v8151 = vmax.f32 %v8136, 0.0
        %v8152 = vmax.f32 %v8137, 0.0
        %v8153 = vmax.f32 %v8138, 0.0
        %v8154 = vmax.f32 %v8139, 0.0
        %v8155 = vmax.f32 %v8140, 0.0
        %v8156 = vmax.f32 %v8141, 0.0
        %v8157 = vmax.f32 %v8142, 0.0
        %v8158 = vmax.f32 %v8143, 0.0
        %v8159 = vmax.f32 %v8144, 0.0
        %v8160 = vmax.f32 %v8145, 0.0
        %8176 = vrot.lane.b32.xlu0 %v8146, 126
        %v8177 = vpop.permute.xlu0 %8176
        %8178 = vrot.lane.b32.xlu0 %v8147, 126
        %v8179 = vpop.permute.xlu0 %8178
        %8180 = vrot.lane.b32.xlu0 %v8148, 126
        %v8181 = vpop.permute.xlu0 %8180
        %8182 = vrot.lane.b32.xlu0 %v8149, 126
        %v8183 = vpop.permute.xlu0 %8182
        %8184 = vrot.lane.b32.xlu0 %v8150, 126
        %v8185 = vpop.permute.xlu0 %8184
        %8186 = vrot.lane.b32.xlu0 %v8151, 126
        %v8187 = vpop.permute.xlu0 %8186
        %8188 = vrot.lane.b32.xlu0 %v8152, 126
        %v8189 = vpop.permute.xlu0 %8188
        %8190 = vrot.lane.b32.xlu0 %v8153, 126
        %v8191 = vpop.permute.xlu0 %8190
        %8192 = vrot.lane.b32.xlu0 %v8154, 126
        %v8193 = vpop.permute.xlu0 %8192
        %8194 = vrot.lane.b32.xlu0 %v8155, 126
        %v8195 = vpop.permute.xlu0 %8194
        %8196 = vrot.lane.b32.xlu0 %v8156, 126
        %v8197 = vpop.permute.xlu0 %8196
        %8198 = vrot.lane.b32.xlu0 %v8157, 126
        %v8199 = vpop.permute.xlu0 %8198
        %8200 = vrot.lane.b32.xlu0 %v8158, 126
        %v8201 = vpop.permute.xlu0 %8200
        %8202 = vrot.lane.b32.xlu0 %v8159, 126
        %v8203 = vpop.permute.xlu0 %8202
        %8204 = vrot.lane.b32.xlu0 %v8160, 126
        %v8205 = vpop.permute.xlu0 %8204
        %vm8206 = vcmask 1031168
        %v8207 = vsel %vm8206, %v8177, %v8179
        %v8208 = vsel %vm8206, %v8179, %v8181
        %v8209 = vsel %vm8206, %v8181, %v8183
        %v8210 = vsel %vm8206, %v8183, %v8185
        %v8211 = vsel %vm8206, %v8187, %v8189
        %v8212 = vsel %vm8206, %v8189, %v8191
        %v8213 = vsel %vm8206, %v8191, %v8193
        %v8214 = vsel %vm8206, %v8193, %v8195
        %v8215 = vsel %vm8206, %v8197, %v8199
        %v8216 = vsel %vm8206, %v8199, %v8201
        %v8217 = vsel %vm8206, %v8201, %v8203
        %v8218 = vsel %vm8206, %v8203, %v8205
        %v8234 = vmax.f32 %v8146, %v8207
        %v8235 = vmax.f32 %v8147, %v8208
        %v8236 = vmax.f32 %v8148, %v8209
        %v8237 = vmax.f32 %v8149, %v8210
        %v8238 = vmax.f32 %v8150, %v8185
        %v8239 = vmax.f32 %v8151, %v8211
        %v8240 = vmax.f32 %v8152, %v8212
        %v8241 = vmax.f32 %v8153, %v8213
        %v8242 = vmax.f32 %v8154, %v8214
        %v8243 = vmax.f32 %v8155, %v8195
        %v8244 = vmax.f32 %v8156, %v8215
        %v8245 = vmax.f32 %v8157, %v8216
        %v8246 = vmax.f32 %v8158, %v8217
        %v8247 = vmax.f32 %v8159, %v8218
        %v8248 = vmax.f32 %v8160, %v8205
        %8264 = vrot.lane.b32.xlu0 %v8234, 64
        %v8265 = vpop.permute.xlu0 %8264
        %8266 = vrot.lane.b32.xlu0 %v8235, 64
        %v8267 = vpop.permute.xlu0 %8266
        %8268 = vrot.lane.b32.xlu0 %v8236, 64
        %v8269 = vpop.permute.xlu0 %8268
        %8270 = vrot.lane.b32.xlu0 %v8237, 64
        %v8271 = vpop.permute.xlu0 %8270
        %8272 = vrot.lane.b32.xlu0 %v8238, 64
        %v8273 = vpop.permute.xlu0 %8272
        %8274 = vrot.lane.b32.xlu0 %v8239, 64
        %v8275 = vpop.permute.xlu0 %8274
        %8276 = vrot.lane.b32.xlu0 %v8240, 64
        %v8277 = vpop.permute.xlu0 %8276
        %8278 = vrot.lane.b32.xlu0 %v8241, 64
        %v8279 = vpop.permute.xlu0 %8278
        %8280 = vrot.lane.b32.xlu0 %v8242, 64
        %v8281 = vpop.permute.xlu0 %8280
        %8282 = vrot.lane.b32.xlu0 %v8243, 64
        %v8283 = vpop.permute.xlu0 %8282
        %8284 = vrot.lane.b32.xlu0 %v8244, 64
        %v8285 = vpop.permute.xlu0 %8284
        %8286 = vrot.lane.b32.xlu0 %v8245, 64
        %v8287 = vpop.permute.xlu0 %8286
        %8288 = vrot.lane.b32.xlu0 %v8246, 64
        %v8289 = vpop.permute.xlu0 %8288
        %8290 = vrot.lane.b32.xlu0 %v8247, 64
        %v8291 = vpop.permute.xlu0 %8290
        %8292 = vrot.lane.b32.xlu0 %v8248, 64
        %v8293 = vpop.permute.xlu0 %8292
        %vm8294 = vcmask 523264
        %v8295 = vsel %vm8294, %v8265, %v8267
        %v8296 = vsel %vm8294, %v8267, %v8269
        %v8297 = vsel %vm8294, %v8269, %v8271
        %v8298 = vsel %vm8294, %v8271, %v8273
        %v8299 = vsel %vm8294, %v8275, %v8277
        %v8300 = vsel %vm8294, %v8277, %v8279
        %v8301 = vsel %vm8294, %v8279, %v8281
        %v8302 = vsel %vm8294, %v8281, %v8283
        %v8303 = vsel %vm8294, %v8285, %v8287
        %v8304 = vsel %vm8294, %v8287, %v8289
        %v8305 = vsel %vm8294, %v8289, %v8291
        %v8306 = vsel %vm8294, %v8291, %v8293
        %v8322 = vmax.f32 %v8234, %v8295
        %v8323 = vmax.f32 %v8235, %v8296
        %v8324 = vmax.f32 %v8236, %v8297
        %v8325 = vmax.f32 %v8237, %v8298
        %v8326 = vmax.f32 %v8238, %v8273
        %v8327 = vmax.f32 %v8239, %v8299
        %v8328 = vmax.f32 %v8240, %v8300
        %v8329 = vmax.f32 %v8241, %v8301
        %v8330 = vmax.f32 %v8242, %v8302
        %v8331 = vmax.f32 %v8243, %v8283
        %v8332 = vmax.f32 %v8244, %v8303
        %v8333 = vmax.f32 %v8245, %v8304
        %v8334 = vmax.f32 %v8246, %v8305
        %v8335 = vmax.f32 %v8247, %v8306
        %v8336 = vmax.f32 %v8248, %v8293
        %v8337 = vpack.c.bf16 %v8327, %v8322
        %v8338 = vpack.c.bf16 %v8328, %v8323
        %v8339 = vpack.c.bf16 %v8329, %v8324
        %v8340 = vpack.c.bf16 %v8330, %v8325
        %v8341 = vpack.c.bf16 %v8331, %v8326
        %v8342 = vpack.c.bf16 %v8332, %v8332
        %v8343 = vpack.c.bf16 %v8333, %v8333
        %v8344 = vpack.c.bf16 %v8334, %v8334
        %v8345 = vpack.c.bf16 %v8335, %v8335
        %v8346 = vpack.c.bf16 %v8336, %v8336
        %v8347 = vld [vmem:[%s5] sm:$0xf]
        %v8348 = vld [vmem:[%s5 + $0x4] sm:$0xf]
        %v8349 = vld [vmem:[%s5 + $0x8] sm:$0xf]
        %v8350 = vld [vmem:[%s5 + $0xc] sm:$0xf]
        %v8351 = vld [vmem:[%s5 + $0x10] sm:$0xf]
        %v8352 = vld [vmem:[%s5 + $0x14] sm:$0xf]
        %v8353 = vld [vmem:[%s5 + $0x18] sm:$0xf]
        %v8354 = vld [vmem:[%s5 + $0x1c] sm:$0xf]
        %v8355 = vld [vmem:[%s5 + $0x20] sm:$0xf]
        %v8356 = vld [vmem:[%s5 + $0x24] sm:$0xf]
        %v8357 = vld [vmem:[%s5 + $0x28] sm:$0xf]
        %v8358 = vld [vmem:[%s5 + $0x2c] sm:$0xf]
        %v8359 = vld [vmem:[%s5 + $0x30] sm:$0xf]
        %v8360 = vld [vmem:[%s5 + $0x34] sm:$0xf]
        %v8361 = vld [vmem:[%s5 + $0x38] sm:$0xf]
        %v8362 = vld [vmem:[%s5 + $0x3c] sm:$0xf]
        %v8363 = vld [vmem:[%s5 + $0x40] sm:$0xf]
        %v8364 = vld [vmem:[%s5 + $0x44] sm:$0xf]
        %v8365 = vld [vmem:[%s5 + $0x48] sm:$0xf]
        %v8366 = vld [vmem:[%s5 + $0x4c] sm:$0xf]
        %v8367 = vld [vmem:[%s5 + $0x50] sm:$0xf]
        %v8368 = vld [vmem:[%s5 + $0x54] sm:$0xf]
        %v8369 = vld [vmem:[%s5 + $0x58] sm:$0xf]
        %v8370 = vld [vmem:[%s5 + $0x5c] sm:$0xf]
        %v8371 = vld [vmem:[%s5 + $0x60] sm:$0xf]
        %v8372 = vld [vmem:[%s5 + $0x64] sm:$0xf]
        %v8373 = vld [vmem:[%s5 + $0x68] sm:$0xf]
        %v8374 = vld [vmem:[%s5 + $0x6c] sm:$0xf]
        %v8375 = vld [vmem:[%s5 + $0x70] sm:$0xf]
        %v8376 = vld [vmem:[%s5 + $0x74] sm:$0xf]
        %v8377 = vld [vmem:[%s5 + $0x78] sm:$0xf]
        %v8378 = vld [vmem:[%s5 + $0x7c] sm:$0xf]
        %v8379 = vld [vmem:[%s5 + $0x80] sm:$0xf]
        %v8380 = vld [vmem:[%s5 + $0x84] sm:$0xf]
        %v8381 = vld [vmem:[%s5 + $0x88] sm:$0xf]
        %v8382 = vld [vmem:[%s5 + $0x8c] sm:$0xf]
        %v8383 = vld [vmem:[%s5 + $0x90] sm:$0xf]
        %v8384 = vld [vmem:[%s5 + $0x94] sm:$0xf]
        %v8385 = vld [vmem:[%s5 + $0x98] sm:$0xf]
        %v8386 = vld [vmem:[%s5 + $0x9c] sm:$0xf]
        %v8387 = vld [vmem:[%s5 + $0xa0] sm:$0xf]
        %v8388 = vld [vmem:[%s5 + $0xa4] sm:$0xf]
        %v8389 = vld [vmem:[%s5 + $0xa8] sm:$0xf]
        %v8390 = vld [vmem:[%s5 + $0xac] sm:$0xf]
        %v8391 = vld [vmem:[%s5 + $0xb0] sm:$0xf]
        %v8392 = vld [vmem:[%s5 + $0xb4] sm:$0xf]
        %v8393 = vld [vmem:[%s5 + $0xb8] sm:$0xf]
        %v8394 = vld [vmem:[%s5 + $0xbc] sm:$0xf]
        %v8395 = vld [vmem:[%s5 + $0xc0] sm:$0xf]
        %v8396 = vld [vmem:[%s5 + $0xc4] sm:$0xf]
        %v8397 = vld [vmem:[%s5 + $0xc8] sm:$0xf]
        %v8398 = vld [vmem:[%s5 + $0xcc] sm:$0xf]
        %v8399 = vld [vmem:[%s5 + $0xd0] sm:$0xf]
        %v8400 = vld [vmem:[%s5 + $0xd4] sm:$0xf]
        %v8401 = vld [vmem:[%s5 + $0xd8] sm:$0xf]
        %v8402 = vld [vmem:[%s5 + $0xdc] sm:$0xf]
        %v8403 = vld [vmem:[%s5 + $0xe0] sm:$0xf]
        %v8404 = vld [vmem:[%s5 + $0xe4] sm:$0xf]
        %v8405 = vld [vmem:[%s5 + $0xe8] sm:$0xf]
        %v8406 = vld [vmem:[%s5 + $0xec] sm:$0xf]
        %v8407 = vld [vmem:[%s5 + $0xf0] sm:$0xf]
        %v8408 = vld [vmem:[%s5 + $0xf4] sm:$0xf]
        %v8409 = vld [vmem:[%s5 + $0xf8] sm:$0xf]
        %v8410 = vld [vmem:[%s5 + $0xfc] sm:$0xf]
        %v8411 = vld [vmem:[%s5 + $0x100] sm:$0xf]
        %v8412 = vld [vmem:[%s5 + $0x104] sm:$0xf]
        %v8413 = vld [vmem:[%s5 + $0x108] sm:$0x1]
        %v8481 = vunpack.c.l.b16 %v8347
        %v8482 = vunpack.c.l.b16 %v8348
        %v8483 = vunpack.c.l.b16 %v8349
        %v8484 = vunpack.c.l.b16 %v8350
        %v8485 = vunpack.c.l.b16 %v8351
        %v8486 = vunpack.c.l.b16 %v8352
        %v8487 = vunpack.c.l.b16 %v8353
        %v8488 = vunpack.c.l.b16 %v8354
        %v8489 = vunpack.c.l.b16 %v8355
        %v8490 = vunpack.c.l.b16 %v8356
        %v8491 = vunpack.c.l.b16 %v8357
        %v8492 = vunpack.c.l.b16 %v8358
        %v8493 = vunpack.c.l.b16 %v8359
        %v8494 = vunpack.c.l.b16 %v8360
        %v8495 = vunpack.c.l.b16 %v8361
        %v8496 = vunpack.c.l.b16 %v8362
        %v8497 = vunpack.c.l.b16 %v8363
        %v8498 = vunpack.c.l.b16 %v8364
        %v8499 = vunpack.c.l.b16 %v8365
        %v8500 = vunpack.c.l.b16 %v8366
        %v8501 = vunpack.c.l.b16 %v8367
        %v8502 = vunpack.c.l.b16 %v8368
        %v8503 = vunpack.c.l.b16 %v8369
        %v8504 = vunpack.c.l.b16 %v8370
        %v8505 = vunpack.c.l.b16 %v8371
        %v8506 = vunpack.c.l.b16 %v8372
        %v8507 = vunpack.c.l.b16 %v8373
        %v8508 = vunpack.c.l.b16 %v8374
        %v8509 = vunpack.c.l.b16 %v8375
        %v8510 = vunpack.c.l.b16 %v8376
        %v8511 = vunpack.c.l.b16 %v8377
        %v8512 = vunpack.c.l.b16 %v8378
        %v8513 = vunpack.c.l.b16 %v8379
        %v8514 = vunpack.c.l.b16 %v8380
        %v8515 = vunpack.c.l.b16 %v8381
        %v8516 = vunpack.c.l.b16 %v8382
        %v8517 = vunpack.c.l.b16 %v8383
        %v8518 = vunpack.c.l.b16 %v8384
        %v8519 = vunpack.c.l.b16 %v8385
        %v8520 = vunpack.c.l.b16 %v8386
        %v8521 = vunpack.c.l.b16 %v8387
        %v8522 = vunpack.c.l.b16 %v8388
        %v8523 = vunpack.c.l.b16 %v8389
        %v8524 = vunpack.c.l.b16 %v8390
        %v8525 = vunpack.c.l.b16 %v8391
        %v8526 = vunpack.c.l.b16 %v8392
        %v8527 = vunpack.c.l.b16 %v8393
        %v8528 = vunpack.c.l.b16 %v8394
        %v8529 = vunpack.c.l.b16 %v8395
        %v8530 = vunpack.c.l.b16 %v8396
        %v8531 = vunpack.c.l.b16 %v8397
        %v8532 = vunpack.c.l.b16 %v8398
        %v8533 = vunpack.c.l.b16 %v8399
        %v8534 = vunpack.c.l.b16 %v8400
        %v8535 = vunpack.c.l.b16 %v8401
        %v8536 = vunpack.c.l.b16 %v8402
        %v8537 = vunpack.c.l.b16 %v8403
        %v8538 = vunpack.c.l.b16 %v8404
        %v8539 = vunpack.c.l.b16 %v8405
        %v8540 = vunpack.c.l.b16 %v8406
        %v8541 = vunpack.c.l.b16 %v8407
        %v8542 = vunpack.c.l.b16 %v8408
        %v8543 = vunpack.c.l.b16 %v8409
        %v8544 = vunpack.c.l.b16 %v8410
        %v8545 = vunpack.c.l.b16 %v8411
        %v8546 = vunpack.c.l.b16 %v8412
        %v8547 = vunpack.c.l.b16 %v8413
        %v8548 = vpack.c.b16 %v8482, %v8481
        %v8549 = vpack.c.b16 %v8484, %v8483
        %v8550 = vpack.c.b16 %v8486, %v8485
        %v8551 = vpack.c.b16 %v8488, %v8487
        %v8552 = vpack.c.b16 %v8490, %v8489
        %v8553 = vpack.c.b16 %v8492, %v8491
        %v8554 = vpack.c.b16 %v8494, %v8493
        %v8555 = vpack.c.b16 %v8496, %v8495
        %v8556 = vpack.c.b16 %v8498, %v8497
        %v8557 = vpack.c.b16 %v8500, %v8499
        %v8558 = vpack.c.b16 %v8502, %v8501
        %v8559 = vpack.c.b16 %v8504, %v8503
        %v8560 = vpack.c.b16 %v8506, %v8505
        %v8561 = vpack.c.b16 %v8508, %v8507
        %v8562 = vpack.c.b16 %v8510, %v8509
        %v8563 = vpack.c.b16 %v8512, %v8511
        %v8564 = vpack.c.b16 %v8514, %v8513
        %v8565 = vpack.c.b16 %v8516, %v8515
        %v8566 = vpack.c.b16 %v8518, %v8517
        %v8567 = vpack.c.b16 %v8520, %v8519
        %v8568 = vpack.c.b16 %v8522, %v8521
        %v8569 = vpack.c.b16 %v8524, %v8523
        %v8570 = vpack.c.b16 %v8526, %v8525
        %v8571 = vpack.c.b16 %v8528, %v8527
        %v8572 = vpack.c.b16 %v8530, %v8529
        %v8573 = vpack.c.b16 %v8532, %v8531
        %v8574 = vpack.c.b16 %v8534, %v8533
        %v8575 = vpack.c.b16 %v8536, %v8535
        %v8576 = vpack.c.b16 %v8538, %v8537
        %v8577 = vpack.c.b16 %v8540, %v8539
        %v8578 = vpack.c.b16 %v8542, %v8541
        %v8579 = vpack.c.b16 %v8544, %v8543
        %v8580 = vpack.c.b16 %v8546, %v8545
        %v8581 = vpack.c.b16 %v8547, %v8547
        %vm8615 = vcmask 138240
        %v8617 = vsel %vm8615, %v8341, 0
        %v8620 = vsel %vm8615, %v8346, 0
        %v8622 = vsel 0, 4294967295, 65535
        %v8623 = vsel %vm500, %v8622, 0
        %v8625 = vand.u32 %v8581, %v8623
        %8627 = vmatpush.bf16.msra.mxu0 %v8555
        %8628 = vmatpush.bf16.msra.mxu0 %v8554
        %8629 = vmatpush.bf16.msra.mxu0 %v8553
        %8630 = vmatpush.bf16.msra.mxu0 %v8552
        %8631 = vmatpush.bf16.msra.mxu0 %v8551
        %8632 = vmatpush.bf16.msra.mxu0 %v8550
        %8633 = vmatpush.bf16.msra.mxu0 %v8549
        %8634 = vmatpush.bf16.msra.mxu0 %v8548
        %8635 = vmatmul.bf16.gmra.mxu0 %v8337
        %v8636 = vpop.f32.mrf.mxu0
        %v8637 = vadd.f32 0.0, %v8636
        %v8638 = vpop.f32.mrf.mxu0
        %v8639 = vadd.f32 0.0, %v8638
        %8640 = vmatmul.bf16.gmra.mxu0 %v8342
        %v8641 = vpop.f32.mrf.mxu0
        %v8642 = vadd.f32 0.0, %v8641
        %v8643 = vpop.f32.mrf.mxu0
        %8644 = vdwg.mxu0
        %8645 = vmatpush.bf16.msra.mxu0 %v8563
        %8646 = vmatpush.bf16.msra.mxu0 %v8562
        %8647 = vmatpush.bf16.msra.mxu0 %v8561
        %8648 = vmatpush.bf16.msra.mxu0 %v8560
        %8649 = vmatpush.bf16.msra.mxu0 %v8559
        %8650 = vmatpush.bf16.msra.mxu0 %v8558
        %8651 = vmatpush.bf16.msra.mxu0 %v8557
        %8652 = vmatpush.bf16.msra.mxu0 %v8556
        %8653 = vmatmul.bf16.gmra.mxu0 %v8338
        %v8654 = vpop.f32.mrf.mxu0
        %v8655 = vadd.f32 %v8637, %v8654
        %v8656 = vpop.f32.mrf.mxu0
        %v8657 = vadd.f32 %v8639, %v8656
        %8658 = vmatmul.bf16.gmra.mxu0 %v8343
        %v8659 = vpop.f32.mrf.mxu0
        %v8660 = vadd.f32 %v8642, %v8659
        %v8661 = vpop.f32.mrf.mxu0
        %8662 = vdwg.mxu0
        %8663 = vmatpush.bf16.msra.mxu0 %v8571
        %8664 = vmatpush.bf16.msra.mxu0 %v8570
        %8665 = vmatpush.bf16.msra.mxu0 %v8569
        %8666 = vmatpush.bf16.msra.mxu0 %v8568
        %8667 = vmatpush.bf16.msra.mxu0 %v8567
        %8668 = vmatpush.bf16.msra.mxu0 %v8566
        %8669 = vmatpush.bf16.msra.mxu0 %v8565
        %8670 = vmatpush.bf16.msra.mxu0 %v8564
        %8671 = vmatmul.bf16.gmra.mxu0 %v8339
        %v8672 = vpop.f32.mrf.mxu0
        %v8673 = vadd.f32 %v8655, %v8672
        %v8674 = vpop.f32.mrf.mxu0
        %v8675 = vadd.f32 %v8657, %v8674
        %8676 = vmatmul.bf16.gmra.mxu0 %v8344
        %v8677 = vpop.f32.mrf.mxu0
        %v8678 = vadd.f32 %v8660, %v8677
        %v8679 = vpop.f32.mrf.mxu0
        %8680 = vdwg.mxu0
        %8681 = vmatpush.bf16.msra.mxu0 %v8579
        %8682 = vmatpush.bf16.msra.mxu0 %v8578
        %8683 = vmatpush.bf16.msra.mxu0 %v8577
        %8684 = vmatpush.bf16.msra.mxu0 %v8576
        %8685 = vmatpush.bf16.msra.mxu0 %v8575
        %8686 = vmatpush.bf16.msra.mxu0 %v8574
        %8687 = vmatpush.bf16.msra.mxu0 %v8573
        %8688 = vmatpush.bf16.msra.mxu0 %v8572
        %8689 = vmatmul.bf16.gmra.mxu0 %v8340
        %v8690 = vpop.f32.mrf.mxu0
        %v8691 = vadd.f32 %v8673, %v8690
        %v8692 = vpop.f32.mrf.mxu0
        %v8693 = vadd.f32 %v8675, %v8692
        %8694 = vmatmul.bf16.gmra.mxu0 %v8345
        %v8695 = vpop.f32.mrf.mxu0
        %v8696 = vadd.f32 %v8678, %v8695
        %v8697 = vpop.f32.mrf.mxu0
        %8698 = vdwg.mxu0
        %8699 = vmatpush.bf16.msra.mxu0 0
        %8700 = vmatpush.bf16.msra.mxu0 0
        %8701 = vmatpush.bf16.msra.mxu0 0
        %8702 = vmatpush.bf16.msra.mxu0 0
        %8703 = vmatpush.bf16.msra.mxu0 0
        %8704 = vmatpush.bf16.msra.mxu0 0
        %8705 = vmatpush.bf16.msra.mxu0 %v8625
        %8706 = vmatpush.bf16.msra.mxu0 %v8580
        %8707 = vmatmul.bf16.gmra.mxu0 %v8617
        %v8708 = vpop.f32.mrf.mxu0
        %v8709 = vadd.f32 %v8691, %v8708
        %v8710 = vpop.f32.mrf.mxu0
        %v8711 = vadd.f32 %v8693, %v8710
        %8712 = vmatmul.bf16.gmra.mxu0 %v8620
        %v8713 = vpop.f32.mrf.mxu0
        %v8714 = vadd.f32 %v8696, %v8713
        %v8715 = vpop.f32.mrf.mxu0
        %8716 = vdwg.mxu0
        %v8717 = vlaneseq
        %vm8718 = vcmp.ge.s32.totalorder %v8717, 0
        %vm8719 = vcmp.lt.s32.totalorder %v8717, 32
        %vm8720 = vmand %vm8718, %vm8719
        %8721 = vst.msk [vmem:[#allocation2] sm:$0x1] %vm8720, %v8709
        %8723 = vst [vmem:[#allocation1] sm:$0xff] %v8709
        %s8724 = scalar_lea.vmem [#allocation1], 1
        %v8725 = vld [vmem:[%s8724] ss:$9 sm:$0xff]
        %8726 = vrot.lane.b32.xlu0 %v8725, 32
        %v8727 = vpop.permute.xlu0 %8726
        %vm8729 = vcmp.ge.s32.totalorder %v8717, 32
        %vm8730 = vcmp.lt.s32.totalorder %v8717, 64
        %vm8731 = vmand %vm8729, %vm8730
        %8732 = vst.msk [vmem:[#allocation2] sm:$0x1] %vm8731, %v8727
        %8733 = vst [vmem:[#allocation1] sm:$0xff] %v8709
        %s8734 = scalar_lea.vmem [#allocation1], 2
        %v8735 = vld [vmem:[%s8734] ss:$9 sm:$0xff]
        %8736 = vrot.lane.b32.xlu0 %v8735, 64
        %v8737 = vpop.permute.xlu0 %8736
        %vm8739 = vcmp.ge.s32.totalorder %v8717, 64
        %vm8740 = vcmp.lt.s32.totalorder %v8717, 96
        %vm8741 = vmand %vm8739, %vm8740
        %8742 = vst.msk [vmem:[#allocation2] sm:$0x1] %vm8741, %v8737
        %8743 = vst [vmem:[#allocation1] sm:$0xff] %v8709
        %s8744 = scalar_lea.vmem [#allocation1], 3
        %v8745 = vld [vmem:[%s8744] ss:$9 sm:$0xff]
        %8746 = vrot.lane.b32.xlu0 %v8745, 96
        %v8747 = vpop.permute.xlu0 %8746
        %vm8749 = vcmp.ge.s32.totalorder %v8717, 96
        %vm8750 = vcmp.lt.s32.totalorder %v8717, 128
        %vm8751 = vmand %vm8749, %vm8750
        %8752 = vst.msk [vmem:[#allocation2] sm:$0x1] %vm8751, %v8747
        %8753 = vst [vmem:[#allocation1] sm:$0xff] %v8709
        %s8754 = scalar_lea.vmem [#allocation1], 4
        %v8755 = vld [vmem:[%s8754] ss:$9 sm:$0xff]
        %8757 = vst.msk [vmem:[#allocation2 + $0x1] sm:$0x1] %vm8720, %v8755
        %8758 = vst [vmem:[#allocation1] sm:$0xff] %v8709
        %s8759 = scalar_lea.vmem [#allocation1], 5
        %v8760 = vld [vmem:[%s8759] ss:$9 sm:$0xff]
        %8761 = vrot.lane.b32.xlu0 %v8760, 32
        %v8762 = vpop.permute.xlu0 %8761
        %8764 = vst.msk [vmem:[#allocation2 + $0x1] sm:$0x1] %vm8731, %v8762
        %8765 = vst [vmem:[#allocation1] sm:$0xff] %v8709
        %s8766 = scalar_lea.vmem [#allocation1], 6
        %v8767 = vld [vmem:[%s8766] ss:$9 sm:$0xff]
        %8768 = vrot.lane.b32.xlu0 %v8767, 64
        %v8769 = vpop.permute.xlu0 %8768
        %8771 = vst.msk [vmem:[#allocation2 + $0x1] sm:$0x1] %vm8741, %v8769
        %8772 = vst [vmem:[#allocation1] sm:$0xff] %v8709
        %s8773 = scalar_lea.vmem [#allocation1], 7
        %v8774 = vld [vmem:[%s8773] ss:$9 sm:$0xff]
        %8775 = vrot.lane.b32.xlu0 %v8774, 96
        %v8776 = vpop.permute.xlu0 %8775
        %8778 = vst.msk [vmem:[#allocation2 + $0x1] sm:$0x1] %vm8751, %v8776
        %8779 = vst.msk [vmem:[#allocation2 + $0x2] sm:$0x1] %vm8720, %v8711
        %8781 = vst [vmem:[#allocation1] sm:$0xff] %v8711
        %s8782 = scalar_lea.vmem [#allocation1], 1
        %v8783 = vld [vmem:[%s8782] ss:$9 sm:$0xff]
        %8784 = vrot.lane.b32.xlu0 %v8783, 32
        %v8785 = vpop.permute.xlu0 %8784
        %8787 = vst.msk [vmem:[#allocation2 + $0x2] sm:$0x1] %vm8731, %v8785
        %8788 = vst [vmem:[#allocation1] sm:$0xff] %v8711
        %s8789 = scalar_lea.vmem [#allocation1], 2
        %v8790 = vld [vmem:[%s8789] ss:$9 sm:$0xff]
        %8791 = vrot.lane.b32.xlu0 %v8790, 64
        %v8792 = vpop.permute.xlu0 %8791
        %8794 = vst.msk [vmem:[#allocation2 + $0x2] sm:$0x1] %vm8741, %v8792
        %8795 = vst [vmem:[#allocation1] sm:$0xff] %v8711
        %s8796 = scalar_lea.vmem [#allocation1], 3
        %v8797 = vld [vmem:[%s8796] ss:$9 sm:$0xff]
        %8798 = vrot.lane.b32.xlu0 %v8797, 96
        %v8799 = vpop.permute.xlu0 %8798
        %8801 = vst.msk [vmem:[#allocation2 + $0x2] sm:$0x1] %vm8751, %v8799
        %8802 = vst [vmem:[#allocation1] sm:$0xff] %v8711
        %s8803 = scalar_lea.vmem [#allocation1], 4
        %v8804 = vld [vmem:[%s8803] ss:$9 sm:$0xff]
        %8806 = vst.msk [vmem:[#allocation2 + $0x3] sm:$0x1] %vm8720, %v8804
        %8807 = vst [vmem:[#allocation1] sm:$0xff] %v8711
        %s8808 = scalar_lea.vmem [#allocation1], 5
        %v8809 = vld [vmem:[%s8808] ss:$9 sm:$0xff]
        %8810 = vrot.lane.b32.xlu0 %v8809, 32
        %v8811 = vpop.permute.xlu0 %8810
        %8813 = vst.msk [vmem:[#allocation2 + $0x3] sm:$0x1] %vm8731, %v8811
        %8814 = vst [vmem:[#allocation1] sm:$0xff] %v8711
        %s8815 = scalar_lea.vmem [#allocation1], 6
        %v8816 = vld [vmem:[%s8815] ss:$9 sm:$0xff]
        %8817 = vrot.lane.b32.xlu0 %v8816, 64
        %v8818 = vpop.permute.xlu0 %8817
        %8820 = vst.msk [vmem:[#allocation2 + $0x3] sm:$0x1] %vm8741, %v8818
        %8821 = vst [vmem:[#allocation1] sm:$0xff] %v8711
        %s8822 = scalar_lea.vmem [#allocation1], 7
        %v8823 = vld [vmem:[%s8822] ss:$9 sm:$0xff]
        %8824 = vrot.lane.b32.xlu0 %v8823, 96
        %v8825 = vpop.permute.xlu0 %8824
        %8827 = vst.msk [vmem:[#allocation2 + $0x3] sm:$0x1] %vm8751, %v8825
        %8828 = vst.msk [vmem:[#allocation2 + $0x4] sm:$0x1] %vm8720, %v8714
        %8830 = vst [vmem:[#allocation1] sm:$0xff] %v8714
        %s8831 = scalar_lea.vmem [#allocation1], 1
        %v8832 = vld [vmem:[%s8831] ss:$9 sm:$0xff]
        %8833 = vrot.lane.b32.xlu0 %v8832, 32
        %v8834 = vpop.permute.xlu0 %8833
        %8836 = vst.msk [vmem:[#allocation2 + $0x4] sm:$0x1] %vm8731, %v8834
        %8837 = vst [vmem:[#allocation1] sm:$0xff] %v8714
        %s8838 = scalar_lea.vmem [#allocation1], 2
        %v8839 = vld [vmem:[%s8838] ss:$9 sm:$0xff]
        %8840 = vrot.lane.b32.xlu0 %v8839, 64
        %v8841 = vpop.permute.xlu0 %8840
        %8843 = vst.msk [vmem:[#allocation2 + $0x4] sm:$0x1] %vm8741, %v8841
        %8844 = vst [vmem:[#allocation1] sm:$0xff] %v8714
        %s8845 = scalar_lea.vmem [#allocation1], 3
        %v8846 = vld [vmem:[%s8845] ss:$9 sm:$0xff]
        %8847 = vrot.lane.b32.xlu0 %v8846, 96
        %v8848 = vpop.permute.xlu0 %8847
        %8850 = vst.msk [vmem:[#allocation2 + $0x4] sm:$0x1] %vm8751, %v8848
        %8851 = vst [vmem:[#allocation1] sm:$0xff] %v8714
        %s8852 = scalar_lea.vmem [#allocation1], 4
        %v8853 = vld [vmem:[%s8852] ss:$9 sm:$0xff]
        %8855 = vst.msk [vmem:[#allocation2 + $0x5] sm:$0x1] %vm8720, %v8853
        %8856 = vst [vmem:[#allocation1] sm:$0xff] %v8714
        %s8857 = scalar_lea.vmem [#allocation1], 5
        %v8858 = vld [vmem:[%s8857] ss:$9 sm:$0xff]
        %8859 = vrot.lane.b32.xlu0 %v8858, 32
        %v8860 = vpop.permute.xlu0 %8859
        %8862 = vst.msk [vmem:[#allocation2 + $0x5] sm:$0x1] %vm8731, %v8860
        %8863 = vst [vmem:[#allocation1] sm:$0xff] %v8714
        %s8864 = scalar_lea.vmem [#allocation1], 6
        %v8865 = vld [vmem:[%s8864] ss:$9 sm:$0xff]
        %8866 = vrot.lane.b32.xlu0 %v8865, 64
        %v8867 = vpop.permute.xlu0 %8866
        %8869 = vst.msk [vmem:[#allocation2 + $0x5] sm:$0x1] %vm8741, %v8867
        %8870 = vst [vmem:[#allocation1] sm:$0xff] %v8714
        %s8871 = scalar_lea.vmem [#allocation1], 7
        %v8872 = vld [vmem:[%s8871] ss:$9 sm:$0xff]
        %8873 = vrot.lane.b32.xlu0 %v8872, 96
        %v8874 = vpop.permute.xlu0 %8873
        %8876 = vst.msk [vmem:[#allocation2 + $0x5] sm:$0x1] %vm8751, %v8874
        %v8877 = vld [vmem:[#allocation2] sm:$0x3f]
        %v8879 = vperm.slane %v8877, 0
        %v8880 = vperm.slane %v8877, 1
        %v8881 = vperm.slane %v8877, 2
        %v8882 = vperm.slane %v8877, 3
        %v8883 = vperm.slane %v8877, 4
        %v8884 = vperm.slane %v8877, 5
        %v8891 = vpack.c.bf16 %v8879, %v8879
        %v8892 = vpack.c.bf16 %v8880, %v8880
        %v8893 = vpack.c.bf16 %v8881, %v8881
        %v8894 = vpack.c.bf16 %v8882, %v8882
        %v8895 = vpack.c.bf16 %v8883, %v8883
        %v8896 = vpack.c.bf16 %v8884, %v8884
        %v8897 = vld [vmem:[%s6] sm:$0xf]
        %v8898 = vld [vmem:[%s6 + $0x4] sm:$0xf]
        %v8899 = vld [vmem:[%s6 + $0x8] sm:$0xf]
        %v8900 = vld [vmem:[%s6 + $0xc] sm:$0xf]
        %v8901 = vld [vmem:[%s6 + $0x10] sm:$0xf]
        %v8902 = vld [vmem:[%s6 + $0x14] sm:$0xf]
        %v8903 = vld [vmem:[%s6 + $0x18] sm:$0xf]
        %v8904 = vld [vmem:[%s6 + $0x1c] sm:$0xf]
        %v8905 = vld [vmem:[%s6 + $0x20] sm:$0xf]
        %v8906 = vld [vmem:[%s6 + $0x24] sm:$0xf]
        %v8907 = vld [vmem:[%s6 + $0x28] sm:$0xf]
        %v8908 = vld [vmem:[%s6 + $0x2c] sm:$0xf]
        %v8909 = vld [vmem:[%s6 + $0x30] sm:$0xf]
        %v8910 = vld [vmem:[%s6 + $0x34] sm:$0xf]
        %v8911 = vld [vmem:[%s6 + $0x38] sm:$0xf]
        %v8912 = vld [vmem:[%s6 + $0x3c] sm:$0xf]
        %v8913 = vld [vmem:[%s6 + $0x40] sm:$0xf]
        %v8914 = vld [vmem:[%s6 + $0x44] sm:$0xf]
        %v8915 = vld [vmem:[%s6 + $0x48] sm:$0xf]
        %v8916 = vld [vmem:[%s6 + $0x4c] sm:$0xf]
        %v8917 = vld [vmem:[%s6 + $0x50] sm:$0xf]
        %v8918 = vld [vmem:[%s6 + $0x54] sm:$0xf]
        %v8919 = vld [vmem:[%s6 + $0x58] sm:$0xf]
        %v8920 = vld [vmem:[%s6 + $0x5c] sm:$0xf]
        %v8921 = vld [vmem:[%s6 + $0x60] sm:$0xf]
        %v8922 = vld [vmem:[%s6 + $0x64] sm:$0xf]
        %v8923 = vld [vmem:[%s6 + $0x68] sm:$0xf]
        %v8924 = vld [vmem:[%s6 + $0x6c] sm:$0xf]
        %v8925 = vld [vmem:[%s6 + $0x70] sm:$0xf]
        %v8926 = vld [vmem:[%s6 + $0x74] sm:$0xf]
        %v8927 = vld [vmem:[%s6 + $0x78] sm:$0xf]
        %v8928 = vld [vmem:[%s6 + $0x7c] sm:$0xf]
        %v8929 = vld [vmem:[%s6 + $0x80] sm:$0xf]
        %v8930 = vld [vmem:[%s6 + $0x84] sm:$0xf]
        %v8931 = vld [vmem:[%s6 + $0x88] sm:$0xf]
        %v8932 = vld [vmem:[%s6 + $0x8c] sm:$0xf]
        %v8933 = vld [vmem:[%s6 + $0x90] sm:$0xf]
        %v8934 = vld [vmem:[%s6 + $0x94] sm:$0xf]
        %v8935 = vld [vmem:[%s6 + $0x98] sm:$0xf]
        %v8936 = vld [vmem:[%s6 + $0x9c] sm:$0xf]
        %v8937 = vld [vmem:[%s6 + $0xa0] sm:$0xf]
        %v8938 = vld [vmem:[%s6 + $0xa4] sm:$0xf]
        %v8939 = vld [vmem:[%s6 + $0xa8] sm:$0xf]
        %v8940 = vld [vmem:[%s6 + $0xac] sm:$0xf]
        %v8941 = vld [vmem:[%s6 + $0xb0] sm:$0xf]
        %v8942 = vld [vmem:[%s6 + $0xb4] sm:$0xf]
        %v8943 = vld [vmem:[%s6 + $0xb8] sm:$0xf]
        %v8944 = vld [vmem:[%s6 + $0xbc] sm:$0xf]
        %v8945 = vld [vmem:[%s6 + $0xc0] sm:$0xf]
        %v8946 = vld [vmem:[%s6 + $0xc4] sm:$0xf]
        %v8947 = vld [vmem:[%s6 + $0xc8] sm:$0xf]
        %v8948 = vld [vmem:[%s6 + $0xcc] sm:$0xf]
        %v8949 = vld [vmem:[%s6 + $0xd0] sm:$0xf]
        %v8950 = vld [vmem:[%s6 + $0xd4] sm:$0xf]
        %v8951 = vld [vmem:[%s6 + $0xd8] sm:$0xf]
        %v8952 = vld [vmem:[%s6 + $0xdc] sm:$0xf]
        %v8953 = vld [vmem:[%s6 + $0xe0] sm:$0xf]
        %v8954 = vld [vmem:[%s6 + $0xe4] sm:$0xf]
        %v8955 = vld [vmem:[%s6 + $0xe8] sm:$0xf]
        %v8956 = vld [vmem:[%s6 + $0xec] sm:$0xf]
        %v8957 = vld [vmem:[%s6 + $0xf0] sm:$0xf]
        %v8958 = vld [vmem:[%s6 + $0xf4] sm:$0xf]
        %v8959 = vld [vmem:[%s6 + $0xf8] sm:$0xf]
        %v8960 = vld [vmem:[%s6 + $0xfc] sm:$0xf]
        %v8961 = vld [vmem:[%s6 + $0x100] sm:$0xf]
        %v8962 = vld [vmem:[%s6 + $0x104] sm:$0xf]
        %v8963 = vld [vmem:[%s6 + $0x108] sm:$0xf]
        %v8964 = vld [vmem:[%s6 + $0x10c] sm:$0xf]
        %v8965 = vld [vmem:[%s6 + $0x110] sm:$0xf]
        %v8966 = vld [vmem:[%s6 + $0x114] sm:$0xf]
        %v8967 = vld [vmem:[%s6 + $0x118] sm:$0xf]
        %v8968 = vld [vmem:[%s6 + $0x11c] sm:$0xf]
        %v8969 = vld [vmem:[%s6 + $0x120] sm:$0xf]
        %v8970 = vld [vmem:[%s6 + $0x124] sm:$0xf]
        %v8971 = vld [vmem:[%s6 + $0x128] sm:$0xf]
        %v8972 = vld [vmem:[%s6 + $0x12c] sm:$0xf]
        %v8973 = vld [vmem:[%s6 + $0x130] sm:$0xf]
        %v8974 = vld [vmem:[%s6 + $0x134] sm:$0xf]
        %v8975 = vld [vmem:[%s6 + $0x138] sm:$0xf]
        %v8976 = vld [vmem:[%s6 + $0x13c] sm:$0xf]
        %v8977 = vld [vmem:[%s6 + $0x140] sm:$0xf]
        %v8978 = vld [vmem:[%s6 + $0x144] sm:$0xf]
        %v8979 = vld [vmem:[%s6 + $0x148] sm:$0xf]
        %v8980 = vld [vmem:[%s6 + $0x14c] sm:$0xf]
        %v8981 = vld [vmem:[%s6 + $0x150] sm:$0xf]
        %v8982 = vld [vmem:[%s6 + $0x154] sm:$0xf]
        %v8983 = vld [vmem:[%s6 + $0x158] sm:$0xf]
        %v8984 = vld [vmem:[%s6 + $0x15c] sm:$0xf]
        %v8985 = vld [vmem:[%s6 + $0x160] sm:$0xf]
        %v8986 = vld [vmem:[%s6 + $0x164] sm:$0xf]
        %v8987 = vld [vmem:[%s6 + $0x168] sm:$0xf]
        %v8988 = vld [vmem:[%s6 + $0x16c] sm:$0xf]
        %v8989 = vld [vmem:[%s6 + $0x170] sm:$0xf]
        %v8990 = vld [vmem:[%s6 + $0x174] sm:$0xf]
        %v8991 = vld [vmem:[%s6 + $0x178] sm:$0xf]
        %v8992 = vld [vmem:[%s6 + $0x17c] sm:$0xf]
        %v8993 = vld [vmem:[%s7] sm:$0x1]
        %v9090 = vunpack.c.l.b16 %v8897
        %v9091 = vunpack.c.l.b16 %v8898
        %v9092 = vunpack.c.l.b16 %v8899
        %v9093 = vunpack.c.l.b16 %v8900
        %v9094 = vunpack.c.l.b16 %v8901
        %v9095 = vunpack.c.l.b16 %v8902
        %v9096 = vunpack.c.l.b16 %v8903
        %v9097 = vunpack.c.l.b16 %v8904
        %v9098 = vunpack.c.l.b16 %v8905
        %v9099 = vunpack.c.l.b16 %v8906
        %v9100 = vunpack.c.l.b16 %v8907
        %v9101 = vunpack.c.l.b16 %v8908
        %v9102 = vunpack.c.l.b16 %v8909
        %v9103 = vunpack.c.l.b16 %v8910
        %v9104 = vunpack.c.l.b16 %v8911
        %v9105 = vunpack.c.l.b16 %v8912
        %v9106 = vunpack.c.l.b16 %v8913
        %v9107 = vunpack.c.l.b16 %v8914
        %v9108 = vunpack.c.l.b16 %v8915
        %v9109 = vunpack.c.l.b16 %v8916
        %v9110 = vunpack.c.l.b16 %v8917
        %v9111 = vunpack.c.l.b16 %v8918
        %v9112 = vunpack.c.l.b16 %v8919
        %v9113 = vunpack.c.l.b16 %v8920
        %v9114 = vunpack.c.l.b16 %v8921
        %v9115 = vunpack.c.l.b16 %v8922
        %v9116 = vunpack.c.l.b16 %v8923
        %v9117 = vunpack.c.l.b16 %v8924
        %v9118 = vunpack.c.l.b16 %v8925
        %v9119 = vunpack.c.l.b16 %v8926
        %v9120 = vunpack.c.l.b16 %v8927
        %v9121 = vunpack.c.l.b16 %v8928
        %v9122 = vunpack.c.l.b16 %v8929
        %v9123 = vunpack.c.l.b16 %v8930
        %v9124 = vunpack.c.l.b16 %v8931
        %v9125 = vunpack.c.l.b16 %v8932
        %v9126 = vunpack.c.l.b16 %v8933
        %v9127 = vunpack.c.l.b16 %v8934
        %v9128 = vunpack.c.l.b16 %v8935
        %v9129 = vunpack.c.l.b16 %v8936
        %v9130 = vunpack.c.l.b16 %v8937
        %v9131 = vunpack.c.l.b16 %v8938
        %v9132 = vunpack.c.l.b16 %v8939
        %v9133 = vunpack.c.l.b16 %v8940
        %v9134 = vunpack.c.l.b16 %v8941
        %v9135 = vunpack.c.l.b16 %v8942
        %v9136 = vunpack.c.l.b16 %v8943
        %v9137 = vunpack.c.l.b16 %v8944
        %v9138 = vunpack.c.l.b16 %v8945
        %v9139 = vunpack.c.l.b16 %v8946
        %v9140 = vunpack.c.l.b16 %v8947
        %v9141 = vunpack.c.l.b16 %v8948
        %v9142 = vunpack.c.l.b16 %v8949
        %v9143 = vunpack.c.l.b16 %v8950
        %v9144 = vunpack.c.l.b16 %v8951
        %v9145 = vunpack.c.l.b16 %v8952
        %v9146 = vunpack.c.l.b16 %v8953
        %v9147 = vunpack.c.l.b16 %v8954
        %v9148 = vunpack.c.l.b16 %v8955
        %v9149 = vunpack.c.l.b16 %v8956
        %v9150 = vunpack.c.l.b16 %v8957
        %v9151 = vunpack.c.l.b16 %v8958
        %v9152 = vunpack.c.l.b16 %v8959
        %v9153 = vunpack.c.l.b16 %v8960
        %v9154 = vunpack.c.l.b16 %v8961
        %v9155 = vunpack.c.l.b16 %v8962
        %v9156 = vunpack.c.l.b16 %v8963
        %v9157 = vunpack.c.l.b16 %v8964
        %v9158 = vunpack.c.l.b16 %v8965
        %v9159 = vunpack.c.l.b16 %v8966
        %v9160 = vunpack.c.l.b16 %v8967
        %v9161 = vunpack.c.l.b16 %v8968
        %v9162 = vunpack.c.l.b16 %v8969
        %v9163 = vunpack.c.l.b16 %v8970
        %v9164 = vunpack.c.l.b16 %v8971
        %v9165 = vunpack.c.l.b16 %v8972
        %v9166 = vunpack.c.l.b16 %v8973
        %v9167 = vunpack.c.l.b16 %v8974
        %v9168 = vunpack.c.l.b16 %v8975
        %v9169 = vunpack.c.l.b16 %v8976
        %v9170 = vunpack.c.l.b16 %v8977
        %v9171 = vunpack.c.l.b16 %v8978
        %v9172 = vunpack.c.l.b16 %v8979
        %v9173 = vunpack.c.l.b16 %v8980
        %v9174 = vunpack.c.l.b16 %v8981
        %v9175 = vunpack.c.l.b16 %v8982
        %v9176 = vunpack.c.l.b16 %v8983
        %v9177 = vunpack.c.l.b16 %v8984
        %v9178 = vunpack.c.l.b16 %v8985
        %v9179 = vunpack.c.l.b16 %v8986
        %v9180 = vunpack.c.l.b16 %v8987
        %v9181 = vunpack.c.l.b16 %v8988
        %v9182 = vunpack.c.l.b16 %v8989
        %v9183 = vunpack.c.l.b16 %v8990
        %v9184 = vunpack.c.l.b16 %v8991
        %v9185 = vunpack.c.l.b16 %v8992
        %v9186 = vpack.c.b16 %v9091, %v9090
        %v9187 = vpack.c.b16 %v9093, %v9092
        %v9188 = vpack.c.b16 %v9095, %v9094
        %v9189 = vpack.c.b16 %v9097, %v9096
        %v9190 = vpack.c.b16 %v9099, %v9098
        %v9191 = vpack.c.b16 %v9101, %v9100
        %v9192 = vpack.c.b16 %v9103, %v9102
        %v9193 = vpack.c.b16 %v9105, %v9104
        %v9194 = vpack.c.b16 %v9107, %v9106
        %v9195 = vpack.c.b16 %v9109, %v9108
        %v9196 = vpack.c.b16 %v9111, %v9110
        %v9197 = vpack.c.b16 %v9113, %v9112
        %v9198 = vpack.c.b16 %v9115, %v9114
        %v9199 = vpack.c.b16 %v9117, %v9116
        %v9200 = vpack.c.b16 %v9119, %v9118
        %v9201 = vpack.c.b16 %v9121, %v9120
        %v9202 = vpack.c.b16 %v9123, %v9122
        %v9203 = vpack.c.b16 %v9125, %v9124
        %v9204 = vpack.c.b16 %v9127, %v9126
        %v9205 = vpack.c.b16 %v9129, %v9128
        %v9206 = vpack.c.b16 %v9131, %v9130
        %v9207 = vpack.c.b16 %v9133, %v9132
        %v9208 = vpack.c.b16 %v9135, %v9134
        %v9209 = vpack.c.b16 %v9137, %v9136
        %v9210 = vpack.c.b16 %v9139, %v9138
        %v9211 = vpack.c.b16 %v9141, %v9140
        %v9212 = vpack.c.b16 %v9143, %v9142
        %v9213 = vpack.c.b16 %v9145, %v9144
        %v9214 = vpack.c.b16 %v9147, %v9146
        %v9215 = vpack.c.b16 %v9149, %v9148
        %v9216 = vpack.c.b16 %v9151, %v9150
        %v9217 = vpack.c.b16 %v9153, %v9152
        %v9218 = vpack.c.b16 %v9155, %v9154
        %v9219 = vpack.c.b16 %v9157, %v9156
        %v9220 = vpack.c.b16 %v9159, %v9158
        %v9221 = vpack.c.b16 %v9161, %v9160
        %v9222 = vpack.c.b16 %v9163, %v9162
        %v9223 = vpack.c.b16 %v9165, %v9164
        %v9224 = vpack.c.b16 %v9167, %v9166
        %v9225 = vpack.c.b16 %v9169, %v9168
        %v9226 = vpack.c.b16 %v9171, %v9170
        %v9227 = vpack.c.b16 %v9173, %v9172
        %v9228 = vpack.c.b16 %v9175, %v9174
        %v9229 = vpack.c.b16 %v9177, %v9176
        %v9230 = vpack.c.b16 %v9179, %v9178
        %v9231 = vpack.c.b16 %v9181, %v9180
        %v9232 = vpack.c.b16 %v9183, %v9182
        %v9233 = vpack.c.b16 %v9185, %v9184
        %9282 = vmatpush.bf16.msra.mxu0 %v9193
        %9283 = vmatpush.bf16.msra.mxu0 %v9192
        %9284 = vmatpush.bf16.msra.mxu0 %v9191
        %9285 = vmatpush.bf16.msra.mxu0 %v9190
        %9286 = vmatpush.bf16.msra.mxu0 %v9189
        %9287 = vmatpush.bf16.msra.mxu0 %v9188
        %9288 = vmatpush.bf16.msra.mxu0 %v9187
        %9289 = vmatpush.bf16.msra.mxu0 %v9186
        %9290 = vmatmul.bf16.gmra.mxu0 %v8891
        %v9291 = vpop.f32.mrf.mxu0
        %v9292 = vadd.f32 %v8993, %v9291
        %v9293 = vpop.f32.mrf.mxu0
        %9294 = vdwg.mxu0
        %9295 = vmatpush.bf16.msra.mxu0 %v9201
        %9296 = vmatpush.bf16.msra.mxu0 %v9200
        %9297 = vmatpush.bf16.msra.mxu0 %v9199
        %9298 = vmatpush.bf16.msra.mxu0 %v9198
        %9299 = vmatpush.bf16.msra.mxu0 %v9197
        %9300 = vmatpush.bf16.msra.mxu0 %v9196
        %9301 = vmatpush.bf16.msra.mxu0 %v9195
        %9302 = vmatpush.bf16.msra.mxu0 %v9194
        %9303 = vmatmul.bf16.gmra.mxu0 %v8892
        %v9304 = vpop.f32.mrf.mxu0
        %v9305 = vadd.f32 %v9292, %v9304
        %v9306 = vpop.f32.mrf.mxu0
        %9307 = vdwg.mxu0
        %9308 = vmatpush.bf16.msra.mxu0 %v9209
        %9309 = vmatpush.bf16.msra.mxu0 %v9208
        %9310 = vmatpush.bf16.msra.mxu0 %v9207
        %9311 = vmatpush.bf16.msra.mxu0 %v9206
        %9312 = vmatpush.bf16.msra.mxu0 %v9205
        %9313 = vmatpush.bf16.msra.mxu0 %v9204
        %9314 = vmatpush.bf16.msra.mxu0 %v9203
        %9315 = vmatpush.bf16.msra.mxu0 %v9202
        %9316 = vmatmul.bf16.gmra.mxu0 %v8893
        %v9317 = vpop.f32.mrf.mxu0
        %v9318 = vadd.f32 %v9305, %v9317
        %v9319 = vpop.f32.mrf.mxu0
        %9320 = vdwg.mxu0
        %9321 = vmatpush.bf16.msra.mxu0 %v9217
        %9322 = vmatpush.bf16.msra.mxu0 %v9216
        %9323 = vmatpush.bf16.msra.mxu0 %v9215
        %9324 = vmatpush.bf16.msra.mxu0 %v9214
        %9325 = vmatpush.bf16.msra.mxu0 %v9213
        %9326 = vmatpush.bf16.msra.mxu0 %v9212
        %9327 = vmatpush.bf16.msra.mxu0 %v9211
        %9328 = vmatpush.bf16.msra.mxu0 %v9210
        %9329 = vmatmul.bf16.gmra.mxu0 %v8894
        %v9330 = vpop.f32.mrf.mxu0
        %v9331 = vadd.f32 %v9318, %v9330
        %v9332 = vpop.f32.mrf.mxu0
        %9333 = vdwg.mxu0
        %9334 = vmatpush.bf16.msra.mxu0 %v9225
        %9335 = vmatpush.bf16.msra.mxu0 %v9224
        %9336 = vmatpush.bf16.msra.mxu0 %v9223
        %9337 = vmatpush.bf16.msra.mxu0 %v9222
        %9338 = vmatpush.bf16.msra.mxu0 %v9221
        %9339 = vmatpush.bf16.msra.mxu0 %v9220
        %9340 = vmatpush.bf16.msra.mxu0 %v9219
        %9341 = vmatpush.bf16.msra.mxu0 %v9218
        %9342 = vmatmul.bf16.gmra.mxu0 %v8895
        %v9343 = vpop.f32.mrf.mxu0
        %v9344 = vadd.f32 %v9331, %v9343
        %v9345 = vpop.f32.mrf.mxu0
        %9346 = vdwg.mxu0
        %9347 = vmatpush.bf16.msra.mxu0 %v9233
        %9348 = vmatpush.bf16.msra.mxu0 %v9232
        %9349 = vmatpush.bf16.msra.mxu0 %v9231
        %9350 = vmatpush.bf16.msra.mxu0 %v9230
        %9351 = vmatpush.bf16.msra.mxu0 %v9229
        %9352 = vmatpush.bf16.msra.mxu0 %v9228
        %9353 = vmatpush.bf16.msra.mxu0 %v9227
        %9354 = vmatpush.bf16.msra.mxu0 %v9226
        %9355 = vmatmul.bf16.gmra.mxu0 %v8896
        %v9356 = vpop.f32.mrf.mxu0
        %v9357 = vadd.f32 %v9344, %v9356
        %v9358 = vpop.f32.mrf.mxu0
        %9359 = vdwg.mxu0
        %v9360 = vmax.f32 %v9357, 0.0
        %v9361 = vpack.c.bf16 %v9360, %v9360
        %v9362 = vld [vmem:[%s8] sm:$0xf]
        %v9363 = vld [vmem:[%s8 + $0x4] sm:$0xf]
        %v9364 = vld [vmem:[%s8 + $0x8] sm:$0xf]
        %v9365 = vld [vmem:[%s8 + $0xc] sm:$0xf]
        %v9366 = vld [vmem:[%s8 + $0x10] sm:$0xf]
        %v9367 = vld [vmem:[%s8 + $0x14] sm:$0xf]
        %v9368 = vld [vmem:[%s8 + $0x18] sm:$0xf]
        %v9369 = vld [vmem:[%s8 + $0x1c] sm:$0xf]
        %v9370 = vld [vmem:[%s8 + $0x20] sm:$0xf]
        %v9371 = vld [vmem:[%s8 + $0x24] sm:$0xf]
        %v9372 = vld [vmem:[%s8 + $0x28] sm:$0xf]
        %v9373 = vld [vmem:[%s8 + $0x2c] sm:$0xf]
        %v9374 = vld [vmem:[%s8 + $0x30] sm:$0xf]
        %v9375 = vld [vmem:[%s8 + $0x34] sm:$0xf]
        %v9376 = vld [vmem:[%s8 + $0x38] sm:$0xf]
        %v9377 = vld [vmem:[%s8 + $0x3c] sm:$0xf]
        %v9378 = vld [vmem:[%s9] sm:$0x1]
        %v9395 = vunpack.c.l.b16 %v9362
        %v9396 = vunpack.c.l.b16 %v9363
        %v9397 = vunpack.c.l.b16 %v9364
        %v9398 = vunpack.c.l.b16 %v9365
        %v9399 = vunpack.c.l.b16 %v9366
        %v9400 = vunpack.c.l.b16 %v9367
        %v9401 = vunpack.c.l.b16 %v9368
        %v9402 = vunpack.c.l.b16 %v9369
        %v9403 = vunpack.c.l.b16 %v9370
        %v9404 = vunpack.c.l.b16 %v9371
        %v9405 = vunpack.c.l.b16 %v9372
        %v9406 = vunpack.c.l.b16 %v9373
        %v9407 = vunpack.c.l.b16 %v9374
        %v9408 = vunpack.c.l.b16 %v9375
        %v9409 = vunpack.c.l.b16 %v9376
        %v9410 = vunpack.c.l.b16 %v9377
        %v9411 = vpack.c.b16 %v9396, %v9395
        %v9412 = vpack.c.b16 %v9398, %v9397
        %v9413 = vpack.c.b16 %v9400, %v9399
        %v9414 = vpack.c.b16 %v9402, %v9401
        %v9415 = vpack.c.b16 %v9404, %v9403
        %v9416 = vpack.c.b16 %v9406, %v9405
        %v9417 = vpack.c.b16 %v9408, %v9407
        %v9418 = vpack.c.b16 %v9410, %v9409
        %9427 = vmatpush.bf16.msra.mxu0 %v9418
        %9428 = vmatpush.bf16.msra.mxu0 %v9417
        %9429 = vmatpush.bf16.msra.mxu0 %v9416
        %9430 = vmatpush.bf16.msra.mxu0 %v9415
        %9431 = vmatpush.bf16.msra.mxu0 %v9414
        %9432 = vmatpush.bf16.msra.mxu0 %v9413
        %9433 = vmatpush.bf16.msra.mxu0 %v9412
        %9434 = vmatpush.bf16.msra.mxu0 %v9411
        %9435 = vmatmul.bf16.gmra.mxu0 %v9361
        %v9436 = vpop.f32.mrf.mxu0
        %v9437 = vadd.f32 %v9378, %v9436
        %v9438 = vpop.f32.mrf.mxu0
        %9439 = vdwg.mxu0
        %v9440 = vmax.f32 %v9437, 0.0
        %v9441 = vpack.c.bf16 %v9440, %v9440
        %v9442 = vld [vmem:[%s10] sm:$0xf]
        %v9443 = vld [vmem:[%s10 + $0x4] sm:$0xf]
        %v9444 = vld [vmem:[%s10 + $0x8] sm:$0xf]
        %v9445 = vld [vmem:[%s10 + $0xc] sm:$0xf]
        %v9446 = vld [vmem:[%s10 + $0x10] sm:$0xf]
        %v9447 = vld [vmem:[%s10 + $0x14] sm:$0xf]
        %v9448 = vld [vmem:[%s10 + $0x18] sm:$0xf]
        %v9449 = vld [vmem:[%s10 + $0x1c] sm:$0xf]
        %v9450 = vld [vmem:[%s10 + $0x20] sm:$0xf]
        %v9451 = vld [vmem:[%s10 + $0x24] sm:$0xf]
        %v9452 = vld [vmem:[%s10 + $0x28] sm:$0xf]
        %v9453 = vld [vmem:[%s10 + $0x2c] sm:$0xf]
        %v9454 = vld [vmem:[%s10 + $0x30] sm:$0xf]
        %v9455 = vld [vmem:[%s10 + $0x34] sm:$0xf]
        %v9456 = vld [vmem:[%s10 + $0x38] sm:$0xf]
        %v9457 = vld [vmem:[%s10 + $0x3c] sm:$0xf]
        %v9458 = vld [vmem:[%s11] sm:$0x1]
        %v9475 = vunpack.c.l.b16 %v9442
        %v9476 = vunpack.c.l.b16 %v9443
        %v9477 = vunpack.c.l.b16 %v9444
        %v9478 = vunpack.c.l.b16 %v9445
        %v9479 = vunpack.c.l.b16 %v9446
        %v9480 = vunpack.c.l.b16 %v9447
        %v9481 = vunpack.c.l.b16 %v9448
        %v9482 = vunpack.c.l.b16 %v9449
        %v9483 = vunpack.c.l.b16 %v9450
        %v9484 = vunpack.c.l.b16 %v9451
        %v9485 = vunpack.c.l.b16 %v9452
        %v9486 = vunpack.c.l.b16 %v9453
        %v9487 = vunpack.c.l.b16 %v9454
        %v9488 = vunpack.c.l.b16 %v9455
        %v9489 = vunpack.c.l.b16 %v9456
        %v9490 = vunpack.c.l.b16 %v9457
        %v9491 = vpack.c.b16 %v9476, %v9475
        %v9492 = vpack.c.b16 %v9478, %v9477
        %v9493 = vpack.c.b16 %v9480, %v9479
        %v9494 = vpack.c.b16 %v9482, %v9481
        %v9495 = vpack.c.b16 %v9484, %v9483
        %v9496 = vpack.c.b16 %v9486, %v9485
        %v9497 = vpack.c.b16 %v9488, %v9487
        %v9498 = vpack.c.b16 %v9490, %v9489
        %9507 = vmatpush.bf16.msra.mxu0 %v9498
        %9508 = vmatpush.bf16.msra.mxu0 %v9497
        %9509 = vmatpush.bf16.msra.mxu0 %v9496
        %9510 = vmatpush.bf16.msra.mxu0 %v9495
        %9511 = vmatpush.bf16.msra.mxu0 %v9494
        %9512 = vmatpush.bf16.msra.mxu0 %v9493
        %9513 = vmatpush.bf16.msra.mxu0 %v9492
        %9514 = vmatpush.bf16.msra.mxu0 %v9491
        %9515 = vmatmul.bf16.gmra.mxu0 %v9441
        %v9516 = vpop.f32.mrf.mxu0
        %v9517 = vadd.f32 %v9458, %v9516
        %v9518 = vpop.f32.mrf.mxu0
        %9519 = vdwg.mxu0
        %9520 = vst [vmem:[%s405] sm:$0x1] %v9517
        %s9521 = sand.u32 %s291, 1
        %s9522 = scalar_lea.sflag [#allocation4], %s9521
        %s9523 = sand.u32 %s291, 1
        %s9524 = scalar_lea.vmem [#allocation3], %s9523
        // Predicated region
        $region69: #{neural_network_forward.1} parent=67 // pred_check
          %p9525 = pneg %p301
        $region70: #{neural_network_forward.1} parent=67 // pred_check_branch
          %9527 = sbr.rel (%p9525) target = $region72
        $region71: #{neural_network_forward.1} parent=67 // pred_region
          %9529 = vsyncadd %s9522, 0
          %s9530 = scalar_lea.hbm %s12, %s26
          %s9532 = sshll.u32 %s9524, 4
          %s9533 = int_to_ptr.vmem [resolvable:$true] %s9532
          %s9534 = sshll.u32 %s9530, 4
          %s9535 = int_to_ptr.hbm [resolvable:$true] %s9534
          %9537 = dma.vmem_to_hbm [thread:$0]  %s9533, 16, %s9535, %s9522
        $region72: #{neural_network_forward.1} parent=67 // pred_fallthru
          _
      $region68: #{neural_network_forward.1} parent=5 // pred_fallthru
        _
      %p9538 = scmp.le.s32.totalorder 2, %s21
      // Predicated region
      $region73: #{neural_network_forward.1} parent=5 // pred_check
        %p9539 = pneg %p9538
      $region74: #{neural_network_forward.1} parent=5 // pred_check_branch
        %9541 = sbr.rel (%p9539) target = $region76
      $region75: #{neural_network_forward.1} parent=5 // pred_region
        %s9542 = ssub.s32 %s21, 2
        // Predicated region
        $region77: #{neural_network_forward.1} parent=75 // pred_check
          %p9543 = pneg %p307
        $region78: #{neural_network_forward.1} parent=75 // pred_check_branch
          %9545 = sbr.rel (%p9543) target = $region80
        $region79: #{neural_network_forward.1} parent=75 // pred_region
          %s9546 = sand.u32 %s292, 1
          %s9547 = scalar_lea.sflag [#allocation4], %s9546
          %s9548 = sand.u32 %s292, 1
          %s9549 = scalar_lea.vmem [#allocation3], %s9548
          %9551 = dma.done %s9547, 16
        $region80: #{neural_network_forward.1} parent=75 // pred_fallthru
          _
      $region76: #{neural_network_forward.1} parent=5 // pred_fallthru
        _
    $region6: #{neural_network_forward.1} parent=1 // loop_footer
      %s25 = sadd.s32 1, %s21
    $region7: #{neural_network_forward.1} parent=1 // loop_footer_branch
      %20 = sbr.rel target = $region3
    $region8: #{neural_network_forward.1} parent=1 // loop_exit
      _
    %9552 = vsyncpa [#allocation4], 1
    %s9553 = scalar_lea.sflag [#allocation4], 1
    %9554 = vsyncpa %s9553, 1

</llo_original>
